<compile_context>
chip_gen: v6e
topology: v6e:2x2x1
jax: 0.10.0
libtpu: 0.0.40
codegen_flags: <defaults>
</compile_context>

<pallas_src>
import numpy as np

import jax
import jax.numpy as jnp
from jax.experimental import pallas as pl
from jax.experimental.pallas import tpu as pltpu


# ----------------------------------------------------------------------------
# Host-side weight folding (runs ONCE per parameter set)
# ----------------------------------------------------------------------------
def _fold_conv_pool_stage(w, b, *, in_ch, in_hw, out_ch, pooled_hw, mxu_dtype):
    """Fold `conv(k=5, VALID) + bias + ReLU + 2x2 max-pool` into a single dense
    matrix stacking the four pooling "corners" along M:

        z = A @ h_in ; z = relu(z + b_stacked)
        h_out = max(z[0:n], z[n:2n], z[2n:3n], z[3n:4n])      (n = out features)

    ReLU and max commute (both monotone), so this equals relu -> max_pool2d(2).
    Flattening follows PyTorch (C, H, W) order."""
    k = 5
    conv_hw = in_hw - k + 1
    assert conv_hw == 2 * pooled_hw
    n_in = in_ch * in_hw * in_hw
    n_out = out_ch * pooled_hw * pooled_hw

    co = np.arange(out_ch)[:, None, None, None, None, None]
    ci = np.arange(in_ch)[None, :, None, None, None, None]
    i = np.arange(pooled_hw)[None, None, :, None, None, None]
    j = np.arange(pooled_hw)[None, None, None, :, None, None]
    kh = np.arange(k)[None, None, None, None, :, None]
    kw = np.arange(k)[None, None, None, None, None, :]
    shape = (out_ch, in_ch, pooled_hw, pooled_hw, k, k)

    o_idx = np.broadcast_to(co * pooled_hw * pooled_hw + i * pooled_hw + j, shape)
    vals = jnp.broadcast_to(w.astype(jnp.float32)[:, :, None, None, :, :], shape)

    mats = []
    for dy in range(2):
        for dx in range(2):
            f_idx = (ci * in_hw * in_hw
                     + (2 * i + dy + kh) * in_hw
                     + (2 * j + dx + kw))
            f_idx = np.broadcast_to(f_idx, shape)
            mats.append(
                jnp.zeros((n_out, n_in), jnp.float32).at[o_idx, f_idx].add(vals))
    a_stacked = jnp.concatenate(mats, axis=0).astype(mxu_dtype)   # (4*n_out, n_in)
    b_flat = jnp.repeat(b.astype(jnp.float32), pooled_hw * pooled_hw)
    b_stacked = jnp.tile(b_flat.reshape(n_out, 1), (4, 1))        # (4*n_out, 1)
    return a_stacked, b_stacked


def _fold_qnn_head(theta, fc3_w, fc3_b):
    """Collapse the 2-qubit QNode + fc3 scalars into 8 reals.

    The trailing RY/CNOT block is a real orthogonal U.  With
    M = U^T diag(1,-1,-1,1) U (trace 0) and the prefix phases a_j above,
        <Z0Z1> = 0.5 * sum_{j<l} M_jl cos(a_j - a_l)
               = K0*ca*cb + K1*sa*sb + K2*ca*cg + K3*sa*sg + K4*cb*cg + K5*sb*sg
    where (ca,sa)=cos/sin(2x0), (cb,sb)=cos/sin(2x1), (cg,sg)=cos/sin(2c)."""
    theta = theta.astype(jnp.float32)

    def ry2(t):                           # RY(2 t), real
        c, s = jnp.cos(t), jnp.sin(t)
        return jnp.stack([jnp.stack([c, -s]), jnp.stack([s, c])])

    cnot01 = jnp.array([[1, 0, 0, 0], [0, 1, 0, 0],
                        [0, 0, 0, 1], [0, 0, 1, 0]], jnp.float32)
    cnot10 = jnp.array([[1, 0, 0, 0], [0, 0, 0, 1],
                        [0, 0, 1, 0], [0, 1, 0, 0]], jnp.float32)

    def layer(t0, t1):
        return jnp.kron(ry2(t0), ry2(t1))

    u = (layer(theta[6], theta[7]) @ cnot01 @ layer(theta[4], theta[5]) @ cnot10
         @ layer(theta[2], theta[3]) @ cnot01 @ layer(theta[0], theta[1]))

    zz = jnp.array([1.0, -1.0, -1.0, 1.0], jnp.float32)
    m = u.T @ (zz[:, None] * u)           # M_jl = sum_k zz_k U_kj U_kl
    coefs = jnp.stack([
        0.5 * (m[0, 3] + m[1, 2]),        # K0: ca*cb
        0.5 * (m[1, 2] - m[0, 3]),        # K1: sa*sb
        0.5 * (m[0, 2] + m[1, 3]),        # K2: ca*cg
        0.5 * (m[1, 3] - m[0, 2]),        # K3: sa*sg
        0.5 * (m[0, 1] + m[2, 3]),        # K4: cb*cg
        0.5 * (m[2, 3] - m[0, 1]),        # K5: sb*sg
        fc3_w.reshape(()), fc3_b.reshape(())])
    return coefs.reshape(1, 8).astype(jnp.float32)


def fold_params(params, mxu_dtype=jnp.bfloat16):
    a1, b1 = _fold_conv_pool_stage(params["conv1_w"], params["conv1_b"],
                                   in_ch=1, in_hw=28, out_ch=2, pooled_hw=12,
                                   mxu_dtype=mxu_dtype)
    a2, b2 = _fold_conv_pool_stage(params["conv2_w"], params["conv2_b"],
                                   in_ch=2, in_hw=12, out_ch=16, pooled_hw=4,
                                   mxu_dtype=mxu_dtype)
    return dict(
        a1=a1, b1=b1, a2=a2, b2=b2,
        fw1=params["fc1_w"].astype(mxu_dtype),
        fb1=params["fc1_b"].reshape(64, 1).astype(jnp.float32),
        fw2=params["fc2_w"].astype(mxu_dtype),
        fb2=params["fc2_b"].reshape(2, 1).astype(jnp.float32),
        coefs=_fold_qnn_head(params["qnn_params"], params["fc3_w"],
                             params["fc3_b"]),
    )


# ----------------------------------------------------------------------------
# In-kernel helpers
# ----------------------------------------------------------------------------
def _sin_cos(x):
    """f32 sin/cos via pi-period range reduction + short Taylor series.

    Uses only mul/add/floor so it lowers on every TPU generation.  After
    reduction |r| <= pi/2, so the truncated series error is < 1e-6."""
    inv_pi = 0.3183098861837907
    pi_hi = 3.140625                       # exact in f32 (201/64)
    pi_lo = 9.676535897932385e-4           # pi - pi_hi
    k = jnp.floor(x * inv_pi + 0.5)
    r = (x - k * pi_hi) - k * pi_lo        # r in [-pi/2, pi/2]
    sgn = 1.0 - 2.0 * (k - 2.0 * jnp.floor(0.5 * k))   # (-1)**k
    r2 = r * r
    s = r * (1.0 + r2 * (-1.0 / 6.0 + r2 * (1.0 / 120.0 + r2 * (
        -1.0 / 5040.0 + r2 * (1.0 / 362880.0 - r2 * (1.0 / 39916800.0))))))
    c = 1.0 + r2 * (-0.5 + r2 * (1.0 / 24.0 + r2 * (
        -1.0 / 720.0 + r2 * (1.0 / 40320.0 - r2 * (1.0 / 3628800.0)))))
    return sgn * s, sgn * c


# ----------------------------------------------------------------------------
# Pallas kernel (the whole network, one launch per batch tile)
# ----------------------------------------------------------------------------
def _fused_forward_kernel(x_ref, a1_ref, b1_ref, a2_ref, b2_ref,
                          fw1_ref, fb1_ref, fw2_ref, fb2_ref, coef_ref, o_ref):
    f32 = jnp.float32
    mxu = a1_ref.dtype
    xv = x_ref[...]                                            # (784, TB) mxu

    # conv1 + bias + ReLU + 2x2 max-pool : ONE stacked matmul + slab max
    z = jnp.dot(a1_ref[...], xv, preferred_element_type=f32)   # (1152, TB)
    z = jnp.maximum(z + b1_ref[...], 0.0)
    h = jnp.maximum(jnp.maximum(z[0:288], z[288:576]),
                    jnp.maximum(z[576:864], z[864:1152])).astype(mxu)   # (288,TB)

    # conv2 + bias + ReLU + 2x2 max-pool (PyTorch (C,H,W) flatten order)
    z = jnp.dot(a2_ref[...], h, preferred_element_type=f32)    # (1024, TB)
    z = jnp.maximum(z + b2_ref[...], 0.0)
    h = jnp.maximum(jnp.maximum(z[0:256], z[256:512]),
                    jnp.maximum(z[512:768], z[768:1024])).astype(mxu)   # (256,TB)
    # TODO(synk): Dropout2d acts as identity (eval-mode semantics); train-mode
    # whole-channel dropout is not modelled.

    # fc1 + ReLU, fc2   (features x batch, so y = W @ x)
    f1 = jnp.maximum(jnp.dot(fw1_ref[...], h, preferred_element_type=f32)
                     + fb1_ref[...], 0.0).astype(mxu)          # (64, TB)
    f2 = jnp.dot(fw2_ref[...], f1, preferred_element_type=f32) + fb2_ref[...]

    # 2-qubit QNN expectation <Z0 Z1>, closed form, batched across lanes
    x0 = f2[0:1, :]
    x1 = f2[1:2, :]
    cph = (jnp.pi - x0) * (jnp.pi - x1)
    args = jnp.concatenate([2.0 * x0, 2.0 * x1, 2.0 * cph], axis=0)   # (3, TB)
    s, c = _sin_cos(args)                                      # single pass
    sa, sb, sg = s[0:1, :], s[1:2, :], s[2:3, :]
    ca, cb, cg = c[0:1, :], c[1:2, :], c[2:3, :]

    coef = coef_ref[...]                                       # (1, 8) f32
    expz = (coef[:, 0:1] * ca * cb + coef[:, 1:2] * sa * sb
            + coef[:, 2:3] * ca * cg + coef[:, 3:4] * sa * sg
            + coef[:, 4:5] * cb * cg + coef[:, 5:6] * sb * sg)

    # fc3 -> cat((x, 1 - x), -1) -> log_softmax  (softplus form, one store)
    l0 = coef[:, 6:7] * expz + coef[:, 7:8]
    d = 1.0 - 2.0 * l0                                         # l1 - l0
    sp = jnp.maximum(d, 0.0) + jnp.log(1.0 + jnp.exp(-jnp.abs(d)))   # softplus(d)
    o_ref[...] = jnp.concatenate([-sp, d - sp], axis=0).astype(o_ref.dtype)


# ----------------------------------------------------------------------------
# Wrappers
# ----------------------------------------------------------------------------
def _forward_impl(x_nchw, folded, *, batch_tile=256):
    """x_nchw: (B, 1, 28, 28). Returns (B, 2) log-probabilities (float32)."""
    B = x_nchw.shape[0]
    assert x_nchw.shape[1:] == (1, 28, 28)
    mxu_dtype = folded["a1"].dtype

    # Cast to the MXU dtype BEFORE the transpose (halves transpose bytes);
    # batch lands on the lane axis -> lane-dense compute inside the kernel.
    x_t = x_nchw.reshape(B, 28 * 28).astype(mxu_dtype).T       # (784, B)
    if B <= batch_tile:
        tb, bp = B, B
    else:
        assert batch_tile % 128 == 0, "batch_tile must be a multiple of 128"
        tb = batch_tile
        bp = ((B + tb - 1) // tb) * tb
        x_t = jnp.pad(x_t, ((0, 0), (0, bp - B)))

    def const_map(i):
        return (0, 0)

    out_t = pl.pallas_call(
        _fused_forward_kernel,
        out_shape=jax.ShapeDtypeStruct((2, bp), jnp.float32),
        grid=(bp // tb,),
        in_specs=[
            pl.BlockSpec((784, tb), lambda i: (0, i)),         # input batch tile
            pl.BlockSpec((1152, 784), const_map),              # conv1+pool (stacked)
            pl.BlockSpec((1152, 1), const_map),
            pl.BlockSpec((1024, 288), const_map),              # conv2+pool (stacked)
            pl.BlockSpec((1024, 1), const_map),
            pl.BlockSpec((64, 256), const_map),                # fc1
            pl.BlockSpec((64, 1), const_map),
            pl.BlockSpec((2, 64), const_map),                  # fc2
            pl.BlockSpec((2, 1), const_map),
            pl.BlockSpec((1, 8), const_map),                   # QNN / head coefficients
        ],
        out_specs=pl.BlockSpec((2, tb), lambda i: (0, i)),
        compiler_params=pltpu.CompilerParams(
            dimension_semantics=("parallel",),                 # v7x: batch tiles -> 2 TCs
            vmem_limit_bytes=32 * 1024 * 1024),
    )(x_t, folded["a1"], folded["b1"], folded["a2"], folded["b2"],
      folded["fw1"], folded["fb1"], folded["fw2"], folded["fb2"],
      folded["coefs"])

    return out_t[:, :B].T                                      # (B, 2)


def make_binary_classifier_forward(params, *, batch_tile=256,
                                   mxu_dtype=jnp.bfloat16):
    """Folds weights ONCE and returns a jitted forward fn (hot path only)."""
    folded = fold_params(params, mxu_dtype)
    fwd_impl = jax.jit(lambda x, f: _forward_impl(x, f, batch_tile=batch_tile))
    return lambda x: fwd_impl(x, folded)


def binary_classifier_forward(x_nchw, params, *, batch_tile=256,
                              mxu_dtype=jnp.bfloat16):
    """One-off convenience wrapper (folds per call; prefer make_* for reuse)."""
    return _forward_impl(x_nchw, fold_params(params, mxu_dtype),
                         batch_tile=batch_tile)


# ----------------------------------------------------------------------------
# Parameter init + direct (un-fused) JAX reference for verification
# ----------------------------------------------------------------------------
def init_params(key):
    ks = jax.random.split(key, 11)
    return {
        "conv1_w": jax.random.normal(ks[0], (2, 1, 5, 5), jnp.float32) * 0.2,
        "conv1_b": jax.random.normal(ks[1], (2,), jnp.float32) * 0.1,
        "conv2_w": jax.random.normal(ks[2], (16, 2, 5, 5), jnp.float32) * 0.1,
        "conv2_b": jax.random.normal(ks[3], (16,), jnp.float32) * 0.1,
        "fc1_w": jax.random.normal(ks[4], (64, 256), jnp.float32) * 0.05,
        "fc1_b": jax.random.normal(ks[5], (64,), jnp.float32) * 0.05,
        "fc2_w": jax.random.normal(ks[6], (2, 64), jnp.float32) * 0.1,
        "fc2_b": jax.random.normal(ks[7], (2,), jnp.float32) * 0.1,
        "fc3_w": jax.random.normal(ks[8], (1, 1), jnp.float32),
        "fc3_b": jax.random.normal(ks[9], (1,), jnp.float32) * 0.1,
        "qnn_params": jax.random.uniform(ks[10], (8,), jnp.float32),
    }


def _qnn_expval_reference(xv, theta):
    """Per-sample complex statevector simulation of the PennyLane circuit
    (ground truth for the closed form used inside the kernel)."""
    i2 = jnp.eye(2, dtype=jnp.complex64)
    h = (1.0 / jnp.sqrt(2.0)).astype(jnp.complex64) * jnp.array(
        [[1, 1], [1, -1]], jnp.complex64)

    def rz(phi):
        em, ep = jnp.exp(-0.5j * phi), jnp.exp(0.5j * phi)
        zero = 0.0 * em
        return jnp.stack([jnp.stack([em, zero]), jnp.stack([zero, ep])])

    def ry(phi):
        c = jnp.cos(phi / 2).astype(jnp.complex64)
        s = jnp.sin(phi / 2).astype(jnp.complex64)
        return jnp.stack([jnp.stack([c, -s]), jnp.stack([s, c])])

    on0 = lambda u: jnp.kron(u, i2)
    on1 = lambda u: jnp.kron(i2, u)
    cnot01 = jnp.array([[1, 0, 0, 0], [0, 1, 0, 0],
                        [0, 0, 0, 1], [0, 0, 1, 0]], jnp.complex64)
    cnot10 = jnp.array([[1, 0, 0, 0], [0, 0, 0, 1],
                        [0, 0, 1, 0], [0, 1, 0, 0]], jnp.complex64)

    x0, x1, t = xv[0], xv[1], theta
    psi = jnp.zeros(4, jnp.complex64).at[0].set(1.0)
    psi = on1(h) @ (on0(h) @ psi)
    psi = on1(rz(2.0 * x1)) @ (on0(rz(2.0 * x0)) @ psi)
    psi = cnot01 @ psi
    psi = on1(rz(2.0 * (jnp.pi - x0) * (jnp.pi - x1))) @ psi
    psi = cnot01 @ psi
    psi = on1(ry(2.0 * t[1])) @ (on0(ry(2.0 * t[0])) @ psi)
    psi = cnot01 @ psi
    psi = on1(ry(2.0 * t[3])) @ (on0(ry(2.0 * t[2])) @ psi)
    psi = cnot10 @ psi
    psi = on1(ry(2.0 * t[5])) @ (on0(ry(2.0 * t[4])) @ psi)
    psi = cnot01 @ psi
    psi = on1(ry(2.0 * t[7])) @ (on0(ry(2.0 * t[6])) @ psi)
    zz = jnp.array([1.0, -1.0, -1.0, 1.0], jnp.float32)
    return jnp.sum(jnp.abs(psi) ** 2 * zz)


def reference_forward(x_nchw, params, mxu_dtype=jnp.bfloat16):
    """Direct JAX mirror of the PyTorch forward (same MXU operand dtype /
    f32 accumulation as the Pallas kernel)."""
    f32 = jnp.float32
    cast = lambda t: t.astype(mxu_dtype)
    B = x_nchw.shape[0]

    def conv(inp, w, b):
        y = jax.lax.conv_general_dilated(
            cast(inp), cast(w), window_strides=(1, 1), padding="VALID",
            dimension_numbers=("NCHW", "OIHW", "NCHW"),
            preferred_element_type=f32)
        return y + b.reshape(1, -1, 1, 1).astype(f32)

    def pool(y):
        return jax.lax.reduce_window(y, -jnp.inf, jax.lax.max,
                                     (1, 1, 2, 2), (1, 1, 2, 2), "VALID")

    y = x_nchw.astype(f32)
    y = pool(jax.nn.relu(conv(y, params["conv1_w"], params["conv1_b"])))
    y = pool(jax.nn.relu(conv(y, params["conv2_w"], params["conv2_b"])))
    y = y.reshape(B, -1)                                       # (B, 256), CHW order
    y = jax.nn.relu(
        jnp.dot(cast(y), cast(params["fc1_w"]).T, preferred_element_type=f32)
        + params["fc1_b"])
    y = (jnp.dot(cast(y), cast(params["fc2_w"]).T, preferred_element_type=f32)
         + params["fc2_b"])
    q = jax.vmap(lambda v: _qnn_expval_reference(v, params["qnn_params"]))(y)
    q = q.reshape(B, 1).astype(f32)
    a = q * params["fc3_w"].reshape(1, 1) + params["fc3_b"].reshape(1, 1)
    logits = jnp.concatenate([a, 1.0 - a], axis=-1)
    return jax.nn.log_softmax(logits, axis=1)


if __name__ == "__main__":
    key = jax.random.PRNGKey(0)
    k_param, k_x = jax.random.split(key)
    params = init_params(k_param)
    # MNIST-like input implied by fc1 = Linear(256, 64): (B, 1, 28, 28)
    x = jax.random.normal(k_x, (2, 1, 28, 28), jnp.float32)

    # Fold once (out of the hot path), then run the fused kernel.
    fwd = make_binary_classifier_forward(params)
    out = jax.block_until_ready(fwd(x))
    assert out.shape == (2, 2) and out.dtype == jnp.float32

    # log_softmax rows must sum to 1 in probability space
    assert bool(jnp.all(jnp.abs(jnp.sum(jnp.exp(out), axis=1) - 1.0) < 1e-4))

    # End-to-end check against the direct (un-fused) reference of the PyTorch
    # forward, run at the same operand precision as the kernel's MXU stages.
    ref = jax.block_until_ready(reference_forward(x, params))
    assert bool(jnp.max(jnp.abs(out - ref)) < 1e-2), (out, ref)

    print("KERNEL_OK")
</pallas_src>

<mosaic_0001>
module attributes {stable_mosaic.version = 11 : i64} {
  func.func @_fused_forward_kernel(%arg0: i32, %arg1: memref<784x2xbf16, #tpu.memory_space<vmem>>, %arg2: memref<1152x784xbf16, #tpu.memory_space<vmem>>, %arg3: memref<1152x1xf32, #tpu.memory_space<vmem>>, %arg4: memref<1024x288xbf16, #tpu.memory_space<vmem>>, %arg5: memref<1024x1xf32, #tpu.memory_space<vmem>>, %arg6: memref<64x256xbf16, #tpu.memory_space<vmem>>, %arg7: memref<64x1xf32, #tpu.memory_space<vmem>>, %arg8: memref<2x64xbf16, #tpu.memory_space<vmem>>, %arg9: memref<2x1xf32, #tpu.memory_space<vmem>>, %arg10: memref<1x8xf32, #tpu.memory_space<vmem>>, %arg11: memref<2x2xf32, #tpu.memory_space<vmem>>) attributes {dimension_semantics = [#tpu.dimension_semantics<parallel>], iteration_bounds = array<i64: 1>, scalar_prefetch = 0 : i64, scratch_operands = 0 : i64, tpu.core_type = #tpu.core_type<tc>, window_params = [{transform_indices = @transform_0, window_bounds = array<i64: 784, 2>}, {pipeline_mode = #tpu.pipeline_mode<synchronous>, transform_indices = @transform_1, window_bounds = array<i64: 1152, 784>}, {pipeline_mode = #tpu.pipeline_mode<synchronous>, transform_indices = @transform_2, window_bounds = array<i64: 1152, 1>}, {pipeline_mode = #tpu.pipeline_mode<synchronous>, transform_indices = @transform_3, window_bounds = array<i64: 1024, 288>}, {pipeline_mode = #tpu.pipeline_mode<synchronous>, transform_indices = @transform_4, window_bounds = array<i64: 1024, 1>}, {pipeline_mode = #tpu.pipeline_mode<synchronous>, transform_indices = @transform_5, window_bounds = array<i64: 64, 256>}, {pipeline_mode = #tpu.pipeline_mode<synchronous>, transform_indices = @transform_6, window_bounds = array<i64: 64, 1>}, {pipeline_mode = #tpu.pipeline_mode<synchronous>, transform_indices = @transform_7, window_bounds = array<i64: 2, 64>}, {pipeline_mode = #tpu.pipeline_mode<synchronous>, transform_indices = @transform_8, window_bounds = array<i64: 2, 1>}, {pipeline_mode = #tpu.pipeline_mode<synchronous>, transform_indices = @transform_9, window_bounds = array<i64: 1, 8>}, {transform_indices = @transform_10, window_bounds = array<i64: 2, 2>}]} {
    %c0 = arith.constant 0 : index
    %c0_0 = arith.constant 0 : index
    %0 = vector.load %arg1[%c0, %c0_0] : memref<784x2xbf16, #tpu.memory_space<vmem>>, vector<784x2xbf16>
    %c0_1 = arith.constant 0 : index
    %c0_2 = arith.constant 0 : index
    %1 = vector.load %arg2[%c0_1, %c0_2] : memref<1152x784xbf16, #tpu.memory_space<vmem>>, vector<1152x784xbf16>
    %cst = arith.constant dense<0.000000e+00> : vector<1152x2xf32>
    %2 = tpu.matmul %1, %0, %cst {dimension_numbers = #tpu.dot_dimension_numbers<[1], [0], [0], [1], [0, 0, 1, 1], [], []>} : vector<1152x784xbf16>, vector<784x2xbf16>, vector<1152x2xf32> -> vector<1152x2xf32>
    %c0_3 = arith.constant 0 : index
    %c0_4 = arith.constant 0 : index
    %3 = vector.load %arg3[%c0_3, %c0_4] : memref<1152x1xf32, #tpu.memory_space<vmem>>, vector<1152x1xf32>
    %4 = vector.broadcast %3 : vector<1152x1xf32> to vector<1152x2xf32>
    %5 = arith.addf %2, %4 : vector<1152x2xf32>
    %cst_5 = arith.constant 0.000000e+00 : f32
    %6 = vector.broadcast %cst_5 : f32 to vector<1152x2xf32>
    %7 = arith.maximumf %5, %6 : vector<1152x2xf32>
    %8 = vector.extract_strided_slice %7 {offsets = [0, 0], sizes = [288, 2], strides = [1, 1]} : vector<1152x2xf32> to vector<288x2xf32>
    %9 = vector.extract_strided_slice %7 {offsets = [288, 0], sizes = [288, 2], strides = [1, 1]} : vector<1152x2xf32> to vector<288x2xf32>
    %10 = arith.maximumf %8, %9 : vector<288x2xf32>
    %11 = vector.extract_strided_slice %7 {offsets = [576, 0], sizes = [288, 2], strides = [1, 1]} : vector<1152x2xf32> to vector<288x2xf32>
    %12 = vector.extract_strided_slice %7 {offsets = [864, 0], sizes = [288, 2], strides = [1, 1]} : vector<1152x2xf32> to vector<288x2xf32>
    %13 = arith.maximumf %11, %12 : vector<288x2xf32>
    %14 = arith.maximumf %10, %13 : vector<288x2xf32>
    %15 = arith.truncf %14 : vector<288x2xf32> to vector<288x2xbf16>
    %c0_6 = arith.constant 0 : index
    %c0_7 = arith.constant 0 : index
    %16 = vector.load %arg4[%c0_6, %c0_7] : memref<1024x288xbf16, #tpu.memory_space<vmem>>, vector<1024x288xbf16>
    %cst_8 = arith.constant dense<0.000000e+00> : vector<1024x2xf32>
    %17 = tpu.matmul %16, %15, %cst_8 {dimension_numbers = #tpu.dot_dimension_numbers<[1], [0], [0], [1], [0, 0, 1, 1], [], []>} : vector<1024x288xbf16>, vector<288x2xbf16>, vector<1024x2xf32> -> vector<1024x2xf32>
    %c0_9 = arith.constant 0 : index
    %c0_10 = arith.constant 0 : index
    %18 = vector.load %arg5[%c0_9, %c0_10] : memref<1024x1xf32, #tpu.memory_space<vmem>>, vector<1024x1xf32>
    %19 = vector.broadcast %18 : vector<1024x1xf32> to vector<1024x2xf32>
    %20 = arith.addf %17, %19 : vector<1024x2xf32>
    %cst_11 = arith.constant 0.000000e+00 : f32
    %21 = vector.broadcast %cst_11 : f32 to vector<1024x2xf32>
    %22 = arith.maximumf %20, %21 : vector<1024x2xf32>
    %23 = vector.extract_strided_slice %22 {offsets = [0, 0], sizes = [256, 2], strides = [1, 1]} : vector<1024x2xf32> to vector<256x2xf32>
    %24 = vector.extract_strided_slice %22 {offsets = [256, 0], sizes = [256, 2], strides = [1, 1]} : vector<1024x2xf32> to vector<256x2xf32>
    %25 = arith.maximumf %23, %24 : vector<256x2xf32>
    %26 = vector.extract_strided_slice %22 {offsets = [512, 0], sizes = [256, 2], strides = [1, 1]} : vector<1024x2xf32> to vector<256x2xf32>
    %27 = vector.extract_strided_slice %22 {offsets = [768, 0], sizes = [256, 2], strides = [1, 1]} : vector<1024x2xf32> to vector<256x2xf32>
    %28 = arith.maximumf %26, %27 : vector<256x2xf32>
    %29 = arith.maximumf %25, %28 : vector<256x2xf32>
    %30 = arith.truncf %29 : vector<256x2xf32> to vector<256x2xbf16>
    %c0_12 = arith.constant 0 : index
    %c0_13 = arith.constant 0 : index
    %31 = vector.load %arg6[%c0_12, %c0_13] : memref<64x256xbf16, #tpu.memory_space<vmem>>, vector<64x256xbf16>
    %cst_14 = arith.constant dense<0.000000e+00> : vector<64x2xf32>
    %32 = tpu.matmul %31, %30, %cst_14 {dimension_numbers = #tpu.dot_dimension_numbers<[1], [0], [0], [1], [0, 0, 1, 1], [], []>} : vector<64x256xbf16>, vector<256x2xbf16>, vector<64x2xf32> -> vector<64x2xf32>
    %c0_15 = arith.constant 0 : index
    %c0_16 = arith.constant 0 : index
    %33 = vector.load %arg7[%c0_15, %c0_16] : memref<64x1xf32, #tpu.memory_space<vmem>>, vector<64x1xf32>
    %34 = vector.broadcast %33 : vector<64x1xf32> to vector<64x2xf32>
    %35 = arith.addf %32, %34 : vector<64x2xf32>
    %cst_17 = arith.constant 0.000000e+00 : f32
    %36 = vector.broadcast %cst_17 : f32 to vector<64x2xf32>
    %37 = arith.maximumf %35, %36 : vector<64x2xf32>
    %38 = arith.truncf %37 : vector<64x2xf32> to vector<64x2xbf16>
    %c0_18 = arith.constant 0 : index
    %c0_19 = arith.constant 0 : index
    %39 = vector.load %arg8[%c0_18, %c0_19] : memref<2x64xbf16, #tpu.memory_space<vmem>>, vector<2x64xbf16>
    %cst_20 = arith.constant dense<0.000000e+00> : vector<2x2xf32>
    %40 = tpu.matmul %39, %38, %cst_20 {dimension_numbers = #tpu.dot_dimension_numbers<[1], [0], [0], [1], [0, 0, 1, 1], [], []>} : vector<2x64xbf16>, vector<64x2xbf16>, vector<2x2xf32> -> vector<2x2xf32>
    %c0_21 = arith.constant 0 : index
    %c0_22 = arith.constant 0 : index
    %41 = vector.load %arg9[%c0_21, %c0_22] : memref<2x1xf32, #tpu.memory_space<vmem>>, vector<2x1xf32>
    %42 = vector.broadcast %41 : vector<2x1xf32> to vector<2x2xf32>
    %43 = arith.addf %40, %42 : vector<2x2xf32>
    %44 = vector.extract_strided_slice %43 {offsets = [0, 0], sizes = [1, 2], strides = [1, 1]} : vector<2x2xf32> to vector<1x2xf32>
    %45 = vector.extract_strided_slice %43 {offsets = [1, 0], sizes = [1, 2], strides = [1, 1]} : vector<2x2xf32> to vector<1x2xf32>
    %cst_23 = arith.constant 3.14159274 : f32
    %46 = vector.broadcast %cst_23 : f32 to vector<1x2xf32>
    %47 = arith.subf %46, %44 : vector<1x2xf32>
    %cst_24 = arith.constant 3.14159274 : f32
    %48 = vector.broadcast %cst_24 : f32 to vector<1x2xf32>
    %49 = arith.subf %48, %45 : vector<1x2xf32>
    %50 = arith.mulf %47, %49 : vector<1x2xf32>
    %cst_25 = arith.constant 2.000000e+00 : f32
    %51 = vector.broadcast %cst_25 : f32 to vector<1x2xf32>
    %52 = arith.mulf %51, %44 : vector<1x2xf32>
    %cst_26 = arith.constant 2.000000e+00 : f32
    %53 = vector.broadcast %cst_26 : f32 to vector<1x2xf32>
    %54 = arith.mulf %53, %45 : vector<1x2xf32>
    %cst_27 = arith.constant 2.000000e+00 : f32
    %55 = vector.broadcast %cst_27 : f32 to vector<1x2xf32>
    %56 = arith.mulf %55, %50 : vector<1x2xf32>
    %57 = tpu.concatenate %52, %54, %56 in 0 : vector<1x2xf32>, vector<1x2xf32>, vector<1x2xf32> -> vector<3x2xf32>
    %cst_28 = arith.constant 0.318309873 : f32
    %58 = vector.broadcast %cst_28 : f32 to vector<3x2xf32>
    %59 = arith.mulf %57, %58 : vector<3x2xf32>
    %cst_29 = arith.constant 5.000000e-01 : f32
    %60 = vector.broadcast %cst_29 : f32 to vector<3x2xf32>
    %61 = arith.addf %59, %60 : vector<3x2xf32>
    %62 = math.floor %61 : vector<3x2xf32>
    %cst_30 = arith.constant 3.140625 : f32
    %63 = vector.broadcast %cst_30 : f32 to vector<3x2xf32>
    %64 = arith.mulf %62, %63 : vector<3x2xf32>
    %65 = arith.subf %57, %64 : vector<3x2xf32>
    %cst_31 = arith.constant 9.67653584E-4 : f32
    %66 = vector.broadcast %cst_31 : f32 to vector<3x2xf32>
    %67 = arith.mulf %62, %66 : vector<3x2xf32>
    %68 = arith.subf %65, %67 : vector<3x2xf32>
    %cst_32 = arith.constant 5.000000e-01 : f32
    %69 = vector.broadcast %cst_32 : f32 to vector<3x2xf32>
    %70 = arith.mulf %69, %62 : vector<3x2xf32>
    %71 = math.floor %70 : vector<3x2xf32>
    %cst_33 = arith.constant 2.000000e+00 : f32
    %72 = vector.broadcast %cst_33 : f32 to vector<3x2xf32>
    %73 = arith.mulf %72, %71 : vector<3x2xf32>
    %74 = arith.subf %62, %73 : vector<3x2xf32>
    %cst_34 = arith.constant 2.000000e+00 : f32
    %75 = vector.broadcast %cst_34 : f32 to vector<3x2xf32>
    %76 = arith.mulf %75, %74 : vector<3x2xf32>
    %cst_35 = arith.constant 1.000000e+00 : f32
    %77 = vector.broadcast %cst_35 : f32 to vector<3x2xf32>
    %78 = arith.subf %77, %76 : vector<3x2xf32>
    %79 = arith.mulf %68, %68 : vector<3x2xf32>
    %cst_36 = arith.constant 2.50521079E-8 : f32
    %80 = vector.broadcast %cst_36 : f32 to vector<3x2xf32>
    %81 = arith.mulf %79, %80 : vector<3x2xf32>
    %cst_37 = arith.constant 2.75573188E-6 : f32
    %82 = vector.broadcast %cst_37 : f32 to vector<3x2xf32>
    %83 = arith.subf %82, %81 : vector<3x2xf32>
    %84 = arith.mulf %79, %83 : vector<3x2xf32>
    %cst_38 = arith.constant -1.98412701E-4 : f32
    %85 = vector.broadcast %cst_38 : f32 to vector<3x2xf32>
    %86 = arith.addf %85, %84 : vector<3x2xf32>
    %87 = arith.mulf %79, %86 : vector<3x2xf32>
    %cst_39 = arith.constant 0.00833333377 : f32
    %88 = vector.broadcast %cst_39 : f32 to vector<3x2xf32>
    %89 = arith.addf %88, %87 : vector<3x2xf32>
    %90 = arith.mulf %79, %89 : vector<3x2xf32>
    %cst_40 = arith.constant -0.166666672 : f32
    %91 = vector.broadcast %cst_40 : f32 to vector<3x2xf32>
    %92 = arith.addf %91, %90 : vector<3x2xf32>
    %93 = arith.mulf %79, %92 : vector<3x2xf32>
    %cst_41 = arith.constant 1.000000e+00 : f32
    %94 = vector.broadcast %cst_41 : f32 to vector<3x2xf32>
    %95 = arith.addf %94, %93 : vector<3x2xf32>
    %96 = arith.mulf %68, %95 : vector<3x2xf32>
    %cst_42 = arith.constant 2.755732E-7 : f32
    %97 = vector.broadcast %cst_42 : f32 to vector<3x2xf32>
    %98 = arith.mulf %79, %97 : vector<3x2xf32>
    %cst_43 = arith.constant 2.48015876E-5 : f32
    %99 = vector.broadcast %cst_43 : f32 to vector<3x2xf32>
    %100 = arith.subf %99, %98 : vector<3x2xf32>
    %101 = arith.mulf %79, %100 : vector<3x2xf32>
    %cst_44 = arith.constant -0.00138888892 : f32
    %102 = vector.broadcast %cst_44 : f32 to vector<3x2xf32>
    %103 = arith.addf %102, %101 : vector<3x2xf32>
    %104 = arith.mulf %79, %103 : vector<3x2xf32>
    %cst_45 = arith.constant 0.0416666679 : f32
    %105 = vector.broadcast %cst_45 : f32 to vector<3x2xf32>
    %106 = arith.addf %105, %104 : vector<3x2xf32>
    %107 = arith.mulf %79, %106 : vector<3x2xf32>
    %cst_46 = arith.constant -5.000000e-01 : f32
    %108 = vector.broadcast %cst_46 : f32 to vector<3x2xf32>
    %109 = arith.addf %108, %107 : vector<3x2xf32>
    %110 = arith.mulf %79, %109 : vector<3x2xf32>
    %cst_47 = arith.constant 1.000000e+00 : f32
    %111 = vector.broadcast %cst_47 : f32 to vector<3x2xf32>
    %112 = arith.addf %111, %110 : vector<3x2xf32>
    %113 = arith.mulf %78, %96 : vector<3x2xf32>
    %114 = arith.mulf %78, %112 : vector<3x2xf32>
    %115 = vector.extract_strided_slice %113 {offsets = [0, 0], sizes = [1, 2], strides = [1, 1]} : vector<3x2xf32> to vector<1x2xf32>
    %116 = vector.extract_strided_slice %113 {offsets = [1, 0], sizes = [1, 2], strides = [1, 1]} : vector<3x2xf32> to vector<1x2xf32>
    %117 = vector.extract_strided_slice %113 {offsets = [2, 0], sizes = [1, 2], strides = [1, 1]} : vector<3x2xf32> to vector<1x2xf32>
    %118 = vector.extract_strided_slice %114 {offsets = [0, 0], sizes = [1, 2], strides = [1, 1]} : vector<3x2xf32> to vector<1x2xf32>
    %119 = vector.extract_strided_slice %114 {offsets = [1, 0], sizes = [1, 2], strides = [1, 1]} : vector<3x2xf32> to vector<1x2xf32>
    %120 = vector.extract_strided_slice %114 {offsets = [2, 0], sizes = [1, 2], strides = [1, 1]} : vector<3x2xf32> to vector<1x2xf32>
    %c0_48 = arith.constant 0 : index
    %c0_49 = arith.constant 0 : index
    %121 = vector.load %arg10[%c0_48, %c0_49] : memref<1x8xf32, #tpu.memory_space<vmem>>, vector<1x8xf32>
    %122 = vector.extract_strided_slice %121 {offsets = [0, 0], sizes = [1, 1], strides = [1, 1]} : vector<1x8xf32> to vector<1x1xf32>
    %123 = vector.broadcast %122 : vector<1x1xf32> to vector<1x2xf32>
    %124 = arith.mulf %123, %118 : vector<1x2xf32>
    %125 = arith.mulf %124, %119 : vector<1x2xf32>
    %126 = vector.extract_strided_slice %121 {offsets = [0, 1], sizes = [1, 1], strides = [1, 1]} : vector<1x8xf32> to vector<1x1xf32>
    %127 = vector.broadcast %126 : vector<1x1xf32> to vector<1x2xf32>
    %128 = arith.mulf %127, %115 : vector<1x2xf32>
    %129 = arith.mulf %128, %116 : vector<1x2xf32>
    %130 = arith.addf %125, %129 : vector<1x2xf32>
    %131 = vector.extract_strided_slice %121 {offsets = [0, 2], sizes = [1, 1], strides = [1, 1]} : vector<1x8xf32> to vector<1x1xf32>
    %132 = vector.broadcast %131 : vector<1x1xf32> to vector<1x2xf32>
    %133 = arith.mulf %132, %118 : vector<1x2xf32>
    %134 = arith.mulf %133, %120 : vector<1x2xf32>
    %135 = arith.addf %130, %134 : vector<1x2xf32>
    %136 = vector.extract_strided_slice %121 {offsets = [0, 3], sizes = [1, 1], strides = [1, 1]} : vector<1x8xf32> to vector<1x1xf32>
    %137 = vector.broadcast %136 : vector<1x1xf32> to vector<1x2xf32>
    %138 = arith.mulf %137, %115 : vector<1x2xf32>
    %139 = arith.mulf %138, %117 : vector<1x2xf32>
    %140 = arith.addf %135, %139 : vector<1x2xf32>
    %141 = vector.extract_strided_slice %121 {offsets = [0, 4], sizes = [1, 1], strides = [1, 1]} : vector<1x8xf32> to vector<1x1xf32>
    %142 = vector.broadcast %141 : vector<1x1xf32> to vector<1x2xf32>
    %143 = arith.mulf %142, %119 : vector<1x2xf32>
    %144 = arith.mulf %143, %120 : vector<1x2xf32>
    %145 = arith.addf %140, %144 : vector<1x2xf32>
    %146 = vector.extract_strided_slice %121 {offsets = [0, 5], sizes = [1, 1], strides = [1, 1]} : vector<1x8xf32> to vector<1x1xf32>
    %147 = vector.broadcast %146 : vector<1x1xf32> to vector<1x2xf32>
    %148 = arith.mulf %147, %116 : vector<1x2xf32>
    %149 = arith.mulf %148, %117 : vector<1x2xf32>
    %150 = arith.addf %145, %149 : vector<1x2xf32>
    %151 = vector.extract_strided_slice %121 {offsets = [0, 6], sizes = [1, 1], strides = [1, 1]} : vector<1x8xf32> to vector<1x1xf32>
    %152 = vector.broadcast %151 : vector<1x1xf32> to vector<1x2xf32>
    %153 = arith.mulf %152, %150 : vector<1x2xf32>
    %154 = vector.extract_strided_slice %121 {offsets = [0, 7], sizes = [1, 1], strides = [1, 1]} : vector<1x8xf32> to vector<1x1xf32>
    %155 = vector.broadcast %154 : vector<1x1xf32> to vector<1x2xf32>
    %156 = arith.addf %153, %155 : vector<1x2xf32>
    %cst_50 = arith.constant 2.000000e+00 : f32
    %157 = vector.broadcast %cst_50 : f32 to vector<1x2xf32>
    %158 = arith.mulf %157, %156 : vector<1x2xf32>
    %cst_51 = arith.constant 1.000000e+00 : f32
    %159 = vector.broadcast %cst_51 : f32 to vector<1x2xf32>
    %160 = arith.subf %159, %158 : vector<1x2xf32>
    %cst_52 = arith.constant 0.000000e+00 : f32
    %161 = vector.broadcast %cst_52 : f32 to vector<1x2xf32>
    %162 = arith.maximumf %160, %161 : vector<1x2xf32>
    %163 = math.absf %160 : vector<1x2xf32>
    %cst_53 = arith.constant 0.000000e+00 : f32
    %164 = vector.broadcast %cst_53 : f32 to vector<1x2xf32>
    %165 = arith.subf %164, %163 : vector<1x2xf32>
    %166 = math.exp %165 : vector<1x2xf32>
    %cst_54 = arith.constant 1.000000e+00 : f32
    %167 = vector.broadcast %cst_54 : f32 to vector<1x2xf32>
    %168 = arith.addf %167, %166 : vector<1x2xf32>
    %169 = math.log %168 : vector<1x2xf32>
    %170 = arith.addf %162, %169 : vector<1x2xf32>
    %cst_55 = arith.constant 0.000000e+00 : f32
    %171 = vector.broadcast %cst_55 : f32 to vector<1x2xf32>
    %172 = arith.subf %171, %170 : vector<1x2xf32>
    %173 = arith.subf %160, %170 : vector<1x2xf32>
    %174 = tpu.concatenate %172, %173 in 0 : vector<1x2xf32>, vector<1x2xf32> -> vector<2x2xf32>
    %c0_56 = arith.constant 0 : index
    %c0_57 = arith.constant 0 : index
    %175 = vector.load %arg11[%c0_56, %c0_57] : memref<2x2xf32, #tpu.memory_space<vmem>>, vector<2x2xf32>
    tpu.vector_store %arg11[%c0_56, %c0_57], %174 {strides = array<i32>} : memref<2x2xf32, #tpu.memory_space<vmem>>, vector<2x2xf32>,
    return
  }
  func.func @transform_0(%arg0: i32) -> (i32, i32) {
    %c0_i32 = arith.constant 0 : i32
    %c0_i32_0 = arith.constant 0 : i32
    return %c0_i32, %arg0 : i32, i32
  }
  func.func @transform_1(%arg0: i32) -> (i32, i32) {
    %c0_i32 = arith.constant 0 : i32
    %c0_i32_0 = arith.constant 0 : i32
    %c0_i32_1 = arith.constant 0 : i32
    return %c0_i32, %c0_i32_0 : i32, i32
  }
  func.func @transform_2(%arg0: i32) -> (i32, i32) {
    %c0_i32 = arith.constant 0 : i32
    %c0_i32_0 = arith.constant 0 : i32
    %c0_i32_1 = arith.constant 0 : i32
    return %c0_i32, %c0_i32_0 : i32, i32
  }
  func.func @transform_3(%arg0: i32) -> (i32, i32) {
    %c0_i32 = arith.constant 0 : i32
    %c0_i32_0 = arith.constant 0 : i32
    %c0_i32_1 = arith.constant 0 : i32
    return %c0_i32, %c0_i32_0 : i32, i32
  }
  func.func @transform_4(%arg0: i32) -> (i32, i32) {
    %c0_i32 = arith.constant 0 : i32
    %c0_i32_0 = arith.constant 0 : i32
    %c0_i32_1 = arith.constant 0 : i32
    return %c0_i32, %c0_i32_0 : i32, i32
  }
  func.func @transform_5(%arg0: i32) -> (i32, i32) {
    %c0_i32 = arith.constant 0 : i32
    %c0_i32_0 = arith.constant 0 : i32
    %c0_i32_1 = arith.constant 0 : i32
    return %c0_i32, %c0_i32_0 : i32, i32
  }
  func.func @transform_6(%arg0: i32) -> (i32, i32) {
    %c0_i32 = arith.constant 0 : i32
    %c0_i32_0 = arith.constant 0 : i32
    %c0_i32_1 = arith.constant 0 : i32
    return %c0_i32, %c0_i32_0 : i32, i32
  }
  func.func @transform_7(%arg0: i32) -> (i32, i32) {
    %c0_i32 = arith.constant 0 : i32
    %c0_i32_0 = arith.constant 0 : i32
    %c0_i32_1 = arith.constant 0 : i32
    return %c0_i32, %c0_i32_0 : i32, i32
  }
  func.func @transform_8(%arg0: i32) -> (i32, i32) {
    %c0_i32 = arith.constant 0 : i32
    %c0_i32_0 = arith.constant 0 : i32
    %c0_i32_1 = arith.constant 0 : i32
    return %c0_i32, %c0_i32_0 : i32, i32
  }
  func.func @transform_9(%arg0: i32) -> (i32, i32) {
    %c0_i32 = arith.constant 0 : i32
    %c0_i32_0 = arith.constant 0 : i32
    %c0_i32_1 = arith.constant 0 : i32
    return %c0_i32, %c0_i32_0 : i32, i32
  }
  func.func @transform_10(%arg0: i32) -> (i32, i32) {
    %c0_i32 = arith.constant 0 : i32
    %c0_i32_0 = arith.constant 0 : i32
    return %c0_i32, %arg0 : i32, i32
  }
}

</mosaic_0001>

<llo_original>
// kernel: _lambda_.1
$region0: #{_lambda_.1}
  #allocation0 [shape = 'u32[]', space=smem, size = 0x4, offset = 0x4, fixed_abs, tag = 'smem constant byte address 0x4 - core index']
  #allocation1 [shape = 'u32[144,128]{1,0:T(1,128)}', space=vmem, size = 0x12000, scoped, tag = 'internal scratch']
  %s0 = inlined_call_operand.vmem [shape: bf16[784,2], index: 0, kind: input, shape index: {}]
  %s1 = inlined_call_operand.vmem [shape: bf16[1152,784], index: 1, kind: input, shape index: {}]
  %s2 = inlined_call_operand.vmem [shape: f32[1152,1], index: 2, kind: input, shape index: {}]
  %s3 = inlined_call_operand.vmem [shape: bf16[1024,288], index: 3, kind: input, shape index: {}]
  %s4 = inlined_call_operand.vmem [shape: f32[1024,1], index: 4, kind: input, shape index: {}]
  %s5 = inlined_call_operand.vmem [shape: bf16[64,256], index: 5, kind: input, shape index: {}]
  %s6 = inlined_call_operand.vmem [shape: f32[64,1], index: 6, kind: input, shape index: {}]
  %s7 = inlined_call_operand.vmem [shape: bf16[2,64], index: 7, kind: input, shape index: {}]
  %s8 = inlined_call_operand.vmem [shape: f32[2,1], index: 8, kind: input, shape index: {}]
  %s9 = inlined_call_operand.vmem [shape: f32[1,8], index: 9, kind: input, shape index: {}]
  %s10 = inlined_call_operand.vmem [shape: f32[2,2], index: 10, kind: output, shape index: {}]
  %s11 = sld [smem:[#allocation0]]
  $region50: #{_lambda_.1} parent=0
    _
  %s13 = ssub.s32 1, %s11
  %s14 = scalar_select 0, %s13, %s11
  // Predicated region
  $region2: #{_lambda_.1} parent=0 // pred_check
    _
  $region3: #{_lambda_.1} parent=0 // pred_check_branch
    %16 = sbr.rel (0) target = $region5
  $region4: #{_lambda_.1} parent=0 // pred_region
    _
  $region5: #{_lambda_.1} parent=0 // pred_fallthru
    _
  // Predicated region
  $region6: #{_lambda_.1} parent=0 // pred_check
    _
  $region7: #{_lambda_.1} parent=0 // pred_check_branch
    %18 = sbr.rel (0) target = $region9
  $region8: #{_lambda_.1} parent=0 // pred_region
    _
  $region9: #{_lambda_.1} parent=0 // pred_fallthru
    _
  // Predicated region
  $region10: #{_lambda_.1} parent=0 // pred_check
    _
  $region11: #{_lambda_.1} parent=0 // pred_check_branch
    %20 = sbr.rel (0) target = $region13
  $region12: #{_lambda_.1} parent=0 // pred_region
    _
  $region13: #{_lambda_.1} parent=0 // pred_fallthru
    _
  // Predicated region
  $region14: #{_lambda_.1} parent=0 // pred_check
    _
  $region15: #{_lambda_.1} parent=0 // pred_check_branch
    %22 = sbr.rel (0) target = $region17
  $region16: #{_lambda_.1} parent=0 // pred_region
    _
  $region17: #{_lambda_.1} parent=0 // pred_fallthru
    _
  // Predicated region
  $region18: #{_lambda_.1} parent=0 // pred_check
    _
  $region19: #{_lambda_.1} parent=0 // pred_check_branch
    %24 = sbr.rel (0) target = $region21
  $region20: #{_lambda_.1} parent=0 // pred_region
    _
  $region21: #{_lambda_.1} parent=0 // pred_fallthru
    _
  // Predicated region
  $region22: #{_lambda_.1} parent=0 // pred_check
    _
  $region23: #{_lambda_.1} parent=0 // pred_check_branch
    %26 = sbr.rel (0) target = $region25
  $region24: #{_lambda_.1} parent=0 // pred_region
    _
  $region25: #{_lambda_.1} parent=0 // pred_fallthru
    _
  // Predicated region
  $region26: #{_lambda_.1} parent=0 // pred_check
    _
  $region27: #{_lambda_.1} parent=0 // pred_check_branch
    %28 = sbr.rel (0) target = $region29
  $region28: #{_lambda_.1} parent=0 // pred_region
    _
  $region29: #{_lambda_.1} parent=0 // pred_fallthru
    _
  // Predicated region
  $region30: #{_lambda_.1} parent=0 // pred_check
    _
  $region31: #{_lambda_.1} parent=0 // pred_check_branch
    %30 = sbr.rel (0) target = $region33
  $region32: #{_lambda_.1} parent=0 // pred_region
    _
  $region33: #{_lambda_.1} parent=0 // pred_fallthru
    _
  // Predicated region
  $region34: #{_lambda_.1} parent=0 // pred_check
    _
  $region35: #{_lambda_.1} parent=0 // pred_check_branch
    %32 = sbr.rel (0) target = $region37
  $region36: #{_lambda_.1} parent=0 // pred_region
    _
  $region37: #{_lambda_.1} parent=0 // pred_fallthru
    _
  // Predicated region
  $region38: #{_lambda_.1} parent=0 // pred_check
    _
  $region39: #{_lambda_.1} parent=0 // pred_check_branch
    %34 = sbr.rel (0) target = $region41
  $region40: #{_lambda_.1} parent=0 // pred_region
    _
  $region41: #{_lambda_.1} parent=0 // pred_fallthru
    _
  %v36 = vld [vmem:[%s0] sm:$0xf]
  %v37 = vld [vmem:[%s0 + $0x4] sm:$0xf]
  %v38 = vld [vmem:[%s0 + $0x8] sm:$0xf]
  %v39 = vld [vmem:[%s0 + $0xc] sm:$0xf]
  %v40 = vld [vmem:[%s0 + $0x10] sm:$0xf]
  %v41 = vld [vmem:[%s0 + $0x14] sm:$0xf]
  %v42 = vld [vmem:[%s0 + $0x18] sm:$0xf]
  %v43 = vld [vmem:[%s0 + $0x1c] sm:$0xf]
  %v44 = vld [vmem:[%s0 + $0x20] sm:$0xf]
  %v45 = vld [vmem:[%s0 + $0x24] sm:$0xf]
  %v46 = vld [vmem:[%s0 + $0x28] sm:$0xf]
  %v47 = vld [vmem:[%s0 + $0x2c] sm:$0xf]
  %v48 = vld [vmem:[%s0 + $0x30] sm:$0xf]
  %v49 = vld [vmem:[%s0 + $0x34] sm:$0xf]
  %v50 = vld [vmem:[%s0 + $0x38] sm:$0xf]
  %v51 = vld [vmem:[%s0 + $0x3c] sm:$0xf]
  %v52 = vld [vmem:[%s0 + $0x40] sm:$0xf]
  %v53 = vld [vmem:[%s0 + $0x44] sm:$0xf]
  %v54 = vld [vmem:[%s0 + $0x48] sm:$0xf]
  %v55 = vld [vmem:[%s0 + $0x4c] sm:$0xf]
  %v56 = vld [vmem:[%s0 + $0x50] sm:$0xf]
  %v57 = vld [vmem:[%s0 + $0x54] sm:$0xf]
  %v58 = vld [vmem:[%s0 + $0x58] sm:$0xf]
  %v59 = vld [vmem:[%s0 + $0x5c] sm:$0xf]
  %v60 = vld [vmem:[%s0 + $0x60] sm:$0xf]
  %v61 = vld [vmem:[%s0 + $0x64] sm:$0xf]
  %v62 = vld [vmem:[%s0 + $0x68] sm:$0xf]
  %v63 = vld [vmem:[%s0 + $0x6c] sm:$0xf]
  %v64 = vld [vmem:[%s0 + $0x70] sm:$0xf]
  %v65 = vld [vmem:[%s0 + $0x74] sm:$0xf]
  %v66 = vld [vmem:[%s0 + $0x78] sm:$0xf]
  %v67 = vld [vmem:[%s0 + $0x7c] sm:$0xf]
  %v68 = vld [vmem:[%s0 + $0x80] sm:$0xf]
  %v69 = vld [vmem:[%s0 + $0x84] sm:$0xf]
  %v70 = vld [vmem:[%s0 + $0x88] sm:$0xf]
  %v71 = vld [vmem:[%s0 + $0x8c] sm:$0xf]
  %v72 = vld [vmem:[%s0 + $0x90] sm:$0xf]
  %v73 = vld [vmem:[%s0 + $0x94] sm:$0xf]
  %v74 = vld [vmem:[%s0 + $0x98] sm:$0xf]
  %v75 = vld [vmem:[%s0 + $0x9c] sm:$0xf]
  %v76 = vld [vmem:[%s0 + $0xa0] sm:$0xf]
  %v77 = vld [vmem:[%s0 + $0xa4] sm:$0xf]
  %v78 = vld [vmem:[%s0 + $0xa8] sm:$0xf]
  %v79 = vld [vmem:[%s0 + $0xac] sm:$0xf]
  %v80 = vld [vmem:[%s0 + $0xb0] sm:$0xf]
  %v81 = vld [vmem:[%s0 + $0xb4] sm:$0xf]
  %v82 = vld [vmem:[%s0 + $0xb8] sm:$0xf]
  %v83 = vld [vmem:[%s0 + $0xbc] sm:$0xf]
  %v84 = vld [vmem:[%s0 + $0xc0] sm:$0xf]
  %v85 = vld [vmem:[%s0 + $0xc4] sm:$0xf]
  %v86 = vld [vmem:[%s0 + $0xc8] sm:$0xf]
  %v87 = vld [vmem:[%s0 + $0xcc] sm:$0xf]
  %v88 = vld [vmem:[%s0 + $0xd0] sm:$0xf]
  %v89 = vld [vmem:[%s0 + $0xd4] sm:$0xf]
  %v90 = vld [vmem:[%s0 + $0xd8] sm:$0xf]
  %v91 = vld [vmem:[%s0 + $0xdc] sm:$0xf]
  %v92 = vld [vmem:[%s0 + $0xe0] sm:$0xf]
  %v93 = vld [vmem:[%s0 + $0xe4] sm:$0xf]
  %v94 = vld [vmem:[%s0 + $0xe8] sm:$0xf]
  %v95 = vld [vmem:[%s0 + $0xec] sm:$0xf]
  %v96 = vld [vmem:[%s0 + $0xf0] sm:$0xf]
  %v97 = vld [vmem:[%s0 + $0xf4] sm:$0xf]
  %v98 = vld [vmem:[%s0 + $0xf8] sm:$0xf]
  %v99 = vld [vmem:[%s0 + $0xfc] sm:$0xf]
  %v100 = vld [vmem:[%s0 + $0x100] sm:$0xf]
  %v101 = vld [vmem:[%s0 + $0x104] sm:$0xf]
  %v102 = vld [vmem:[%s0 + $0x108] sm:$0xf]
  %v103 = vld [vmem:[%s0 + $0x10c] sm:$0xf]
  %v104 = vld [vmem:[%s0 + $0x110] sm:$0xf]
  %v105 = vld [vmem:[%s0 + $0x114] sm:$0xf]
  %v106 = vld [vmem:[%s0 + $0x118] sm:$0xf]
  %v107 = vld [vmem:[%s0 + $0x11c] sm:$0xf]
  %v108 = vld [vmem:[%s0 + $0x120] sm:$0xf]
  %v109 = vld [vmem:[%s0 + $0x124] sm:$0xf]
  %v110 = vld [vmem:[%s0 + $0x128] sm:$0xf]
  %v111 = vld [vmem:[%s0 + $0x12c] sm:$0xf]
  %v112 = vld [vmem:[%s0 + $0x130] sm:$0xf]
  %v113 = vld [vmem:[%s0 + $0x134] sm:$0xf]
  %v114 = vld [vmem:[%s0 + $0x138] sm:$0xf]
  %v115 = vld [vmem:[%s0 + $0x13c] sm:$0xf]
  %v116 = vld [vmem:[%s0 + $0x140] sm:$0xf]
  %v117 = vld [vmem:[%s0 + $0x144] sm:$0xf]
  %v118 = vld [vmem:[%s0 + $0x148] sm:$0xf]
  %v119 = vld [vmem:[%s0 + $0x14c] sm:$0xf]
  %v120 = vld [vmem:[%s0 + $0x150] sm:$0xf]
  %v121 = vld [vmem:[%s0 + $0x154] sm:$0xf]
  %v122 = vld [vmem:[%s0 + $0x158] sm:$0xf]
  %v123 = vld [vmem:[%s0 + $0x15c] sm:$0xf]
  %v124 = vld [vmem:[%s0 + $0x160] sm:$0xf]
  %v125 = vld [vmem:[%s0 + $0x164] sm:$0xf]
  %v126 = vld [vmem:[%s0 + $0x168] sm:$0xf]
  %v127 = vld [vmem:[%s0 + $0x16c] sm:$0xf]
  %v128 = vld [vmem:[%s0 + $0x170] sm:$0xf]
  %v129 = vld [vmem:[%s0 + $0x174] sm:$0xf]
  %v130 = vld [vmem:[%s0 + $0x178] sm:$0xf]
  %v131 = vld [vmem:[%s0 + $0x17c] sm:$0xf]
  %v132 = vld [vmem:[%s0 + $0x180] sm:$0xf]
  %v133 = vld [vmem:[%s0 + $0x184] sm:$0xf]
  %v134 = vld [vmem:[%s1] sm:$0xff]
  %v135 = vld [vmem:[%s1 + $0x8] sm:$0xff]
  %v136 = vld [vmem:[%s1 + $0x10] sm:$0xff]
  %v137 = vld [vmem:[%s1 + $0x18] sm:$0xf]
  %v138 = vld [vmem:[%s1 + $0x1c] sm:$0xff]
  %v139 = vld [vmem:[%s1 + $0x24] sm:$0xff]
  %v140 = vld [vmem:[%s1 + $0x2c] sm:$0xff]
  %v141 = vld [vmem:[%s1 + $0x34] sm:$0xf]
  %v142 = vld [vmem:[%s1 + $0x38] sm:$0xff]
  %v143 = vld [vmem:[%s1 + $0x40] sm:$0xff]
  %v144 = vld [vmem:[%s1 + $0x48] sm:$0xff]
  %v145 = vld [vmem:[%s1 + $0x50] sm:$0xf]
  %v146 = vld [vmem:[%s1 + $0x54] sm:$0xff]
  %v147 = vld [vmem:[%s1 + $0x5c] sm:$0xff]
  %v148 = vld [vmem:[%s1 + $0x64] sm:$0xff]
  %v149 = vld [vmem:[%s1 + $0x6c] sm:$0xf]
  %v150 = vld [vmem:[%s1 + $0x70] sm:$0xff]
  %v151 = vld [vmem:[%s1 + $0x78] sm:$0xff]
  %v152 = vld [vmem:[%s1 + $0x80] sm:$0xff]
  %v153 = vld [vmem:[%s1 + $0x88] sm:$0xf]
  %v154 = vld [vmem:[%s1 + $0x8c] sm:$0xff]
  %v155 = vld [vmem:[%s1 + $0x94] sm:$0xff]
  %v156 = vld [vmem:[%s1 + $0x9c] sm:$0xff]
  %v157 = vld [vmem:[%s1 + $0xa4] sm:$0xf]
  %v158 = vld [vmem:[%s1 + $0xa8] sm:$0xff]
  %v159 = vld [vmem:[%s1 + $0xb0] sm:$0xff]
  %v160 = vld [vmem:[%s1 + $0xb8] sm:$0xff]
  %v161 = vld [vmem:[%s1 + $0xc0] sm:$0xf]
  %v162 = vld [vmem:[%s1 + $0xc4] sm:$0xff]
  %v163 = vld [vmem:[%s1 + $0xcc] sm:$0xff]
  %v164 = vld [vmem:[%s1 + $0xd4] sm:$0xff]
  %v165 = vld [vmem:[%s1 + $0xdc] sm:$0xf]
  %v166 = vld [vmem:[%s1 + $0xe0] sm:$0xff]
  %v167 = vld [vmem:[%s1 + $0xe8] sm:$0xff]
  %v168 = vld [vmem:[%s1 + $0xf0] sm:$0xff]
  %v169 = vld [vmem:[%s1 + $0xf8] sm:$0xf]
  %v170 = vld [vmem:[%s1 + $0xfc] sm:$0xff]
  %v171 = vld [vmem:[%s1 + $0x104] sm:$0xff]
  %v172 = vld [vmem:[%s1 + $0x10c] sm:$0xff]
  %v173 = vld [vmem:[%s1 + $0x114] sm:$0xf]
  %v174 = vld [vmem:[%s1 + $0x118] sm:$0xff]
  %v175 = vld [vmem:[%s1 + $0x120] sm:$0xff]
  %v176 = vld [vmem:[%s1 + $0x128] sm:$0xff]
  %v177 = vld [vmem:[%s1 + $0x130] sm:$0xf]
  %v178 = vld [vmem:[%s1 + $0x134] sm:$0xff]
  %v179 = vld [vmem:[%s1 + $0x13c] sm:$0xff]
  %v180 = vld [vmem:[%s1 + $0x144] sm:$0xff]
  %v181 = vld [vmem:[%s1 + $0x14c] sm:$0xf]
  %v182 = vld [vmem:[%s1 + $0x150] sm:$0xff]
  %v183 = vld [vmem:[%s1 + $0x158] sm:$0xff]
  %v184 = vld [vmem:[%s1 + $0x160] sm:$0xff]
  %v185 = vld [vmem:[%s1 + $0x168] sm:$0xf]
  %v186 = vld [vmem:[%s1 + $0x16c] sm:$0xff]
  %v187 = vld [vmem:[%s1 + $0x174] sm:$0xff]
  %v188 = vld [vmem:[%s1 + $0x17c] sm:$0xff]
  %v189 = vld [vmem:[%s1 + $0x184] sm:$0xf]
  %v190 = vld [vmem:[%s1 + $0x188] sm:$0xff]
  %v191 = vld [vmem:[%s1 + $0x190] sm:$0xff]
  %v192 = vld [vmem:[%s1 + $0x198] sm:$0xff]
  %v193 = vld [vmem:[%s1 + $0x1a0] sm:$0xf]
  %v194 = vld [vmem:[%s1 + $0x1a4] sm:$0xff]
  %v195 = vld [vmem:[%s1 + $0x1ac] sm:$0xff]
  %v196 = vld [vmem:[%s1 + $0x1b4] sm:$0xff]
  %v197 = vld [vmem:[%s1 + $0x1bc] sm:$0xf]
  %v198 = vld [vmem:[%s1 + $0x1c0] sm:$0xff]
  %v199 = vld [vmem:[%s1 + $0x1c8] sm:$0xff]
  %v200 = vld [vmem:[%s1 + $0x1d0] sm:$0xff]
  %v201 = vld [vmem:[%s1 + $0x1d8] sm:$0xf]
  %v202 = vld [vmem:[%s1 + $0x1dc] sm:$0xff]
  %v203 = vld [vmem:[%s1 + $0x1e4] sm:$0xff]
  %v204 = vld [vmem:[%s1 + $0x1ec] sm:$0xff]
  %v205 = vld [vmem:[%s1 + $0x1f4] sm:$0xf]
  %v206 = vld [vmem:[%s1 + $0x1f8] sm:$0xff]
  %v207 = vld [vmem:[%s1 + $0x200] sm:$0xff]
  %v208 = vld [vmem:[%s1 + $0x208] sm:$0xff]
  %v209 = vld [vmem:[%s1 + $0x210] sm:$0xf]
  %v210 = vld [vmem:[%s1 + $0x214] sm:$0xff]
  %v211 = vld [vmem:[%s1 + $0x21c] sm:$0xff]
  %v212 = vld [vmem:[%s1 + $0x224] sm:$0xff]
  %v213 = vld [vmem:[%s1 + $0x22c] sm:$0xf]
  %v214 = vld [vmem:[%s1 + $0x230] sm:$0xff]
  %v215 = vld [vmem:[%s1 + $0x238] sm:$0xff]
  %v216 = vld [vmem:[%s1 + $0x240] sm:$0xff]
  %v217 = vld [vmem:[%s1 + $0x248] sm:$0xf]
  %v218 = vld [vmem:[%s1 + $0x24c] sm:$0xff]
  %v219 = vld [vmem:[%s1 + $0x254] sm:$0xff]
  %v220 = vld [vmem:[%s1 + $0x25c] sm:$0xff]
  %v221 = vld [vmem:[%s1 + $0x264] sm:$0xf]
  %v222 = vld [vmem:[%s1 + $0x268] sm:$0xff]
  %v223 = vld [vmem:[%s1 + $0x270] sm:$0xff]
  %v224 = vld [vmem:[%s1 + $0x278] sm:$0xff]
  %v225 = vld [vmem:[%s1 + $0x280] sm:$0xf]
  %v226 = vld [vmem:[%s1 + $0x284] sm:$0xff]
  %v227 = vld [vmem:[%s1 + $0x28c] sm:$0xff]
  %v228 = vld [vmem:[%s1 + $0x294] sm:$0xff]
  %v229 = vld [vmem:[%s1 + $0x29c] sm:$0xf]
  %v230 = vld [vmem:[%s1 + $0x2a0] sm:$0xff]
  %v231 = vld [vmem:[%s1 + $0x2a8] sm:$0xff]
  %v232 = vld [vmem:[%s1 + $0x2b0] sm:$0xff]
  %v233 = vld [vmem:[%s1 + $0x2b8] sm:$0xf]
  %v234 = vld [vmem:[%s1 + $0x2bc] sm:$0xff]
  %v235 = vld [vmem:[%s1 + $0x2c4] sm:$0xff]
  %v236 = vld [vmem:[%s1 + $0x2cc] sm:$0xff]
  %v237 = vld [vmem:[%s1 + $0x2d4] sm:$0xf]
  %v238 = vld [vmem:[%s1 + $0x2d8] sm:$0xff]
  %v239 = vld [vmem:[%s1 + $0x2e0] sm:$0xff]
  %v240 = vld [vmem:[%s1 + $0x2e8] sm:$0xff]
  %v241 = vld [vmem:[%s1 + $0x2f0] sm:$0xf]
  %v242 = vld [vmem:[%s1 + $0x2f4] sm:$0xff]
  %v243 = vld [vmem:[%s1 + $0x2fc] sm:$0xff]
  %v244 = vld [vmem:[%s1 + $0x304] sm:$0xff]
  %v245 = vld [vmem:[%s1 + $0x30c] sm:$0xf]
  %v246 = vld [vmem:[%s1 + $0x310] sm:$0xff]
  %v247 = vld [vmem:[%s1 + $0x318] sm:$0xff]
  %v248 = vld [vmem:[%s1 + $0x320] sm:$0xff]
  %v249 = vld [vmem:[%s1 + $0x328] sm:$0xf]
  %v250 = vld [vmem:[%s1 + $0x32c] sm:$0xff]
  %v251 = vld [vmem:[%s1 + $0x334] sm:$0xff]
  %v252 = vld [vmem:[%s1 + $0x33c] sm:$0xff]
  %v253 = vld [vmem:[%s1 + $0x344] sm:$0xf]
  %v254 = vld [vmem:[%s1 + $0x348] sm:$0xff]
  %v255 = vld [vmem:[%s1 + $0x350] sm:$0xff]
  %v256 = vld [vmem:[%s1 + $0x358] sm:$0xff]
  %v257 = vld [vmem:[%s1 + $0x360] sm:$0xf]
  %v258 = vld [vmem:[%s1 + $0x364] sm:$0xff]
  %v259 = vld [vmem:[%s1 + $0x36c] sm:$0xff]
  %v260 = vld [vmem:[%s1 + $0x374] sm:$0xff]
  %v261 = vld [vmem:[%s1 + $0x37c] sm:$0xf]
  %v262 = vld [vmem:[%s1 + $0x380] sm:$0xff]
  %v263 = vld [vmem:[%s1 + $0x388] sm:$0xff]
  %v264 = vld [vmem:[%s1 + $0x390] sm:$0xff]
  %v265 = vld [vmem:[%s1 + $0x398] sm:$0xf]
  %v266 = vld [vmem:[%s1 + $0x39c] sm:$0xff]
  %v267 = vld [vmem:[%s1 + $0x3a4] sm:$0xff]
  %v268 = vld [vmem:[%s1 + $0x3ac] sm:$0xff]
  %v269 = vld [vmem:[%s1 + $0x3b4] sm:$0xf]
  %v270 = vld [vmem:[%s1 + $0x3b8] sm:$0xff]
  %v271 = vld [vmem:[%s1 + $0x3c0] sm:$0xff]
  %v272 = vld [vmem:[%s1 + $0x3c8] sm:$0xff]
  %v273 = vld [vmem:[%s1 + $0x3d0] sm:$0xf]
  %v274 = vld [vmem:[%s1 + $0x3d4] sm:$0xff]
  %v275 = vld [vmem:[%s1 + $0x3dc] sm:$0xff]
  %v276 = vld [vmem:[%s1 + $0x3e4] sm:$0xff]
  %v277 = vld [vmem:[%s1 + $0x3ec] sm:$0xf]
  %v278 = vld [vmem:[%s1 + $0x3f0] sm:$0xff]
  %v279 = vld [vmem:[%s1 + $0x3f8] sm:$0xff]
  %v280 = vld [vmem:[%s1 + $0x400] sm:$0xff]
  %v281 = vld [vmem:[%s1 + $0x408] sm:$0xf]
  %v282 = vld [vmem:[%s1 + $0x40c] sm:$0xff]
  %v283 = vld [vmem:[%s1 + $0x414] sm:$0xff]
  %v284 = vld [vmem:[%s1 + $0x41c] sm:$0xff]
  %v285 = vld [vmem:[%s1 + $0x424] sm:$0xf]
  %v286 = vld [vmem:[%s1 + $0x428] sm:$0xff]
  %v287 = vld [vmem:[%s1 + $0x430] sm:$0xff]
  %v288 = vld [vmem:[%s1 + $0x438] sm:$0xff]
  %v289 = vld [vmem:[%s1 + $0x440] sm:$0xf]
  %v290 = vld [vmem:[%s1 + $0x444] sm:$0xff]
  %v291 = vld [vmem:[%s1 + $0x44c] sm:$0xff]
  %v292 = vld [vmem:[%s1 + $0x454] sm:$0xff]
  %v293 = vld [vmem:[%s1 + $0x45c] sm:$0xf]
  %v294 = vld [vmem:[%s1 + $0x460] sm:$0xff]
  %v295 = vld [vmem:[%s1 + $0x468] sm:$0xff]
  %v296 = vld [vmem:[%s1 + $0x470] sm:$0xff]
  %v297 = vld [vmem:[%s1 + $0x478] sm:$0xf]
  %v298 = vld [vmem:[%s1 + $0x47c] sm:$0xff]
  %v299 = vld [vmem:[%s1 + $0x484] sm:$0xff]
  %v300 = vld [vmem:[%s1 + $0x48c] sm:$0xff]
  %v301 = vld [vmem:[%s1 + $0x494] sm:$0xf]
  %v302 = vld [vmem:[%s1 + $0x498] sm:$0xff]
  %v303 = vld [vmem:[%s1 + $0x4a0] sm:$0xff]
  %v304 = vld [vmem:[%s1 + $0x4a8] sm:$0xff]
  %v305 = vld [vmem:[%s1 + $0x4b0] sm:$0xf]
  %v306 = vld [vmem:[%s1 + $0x4b4] sm:$0xff]
  %v307 = vld [vmem:[%s1 + $0x4bc] sm:$0xff]
  %v308 = vld [vmem:[%s1 + $0x4c4] sm:$0xff]
  %v309 = vld [vmem:[%s1 + $0x4cc] sm:$0xf]
  %v310 = vld [vmem:[%s1 + $0x4d0] sm:$0xff]
  %v311 = vld [vmem:[%s1 + $0x4d8] sm:$0xff]
  %v312 = vld [vmem:[%s1 + $0x4e0] sm:$0xff]
  %v313 = vld [vmem:[%s1 + $0x4e8] sm:$0xf]
  %v314 = vld [vmem:[%s1 + $0x4ec] sm:$0xff]
  %v315 = vld [vmem:[%s1 + $0x4f4] sm:$0xff]
  %v316 = vld [vmem:[%s1 + $0x4fc] sm:$0xff]
  %v317 = vld [vmem:[%s1 + $0x504] sm:$0xf]
  %v318 = vld [vmem:[%s1 + $0x508] sm:$0xff]
  %v319 = vld [vmem:[%s1 + $0x510] sm:$0xff]
  %v320 = vld [vmem:[%s1 + $0x518] sm:$0xff]
  %v321 = vld [vmem:[%s1 + $0x520] sm:$0xf]
  %v322 = vld [vmem:[%s1 + $0x524] sm:$0xff]
  %v323 = vld [vmem:[%s1 + $0x52c] sm:$0xff]
  %v324 = vld [vmem:[%s1 + $0x534] sm:$0xff]
  %v325 = vld [vmem:[%s1 + $0x53c] sm:$0xf]
  %v326 = vld [vmem:[%s1 + $0x540] sm:$0xff]
  %v327 = vld [vmem:[%s1 + $0x548] sm:$0xff]
  %v328 = vld [vmem:[%s1 + $0x550] sm:$0xff]
  %v329 = vld [vmem:[%s1 + $0x558] sm:$0xf]
  %v330 = vld [vmem:[%s1 + $0x55c] sm:$0xff]
  %v331 = vld [vmem:[%s1 + $0x564] sm:$0xff]
  %v332 = vld [vmem:[%s1 + $0x56c] sm:$0xff]
  %v333 = vld [vmem:[%s1 + $0x574] sm:$0xf]
  %v334 = vld [vmem:[%s1 + $0x578] sm:$0xff]
  %v335 = vld [vmem:[%s1 + $0x580] sm:$0xff]
  %v336 = vld [vmem:[%s1 + $0x588] sm:$0xff]
  %v337 = vld [vmem:[%s1 + $0x590] sm:$0xf]
  %v338 = vld [vmem:[%s1 + $0x594] sm:$0xff]
  %v339 = vld [vmem:[%s1 + $0x59c] sm:$0xff]
  %v340 = vld [vmem:[%s1 + $0x5a4] sm:$0xff]
  %v341 = vld [vmem:[%s1 + $0x5ac] sm:$0xf]
  %v342 = vld [vmem:[%s1 + $0x5b0] sm:$0xff]
  %v343 = vld [vmem:[%s1 + $0x5b8] sm:$0xff]
  %v344 = vld [vmem:[%s1 + $0x5c0] sm:$0xff]
  %v345 = vld [vmem:[%s1 + $0x5c8] sm:$0xf]
  %v346 = vld [vmem:[%s1 + $0x5cc] sm:$0xff]
  %v347 = vld [vmem:[%s1 + $0x5d4] sm:$0xff]
  %v348 = vld [vmem:[%s1 + $0x5dc] sm:$0xff]
  %v349 = vld [vmem:[%s1 + $0x5e4] sm:$0xf]
  %v350 = vld [vmem:[%s1 + $0x5e8] sm:$0xff]
  %v351 = vld [vmem:[%s1 + $0x5f0] sm:$0xff]
  %v352 = vld [vmem:[%s1 + $0x5f8] sm:$0xff]
  %v353 = vld [vmem:[%s1 + $0x600] sm:$0xf]
  %v354 = vld [vmem:[%s1 + $0x604] sm:$0xff]
  %v355 = vld [vmem:[%s1 + $0x60c] sm:$0xff]
  %v356 = vld [vmem:[%s1 + $0x614] sm:$0xff]
  %v357 = vld [vmem:[%s1 + $0x61c] sm:$0xf]
  %v358 = vld [vmem:[%s1 + $0x620] sm:$0xff]
  %v359 = vld [vmem:[%s1 + $0x628] sm:$0xff]
  %v360 = vld [vmem:[%s1 + $0x630] sm:$0xff]
  %v361 = vld [vmem:[%s1 + $0x638] sm:$0xf]
  %v362 = vld [vmem:[%s1 + $0x63c] sm:$0xff]
  %v363 = vld [vmem:[%s1 + $0x644] sm:$0xff]
  %v364 = vld [vmem:[%s1 + $0x64c] sm:$0xff]
  %v365 = vld [vmem:[%s1 + $0x654] sm:$0xf]
  %v366 = vld [vmem:[%s1 + $0x658] sm:$0xff]
  %v367 = vld [vmem:[%s1 + $0x660] sm:$0xff]
  %v368 = vld [vmem:[%s1 + $0x668] sm:$0xff]
  %v369 = vld [vmem:[%s1 + $0x670] sm:$0xf]
  %v370 = vld [vmem:[%s1 + $0x674] sm:$0xff]
  %v371 = vld [vmem:[%s1 + $0x67c] sm:$0xff]
  %v372 = vld [vmem:[%s1 + $0x684] sm:$0xff]
  %v373 = vld [vmem:[%s1 + $0x68c] sm:$0xf]
  %v374 = vld [vmem:[%s1 + $0x690] sm:$0xff]
  %v375 = vld [vmem:[%s1 + $0x698] sm:$0xff]
  %v376 = vld [vmem:[%s1 + $0x6a0] sm:$0xff]
  %v377 = vld [vmem:[%s1 + $0x6a8] sm:$0xf]
  %v378 = vld [vmem:[%s1 + $0x6ac] sm:$0xff]
  %v379 = vld [vmem:[%s1 + $0x6b4] sm:$0xff]
  %v380 = vld [vmem:[%s1 + $0x6bc] sm:$0xff]
  %v381 = vld [vmem:[%s1 + $0x6c4] sm:$0xf]
  %v382 = vld [vmem:[%s1 + $0x6c8] sm:$0xff]
  %v383 = vld [vmem:[%s1 + $0x6d0] sm:$0xff]
  %v384 = vld [vmem:[%s1 + $0x6d8] sm:$0xff]
  %v385 = vld [vmem:[%s1 + $0x6e0] sm:$0xf]
  %v386 = vld [vmem:[%s1 + $0x6e4] sm:$0xff]
  %v387 = vld [vmem:[%s1 + $0x6ec] sm:$0xff]
  %v388 = vld [vmem:[%s1 + $0x6f4] sm:$0xff]
  %v389 = vld [vmem:[%s1 + $0x6fc] sm:$0xf]
  %v390 = vld [vmem:[%s1 + $0x700] sm:$0xff]
  %v391 = vld [vmem:[%s1 + $0x708] sm:$0xff]
  %v392 = vld [vmem:[%s1 + $0x710] sm:$0xff]
  %v393 = vld [vmem:[%s1 + $0x718] sm:$0xf]
  %v394 = vld [vmem:[%s1 + $0x71c] sm:$0xff]
  %v395 = vld [vmem:[%s1 + $0x724] sm:$0xff]
  %v396 = vld [vmem:[%s1 + $0x72c] sm:$0xff]
  %v397 = vld [vmem:[%s1 + $0x734] sm:$0xf]
  %v398 = vld [vmem:[%s1 + $0x738] sm:$0xff]
  %v399 = vld [vmem:[%s1 + $0x740] sm:$0xff]
  %v400 = vld [vmem:[%s1 + $0x748] sm:$0xff]
  %v401 = vld [vmem:[%s1 + $0x750] sm:$0xf]
  %v402 = vld [vmem:[%s1 + $0x754] sm:$0xff]
  %v403 = vld [vmem:[%s1 + $0x75c] sm:$0xff]
  %v404 = vld [vmem:[%s1 + $0x764] sm:$0xff]
  %v405 = vld [vmem:[%s1 + $0x76c] sm:$0xf]
  %v406 = vld [vmem:[%s1 + $0x770] sm:$0xff]
  %v407 = vld [vmem:[%s1 + $0x778] sm:$0xff]
  %v408 = vld [vmem:[%s1 + $0x780] sm:$0xff]
  %v409 = vld [vmem:[%s1 + $0x788] sm:$0xf]
  %v410 = vld [vmem:[%s1 + $0x78c] sm:$0xff]
  %v411 = vld [vmem:[%s1 + $0x794] sm:$0xff]
  %v412 = vld [vmem:[%s1 + $0x79c] sm:$0xff]
  %v413 = vld [vmem:[%s1 + $0x7a4] sm:$0xf]
  %v414 = vld [vmem:[%s1 + $0x7a8] sm:$0xff]
  %v415 = vld [vmem:[%s1 + $0x7b0] sm:$0xff]
  %v416 = vld [vmem:[%s1 + $0x7b8] sm:$0xff]
  %v417 = vld [vmem:[%s1 + $0x7c0] sm:$0xf]
  %v418 = vld [vmem:[%s1 + $0x7c4] sm:$0xff]
  %v419 = vld [vmem:[%s1 + $0x7cc] sm:$0xff]
  %v420 = vld [vmem:[%s1 + $0x7d4] sm:$0xff]
  %v421 = vld [vmem:[%s1 + $0x7dc] sm:$0xf]
  %v422 = vld [vmem:[%s1 + $0x7e0] sm:$0xff]
  %v423 = vld [vmem:[%s1 + $0x7e8] sm:$0xff]
  %v424 = vld [vmem:[%s1 + $0x7f0] sm:$0xff]
  %v425 = vld [vmem:[%s1 + $0x7f8] sm:$0xf]
  %v426 = vld [vmem:[%s1 + $0x7fc] sm:$0xff]
  %v427 = vld [vmem:[%s1 + $0x804] sm:$0xff]
  %v428 = vld [vmem:[%s1 + $0x80c] sm:$0xff]
  %v429 = vld [vmem:[%s1 + $0x814] sm:$0xf]
  %v430 = vld [vmem:[%s1 + $0x818] sm:$0xff]
  %v431 = vld [vmem:[%s1 + $0x820] sm:$0xff]
  %v432 = vld [vmem:[%s1 + $0x828] sm:$0xff]
  %v433 = vld [vmem:[%s1 + $0x830] sm:$0xf]
  %v434 = vld [vmem:[%s1 + $0x834] sm:$0xff]
  %v435 = vld [vmem:[%s1 + $0x83c] sm:$0xff]
  %v436 = vld [vmem:[%s1 + $0x844] sm:$0xff]
  %v437 = vld [vmem:[%s1 + $0x84c] sm:$0xf]
  %v438 = vld [vmem:[%s1 + $0x850] sm:$0xff]
  %v439 = vld [vmem:[%s1 + $0x858] sm:$0xff]
  %v440 = vld [vmem:[%s1 + $0x860] sm:$0xff]
  %v441 = vld [vmem:[%s1 + $0x868] sm:$0xf]
  %v442 = vld [vmem:[%s1 + $0x86c] sm:$0xff]
  %v443 = vld [vmem:[%s1 + $0x874] sm:$0xff]
  %v444 = vld [vmem:[%s1 + $0x87c] sm:$0xff]
  %v445 = vld [vmem:[%s1 + $0x884] sm:$0xf]
  %v446 = vld [vmem:[%s1 + $0x888] sm:$0xff]
  %v447 = vld [vmem:[%s1 + $0x890] sm:$0xff]
  %v448 = vld [vmem:[%s1 + $0x898] sm:$0xff]
  %v449 = vld [vmem:[%s1 + $0x8a0] sm:$0xf]
  %v450 = vld [vmem:[%s1 + $0x8a4] sm:$0xff]
  %v451 = vld [vmem:[%s1 + $0x8ac] sm:$0xff]
  %v452 = vld [vmem:[%s1 + $0x8b4] sm:$0xff]
  %v453 = vld [vmem:[%s1 + $0x8bc] sm:$0xf]
  %v454 = vld [vmem:[%s1 + $0x8c0] sm:$0xff]
  %v455 = vld [vmem:[%s1 + $0x8c8] sm:$0xff]
  %v456 = vld [vmem:[%s1 + $0x8d0] sm:$0xff]
  %v457 = vld [vmem:[%s1 + $0x8d8] sm:$0xf]
  %v458 = vld [vmem:[%s1 + $0x8dc] sm:$0xff]
  %v459 = vld [vmem:[%s1 + $0x8e4] sm:$0xff]
  %v460 = vld [vmem:[%s1 + $0x8ec] sm:$0xff]
  %v461 = vld [vmem:[%s1 + $0x8f4] sm:$0xf]
  %v462 = vld [vmem:[%s1 + $0x8f8] sm:$0xff]
  %v463 = vld [vmem:[%s1 + $0x900] sm:$0xff]
  %v464 = vld [vmem:[%s1 + $0x908] sm:$0xff]
  %v465 = vld [vmem:[%s1 + $0x910] sm:$0xf]
  %v466 = vld [vmem:[%s1 + $0x914] sm:$0xff]
  %v467 = vld [vmem:[%s1 + $0x91c] sm:$0xff]
  %v468 = vld [vmem:[%s1 + $0x924] sm:$0xff]
  %v469 = vld [vmem:[%s1 + $0x92c] sm:$0xf]
  %v470 = vld [vmem:[%s1 + $0x930] sm:$0xff]
  %v471 = vld [vmem:[%s1 + $0x938] sm:$0xff]
  %v472 = vld [vmem:[%s1 + $0x940] sm:$0xff]
  %v473 = vld [vmem:[%s1 + $0x948] sm:$0xf]
  %v474 = vld [vmem:[%s1 + $0x94c] sm:$0xff]
  %v475 = vld [vmem:[%s1 + $0x954] sm:$0xff]
  %v476 = vld [vmem:[%s1 + $0x95c] sm:$0xff]
  %v477 = vld [vmem:[%s1 + $0x964] sm:$0xf]
  %v478 = vld [vmem:[%s1 + $0x968] sm:$0xff]
  %v479 = vld [vmem:[%s1 + $0x970] sm:$0xff]
  %v480 = vld [vmem:[%s1 + $0x978] sm:$0xff]
  %v481 = vld [vmem:[%s1 + $0x980] sm:$0xf]
  %v482 = vld [vmem:[%s1 + $0x984] sm:$0xff]
  %v483 = vld [vmem:[%s1 + $0x98c] sm:$0xff]
  %v484 = vld [vmem:[%s1 + $0x994] sm:$0xff]
  %v485 = vld [vmem:[%s1 + $0x99c] sm:$0xf]
  %v486 = vld [vmem:[%s1 + $0x9a0] sm:$0xff]
  %v487 = vld [vmem:[%s1 + $0x9a8] sm:$0xff]
  %v488 = vld [vmem:[%s1 + $0x9b0] sm:$0xff]
  %v489 = vld [vmem:[%s1 + $0x9b8] sm:$0xf]
  %v490 = vld [vmem:[%s1 + $0x9bc] sm:$0xff]
  %v491 = vld [vmem:[%s1 + $0x9c4] sm:$0xff]
  %v492 = vld [vmem:[%s1 + $0x9cc] sm:$0xff]
  %v493 = vld [vmem:[%s1 + $0x9d4] sm:$0xf]
  %v494 = vld [vmem:[%s1 + $0x9d8] sm:$0xff]
  %v495 = vld [vmem:[%s1 + $0x9e0] sm:$0xff]
  %v496 = vld [vmem:[%s1 + $0x9e8] sm:$0xff]
  %v497 = vld [vmem:[%s1 + $0x9f0] sm:$0xf]
  %v498 = vld [vmem:[%s1 + $0x9f4] sm:$0xff]
  %v499 = vld [vmem:[%s1 + $0x9fc] sm:$0xff]
  %v500 = vld [vmem:[%s1 + $0xa04] sm:$0xff]
  %v501 = vld [vmem:[%s1 + $0xa0c] sm:$0xf]
  %v502 = vld [vmem:[%s1 + $0xa10] sm:$0xff]
  %v503 = vld [vmem:[%s1 + $0xa18] sm:$0xff]
  %v504 = vld [vmem:[%s1 + $0xa20] sm:$0xff]
  %v505 = vld [vmem:[%s1 + $0xa28] sm:$0xf]
  %v506 = vld [vmem:[%s1 + $0xa2c] sm:$0xff]
  %v507 = vld [vmem:[%s1 + $0xa34] sm:$0xff]
  %v508 = vld [vmem:[%s1 + $0xa3c] sm:$0xff]
  %v509 = vld [vmem:[%s1 + $0xa44] sm:$0xf]
  %v510 = vld [vmem:[%s1 + $0xa48] sm:$0xff]
  %v511 = vld [vmem:[%s1 + $0xa50] sm:$0xff]
  %v512 = vld [vmem:[%s1 + $0xa58] sm:$0xff]
  %v513 = vld [vmem:[%s1 + $0xa60] sm:$0xf]
  %v514 = vld [vmem:[%s1 + $0xa64] sm:$0xff]
  %v515 = vld [vmem:[%s1 + $0xa6c] sm:$0xff]
  %v516 = vld [vmem:[%s1 + $0xa74] sm:$0xff]
  %v517 = vld [vmem:[%s1 + $0xa7c] sm:$0xf]
  %v518 = vld [vmem:[%s1 + $0xa80] sm:$0xff]
  %v519 = vld [vmem:[%s1 + $0xa88] sm:$0xff]
  %v520 = vld [vmem:[%s1 + $0xa90] sm:$0xff]
  %v521 = vld [vmem:[%s1 + $0xa98] sm:$0xf]
  %v522 = vld [vmem:[%s1 + $0xa9c] sm:$0xff]
  %v523 = vld [vmem:[%s1 + $0xaa4] sm:$0xff]
  %v524 = vld [vmem:[%s1 + $0xaac] sm:$0xff]
  %v525 = vld [vmem:[%s1 + $0xab4] sm:$0xf]
  %v526 = vld [vmem:[%s1 + $0xab8] sm:$0xff]
  %v527 = vld [vmem:[%s1 + $0xac0] sm:$0xff]
  %v528 = vld [vmem:[%s1 + $0xac8] sm:$0xff]
  %v529 = vld [vmem:[%s1 + $0xad0] sm:$0xf]
  %v530 = vld [vmem:[%s1 + $0xad4] sm:$0xff]
  %v531 = vld [vmem:[%s1 + $0xadc] sm:$0xff]
  %v532 = vld [vmem:[%s1 + $0xae4] sm:$0xff]
  %v533 = vld [vmem:[%s1 + $0xaec] sm:$0xf]
  %v534 = vld [vmem:[%s1 + $0xaf0] sm:$0xff]
  %v535 = vld [vmem:[%s1 + $0xaf8] sm:$0xff]
  %v536 = vld [vmem:[%s1 + $0xb00] sm:$0xff]
  %v537 = vld [vmem:[%s1 + $0xb08] sm:$0xf]
  %v538 = vld [vmem:[%s1 + $0xb0c] sm:$0xff]
  %v539 = vld [vmem:[%s1 + $0xb14] sm:$0xff]
  %v540 = vld [vmem:[%s1 + $0xb1c] sm:$0xff]
  %v541 = vld [vmem:[%s1 + $0xb24] sm:$0xf]
  %v542 = vld [vmem:[%s1 + $0xb28] sm:$0xff]
  %v543 = vld [vmem:[%s1 + $0xb30] sm:$0xff]
  %v544 = vld [vmem:[%s1 + $0xb38] sm:$0xff]
  %v545 = vld [vmem:[%s1 + $0xb40] sm:$0xf]
  %v546 = vld [vmem:[%s1 + $0xb44] sm:$0xff]
  %v547 = vld [vmem:[%s1 + $0xb4c] sm:$0xff]
  %v548 = vld [vmem:[%s1 + $0xb54] sm:$0xff]
  %v549 = vld [vmem:[%s1 + $0xb5c] sm:$0xf]
  %v550 = vld [vmem:[%s1 + $0xb60] sm:$0xff]
  %v551 = vld [vmem:[%s1 + $0xb68] sm:$0xff]
  %v552 = vld [vmem:[%s1 + $0xb70] sm:$0xff]
  %v553 = vld [vmem:[%s1 + $0xb78] sm:$0xf]
  %v554 = vld [vmem:[%s1 + $0xb7c] sm:$0xff]
  %v555 = vld [vmem:[%s1 + $0xb84] sm:$0xff]
  %v556 = vld [vmem:[%s1 + $0xb8c] sm:$0xff]
  %v557 = vld [vmem:[%s1 + $0xb94] sm:$0xf]
  %v558 = vld [vmem:[%s1 + $0xb98] sm:$0xff]
  %v559 = vld [vmem:[%s1 + $0xba0] sm:$0xff]
  %v560 = vld [vmem:[%s1 + $0xba8] sm:$0xff]
  %v561 = vld [vmem:[%s1 + $0xbb0] sm:$0xf]
  %v562 = vld [vmem:[%s1 + $0xbb4] sm:$0xff]
  %v563 = vld [vmem:[%s1 + $0xbbc] sm:$0xff]
  %v564 = vld [vmem:[%s1 + $0xbc4] sm:$0xff]
  %v565 = vld [vmem:[%s1 + $0xbcc] sm:$0xf]
  %v566 = vld [vmem:[%s1 + $0xbd0] sm:$0xff]
  %v567 = vld [vmem:[%s1 + $0xbd8] sm:$0xff]
  %v568 = vld [vmem:[%s1 + $0xbe0] sm:$0xff]
  %v569 = vld [vmem:[%s1 + $0xbe8] sm:$0xf]
  %v570 = vld [vmem:[%s1 + $0xbec] sm:$0xff]
  %v571 = vld [vmem:[%s1 + $0xbf4] sm:$0xff]
  %v572 = vld [vmem:[%s1 + $0xbfc] sm:$0xff]
  %v573 = vld [vmem:[%s1 + $0xc04] sm:$0xf]
  %v574 = vld [vmem:[%s1 + $0xc08] sm:$0xff]
  %v575 = vld [vmem:[%s1 + $0xc10] sm:$0xff]
  %v576 = vld [vmem:[%s1 + $0xc18] sm:$0xff]
  %v577 = vld [vmem:[%s1 + $0xc20] sm:$0xf]
  %v578 = vld [vmem:[%s1 + $0xc24] sm:$0xff]
  %v579 = vld [vmem:[%s1 + $0xc2c] sm:$0xff]
  %v580 = vld [vmem:[%s1 + $0xc34] sm:$0xff]
  %v581 = vld [vmem:[%s1 + $0xc3c] sm:$0xf]
  %v582 = vld [vmem:[%s1 + $0xc40] sm:$0xff]
  %v583 = vld [vmem:[%s1 + $0xc48] sm:$0xff]
  %v584 = vld [vmem:[%s1 + $0xc50] sm:$0xff]
  %v585 = vld [vmem:[%s1 + $0xc58] sm:$0xf]
  %v586 = vld [vmem:[%s1 + $0xc5c] sm:$0xff]
  %v587 = vld [vmem:[%s1 + $0xc64] sm:$0xff]
  %v588 = vld [vmem:[%s1 + $0xc6c] sm:$0xff]
  %v589 = vld [vmem:[%s1 + $0xc74] sm:$0xf]
  %v590 = vld [vmem:[%s1 + $0xc78] sm:$0xff]
  %v591 = vld [vmem:[%s1 + $0xc80] sm:$0xff]
  %v592 = vld [vmem:[%s1 + $0xc88] sm:$0xff]
  %v593 = vld [vmem:[%s1 + $0xc90] sm:$0xf]
  %v594 = vld [vmem:[%s1 + $0xc94] sm:$0xff]
  %v595 = vld [vmem:[%s1 + $0xc9c] sm:$0xff]
  %v596 = vld [vmem:[%s1 + $0xca4] sm:$0xff]
  %v597 = vld [vmem:[%s1 + $0xcac] sm:$0xf]
  %v598 = vld [vmem:[%s1 + $0xcb0] sm:$0xff]
  %v599 = vld [vmem:[%s1 + $0xcb8] sm:$0xff]
  %v600 = vld [vmem:[%s1 + $0xcc0] sm:$0xff]
  %v601 = vld [vmem:[%s1 + $0xcc8] sm:$0xf]
  %v602 = vld [vmem:[%s1 + $0xccc] sm:$0xff]
  %v603 = vld [vmem:[%s1 + $0xcd4] sm:$0xff]
  %v604 = vld [vmem:[%s1 + $0xcdc] sm:$0xff]
  %v605 = vld [vmem:[%s1 + $0xce4] sm:$0xf]
  %v606 = vld [vmem:[%s1 + $0xce8] sm:$0xff]
  %v607 = vld [vmem:[%s1 + $0xcf0] sm:$0xff]
  %v608 = vld [vmem:[%s1 + $0xcf8] sm:$0xff]
  %v609 = vld [vmem:[%s1 + $0xd00] sm:$0xf]
  %v610 = vld [vmem:[%s1 + $0xd04] sm:$0xff]
  %v611 = vld [vmem:[%s1 + $0xd0c] sm:$0xff]
  %v612 = vld [vmem:[%s1 + $0xd14] sm:$0xff]
  %v613 = vld [vmem:[%s1 + $0xd1c] sm:$0xf]
  %v614 = vld [vmem:[%s1 + $0xd20] sm:$0xff]
  %v615 = vld [vmem:[%s1 + $0xd28] sm:$0xff]
  %v616 = vld [vmem:[%s1 + $0xd30] sm:$0xff]
  %v617 = vld [vmem:[%s1 + $0xd38] sm:$0xf]
  %v618 = vld [vmem:[%s1 + $0xd3c] sm:$0xff]
  %v619 = vld [vmem:[%s1 + $0xd44] sm:$0xff]
  %v620 = vld [vmem:[%s1 + $0xd4c] sm:$0xff]
  %v621 = vld [vmem:[%s1 + $0xd54] sm:$0xf]
  %v622 = vld [vmem:[%s1 + $0xd58] sm:$0xff]
  %v623 = vld [vmem:[%s1 + $0xd60] sm:$0xff]
  %v624 = vld [vmem:[%s1 + $0xd68] sm:$0xff]
  %v625 = vld [vmem:[%s1 + $0xd70] sm:$0xf]
  %v626 = vld [vmem:[%s1 + $0xd74] sm:$0xff]
  %v627 = vld [vmem:[%s1 + $0xd7c] sm:$0xff]
  %v628 = vld [vmem:[%s1 + $0xd84] sm:$0xff]
  %v629 = vld [vmem:[%s1 + $0xd8c] sm:$0xf]
  %v630 = vld [vmem:[%s1 + $0xd90] sm:$0xff]
  %v631 = vld [vmem:[%s1 + $0xd98] sm:$0xff]
  %v632 = vld [vmem:[%s1 + $0xda0] sm:$0xff]
  %v633 = vld [vmem:[%s1 + $0xda8] sm:$0xf]
  %v634 = vld [vmem:[%s1 + $0xdac] sm:$0xff]
  %v635 = vld [vmem:[%s1 + $0xdb4] sm:$0xff]
  %v636 = vld [vmem:[%s1 + $0xdbc] sm:$0xff]
  %v637 = vld [vmem:[%s1 + $0xdc4] sm:$0xf]
  %v638 = vld [vmem:[%s1 + $0xdc8] sm:$0xff]
  %v639 = vld [vmem:[%s1 + $0xdd0] sm:$0xff]
  %v640 = vld [vmem:[%s1 + $0xdd8] sm:$0xff]
  %v641 = vld [vmem:[%s1 + $0xde0] sm:$0xf]
  %v642 = vld [vmem:[%s1 + $0xde4] sm:$0xff]
  %v643 = vld [vmem:[%s1 + $0xdec] sm:$0xff]
  %v644 = vld [vmem:[%s1 + $0xdf4] sm:$0xff]
  %v645 = vld [vmem:[%s1 + $0xdfc] sm:$0xf]
  %v646 = vld [vmem:[%s1 + $0xe00] sm:$0xff]
  %v647 = vld [vmem:[%s1 + $0xe08] sm:$0xff]
  %v648 = vld [vmem:[%s1 + $0xe10] sm:$0xff]
  %v649 = vld [vmem:[%s1 + $0xe18] sm:$0xf]
  %v650 = vld [vmem:[%s1 + $0xe1c] sm:$0xff]
  %v651 = vld [vmem:[%s1 + $0xe24] sm:$0xff]
  %v652 = vld [vmem:[%s1 + $0xe2c] sm:$0xff]
  %v653 = vld [vmem:[%s1 + $0xe34] sm:$0xf]
  %v654 = vld [vmem:[%s1 + $0xe38] sm:$0xff]
  %v655 = vld [vmem:[%s1 + $0xe40] sm:$0xff]
  %v656 = vld [vmem:[%s1 + $0xe48] sm:$0xff]
  %v657 = vld [vmem:[%s1 + $0xe50] sm:$0xf]
  %v658 = vld [vmem:[%s1 + $0xe54] sm:$0xff]
  %v659 = vld [vmem:[%s1 + $0xe5c] sm:$0xff]
  %v660 = vld [vmem:[%s1 + $0xe64] sm:$0xff]
  %v661 = vld [vmem:[%s1 + $0xe6c] sm:$0xf]
  %v662 = vld [vmem:[%s1 + $0xe70] sm:$0xff]
  %v663 = vld [vmem:[%s1 + $0xe78] sm:$0xff]
  %v664 = vld [vmem:[%s1 + $0xe80] sm:$0xff]
  %v665 = vld [vmem:[%s1 + $0xe88] sm:$0xf]
  %v666 = vld [vmem:[%s1 + $0xe8c] sm:$0xff]
  %v667 = vld [vmem:[%s1 + $0xe94] sm:$0xff]
  %v668 = vld [vmem:[%s1 + $0xe9c] sm:$0xff]
  %v669 = vld [vmem:[%s1 + $0xea4] sm:$0xf]
  %v670 = vld [vmem:[%s1 + $0xea8] sm:$0xff]
  %v671 = vld [vmem:[%s1 + $0xeb0] sm:$0xff]
  %v672 = vld [vmem:[%s1 + $0xeb8] sm:$0xff]
  %v673 = vld [vmem:[%s1 + $0xec0] sm:$0xf]
  %v674 = vld [vmem:[%s1 + $0xec4] sm:$0xff]
  %v675 = vld [vmem:[%s1 + $0xecc] sm:$0xff]
  %v676 = vld [vmem:[%s1 + $0xed4] sm:$0xff]
  %v677 = vld [vmem:[%s1 + $0xedc] sm:$0xf]
  %v678 = vld [vmem:[%s1 + $0xee0] sm:$0xff]
  %v679 = vld [vmem:[%s1 + $0xee8] sm:$0xff]
  %v680 = vld [vmem:[%s1 + $0xef0] sm:$0xff]
  %v681 = vld [vmem:[%s1 + $0xef8] sm:$0xf]
  %v682 = vld [vmem:[%s1 + $0xefc] sm:$0xff]
  %v683 = vld [vmem:[%s1 + $0xf04] sm:$0xff]
  %v684 = vld [vmem:[%s1 + $0xf0c] sm:$0xff]
  %v685 = vld [vmem:[%s1 + $0xf14] sm:$0xf]
  %v686 = vld [vmem:[%s1 + $0xf18] sm:$0xff]
  %v687 = vld [vmem:[%s1 + $0xf20] sm:$0xff]
  %v688 = vld [vmem:[%s1 + $0xf28] sm:$0xff]
  %v689 = vld [vmem:[%s1 + $0xf30] sm:$0xf]
  %v690 = vld [vmem:[%s1 + $0xf34] sm:$0xff]
  %v691 = vld [vmem:[%s1 + $0xf3c] sm:$0xff]
  %v692 = vld [vmem:[%s1 + $0xf44] sm:$0xff]
  %v693 = vld [vmem:[%s1 + $0xf4c] sm:$0xf]
  %v694 = vld [vmem:[%s1 + $0xf50] sm:$0xff]
  %v695 = vld [vmem:[%s1 + $0xf58] sm:$0xff]
  %v696 = vld [vmem:[%s1 + $0xf60] sm:$0xff]
  %v697 = vld [vmem:[%s1 + $0xf68] sm:$0xf]
  %v698 = vld [vmem:[%s1 + $0xf6c] sm:$0xff]
  %v699 = vld [vmem:[%s1 + $0xf74] sm:$0xff]
  %v700 = vld [vmem:[%s1 + $0xf7c] sm:$0xff]
  %v701 = vld [vmem:[%s1 + $0xf84] sm:$0xf]
  %v702 = vld [vmem:[%s1 + $0xf88] sm:$0xff]
  %v703 = vld [vmem:[%s1 + $0xf90] sm:$0xff]
  %v704 = vld [vmem:[%s1 + $0xf98] sm:$0xff]
  %v705 = vld [vmem:[%s1 + $0xfa0] sm:$0xf]
  %v706 = vld [vmem:[%s1 + $0xfa4] sm:$0xff]
  %v707 = vld [vmem:[%s1 + $0xfac] sm:$0xff]
  %v708 = vld [vmem:[%s1 + $0xfb4] sm:$0xff]
  %v709 = vld [vmem:[%s1 + $0xfbc] sm:$0xf]
  %v710 = vld [vmem:[%s2] sm:$0xff]
  %v711 = vld [vmem:[%s2 + $0x8] sm:$0xff]
  %v712 = vld [vmem:[%s2 + $0x10] sm:$0xff]
  %v713 = vld [vmem:[%s2 + $0x18] sm:$0xff]
  %v714 = vld [vmem:[%s2 + $0x20] sm:$0xff]
  %v715 = vld [vmem:[%s2 + $0x28] sm:$0xff]
  %v716 = vld [vmem:[%s2 + $0x30] sm:$0xff]
  %v717 = vld [vmem:[%s2 + $0x38] sm:$0xff]
  %v718 = vld [vmem:[%s2 + $0x40] sm:$0xff]
  %v719 = vld [vmem:[%s2 + $0x48] sm:$0xff]
  %v720 = vld [vmem:[%s2 + $0x50] sm:$0xff]
  %v721 = vld [vmem:[%s2 + $0x58] sm:$0xff]
  %v722 = vld [vmem:[%s2 + $0x60] sm:$0xff]
  %v723 = vld [vmem:[%s2 + $0x68] sm:$0xff]
  %v724 = vld [vmem:[%s2 + $0x70] sm:$0xff]
  %v725 = vld [vmem:[%s2 + $0x78] sm:$0xff]
  %v726 = vld [vmem:[%s2 + $0x80] sm:$0xff]
  %v727 = vld [vmem:[%s2 + $0x88] sm:$0xff]
  %v728 = vld [vmem:[%s2 + $0x90] sm:$0xff]
  %v729 = vld [vmem:[%s2 + $0x98] sm:$0xff]
  %v730 = vld [vmem:[%s2 + $0xa0] sm:$0xff]
  %v731 = vld [vmem:[%s2 + $0xa8] sm:$0xff]
  %v732 = vld [vmem:[%s2 + $0xb0] sm:$0xff]
  %v733 = vld [vmem:[%s2 + $0xb8] sm:$0xff]
  %v734 = vld [vmem:[%s2 + $0xc0] sm:$0xff]
  %v735 = vld [vmem:[%s2 + $0xc8] sm:$0xff]
  %v736 = vld [vmem:[%s2 + $0xd0] sm:$0xff]
  %v737 = vld [vmem:[%s2 + $0xd8] sm:$0xff]
  %v738 = vld [vmem:[%s2 + $0xe0] sm:$0xff]
  %v739 = vld [vmem:[%s2 + $0xe8] sm:$0xff]
  %v740 = vld [vmem:[%s2 + $0xf0] sm:$0xff]
  %v741 = vld [vmem:[%s2 + $0xf8] sm:$0xff]
  %v742 = vld [vmem:[%s2 + $0x100] sm:$0xff]
  %v743 = vld [vmem:[%s2 + $0x108] sm:$0xff]
  %v744 = vld [vmem:[%s2 + $0x110] sm:$0xff]
  %v745 = vld [vmem:[%s2 + $0x118] sm:$0xff]
  %v746 = vld [vmem:[%s2 + $0x120] sm:$0xff]
  %v747 = vld [vmem:[%s2 + $0x128] sm:$0xff]
  %v748 = vld [vmem:[%s2 + $0x130] sm:$0xff]
  %v749 = vld [vmem:[%s2 + $0x138] sm:$0xff]
  %v750 = vld [vmem:[%s2 + $0x140] sm:$0xff]
  %v751 = vld [vmem:[%s2 + $0x148] sm:$0xff]
  %v752 = vld [vmem:[%s2 + $0x150] sm:$0xff]
  %v753 = vld [vmem:[%s2 + $0x158] sm:$0xff]
  %v754 = vld [vmem:[%s2 + $0x160] sm:$0xff]
  %v755 = vld [vmem:[%s2 + $0x168] sm:$0xff]
  %v756 = vld [vmem:[%s2 + $0x170] sm:$0xff]
  %v757 = vld [vmem:[%s2 + $0x178] sm:$0xff]
  %v758 = vld [vmem:[%s2 + $0x180] sm:$0xff]
  %v759 = vld [vmem:[%s2 + $0x188] sm:$0xff]
  %v760 = vld [vmem:[%s2 + $0x190] sm:$0xff]
  %v761 = vld [vmem:[%s2 + $0x198] sm:$0xff]
  %v762 = vld [vmem:[%s2 + $0x1a0] sm:$0xff]
  %v763 = vld [vmem:[%s2 + $0x1a8] sm:$0xff]
  %v764 = vld [vmem:[%s2 + $0x1b0] sm:$0xff]
  %v765 = vld [vmem:[%s2 + $0x1b8] sm:$0xff]
  %v766 = vld [vmem:[%s2 + $0x1c0] sm:$0xff]
  %v767 = vld [vmem:[%s2 + $0x1c8] sm:$0xff]
  %v768 = vld [vmem:[%s2 + $0x1d0] sm:$0xff]
  %v769 = vld [vmem:[%s2 + $0x1d8] sm:$0xff]
  %v770 = vld [vmem:[%s2 + $0x1e0] sm:$0xff]
  %v771 = vld [vmem:[%s2 + $0x1e8] sm:$0xff]
  %v772 = vld [vmem:[%s2 + $0x1f0] sm:$0xff]
  %v773 = vld [vmem:[%s2 + $0x1f8] sm:$0xff]
  %v774 = vld [vmem:[%s2 + $0x200] sm:$0xff]
  %v775 = vld [vmem:[%s2 + $0x208] sm:$0xff]
  %v776 = vld [vmem:[%s2 + $0x210] sm:$0xff]
  %v777 = vld [vmem:[%s2 + $0x218] sm:$0xff]
  %v778 = vld [vmem:[%s2 + $0x220] sm:$0xff]
  %v779 = vld [vmem:[%s2 + $0x228] sm:$0xff]
  %v780 = vld [vmem:[%s2 + $0x230] sm:$0xff]
  %v781 = vld [vmem:[%s2 + $0x238] sm:$0xff]
  %v782 = vld [vmem:[%s2 + $0x240] sm:$0xff]
  %v783 = vld [vmem:[%s2 + $0x248] sm:$0xff]
  %v784 = vld [vmem:[%s2 + $0x250] sm:$0xff]
  %v785 = vld [vmem:[%s2 + $0x258] sm:$0xff]
  %v786 = vld [vmem:[%s2 + $0x260] sm:$0xff]
  %v787 = vld [vmem:[%s2 + $0x268] sm:$0xff]
  %v788 = vld [vmem:[%s2 + $0x270] sm:$0xff]
  %v789 = vld [vmem:[%s2 + $0x278] sm:$0xff]
  %v790 = vld [vmem:[%s2 + $0x280] sm:$0xff]
  %v791 = vld [vmem:[%s2 + $0x288] sm:$0xff]
  %v792 = vld [vmem:[%s2 + $0x290] sm:$0xff]
  %v793 = vld [vmem:[%s2 + $0x298] sm:$0xff]
  %v794 = vld [vmem:[%s2 + $0x2a0] sm:$0xff]
  %v795 = vld [vmem:[%s2 + $0x2a8] sm:$0xff]
  %v796 = vld [vmem:[%s2 + $0x2b0] sm:$0xff]
  %v797 = vld [vmem:[%s2 + $0x2b8] sm:$0xff]
  %v798 = vld [vmem:[%s2 + $0x2c0] sm:$0xff]
  %v799 = vld [vmem:[%s2 + $0x2c8] sm:$0xff]
  %v800 = vld [vmem:[%s2 + $0x2d0] sm:$0xff]
  %v801 = vld [vmem:[%s2 + $0x2d8] sm:$0xff]
  %v802 = vld [vmem:[%s2 + $0x2e0] sm:$0xff]
  %v803 = vld [vmem:[%s2 + $0x2e8] sm:$0xff]
  %v804 = vld [vmem:[%s2 + $0x2f0] sm:$0xff]
  %v805 = vld [vmem:[%s2 + $0x2f8] sm:$0xff]
  %v806 = vld [vmem:[%s2 + $0x300] sm:$0xff]
  %v807 = vld [vmem:[%s2 + $0x308] sm:$0xff]
  %v808 = vld [vmem:[%s2 + $0x310] sm:$0xff]
  %v809 = vld [vmem:[%s2 + $0x318] sm:$0xff]
  %v810 = vld [vmem:[%s2 + $0x320] sm:$0xff]
  %v811 = vld [vmem:[%s2 + $0x328] sm:$0xff]
  %v812 = vld [vmem:[%s2 + $0x330] sm:$0xff]
  %v813 = vld [vmem:[%s2 + $0x338] sm:$0xff]
  %v814 = vld [vmem:[%s2 + $0x340] sm:$0xff]
  %v815 = vld [vmem:[%s2 + $0x348] sm:$0xff]
  %v816 = vld [vmem:[%s2 + $0x350] sm:$0xff]
  %v817 = vld [vmem:[%s2 + $0x358] sm:$0xff]
  %v818 = vld [vmem:[%s2 + $0x360] sm:$0xff]
  %v819 = vld [vmem:[%s2 + $0x368] sm:$0xff]
  %v820 = vld [vmem:[%s2 + $0x370] sm:$0xff]
  %v821 = vld [vmem:[%s2 + $0x378] sm:$0xff]
  %v822 = vld [vmem:[%s2 + $0x380] sm:$0xff]
  %v823 = vld [vmem:[%s2 + $0x388] sm:$0xff]
  %v824 = vld [vmem:[%s2 + $0x390] sm:$0xff]
  %v825 = vld [vmem:[%s2 + $0x398] sm:$0xff]
  %v826 = vld [vmem:[%s2 + $0x3a0] sm:$0xff]
  %v827 = vld [vmem:[%s2 + $0x3a8] sm:$0xff]
  %v828 = vld [vmem:[%s2 + $0x3b0] sm:$0xff]
  %v829 = vld [vmem:[%s2 + $0x3b8] sm:$0xff]
  %v830 = vld [vmem:[%s2 + $0x3c0] sm:$0xff]
  %v831 = vld [vmem:[%s2 + $0x3c8] sm:$0xff]
  %v832 = vld [vmem:[%s2 + $0x3d0] sm:$0xff]
  %v833 = vld [vmem:[%s2 + $0x3d8] sm:$0xff]
  %v834 = vld [vmem:[%s2 + $0x3e0] sm:$0xff]
  %v835 = vld [vmem:[%s2 + $0x3e8] sm:$0xff]
  %v836 = vld [vmem:[%s2 + $0x3f0] sm:$0xff]
  %v837 = vld [vmem:[%s2 + $0x3f8] sm:$0xff]
  %v838 = vld [vmem:[%s2 + $0x400] sm:$0xff]
  %v839 = vld [vmem:[%s2 + $0x408] sm:$0xff]
  %v840 = vld [vmem:[%s2 + $0x410] sm:$0xff]
  %v841 = vld [vmem:[%s2 + $0x418] sm:$0xff]
  %v842 = vld [vmem:[%s2 + $0x420] sm:$0xff]
  %v843 = vld [vmem:[%s2 + $0x428] sm:$0xff]
  %v844 = vld [vmem:[%s2 + $0x430] sm:$0xff]
  %v845 = vld [vmem:[%s2 + $0x438] sm:$0xff]
  %v846 = vld [vmem:[%s2 + $0x440] sm:$0xff]
  %v847 = vld [vmem:[%s2 + $0x448] sm:$0xff]
  %v848 = vld [vmem:[%s2 + $0x450] sm:$0xff]
  %v849 = vld [vmem:[%s2 + $0x458] sm:$0xff]
  %v850 = vld [vmem:[%s2 + $0x460] sm:$0xff]
  %v851 = vld [vmem:[%s2 + $0x468] sm:$0xff]
  %v852 = vld [vmem:[%s2 + $0x470] sm:$0xff]
  %v853 = vld [vmem:[%s2 + $0x478] sm:$0xff]
  %855 = vset.pattern.permute.xlu0 0
  %856 = vperm.xlu0 %855, %v710
  %v857 = vpop.permute.xlu0 %856
  %860 = vset.pattern.permute.xlu0 0
  %861 = vperm.xlu0 %860, %v711
  %v862 = vpop.permute.xlu0 %861
  %865 = vset.pattern.permute.xlu0 0
  %866 = vperm.xlu0 %865, %v712
  %v867 = vpop.permute.xlu0 %866
  %870 = vset.pattern.permute.xlu0 0
  %871 = vperm.xlu0 %870, %v713
  %v872 = vpop.permute.xlu0 %871
  %875 = vset.pattern.permute.xlu0 0
  %876 = vperm.xlu0 %875, %v714
  %v877 = vpop.permute.xlu0 %876
  %880 = vset.pattern.permute.xlu0 0
  %881 = vperm.xlu0 %880, %v715
  %v882 = vpop.permute.xlu0 %881
  %885 = vset.pattern.permute.xlu0 0
  %886 = vperm.xlu0 %885, %v716
  %v887 = vpop.permute.xlu0 %886
  %890 = vset.pattern.permute.xlu0 0
  %891 = vperm.xlu0 %890, %v717
  %v892 = vpop.permute.xlu0 %891
  %895 = vset.pattern.permute.xlu0 0
  %896 = vperm.xlu0 %895, %v718
  %v897 = vpop.permute.xlu0 %896
  %900 = vset.pattern.permute.xlu0 0
  %901 = vperm.xlu0 %900, %v719
  %v902 = vpop.permute.xlu0 %901
  %905 = vset.pattern.permute.xlu0 0
  %906 = vperm.xlu0 %905, %v720
  %v907 = vpop.permute.xlu0 %906
  %910 = vset.pattern.permute.xlu0 0
  %911 = vperm.xlu0 %910, %v721
  %v912 = vpop.permute.xlu0 %911
  %915 = vset.pattern.permute.xlu0 0
  %916 = vperm.xlu0 %915, %v722
  %v917 = vpop.permute.xlu0 %916
  %920 = vset.pattern.permute.xlu0 0
  %921 = vperm.xlu0 %920, %v723
  %v922 = vpop.permute.xlu0 %921
  %925 = vset.pattern.permute.xlu0 0
  %926 = vperm.xlu0 %925, %v724
  %v927 = vpop.permute.xlu0 %926
  %930 = vset.pattern.permute.xlu0 0
  %931 = vperm.xlu0 %930, %v725
  %v932 = vpop.permute.xlu0 %931
  %935 = vset.pattern.permute.xlu0 0
  %936 = vperm.xlu0 %935, %v726
  %v937 = vpop.permute.xlu0 %936
  %940 = vset.pattern.permute.xlu0 0
  %941 = vperm.xlu0 %940, %v727
  %v942 = vpop.permute.xlu0 %941
  %945 = vset.pattern.permute.xlu0 0
  %946 = vperm.xlu0 %945, %v728
  %v947 = vpop.permute.xlu0 %946
  %950 = vset.pattern.permute.xlu0 0
  %951 = vperm.xlu0 %950, %v729
  %v952 = vpop.permute.xlu0 %951
  %955 = vset.pattern.permute.xlu0 0
  %956 = vperm.xlu0 %955, %v730
  %v957 = vpop.permute.xlu0 %956
  %960 = vset.pattern.permute.xlu0 0
  %961 = vperm.xlu0 %960, %v731
  %v962 = vpop.permute.xlu0 %961
  %965 = vset.pattern.permute.xlu0 0
  %966 = vperm.xlu0 %965, %v732
  %v967 = vpop.permute.xlu0 %966
  %970 = vset.pattern.permute.xlu0 0
  %971 = vperm.xlu0 %970, %v733
  %v972 = vpop.permute.xlu0 %971
  %975 = vset.pattern.permute.xlu0 0
  %976 = vperm.xlu0 %975, %v734
  %v977 = vpop.permute.xlu0 %976
  %980 = vset.pattern.permute.xlu0 0
  %981 = vperm.xlu0 %980, %v735
  %v982 = vpop.permute.xlu0 %981
  %985 = vset.pattern.permute.xlu0 0
  %986 = vperm.xlu0 %985, %v736
  %v987 = vpop.permute.xlu0 %986
  %990 = vset.pattern.permute.xlu0 0
  %991 = vperm.xlu0 %990, %v737
  %v992 = vpop.permute.xlu0 %991
  %995 = vset.pattern.permute.xlu0 0
  %996 = vperm.xlu0 %995, %v738
  %v997 = vpop.permute.xlu0 %996
  %1000 = vset.pattern.permute.xlu0 0
  %1001 = vperm.xlu0 %1000, %v739
  %v1002 = vpop.permute.xlu0 %1001
  %1005 = vset.pattern.permute.xlu0 0
  %1006 = vperm.xlu0 %1005, %v740
  %v1007 = vpop.permute.xlu0 %1006
  %1010 = vset.pattern.permute.xlu0 0
  %1011 = vperm.xlu0 %1010, %v741
  %v1012 = vpop.permute.xlu0 %1011
  %1015 = vset.pattern.permute.xlu0 0
  %1016 = vperm.xlu0 %1015, %v742
  %v1017 = vpop.permute.xlu0 %1016
  %1020 = vset.pattern.permute.xlu0 0
  %1021 = vperm.xlu0 %1020, %v743
  %v1022 = vpop.permute.xlu0 %1021
  %1025 = vset.pattern.permute.xlu0 0
  %1026 = vperm.xlu0 %1025, %v744
  %v1027 = vpop.permute.xlu0 %1026
  %1030 = vset.pattern.permute.xlu0 0
  %1031 = vperm.xlu0 %1030, %v745
  %v1032 = vpop.permute.xlu0 %1031
  %1035 = vset.pattern.permute.xlu0 0
  %1036 = vperm.xlu0 %1035, %v746
  %v1037 = vpop.permute.xlu0 %1036
  %1040 = vset.pattern.permute.xlu0 0
  %1041 = vperm.xlu0 %1040, %v747
  %v1042 = vpop.permute.xlu0 %1041
  %1045 = vset.pattern.permute.xlu0 0
  %1046 = vperm.xlu0 %1045, %v748
  %v1047 = vpop.permute.xlu0 %1046
  %1050 = vset.pattern.permute.xlu0 0
  %1051 = vperm.xlu0 %1050, %v749
  %v1052 = vpop.permute.xlu0 %1051
  %1055 = vset.pattern.permute.xlu0 0
  %1056 = vperm.xlu0 %1055, %v750
  %v1057 = vpop.permute.xlu0 %1056
  %1060 = vset.pattern.permute.xlu0 0
  %1061 = vperm.xlu0 %1060, %v751
  %v1062 = vpop.permute.xlu0 %1061
  %1065 = vset.pattern.permute.xlu0 0
  %1066 = vperm.xlu0 %1065, %v752
  %v1067 = vpop.permute.xlu0 %1066
  %1070 = vset.pattern.permute.xlu0 0
  %1071 = vperm.xlu0 %1070, %v753
  %v1072 = vpop.permute.xlu0 %1071
  %1075 = vset.pattern.permute.xlu0 0
  %1076 = vperm.xlu0 %1075, %v754
  %v1077 = vpop.permute.xlu0 %1076
  %1080 = vset.pattern.permute.xlu0 0
  %1081 = vperm.xlu0 %1080, %v755
  %v1082 = vpop.permute.xlu0 %1081
  %1085 = vset.pattern.permute.xlu0 0
  %1086 = vperm.xlu0 %1085, %v756
  %v1087 = vpop.permute.xlu0 %1086
  %1090 = vset.pattern.permute.xlu0 0
  %1091 = vperm.xlu0 %1090, %v757
  %v1092 = vpop.permute.xlu0 %1091
  %1095 = vset.pattern.permute.xlu0 0
  %1096 = vperm.xlu0 %1095, %v758
  %v1097 = vpop.permute.xlu0 %1096
  %1100 = vset.pattern.permute.xlu0 0
  %1101 = vperm.xlu0 %1100, %v759
  %v1102 = vpop.permute.xlu0 %1101
  %1105 = vset.pattern.permute.xlu0 0
  %1106 = vperm.xlu0 %1105, %v760
  %v1107 = vpop.permute.xlu0 %1106
  %1110 = vset.pattern.permute.xlu0 0
  %1111 = vperm.xlu0 %1110, %v761
  %v1112 = vpop.permute.xlu0 %1111
  %1115 = vset.pattern.permute.xlu0 0
  %1116 = vperm.xlu0 %1115, %v762
  %v1117 = vpop.permute.xlu0 %1116
  %1120 = vset.pattern.permute.xlu0 0
  %1121 = vperm.xlu0 %1120, %v763
  %v1122 = vpop.permute.xlu0 %1121
  %1125 = vset.pattern.permute.xlu0 0
  %1126 = vperm.xlu0 %1125, %v764
  %v1127 = vpop.permute.xlu0 %1126
  %1130 = vset.pattern.permute.xlu0 0
  %1131 = vperm.xlu0 %1130, %v765
  %v1132 = vpop.permute.xlu0 %1131
  %1135 = vset.pattern.permute.xlu0 0
  %1136 = vperm.xlu0 %1135, %v766
  %v1137 = vpop.permute.xlu0 %1136
  %1140 = vset.pattern.permute.xlu0 0
  %1141 = vperm.xlu0 %1140, %v767
  %v1142 = vpop.permute.xlu0 %1141
  %1145 = vset.pattern.permute.xlu0 0
  %1146 = vperm.xlu0 %1145, %v768
  %v1147 = vpop.permute.xlu0 %1146
  %1150 = vset.pattern.permute.xlu0 0
  %1151 = vperm.xlu0 %1150, %v769
  %v1152 = vpop.permute.xlu0 %1151
  %1155 = vset.pattern.permute.xlu0 0
  %1156 = vperm.xlu0 %1155, %v770
  %v1157 = vpop.permute.xlu0 %1156
  %1160 = vset.pattern.permute.xlu0 0
  %1161 = vperm.xlu0 %1160, %v771
  %v1162 = vpop.permute.xlu0 %1161
  %1165 = vset.pattern.permute.xlu0 0
  %1166 = vperm.xlu0 %1165, %v772
  %v1167 = vpop.permute.xlu0 %1166
  %1170 = vset.pattern.permute.xlu0 0
  %1171 = vperm.xlu0 %1170, %v773
  %v1172 = vpop.permute.xlu0 %1171
  %1175 = vset.pattern.permute.xlu0 0
  %1176 = vperm.xlu0 %1175, %v774
  %v1177 = vpop.permute.xlu0 %1176
  %1180 = vset.pattern.permute.xlu0 0
  %1181 = vperm.xlu0 %1180, %v775
  %v1182 = vpop.permute.xlu0 %1181
  %1185 = vset.pattern.permute.xlu0 0
  %1186 = vperm.xlu0 %1185, %v776
  %v1187 = vpop.permute.xlu0 %1186
  %1190 = vset.pattern.permute.xlu0 0
  %1191 = vperm.xlu0 %1190, %v777
  %v1192 = vpop.permute.xlu0 %1191
  %1195 = vset.pattern.permute.xlu0 0
  %1196 = vperm.xlu0 %1195, %v778
  %v1197 = vpop.permute.xlu0 %1196
  %1200 = vset.pattern.permute.xlu0 0
  %1201 = vperm.xlu0 %1200, %v779
  %v1202 = vpop.permute.xlu0 %1201
  %1205 = vset.pattern.permute.xlu0 0
  %1206 = vperm.xlu0 %1205, %v780
  %v1207 = vpop.permute.xlu0 %1206
  %1210 = vset.pattern.permute.xlu0 0
  %1211 = vperm.xlu0 %1210, %v781
  %v1212 = vpop.permute.xlu0 %1211
  %1215 = vset.pattern.permute.xlu0 0
  %1216 = vperm.xlu0 %1215, %v782
  %v1217 = vpop.permute.xlu0 %1216
  %1220 = vset.pattern.permute.xlu0 0
  %1221 = vperm.xlu0 %1220, %v783
  %v1222 = vpop.permute.xlu0 %1221
  %1225 = vset.pattern.permute.xlu0 0
  %1226 = vperm.xlu0 %1225, %v784
  %v1227 = vpop.permute.xlu0 %1226
  %1230 = vset.pattern.permute.xlu0 0
  %1231 = vperm.xlu0 %1230, %v785
  %v1232 = vpop.permute.xlu0 %1231
  %1235 = vset.pattern.permute.xlu0 0
  %1236 = vperm.xlu0 %1235, %v786
  %v1237 = vpop.permute.xlu0 %1236
  %1240 = vset.pattern.permute.xlu0 0
  %1241 = vperm.xlu0 %1240, %v787
  %v1242 = vpop.permute.xlu0 %1241
  %1245 = vset.pattern.permute.xlu0 0
  %1246 = vperm.xlu0 %1245, %v788
  %v1247 = vpop.permute.xlu0 %1246
  %1250 = vset.pattern.permute.xlu0 0
  %1251 = vperm.xlu0 %1250, %v789
  %v1252 = vpop.permute.xlu0 %1251
  %1255 = vset.pattern.permute.xlu0 0
  %1256 = vperm.xlu0 %1255, %v790
  %v1257 = vpop.permute.xlu0 %1256
  %1260 = vset.pattern.permute.xlu0 0
  %1261 = vperm.xlu0 %1260, %v791
  %v1262 = vpop.permute.xlu0 %1261
  %1265 = vset.pattern.permute.xlu0 0
  %1266 = vperm.xlu0 %1265, %v792
  %v1267 = vpop.permute.xlu0 %1266
  %1270 = vset.pattern.permute.xlu0 0
  %1271 = vperm.xlu0 %1270, %v793
  %v1272 = vpop.permute.xlu0 %1271
  %1275 = vset.pattern.permute.xlu0 0
  %1276 = vperm.xlu0 %1275, %v794
  %v1277 = vpop.permute.xlu0 %1276
  %1280 = vset.pattern.permute.xlu0 0
  %1281 = vperm.xlu0 %1280, %v795
  %v1282 = vpop.permute.xlu0 %1281
  %1285 = vset.pattern.permute.xlu0 0
  %1286 = vperm.xlu0 %1285, %v796
  %v1287 = vpop.permute.xlu0 %1286
  %1290 = vset.pattern.permute.xlu0 0
  %1291 = vperm.xlu0 %1290, %v797
  %v1292 = vpop.permute.xlu0 %1291
  %1295 = vset.pattern.permute.xlu0 0
  %1296 = vperm.xlu0 %1295, %v798
  %v1297 = vpop.permute.xlu0 %1296
  %1300 = vset.pattern.permute.xlu0 0
  %1301 = vperm.xlu0 %1300, %v799
  %v1302 = vpop.permute.xlu0 %1301
  %1305 = vset.pattern.permute.xlu0 0
  %1306 = vperm.xlu0 %1305, %v800
  %v1307 = vpop.permute.xlu0 %1306
  %1310 = vset.pattern.permute.xlu0 0
  %1311 = vperm.xlu0 %1310, %v801
  %v1312 = vpop.permute.xlu0 %1311
  %1315 = vset.pattern.permute.xlu0 0
  %1316 = vperm.xlu0 %1315, %v802
  %v1317 = vpop.permute.xlu0 %1316
  %1320 = vset.pattern.permute.xlu0 0
  %1321 = vperm.xlu0 %1320, %v803
  %v1322 = vpop.permute.xlu0 %1321
  %1325 = vset.pattern.permute.xlu0 0
  %1326 = vperm.xlu0 %1325, %v804
  %v1327 = vpop.permute.xlu0 %1326
  %1330 = vset.pattern.permute.xlu0 0
  %1331 = vperm.xlu0 %1330, %v805
  %v1332 = vpop.permute.xlu0 %1331
  %1335 = vset.pattern.permute.xlu0 0
  %1336 = vperm.xlu0 %1335, %v806
  %v1337 = vpop.permute.xlu0 %1336
  %1340 = vset.pattern.permute.xlu0 0
  %1341 = vperm.xlu0 %1340, %v807
  %v1342 = vpop.permute.xlu0 %1341
  %1345 = vset.pattern.permute.xlu0 0
  %1346 = vperm.xlu0 %1345, %v808
  %v1347 = vpop.permute.xlu0 %1346
  %1350 = vset.pattern.permute.xlu0 0
  %1351 = vperm.xlu0 %1350, %v809
  %v1352 = vpop.permute.xlu0 %1351
  %1355 = vset.pattern.permute.xlu0 0
  %1356 = vperm.xlu0 %1355, %v810
  %v1357 = vpop.permute.xlu0 %1356
  %1360 = vset.pattern.permute.xlu0 0
  %1361 = vperm.xlu0 %1360, %v811
  %v1362 = vpop.permute.xlu0 %1361
  %1365 = vset.pattern.permute.xlu0 0
  %1366 = vperm.xlu0 %1365, %v812
  %v1367 = vpop.permute.xlu0 %1366
  %1370 = vset.pattern.permute.xlu0 0
  %1371 = vperm.xlu0 %1370, %v813
  %v1372 = vpop.permute.xlu0 %1371
  %1375 = vset.pattern.permute.xlu0 0
  %1376 = vperm.xlu0 %1375, %v814
  %v1377 = vpop.permute.xlu0 %1376
  %1380 = vset.pattern.permute.xlu0 0
  %1381 = vperm.xlu0 %1380, %v815
  %v1382 = vpop.permute.xlu0 %1381
  %1385 = vset.pattern.permute.xlu0 0
  %1386 = vperm.xlu0 %1385, %v816
  %v1387 = vpop.permute.xlu0 %1386
  %1390 = vset.pattern.permute.xlu0 0
  %1391 = vperm.xlu0 %1390, %v817
  %v1392 = vpop.permute.xlu0 %1391
  %1395 = vset.pattern.permute.xlu0 0
  %1396 = vperm.xlu0 %1395, %v818
  %v1397 = vpop.permute.xlu0 %1396
  %1400 = vset.pattern.permute.xlu0 0
  %1401 = vperm.xlu0 %1400, %v819
  %v1402 = vpop.permute.xlu0 %1401
  %1405 = vset.pattern.permute.xlu0 0
  %1406 = vperm.xlu0 %1405, %v820
  %v1407 = vpop.permute.xlu0 %1406
  %1410 = vset.pattern.permute.xlu0 0
  %1411 = vperm.xlu0 %1410, %v821
  %v1412 = vpop.permute.xlu0 %1411
  %1415 = vset.pattern.permute.xlu0 0
  %1416 = vperm.xlu0 %1415, %v822
  %v1417 = vpop.permute.xlu0 %1416
  %1420 = vset.pattern.permute.xlu0 0
  %1421 = vperm.xlu0 %1420, %v823
  %v1422 = vpop.permute.xlu0 %1421
  %1425 = vset.pattern.permute.xlu0 0
  %1426 = vperm.xlu0 %1425, %v824
  %v1427 = vpop.permute.xlu0 %1426
  %1430 = vset.pattern.permute.xlu0 0
  %1431 = vperm.xlu0 %1430, %v825
  %v1432 = vpop.permute.xlu0 %1431
  %1435 = vset.pattern.permute.xlu0 0
  %1436 = vperm.xlu0 %1435, %v826
  %v1437 = vpop.permute.xlu0 %1436
  %1440 = vset.pattern.permute.xlu0 0
  %1441 = vperm.xlu0 %1440, %v827
  %v1442 = vpop.permute.xlu0 %1441
  %1445 = vset.pattern.permute.xlu0 0
  %1446 = vperm.xlu0 %1445, %v828
  %v1447 = vpop.permute.xlu0 %1446
  %1450 = vset.pattern.permute.xlu0 0
  %1451 = vperm.xlu0 %1450, %v829
  %v1452 = vpop.permute.xlu0 %1451
  %1455 = vset.pattern.permute.xlu0 0
  %1456 = vperm.xlu0 %1455, %v830
  %v1457 = vpop.permute.xlu0 %1456
  %1460 = vset.pattern.permute.xlu0 0
  %1461 = vperm.xlu0 %1460, %v831
  %v1462 = vpop.permute.xlu0 %1461
  %1465 = vset.pattern.permute.xlu0 0
  %1466 = vperm.xlu0 %1465, %v832
  %v1467 = vpop.permute.xlu0 %1466
  %1470 = vset.pattern.permute.xlu0 0
  %1471 = vperm.xlu0 %1470, %v833
  %v1472 = vpop.permute.xlu0 %1471
  %1475 = vset.pattern.permute.xlu0 0
  %1476 = vperm.xlu0 %1475, %v834
  %v1477 = vpop.permute.xlu0 %1476
  %1480 = vset.pattern.permute.xlu0 0
  %1481 = vperm.xlu0 %1480, %v835
  %v1482 = vpop.permute.xlu0 %1481
  %1485 = vset.pattern.permute.xlu0 0
  %1486 = vperm.xlu0 %1485, %v836
  %v1487 = vpop.permute.xlu0 %1486
  %1490 = vset.pattern.permute.xlu0 0
  %1491 = vperm.xlu0 %1490, %v837
  %v1492 = vpop.permute.xlu0 %1491
  %1495 = vset.pattern.permute.xlu0 0
  %1496 = vperm.xlu0 %1495, %v838
  %v1497 = vpop.permute.xlu0 %1496
  %1500 = vset.pattern.permute.xlu0 0
  %1501 = vperm.xlu0 %1500, %v839
  %v1502 = vpop.permute.xlu0 %1501
  %1505 = vset.pattern.permute.xlu0 0
  %1506 = vperm.xlu0 %1505, %v840
  %v1507 = vpop.permute.xlu0 %1506
  %1510 = vset.pattern.permute.xlu0 0
  %1511 = vperm.xlu0 %1510, %v841
  %v1512 = vpop.permute.xlu0 %1511
  %1515 = vset.pattern.permute.xlu0 0
  %1516 = vperm.xlu0 %1515, %v842
  %v1517 = vpop.permute.xlu0 %1516
  %1520 = vset.pattern.permute.xlu0 0
  %1521 = vperm.xlu0 %1520, %v843
  %v1522 = vpop.permute.xlu0 %1521
  %1525 = vset.pattern.permute.xlu0 0
  %1526 = vperm.xlu0 %1525, %v844
  %v1527 = vpop.permute.xlu0 %1526
  %1530 = vset.pattern.permute.xlu0 0
  %1531 = vperm.xlu0 %1530, %v845
  %v1532 = vpop.permute.xlu0 %1531
  %1535 = vset.pattern.permute.xlu0 0
  %1536 = vperm.xlu0 %1535, %v846
  %v1537 = vpop.permute.xlu0 %1536
  %1540 = vset.pattern.permute.xlu0 0
  %1541 = vperm.xlu0 %1540, %v847
  %v1542 = vpop.permute.xlu0 %1541
  %1545 = vset.pattern.permute.xlu0 0
  %1546 = vperm.xlu0 %1545, %v848
  %v1547 = vpop.permute.xlu0 %1546
  %1550 = vset.pattern.permute.xlu0 0
  %1551 = vperm.xlu0 %1550, %v849
  %v1552 = vpop.permute.xlu0 %1551
  %1555 = vset.pattern.permute.xlu0 0
  %1556 = vperm.xlu0 %1555, %v850
  %v1557 = vpop.permute.xlu0 %1556
  %1560 = vset.pattern.permute.xlu0 0
  %1561 = vperm.xlu0 %1560, %v851
  %v1562 = vpop.permute.xlu0 %1561
  %1565 = vset.pattern.permute.xlu0 0
  %1566 = vperm.xlu0 %1565, %v852
  %v1567 = vpop.permute.xlu0 %1566
  %1570 = vset.pattern.permute.xlu0 0
  %1571 = vperm.xlu0 %1570, %v853
  %v1572 = vpop.permute.xlu0 %1571
  %v2150 = vunpack.c.l.b16 %v134
  %v2151 = vunpack.c.h.b16 %v134
  %v2152 = vunpack.c.l.b16 %v135
  %v2153 = vunpack.c.h.b16 %v135
  %v2154 = vunpack.c.l.b16 %v136
  %v2155 = vunpack.c.h.b16 %v136
  %v2156 = vunpack.c.l.b16 %v137
  %v2157 = vunpack.c.l.b16 %v138
  %v2158 = vunpack.c.h.b16 %v138
  %v2159 = vunpack.c.l.b16 %v139
  %v2160 = vunpack.c.h.b16 %v139
  %v2161 = vunpack.c.l.b16 %v140
  %v2162 = vunpack.c.h.b16 %v140
  %v2163 = vunpack.c.l.b16 %v141
  %v2164 = vunpack.c.l.b16 %v142
  %v2165 = vunpack.c.h.b16 %v142
  %v2166 = vunpack.c.l.b16 %v143
  %v2167 = vunpack.c.h.b16 %v143
  %v2168 = vunpack.c.l.b16 %v144
  %v2169 = vunpack.c.h.b16 %v144
  %v2170 = vunpack.c.l.b16 %v145
  %v2171 = vunpack.c.l.b16 %v146
  %v2172 = vunpack.c.h.b16 %v146
  %v2173 = vunpack.c.l.b16 %v147
  %v2174 = vunpack.c.h.b16 %v147
  %v2175 = vunpack.c.l.b16 %v148
  %v2176 = vunpack.c.h.b16 %v148
  %v2177 = vunpack.c.l.b16 %v149
  %v2178 = vunpack.c.l.b16 %v150
  %v2179 = vunpack.c.h.b16 %v150
  %v2180 = vunpack.c.l.b16 %v151
  %v2181 = vunpack.c.h.b16 %v151
  %v2182 = vunpack.c.l.b16 %v152
  %v2183 = vunpack.c.h.b16 %v152
  %v2184 = vunpack.c.l.b16 %v153
  %v2185 = vunpack.c.l.b16 %v154
  %v2186 = vunpack.c.h.b16 %v154
  %v2187 = vunpack.c.l.b16 %v155
  %v2188 = vunpack.c.h.b16 %v155
  %v2189 = vunpack.c.l.b16 %v156
  %v2190 = vunpack.c.h.b16 %v156
  %v2191 = vunpack.c.l.b16 %v157
  %v2192 = vunpack.c.l.b16 %v158
  %v2193 = vunpack.c.h.b16 %v158
  %v2194 = vunpack.c.l.b16 %v159
  %v2195 = vunpack.c.h.b16 %v159
  %v2196 = vunpack.c.l.b16 %v160
  %v2197 = vunpack.c.h.b16 %v160
  %v2198 = vunpack.c.l.b16 %v161
  %v2199 = vunpack.c.l.b16 %v162
  %v2200 = vunpack.c.h.b16 %v162
  %v2201 = vunpack.c.l.b16 %v163
  %v2202 = vunpack.c.h.b16 %v163
  %v2203 = vunpack.c.l.b16 %v164
  %v2204 = vunpack.c.h.b16 %v164
  %v2205 = vunpack.c.l.b16 %v165
  %v2206 = vunpack.c.l.b16 %v166
  %v2207 = vunpack.c.h.b16 %v166
  %v2208 = vunpack.c.l.b16 %v167
  %v2209 = vunpack.c.h.b16 %v167
  %v2210 = vunpack.c.l.b16 %v168
  %v2211 = vunpack.c.h.b16 %v168
  %v2212 = vunpack.c.l.b16 %v169
  %v2213 = vunpack.c.l.b16 %v170
  %v2214 = vunpack.c.h.b16 %v170
  %v2215 = vunpack.c.l.b16 %v171
  %v2216 = vunpack.c.h.b16 %v171
  %v2217 = vunpack.c.l.b16 %v172
  %v2218 = vunpack.c.h.b16 %v172
  %v2219 = vunpack.c.l.b16 %v173
  %v2220 = vunpack.c.l.b16 %v174
  %v2221 = vunpack.c.h.b16 %v174
  %v2222 = vunpack.c.l.b16 %v175
  %v2223 = vunpack.c.h.b16 %v175
  %v2224 = vunpack.c.l.b16 %v176
  %v2225 = vunpack.c.h.b16 %v176
  %v2226 = vunpack.c.l.b16 %v177
  %v2227 = vunpack.c.l.b16 %v178
  %v2228 = vunpack.c.h.b16 %v178
  %v2229 = vunpack.c.l.b16 %v179
  %v2230 = vunpack.c.h.b16 %v179
  %v2231 = vunpack.c.l.b16 %v180
  %v2232 = vunpack.c.h.b16 %v180
  %v2233 = vunpack.c.l.b16 %v181
  %v2234 = vunpack.c.l.b16 %v182
  %v2235 = vunpack.c.h.b16 %v182
  %v2236 = vunpack.c.l.b16 %v183
  %v2237 = vunpack.c.h.b16 %v183
  %v2238 = vunpack.c.l.b16 %v184
  %v2239 = vunpack.c.h.b16 %v184
  %v2240 = vunpack.c.l.b16 %v185
  %v2241 = vunpack.c.l.b16 %v186
  %v2242 = vunpack.c.h.b16 %v186
  %v2243 = vunpack.c.l.b16 %v187
  %v2244 = vunpack.c.h.b16 %v187
  %v2245 = vunpack.c.l.b16 %v188
  %v2246 = vunpack.c.h.b16 %v188
  %v2247 = vunpack.c.l.b16 %v189
  %v2248 = vunpack.c.l.b16 %v190
  %v2249 = vunpack.c.h.b16 %v190
  %v2250 = vunpack.c.l.b16 %v191
  %v2251 = vunpack.c.h.b16 %v191
  %v2252 = vunpack.c.l.b16 %v192
  %v2253 = vunpack.c.h.b16 %v192
  %v2254 = vunpack.c.l.b16 %v193
  %v2255 = vunpack.c.l.b16 %v194
  %v2256 = vunpack.c.h.b16 %v194
  %v2257 = vunpack.c.l.b16 %v195
  %v2258 = vunpack.c.h.b16 %v195
  %v2259 = vunpack.c.l.b16 %v196
  %v2260 = vunpack.c.h.b16 %v196
  %v2261 = vunpack.c.l.b16 %v197
  %v2262 = vunpack.c.l.b16 %v198
  %v2263 = vunpack.c.h.b16 %v198
  %v2264 = vunpack.c.l.b16 %v199
  %v2265 = vunpack.c.h.b16 %v199
  %v2266 = vunpack.c.l.b16 %v200
  %v2267 = vunpack.c.h.b16 %v200
  %v2268 = vunpack.c.l.b16 %v201
  %v2269 = vunpack.c.l.b16 %v202
  %v2270 = vunpack.c.h.b16 %v202
  %v2271 = vunpack.c.l.b16 %v203
  %v2272 = vunpack.c.h.b16 %v203
  %v2273 = vunpack.c.l.b16 %v204
  %v2274 = vunpack.c.h.b16 %v204
  %v2275 = vunpack.c.l.b16 %v205
  %v2276 = vunpack.c.l.b16 %v206
  %v2277 = vunpack.c.h.b16 %v206
  %v2278 = vunpack.c.l.b16 %v207
  %v2279 = vunpack.c.h.b16 %v207
  %v2280 = vunpack.c.l.b16 %v208
  %v2281 = vunpack.c.h.b16 %v208
  %v2282 = vunpack.c.l.b16 %v209
  %v2283 = vunpack.c.l.b16 %v210
  %v2284 = vunpack.c.h.b16 %v210
  %v2285 = vunpack.c.l.b16 %v211
  %v2286 = vunpack.c.h.b16 %v211
  %v2287 = vunpack.c.l.b16 %v212
  %v2288 = vunpack.c.h.b16 %v212
  %v2289 = vunpack.c.l.b16 %v213
  %v2290 = vunpack.c.l.b16 %v214
  %v2291 = vunpack.c.h.b16 %v214
  %v2292 = vunpack.c.l.b16 %v215
  %v2293 = vunpack.c.h.b16 %v215
  %v2294 = vunpack.c.l.b16 %v216
  %v2295 = vunpack.c.h.b16 %v216
  %v2296 = vunpack.c.l.b16 %v217
  %v2297 = vunpack.c.l.b16 %v218
  %v2298 = vunpack.c.h.b16 %v218
  %v2299 = vunpack.c.l.b16 %v219
  %v2300 = vunpack.c.h.b16 %v219
  %v2301 = vunpack.c.l.b16 %v220
  %v2302 = vunpack.c.h.b16 %v220
  %v2303 = vunpack.c.l.b16 %v221
  %v2304 = vunpack.c.l.b16 %v222
  %v2305 = vunpack.c.h.b16 %v222
  %v2306 = vunpack.c.l.b16 %v223
  %v2307 = vunpack.c.h.b16 %v223
  %v2308 = vunpack.c.l.b16 %v224
  %v2309 = vunpack.c.h.b16 %v224
  %v2310 = vunpack.c.l.b16 %v225
  %v2311 = vunpack.c.l.b16 %v226
  %v2312 = vunpack.c.h.b16 %v226
  %v2313 = vunpack.c.l.b16 %v227
  %v2314 = vunpack.c.h.b16 %v227
  %v2315 = vunpack.c.l.b16 %v228
  %v2316 = vunpack.c.h.b16 %v228
  %v2317 = vunpack.c.l.b16 %v229
  %v2318 = vunpack.c.l.b16 %v230
  %v2319 = vunpack.c.h.b16 %v230
  %v2320 = vunpack.c.l.b16 %v231
  %v2321 = vunpack.c.h.b16 %v231
  %v2322 = vunpack.c.l.b16 %v232
  %v2323 = vunpack.c.h.b16 %v232
  %v2324 = vunpack.c.l.b16 %v233
  %v2325 = vunpack.c.l.b16 %v234
  %v2326 = vunpack.c.h.b16 %v234
  %v2327 = vunpack.c.l.b16 %v235
  %v2328 = vunpack.c.h.b16 %v235
  %v2329 = vunpack.c.l.b16 %v236
  %v2330 = vunpack.c.h.b16 %v236
  %v2331 = vunpack.c.l.b16 %v237
  %v2332 = vunpack.c.l.b16 %v238
  %v2333 = vunpack.c.h.b16 %v238
  %v2334 = vunpack.c.l.b16 %v239
  %v2335 = vunpack.c.h.b16 %v239
  %v2336 = vunpack.c.l.b16 %v240
  %v2337 = vunpack.c.h.b16 %v240
  %v2338 = vunpack.c.l.b16 %v241
  %v2339 = vunpack.c.l.b16 %v242
  %v2340 = vunpack.c.h.b16 %v242
  %v2341 = vunpack.c.l.b16 %v243
  %v2342 = vunpack.c.h.b16 %v243
  %v2343 = vunpack.c.l.b16 %v244
  %v2344 = vunpack.c.h.b16 %v244
  %v2345 = vunpack.c.l.b16 %v245
  %v2346 = vunpack.c.l.b16 %v246
  %v2347 = vunpack.c.h.b16 %v246
  %v2348 = vunpack.c.l.b16 %v247
  %v2349 = vunpack.c.h.b16 %v247
  %v2350 = vunpack.c.l.b16 %v248
  %v2351 = vunpack.c.h.b16 %v248
  %v2352 = vunpack.c.l.b16 %v249
  %v2353 = vunpack.c.l.b16 %v250
  %v2354 = vunpack.c.h.b16 %v250
  %v2355 = vunpack.c.l.b16 %v251
  %v2356 = vunpack.c.h.b16 %v251
  %v2357 = vunpack.c.l.b16 %v252
  %v2358 = vunpack.c.h.b16 %v252
  %v2359 = vunpack.c.l.b16 %v253
  %v2360 = vunpack.c.l.b16 %v254
  %v2361 = vunpack.c.h.b16 %v254
  %v2362 = vunpack.c.l.b16 %v255
  %v2363 = vunpack.c.h.b16 %v255
  %v2364 = vunpack.c.l.b16 %v256
  %v2365 = vunpack.c.h.b16 %v256
  %v2366 = vunpack.c.l.b16 %v257
  %v2367 = vunpack.c.l.b16 %v258
  %v2368 = vunpack.c.h.b16 %v258
  %v2369 = vunpack.c.l.b16 %v259
  %v2370 = vunpack.c.h.b16 %v259
  %v2371 = vunpack.c.l.b16 %v260
  %v2372 = vunpack.c.h.b16 %v260
  %v2373 = vunpack.c.l.b16 %v261
  %v2374 = vunpack.c.l.b16 %v262
  %v2375 = vunpack.c.h.b16 %v262
  %v2376 = vunpack.c.l.b16 %v263
  %v2377 = vunpack.c.h.b16 %v263
  %v2378 = vunpack.c.l.b16 %v264
  %v2379 = vunpack.c.h.b16 %v264
  %v2380 = vunpack.c.l.b16 %v265
  %v2381 = vunpack.c.l.b16 %v266
  %v2382 = vunpack.c.h.b16 %v266
  %v2383 = vunpack.c.l.b16 %v267
  %v2384 = vunpack.c.h.b16 %v267
  %v2385 = vunpack.c.l.b16 %v268
  %v2386 = vunpack.c.h.b16 %v268
  %v2387 = vunpack.c.l.b16 %v269
  %v2388 = vunpack.c.l.b16 %v270
  %v2389 = vunpack.c.h.b16 %v270
  %v2390 = vunpack.c.l.b16 %v271
  %v2391 = vunpack.c.h.b16 %v271
  %v2392 = vunpack.c.l.b16 %v272
  %v2393 = vunpack.c.h.b16 %v272
  %v2394 = vunpack.c.l.b16 %v273
  %v2395 = vunpack.c.l.b16 %v274
  %v2396 = vunpack.c.h.b16 %v274
  %v2397 = vunpack.c.l.b16 %v275
  %v2398 = vunpack.c.h.b16 %v275
  %v2399 = vunpack.c.l.b16 %v276
  %v2400 = vunpack.c.h.b16 %v276
  %v2401 = vunpack.c.l.b16 %v277
  %v2402 = vunpack.c.l.b16 %v278
  %v2403 = vunpack.c.h.b16 %v278
  %v2404 = vunpack.c.l.b16 %v279
  %v2405 = vunpack.c.h.b16 %v279
  %v2406 = vunpack.c.l.b16 %v280
  %v2407 = vunpack.c.h.b16 %v280
  %v2408 = vunpack.c.l.b16 %v281
  %v2409 = vunpack.c.l.b16 %v282
  %v2410 = vunpack.c.h.b16 %v282
  %v2411 = vunpack.c.l.b16 %v283
  %v2412 = vunpack.c.h.b16 %v283
  %v2413 = vunpack.c.l.b16 %v284
  %v2414 = vunpack.c.h.b16 %v284
  %v2415 = vunpack.c.l.b16 %v285
  %v2416 = vunpack.c.l.b16 %v286
  %v2417 = vunpack.c.h.b16 %v286
  %v2418 = vunpack.c.l.b16 %v287
  %v2419 = vunpack.c.h.b16 %v287
  %v2420 = vunpack.c.l.b16 %v288
  %v2421 = vunpack.c.h.b16 %v288
  %v2422 = vunpack.c.l.b16 %v289
  %v2423 = vunpack.c.l.b16 %v290
  %v2424 = vunpack.c.h.b16 %v290
  %v2425 = vunpack.c.l.b16 %v291
  %v2426 = vunpack.c.h.b16 %v291
  %v2427 = vunpack.c.l.b16 %v292
  %v2428 = vunpack.c.h.b16 %v292
  %v2429 = vunpack.c.l.b16 %v293
  %v2430 = vunpack.c.l.b16 %v294
  %v2431 = vunpack.c.h.b16 %v294
  %v2432 = vunpack.c.l.b16 %v295
  %v2433 = vunpack.c.h.b16 %v295
  %v2434 = vunpack.c.l.b16 %v296
  %v2435 = vunpack.c.h.b16 %v296
  %v2436 = vunpack.c.l.b16 %v297
  %v2437 = vunpack.c.l.b16 %v298
  %v2438 = vunpack.c.h.b16 %v298
  %v2439 = vunpack.c.l.b16 %v299
  %v2440 = vunpack.c.h.b16 %v299
  %v2441 = vunpack.c.l.b16 %v300
  %v2442 = vunpack.c.h.b16 %v300
  %v2443 = vunpack.c.l.b16 %v301
  %v2444 = vunpack.c.l.b16 %v302
  %v2445 = vunpack.c.h.b16 %v302
  %v2446 = vunpack.c.l.b16 %v303
  %v2447 = vunpack.c.h.b16 %v303
  %v2448 = vunpack.c.l.b16 %v304
  %v2449 = vunpack.c.h.b16 %v304
  %v2450 = vunpack.c.l.b16 %v305
  %v2451 = vunpack.c.l.b16 %v306
  %v2452 = vunpack.c.h.b16 %v306
  %v2453 = vunpack.c.l.b16 %v307
  %v2454 = vunpack.c.h.b16 %v307
  %v2455 = vunpack.c.l.b16 %v308
  %v2456 = vunpack.c.h.b16 %v308
  %v2457 = vunpack.c.l.b16 %v309
  %v2458 = vunpack.c.l.b16 %v310
  %v2459 = vunpack.c.h.b16 %v310
  %v2460 = vunpack.c.l.b16 %v311
  %v2461 = vunpack.c.h.b16 %v311
  %v2462 = vunpack.c.l.b16 %v312
  %v2463 = vunpack.c.h.b16 %v312
  %v2464 = vunpack.c.l.b16 %v313
  %v2465 = vunpack.c.l.b16 %v314
  %v2466 = vunpack.c.h.b16 %v314
  %v2467 = vunpack.c.l.b16 %v315
  %v2468 = vunpack.c.h.b16 %v315
  %v2469 = vunpack.c.l.b16 %v316
  %v2470 = vunpack.c.h.b16 %v316
  %v2471 = vunpack.c.l.b16 %v317
  %v2472 = vunpack.c.l.b16 %v318
  %v2473 = vunpack.c.h.b16 %v318
  %v2474 = vunpack.c.l.b16 %v319
  %v2475 = vunpack.c.h.b16 %v319
  %v2476 = vunpack.c.l.b16 %v320
  %v2477 = vunpack.c.h.b16 %v320
  %v2478 = vunpack.c.l.b16 %v321
  %v2479 = vunpack.c.l.b16 %v322
  %v2480 = vunpack.c.h.b16 %v322
  %v2481 = vunpack.c.l.b16 %v323
  %v2482 = vunpack.c.h.b16 %v323
  %v2483 = vunpack.c.l.b16 %v324
  %v2484 = vunpack.c.h.b16 %v324
  %v2485 = vunpack.c.l.b16 %v325
  %v2486 = vunpack.c.l.b16 %v326
  %v2487 = vunpack.c.h.b16 %v326
  %v2488 = vunpack.c.l.b16 %v327
  %v2489 = vunpack.c.h.b16 %v327
  %v2490 = vunpack.c.l.b16 %v328
  %v2491 = vunpack.c.h.b16 %v328
  %v2492 = vunpack.c.l.b16 %v329
  %v2493 = vunpack.c.l.b16 %v330
  %v2494 = vunpack.c.h.b16 %v330
  %v2495 = vunpack.c.l.b16 %v331
  %v2496 = vunpack.c.h.b16 %v331
  %v2497 = vunpack.c.l.b16 %v332
  %v2498 = vunpack.c.h.b16 %v332
  %v2499 = vunpack.c.l.b16 %v333
  %v2500 = vunpack.c.l.b16 %v334
  %v2501 = vunpack.c.h.b16 %v334
  %v2502 = vunpack.c.l.b16 %v335
  %v2503 = vunpack.c.h.b16 %v335
  %v2504 = vunpack.c.l.b16 %v336
  %v2505 = vunpack.c.h.b16 %v336
  %v2506 = vunpack.c.l.b16 %v337
  %v2507 = vunpack.c.l.b16 %v338
  %v2508 = vunpack.c.h.b16 %v338
  %v2509 = vunpack.c.l.b16 %v339
  %v2510 = vunpack.c.h.b16 %v339
  %v2511 = vunpack.c.l.b16 %v340
  %v2512 = vunpack.c.h.b16 %v340
  %v2513 = vunpack.c.l.b16 %v341
  %v2514 = vunpack.c.l.b16 %v342
  %v2515 = vunpack.c.h.b16 %v342
  %v2516 = vunpack.c.l.b16 %v343
  %v2517 = vunpack.c.h.b16 %v343
  %v2518 = vunpack.c.l.b16 %v344
  %v2519 = vunpack.c.h.b16 %v344
  %v2520 = vunpack.c.l.b16 %v345
  %v2521 = vunpack.c.l.b16 %v346
  %v2522 = vunpack.c.h.b16 %v346
  %v2523 = vunpack.c.l.b16 %v347
  %v2524 = vunpack.c.h.b16 %v347
  %v2525 = vunpack.c.l.b16 %v348
  %v2526 = vunpack.c.h.b16 %v348
  %v2527 = vunpack.c.l.b16 %v349
  %v2528 = vunpack.c.l.b16 %v350
  %v2529 = vunpack.c.h.b16 %v350
  %v2530 = vunpack.c.l.b16 %v351
  %v2531 = vunpack.c.h.b16 %v351
  %v2532 = vunpack.c.l.b16 %v352
  %v2533 = vunpack.c.h.b16 %v352
  %v2534 = vunpack.c.l.b16 %v353
  %v2535 = vunpack.c.l.b16 %v354
  %v2536 = vunpack.c.h.b16 %v354
  %v2537 = vunpack.c.l.b16 %v355
  %v2538 = vunpack.c.h.b16 %v355
  %v2539 = vunpack.c.l.b16 %v356
  %v2540 = vunpack.c.h.b16 %v356
  %v2541 = vunpack.c.l.b16 %v357
  %v2542 = vunpack.c.l.b16 %v358
  %v2543 = vunpack.c.h.b16 %v358
  %v2544 = vunpack.c.l.b16 %v359
  %v2545 = vunpack.c.h.b16 %v359
  %v2546 = vunpack.c.l.b16 %v360
  %v2547 = vunpack.c.h.b16 %v360
  %v2548 = vunpack.c.l.b16 %v361
  %v2549 = vunpack.c.l.b16 %v362
  %v2550 = vunpack.c.h.b16 %v362
  %v2551 = vunpack.c.l.b16 %v363
  %v2552 = vunpack.c.h.b16 %v363
  %v2553 = vunpack.c.l.b16 %v364
  %v2554 = vunpack.c.h.b16 %v364
  %v2555 = vunpack.c.l.b16 %v365
  %v2556 = vunpack.c.l.b16 %v366
  %v2557 = vunpack.c.h.b16 %v366
  %v2558 = vunpack.c.l.b16 %v367
  %v2559 = vunpack.c.h.b16 %v367
  %v2560 = vunpack.c.l.b16 %v368
  %v2561 = vunpack.c.h.b16 %v368
  %v2562 = vunpack.c.l.b16 %v369
  %v2563 = vunpack.c.l.b16 %v370
  %v2564 = vunpack.c.h.b16 %v370
  %v2565 = vunpack.c.l.b16 %v371
  %v2566 = vunpack.c.h.b16 %v371
  %v2567 = vunpack.c.l.b16 %v372
  %v2568 = vunpack.c.h.b16 %v372
  %v2569 = vunpack.c.l.b16 %v373
  %v2570 = vunpack.c.l.b16 %v374
  %v2571 = vunpack.c.h.b16 %v374
  %v2572 = vunpack.c.l.b16 %v375
  %v2573 = vunpack.c.h.b16 %v375
  %v2574 = vunpack.c.l.b16 %v376
  %v2575 = vunpack.c.h.b16 %v376
  %v2576 = vunpack.c.l.b16 %v377
  %v2577 = vunpack.c.l.b16 %v378
  %v2578 = vunpack.c.h.b16 %v378
  %v2579 = vunpack.c.l.b16 %v379
  %v2580 = vunpack.c.h.b16 %v379
  %v2581 = vunpack.c.l.b16 %v380
  %v2582 = vunpack.c.h.b16 %v380
  %v2583 = vunpack.c.l.b16 %v381
  %v2584 = vunpack.c.l.b16 %v382
  %v2585 = vunpack.c.h.b16 %v382
  %v2586 = vunpack.c.l.b16 %v383
  %v2587 = vunpack.c.h.b16 %v383
  %v2588 = vunpack.c.l.b16 %v384
  %v2589 = vunpack.c.h.b16 %v384
  %v2590 = vunpack.c.l.b16 %v385
  %v2591 = vunpack.c.l.b16 %v386
  %v2592 = vunpack.c.h.b16 %v386
  %v2593 = vunpack.c.l.b16 %v387
  %v2594 = vunpack.c.h.b16 %v387
  %v2595 = vunpack.c.l.b16 %v388
  %v2596 = vunpack.c.h.b16 %v388
  %v2597 = vunpack.c.l.b16 %v389
  %v2598 = vunpack.c.l.b16 %v390
  %v2599 = vunpack.c.h.b16 %v390
  %v2600 = vunpack.c.l.b16 %v391
  %v2601 = vunpack.c.h.b16 %v391
  %v2602 = vunpack.c.l.b16 %v392
  %v2603 = vunpack.c.h.b16 %v392
  %v2604 = vunpack.c.l.b16 %v393
  %v2605 = vunpack.c.l.b16 %v394
  %v2606 = vunpack.c.h.b16 %v394
  %v2607 = vunpack.c.l.b16 %v395
  %v2608 = vunpack.c.h.b16 %v395
  %v2609 = vunpack.c.l.b16 %v396
  %v2610 = vunpack.c.h.b16 %v396
  %v2611 = vunpack.c.l.b16 %v397
  %v2612 = vunpack.c.l.b16 %v398
  %v2613 = vunpack.c.h.b16 %v398
  %v2614 = vunpack.c.l.b16 %v399
  %v2615 = vunpack.c.h.b16 %v399
  %v2616 = vunpack.c.l.b16 %v400
  %v2617 = vunpack.c.h.b16 %v400
  %v2618 = vunpack.c.l.b16 %v401
  %v2619 = vunpack.c.l.b16 %v402
  %v2620 = vunpack.c.h.b16 %v402
  %v2621 = vunpack.c.l.b16 %v403
  %v2622 = vunpack.c.h.b16 %v403
  %v2623 = vunpack.c.l.b16 %v404
  %v2624 = vunpack.c.h.b16 %v404
  %v2625 = vunpack.c.l.b16 %v405
  %v2626 = vunpack.c.l.b16 %v406
  %v2627 = vunpack.c.h.b16 %v406
  %v2628 = vunpack.c.l.b16 %v407
  %v2629 = vunpack.c.h.b16 %v407
  %v2630 = vunpack.c.l.b16 %v408
  %v2631 = vunpack.c.h.b16 %v408
  %v2632 = vunpack.c.l.b16 %v409
  %v2633 = vunpack.c.l.b16 %v410
  %v2634 = vunpack.c.h.b16 %v410
  %v2635 = vunpack.c.l.b16 %v411
  %v2636 = vunpack.c.h.b16 %v411
  %v2637 = vunpack.c.l.b16 %v412
  %v2638 = vunpack.c.h.b16 %v412
  %v2639 = vunpack.c.l.b16 %v413
  %v2640 = vunpack.c.l.b16 %v414
  %v2641 = vunpack.c.h.b16 %v414
  %v2642 = vunpack.c.l.b16 %v415
  %v2643 = vunpack.c.h.b16 %v415
  %v2644 = vunpack.c.l.b16 %v416
  %v2645 = vunpack.c.h.b16 %v416
  %v2646 = vunpack.c.l.b16 %v417
  %v2647 = vunpack.c.l.b16 %v418
  %v2648 = vunpack.c.h.b16 %v418
  %v2649 = vunpack.c.l.b16 %v419
  %v2650 = vunpack.c.h.b16 %v419
  %v2651 = vunpack.c.l.b16 %v420
  %v2652 = vunpack.c.h.b16 %v420
  %v2653 = vunpack.c.l.b16 %v421
  %v2654 = vunpack.c.l.b16 %v422
  %v2655 = vunpack.c.h.b16 %v422
  %v2656 = vunpack.c.l.b16 %v423
  %v2657 = vunpack.c.h.b16 %v423
  %v2658 = vunpack.c.l.b16 %v424
  %v2659 = vunpack.c.h.b16 %v424
  %v2660 = vunpack.c.l.b16 %v425
  %v2661 = vunpack.c.l.b16 %v426
  %v2662 = vunpack.c.h.b16 %v426
  %v2663 = vunpack.c.l.b16 %v427
  %v2664 = vunpack.c.h.b16 %v427
  %v2665 = vunpack.c.l.b16 %v428
  %v2666 = vunpack.c.h.b16 %v428
  %v2667 = vunpack.c.l.b16 %v429
  %v2668 = vunpack.c.l.b16 %v430
  %v2669 = vunpack.c.h.b16 %v430
  %v2670 = vunpack.c.l.b16 %v431
  %v2671 = vunpack.c.h.b16 %v431
  %v2672 = vunpack.c.l.b16 %v432
  %v2673 = vunpack.c.h.b16 %v432
  %v2674 = vunpack.c.l.b16 %v433
  %v2675 = vunpack.c.l.b16 %v434
  %v2676 = vunpack.c.h.b16 %v434
  %v2677 = vunpack.c.l.b16 %v435
  %v2678 = vunpack.c.h.b16 %v435
  %v2679 = vunpack.c.l.b16 %v436
  %v2680 = vunpack.c.h.b16 %v436
  %v2681 = vunpack.c.l.b16 %v437
  %v2682 = vunpack.c.l.b16 %v438
  %v2683 = vunpack.c.h.b16 %v438
  %v2684 = vunpack.c.l.b16 %v439
  %v2685 = vunpack.c.h.b16 %v439
  %v2686 = vunpack.c.l.b16 %v440
  %v2687 = vunpack.c.h.b16 %v440
  %v2688 = vunpack.c.l.b16 %v441
  %v2689 = vunpack.c.l.b16 %v442
  %v2690 = vunpack.c.h.b16 %v442
  %v2691 = vunpack.c.l.b16 %v443
  %v2692 = vunpack.c.h.b16 %v443
  %v2693 = vunpack.c.l.b16 %v444
  %v2694 = vunpack.c.h.b16 %v444
  %v2695 = vunpack.c.l.b16 %v445
  %v2696 = vunpack.c.l.b16 %v446
  %v2697 = vunpack.c.h.b16 %v446
  %v2698 = vunpack.c.l.b16 %v447
  %v2699 = vunpack.c.h.b16 %v447
  %v2700 = vunpack.c.l.b16 %v448
  %v2701 = vunpack.c.h.b16 %v448
  %v2702 = vunpack.c.l.b16 %v449
  %v2703 = vunpack.c.l.b16 %v450
  %v2704 = vunpack.c.h.b16 %v450
  %v2705 = vunpack.c.l.b16 %v451
  %v2706 = vunpack.c.h.b16 %v451
  %v2707 = vunpack.c.l.b16 %v452
  %v2708 = vunpack.c.h.b16 %v452
  %v2709 = vunpack.c.l.b16 %v453
  %v2710 = vunpack.c.l.b16 %v454
  %v2711 = vunpack.c.h.b16 %v454
  %v2712 = vunpack.c.l.b16 %v455
  %v2713 = vunpack.c.h.b16 %v455
  %v2714 = vunpack.c.l.b16 %v456
  %v2715 = vunpack.c.h.b16 %v456
  %v2716 = vunpack.c.l.b16 %v457
  %v2717 = vunpack.c.l.b16 %v458
  %v2718 = vunpack.c.h.b16 %v458
  %v2719 = vunpack.c.l.b16 %v459
  %v2720 = vunpack.c.h.b16 %v459
  %v2721 = vunpack.c.l.b16 %v460
  %v2722 = vunpack.c.h.b16 %v460
  %v2723 = vunpack.c.l.b16 %v461
  %v2724 = vunpack.c.l.b16 %v462
  %v2725 = vunpack.c.h.b16 %v462
  %v2726 = vunpack.c.l.b16 %v463
  %v2727 = vunpack.c.h.b16 %v463
  %v2728 = vunpack.c.l.b16 %v464
  %v2729 = vunpack.c.h.b16 %v464
  %v2730 = vunpack.c.l.b16 %v465
  %v2731 = vunpack.c.l.b16 %v466
  %v2732 = vunpack.c.h.b16 %v466
  %v2733 = vunpack.c.l.b16 %v467
  %v2734 = vunpack.c.h.b16 %v467
  %v2735 = vunpack.c.l.b16 %v468
  %v2736 = vunpack.c.h.b16 %v468
  %v2737 = vunpack.c.l.b16 %v469
  %v2738 = vunpack.c.l.b16 %v470
  %v2739 = vunpack.c.h.b16 %v470
  %v2740 = vunpack.c.l.b16 %v471
  %v2741 = vunpack.c.h.b16 %v471
  %v2742 = vunpack.c.l.b16 %v472
  %v2743 = vunpack.c.h.b16 %v472
  %v2744 = vunpack.c.l.b16 %v473
  %v2745 = vunpack.c.l.b16 %v474
  %v2746 = vunpack.c.h.b16 %v474
  %v2747 = vunpack.c.l.b16 %v475
  %v2748 = vunpack.c.h.b16 %v475
  %v2749 = vunpack.c.l.b16 %v476
  %v2750 = vunpack.c.h.b16 %v476
  %v2751 = vunpack.c.l.b16 %v477
  %v2752 = vunpack.c.l.b16 %v478
  %v2753 = vunpack.c.h.b16 %v478
  %v2754 = vunpack.c.l.b16 %v479
  %v2755 = vunpack.c.h.b16 %v479
  %v2756 = vunpack.c.l.b16 %v480
  %v2757 = vunpack.c.h.b16 %v480
  %v2758 = vunpack.c.l.b16 %v481
  %v2759 = vunpack.c.l.b16 %v482
  %v2760 = vunpack.c.h.b16 %v482
  %v2761 = vunpack.c.l.b16 %v483
  %v2762 = vunpack.c.h.b16 %v483
  %v2763 = vunpack.c.l.b16 %v484
  %v2764 = vunpack.c.h.b16 %v484
  %v2765 = vunpack.c.l.b16 %v485
  %v2766 = vunpack.c.l.b16 %v486
  %v2767 = vunpack.c.h.b16 %v486
  %v2768 = vunpack.c.l.b16 %v487
  %v2769 = vunpack.c.h.b16 %v487
  %v2770 = vunpack.c.l.b16 %v488
  %v2771 = vunpack.c.h.b16 %v488
  %v2772 = vunpack.c.l.b16 %v489
  %v2773 = vunpack.c.l.b16 %v490
  %v2774 = vunpack.c.h.b16 %v490
  %v2775 = vunpack.c.l.b16 %v491
  %v2776 = vunpack.c.h.b16 %v491
  %v2777 = vunpack.c.l.b16 %v492
  %v2778 = vunpack.c.h.b16 %v492
  %v2779 = vunpack.c.l.b16 %v493
  %v2780 = vunpack.c.l.b16 %v494
  %v2781 = vunpack.c.h.b16 %v494
  %v2782 = vunpack.c.l.b16 %v495
  %v2783 = vunpack.c.h.b16 %v495
  %v2784 = vunpack.c.l.b16 %v496
  %v2785 = vunpack.c.h.b16 %v496
  %v2786 = vunpack.c.l.b16 %v497
  %v2787 = vunpack.c.l.b16 %v498
  %v2788 = vunpack.c.h.b16 %v498
  %v2789 = vunpack.c.l.b16 %v499
  %v2790 = vunpack.c.h.b16 %v499
  %v2791 = vunpack.c.l.b16 %v500
  %v2792 = vunpack.c.h.b16 %v500
  %v2793 = vunpack.c.l.b16 %v501
  %v2794 = vunpack.c.l.b16 %v502
  %v2795 = vunpack.c.h.b16 %v502
  %v2796 = vunpack.c.l.b16 %v503
  %v2797 = vunpack.c.h.b16 %v503
  %v2798 = vunpack.c.l.b16 %v504
  %v2799 = vunpack.c.h.b16 %v504
  %v2800 = vunpack.c.l.b16 %v505
  %v2801 = vunpack.c.l.b16 %v506
  %v2802 = vunpack.c.h.b16 %v506
  %v2803 = vunpack.c.l.b16 %v507
  %v2804 = vunpack.c.h.b16 %v507
  %v2805 = vunpack.c.l.b16 %v508
  %v2806 = vunpack.c.h.b16 %v508
  %v2807 = vunpack.c.l.b16 %v509
  %v2808 = vunpack.c.l.b16 %v510
  %v2809 = vunpack.c.h.b16 %v510
  %v2810 = vunpack.c.l.b16 %v511
  %v2811 = vunpack.c.h.b16 %v511
  %v2812 = vunpack.c.l.b16 %v512
  %v2813 = vunpack.c.h.b16 %v512
  %v2814 = vunpack.c.l.b16 %v513
  %v2815 = vunpack.c.l.b16 %v514
  %v2816 = vunpack.c.h.b16 %v514
  %v2817 = vunpack.c.l.b16 %v515
  %v2818 = vunpack.c.h.b16 %v515
  %v2819 = vunpack.c.l.b16 %v516
  %v2820 = vunpack.c.h.b16 %v516
  %v2821 = vunpack.c.l.b16 %v517
  %v2822 = vunpack.c.l.b16 %v518
  %v2823 = vunpack.c.h.b16 %v518
  %v2824 = vunpack.c.l.b16 %v519
  %v2825 = vunpack.c.h.b16 %v519
  %v2826 = vunpack.c.l.b16 %v520
  %v2827 = vunpack.c.h.b16 %v520
  %v2828 = vunpack.c.l.b16 %v521
  %v2829 = vunpack.c.l.b16 %v522
  %v2830 = vunpack.c.h.b16 %v522
  %v2831 = vunpack.c.l.b16 %v523
  %v2832 = vunpack.c.h.b16 %v523
  %v2833 = vunpack.c.l.b16 %v524
  %v2834 = vunpack.c.h.b16 %v524
  %v2835 = vunpack.c.l.b16 %v525
  %v2836 = vunpack.c.l.b16 %v526
  %v2837 = vunpack.c.h.b16 %v526
  %v2838 = vunpack.c.l.b16 %v527
  %v2839 = vunpack.c.h.b16 %v527
  %v2840 = vunpack.c.l.b16 %v528
  %v2841 = vunpack.c.h.b16 %v528
  %v2842 = vunpack.c.l.b16 %v529
  %v2843 = vunpack.c.l.b16 %v530
  %v2844 = vunpack.c.h.b16 %v530
  %v2845 = vunpack.c.l.b16 %v531
  %v2846 = vunpack.c.h.b16 %v531
  %v2847 = vunpack.c.l.b16 %v532
  %v2848 = vunpack.c.h.b16 %v532
  %v2849 = vunpack.c.l.b16 %v533
  %v2850 = vunpack.c.l.b16 %v534
  %v2851 = vunpack.c.h.b16 %v534
  %v2852 = vunpack.c.l.b16 %v535
  %v2853 = vunpack.c.h.b16 %v535
  %v2854 = vunpack.c.l.b16 %v536
  %v2855 = vunpack.c.h.b16 %v536
  %v2856 = vunpack.c.l.b16 %v537
  %v2857 = vunpack.c.l.b16 %v538
  %v2858 = vunpack.c.h.b16 %v538
  %v2859 = vunpack.c.l.b16 %v539
  %v2860 = vunpack.c.h.b16 %v539
  %v2861 = vunpack.c.l.b16 %v540
  %v2862 = vunpack.c.h.b16 %v540
  %v2863 = vunpack.c.l.b16 %v541
  %v2864 = vunpack.c.l.b16 %v542
  %v2865 = vunpack.c.h.b16 %v542
  %v2866 = vunpack.c.l.b16 %v543
  %v2867 = vunpack.c.h.b16 %v543
  %v2868 = vunpack.c.l.b16 %v544
  %v2869 = vunpack.c.h.b16 %v544
  %v2870 = vunpack.c.l.b16 %v545
  %v2871 = vunpack.c.l.b16 %v546
  %v2872 = vunpack.c.h.b16 %v546
  %v2873 = vunpack.c.l.b16 %v547
  %v2874 = vunpack.c.h.b16 %v547
  %v2875 = vunpack.c.l.b16 %v548
  %v2876 = vunpack.c.h.b16 %v548
  %v2877 = vunpack.c.l.b16 %v549
  %v2878 = vunpack.c.l.b16 %v550
  %v2879 = vunpack.c.h.b16 %v550
  %v2880 = vunpack.c.l.b16 %v551
  %v2881 = vunpack.c.h.b16 %v551
  %v2882 = vunpack.c.l.b16 %v552
  %v2883 = vunpack.c.h.b16 %v552
  %v2884 = vunpack.c.l.b16 %v553
  %v2885 = vunpack.c.l.b16 %v554
  %v2886 = vunpack.c.h.b16 %v554
  %v2887 = vunpack.c.l.b16 %v555
  %v2888 = vunpack.c.h.b16 %v555
  %v2889 = vunpack.c.l.b16 %v556
  %v2890 = vunpack.c.h.b16 %v556
  %v2891 = vunpack.c.l.b16 %v557
  %v2892 = vunpack.c.l.b16 %v558
  %v2893 = vunpack.c.h.b16 %v558
  %v2894 = vunpack.c.l.b16 %v559
  %v2895 = vunpack.c.h.b16 %v559
  %v2896 = vunpack.c.l.b16 %v560
  %v2897 = vunpack.c.h.b16 %v560
  %v2898 = vunpack.c.l.b16 %v561
  %v2899 = vunpack.c.l.b16 %v562
  %v2900 = vunpack.c.h.b16 %v562
  %v2901 = vunpack.c.l.b16 %v563
  %v2902 = vunpack.c.h.b16 %v563
  %v2903 = vunpack.c.l.b16 %v564
  %v2904 = vunpack.c.h.b16 %v564
  %v2905 = vunpack.c.l.b16 %v565
  %v2906 = vunpack.c.l.b16 %v566
  %v2907 = vunpack.c.h.b16 %v566
  %v2908 = vunpack.c.l.b16 %v567
  %v2909 = vunpack.c.h.b16 %v567
  %v2910 = vunpack.c.l.b16 %v568
  %v2911 = vunpack.c.h.b16 %v568
  %v2912 = vunpack.c.l.b16 %v569
  %v2913 = vunpack.c.l.b16 %v570
  %v2914 = vunpack.c.h.b16 %v570
  %v2915 = vunpack.c.l.b16 %v571
  %v2916 = vunpack.c.h.b16 %v571
  %v2917 = vunpack.c.l.b16 %v572
  %v2918 = vunpack.c.h.b16 %v572
  %v2919 = vunpack.c.l.b16 %v573
  %v2920 = vunpack.c.l.b16 %v574
  %v2921 = vunpack.c.h.b16 %v574
  %v2922 = vunpack.c.l.b16 %v575
  %v2923 = vunpack.c.h.b16 %v575
  %v2924 = vunpack.c.l.b16 %v576
  %v2925 = vunpack.c.h.b16 %v576
  %v2926 = vunpack.c.l.b16 %v577
  %v2927 = vunpack.c.l.b16 %v578
  %v2928 = vunpack.c.h.b16 %v578
  %v2929 = vunpack.c.l.b16 %v579
  %v2930 = vunpack.c.h.b16 %v579
  %v2931 = vunpack.c.l.b16 %v580
  %v2932 = vunpack.c.h.b16 %v580
  %v2933 = vunpack.c.l.b16 %v581
  %v2934 = vunpack.c.l.b16 %v582
  %v2935 = vunpack.c.h.b16 %v582
  %v2936 = vunpack.c.l.b16 %v583
  %v2937 = vunpack.c.h.b16 %v583
  %v2938 = vunpack.c.l.b16 %v584
  %v2939 = vunpack.c.h.b16 %v584
  %v2940 = vunpack.c.l.b16 %v585
  %v2941 = vunpack.c.l.b16 %v586
  %v2942 = vunpack.c.h.b16 %v586
  %v2943 = vunpack.c.l.b16 %v587
  %v2944 = vunpack.c.h.b16 %v587
  %v2945 = vunpack.c.l.b16 %v588
  %v2946 = vunpack.c.h.b16 %v588
  %v2947 = vunpack.c.l.b16 %v589
  %v2948 = vunpack.c.l.b16 %v590
  %v2949 = vunpack.c.h.b16 %v590
  %v2950 = vunpack.c.l.b16 %v591
  %v2951 = vunpack.c.h.b16 %v591
  %v2952 = vunpack.c.l.b16 %v592
  %v2953 = vunpack.c.h.b16 %v592
  %v2954 = vunpack.c.l.b16 %v593
  %v2955 = vunpack.c.l.b16 %v594
  %v2956 = vunpack.c.h.b16 %v594
  %v2957 = vunpack.c.l.b16 %v595
  %v2958 = vunpack.c.h.b16 %v595
  %v2959 = vunpack.c.l.b16 %v596
  %v2960 = vunpack.c.h.b16 %v596
  %v2961 = vunpack.c.l.b16 %v597
  %v2962 = vunpack.c.l.b16 %v598
  %v2963 = vunpack.c.h.b16 %v598
  %v2964 = vunpack.c.l.b16 %v599
  %v2965 = vunpack.c.h.b16 %v599
  %v2966 = vunpack.c.l.b16 %v600
  %v2967 = vunpack.c.h.b16 %v600
  %v2968 = vunpack.c.l.b16 %v601
  %v2969 = vunpack.c.l.b16 %v602
  %v2970 = vunpack.c.h.b16 %v602
  %v2971 = vunpack.c.l.b16 %v603
  %v2972 = vunpack.c.h.b16 %v603
  %v2973 = vunpack.c.l.b16 %v604
  %v2974 = vunpack.c.h.b16 %v604
  %v2975 = vunpack.c.l.b16 %v605
  %v2976 = vunpack.c.l.b16 %v606
  %v2977 = vunpack.c.h.b16 %v606
  %v2978 = vunpack.c.l.b16 %v607
  %v2979 = vunpack.c.h.b16 %v607
  %v2980 = vunpack.c.l.b16 %v608
  %v2981 = vunpack.c.h.b16 %v608
  %v2982 = vunpack.c.l.b16 %v609
  %v2983 = vunpack.c.l.b16 %v610
  %v2984 = vunpack.c.h.b16 %v610
  %v2985 = vunpack.c.l.b16 %v611
  %v2986 = vunpack.c.h.b16 %v611
  %v2987 = vunpack.c.l.b16 %v612
  %v2988 = vunpack.c.h.b16 %v612
  %v2989 = vunpack.c.l.b16 %v613
  %v2990 = vunpack.c.l.b16 %v614
  %v2991 = vunpack.c.h.b16 %v614
  %v2992 = vunpack.c.l.b16 %v615
  %v2993 = vunpack.c.h.b16 %v615
  %v2994 = vunpack.c.l.b16 %v616
  %v2995 = vunpack.c.h.b16 %v616
  %v2996 = vunpack.c.l.b16 %v617
  %v2997 = vunpack.c.l.b16 %v618
  %v2998 = vunpack.c.h.b16 %v618
  %v2999 = vunpack.c.l.b16 %v619
  %v3000 = vunpack.c.h.b16 %v619
  %v3001 = vunpack.c.l.b16 %v620
  %v3002 = vunpack.c.h.b16 %v620
  %v3003 = vunpack.c.l.b16 %v621
  %v3004 = vunpack.c.l.b16 %v622
  %v3005 = vunpack.c.h.b16 %v622
  %v3006 = vunpack.c.l.b16 %v623
  %v3007 = vunpack.c.h.b16 %v623
  %v3008 = vunpack.c.l.b16 %v624
  %v3009 = vunpack.c.h.b16 %v624
  %v3010 = vunpack.c.l.b16 %v625
  %v3011 = vunpack.c.l.b16 %v626
  %v3012 = vunpack.c.h.b16 %v626
  %v3013 = vunpack.c.l.b16 %v627
  %v3014 = vunpack.c.h.b16 %v627
  %v3015 = vunpack.c.l.b16 %v628
  %v3016 = vunpack.c.h.b16 %v628
  %v3017 = vunpack.c.l.b16 %v629
  %v3018 = vunpack.c.l.b16 %v630
  %v3019 = vunpack.c.h.b16 %v630
  %v3020 = vunpack.c.l.b16 %v631
  %v3021 = vunpack.c.h.b16 %v631
  %v3022 = vunpack.c.l.b16 %v632
  %v3023 = vunpack.c.h.b16 %v632
  %v3024 = vunpack.c.l.b16 %v633
  %v3025 = vunpack.c.l.b16 %v634
  %v3026 = vunpack.c.h.b16 %v634
  %v3027 = vunpack.c.l.b16 %v635
  %v3028 = vunpack.c.h.b16 %v635
  %v3029 = vunpack.c.l.b16 %v636
  %v3030 = vunpack.c.h.b16 %v636
  %v3031 = vunpack.c.l.b16 %v637
  %v3032 = vunpack.c.l.b16 %v638
  %v3033 = vunpack.c.h.b16 %v638
  %v3034 = vunpack.c.l.b16 %v639
  %v3035 = vunpack.c.h.b16 %v639
  %v3036 = vunpack.c.l.b16 %v640
  %v3037 = vunpack.c.h.b16 %v640
  %v3038 = vunpack.c.l.b16 %v641
  %v3039 = vunpack.c.l.b16 %v642
  %v3040 = vunpack.c.h.b16 %v642
  %v3041 = vunpack.c.l.b16 %v643
  %v3042 = vunpack.c.h.b16 %v643
  %v3043 = vunpack.c.l.b16 %v644
  %v3044 = vunpack.c.h.b16 %v644
  %v3045 = vunpack.c.l.b16 %v645
  %v3046 = vunpack.c.l.b16 %v646
  %v3047 = vunpack.c.h.b16 %v646
  %v3048 = vunpack.c.l.b16 %v647
  %v3049 = vunpack.c.h.b16 %v647
  %v3050 = vunpack.c.l.b16 %v648
  %v3051 = vunpack.c.h.b16 %v648
  %v3052 = vunpack.c.l.b16 %v649
  %v3053 = vunpack.c.l.b16 %v650
  %v3054 = vunpack.c.h.b16 %v650
  %v3055 = vunpack.c.l.b16 %v651
  %v3056 = vunpack.c.h.b16 %v651
  %v3057 = vunpack.c.l.b16 %v652
  %v3058 = vunpack.c.h.b16 %v652
  %v3059 = vunpack.c.l.b16 %v653
  %v3060 = vunpack.c.l.b16 %v654
  %v3061 = vunpack.c.h.b16 %v654
  %v3062 = vunpack.c.l.b16 %v655
  %v3063 = vunpack.c.h.b16 %v655
  %v3064 = vunpack.c.l.b16 %v656
  %v3065 = vunpack.c.h.b16 %v656
  %v3066 = vunpack.c.l.b16 %v657
  %v3067 = vunpack.c.l.b16 %v658
  %v3068 = vunpack.c.h.b16 %v658
  %v3069 = vunpack.c.l.b16 %v659
  %v3070 = vunpack.c.h.b16 %v659
  %v3071 = vunpack.c.l.b16 %v660
  %v3072 = vunpack.c.h.b16 %v660
  %v3073 = vunpack.c.l.b16 %v661
  %v3074 = vunpack.c.l.b16 %v662
  %v3075 = vunpack.c.h.b16 %v662
  %v3076 = vunpack.c.l.b16 %v663
  %v3077 = vunpack.c.h.b16 %v663
  %v3078 = vunpack.c.l.b16 %v664
  %v3079 = vunpack.c.h.b16 %v664
  %v3080 = vunpack.c.l.b16 %v665
  %v3081 = vunpack.c.l.b16 %v666
  %v3082 = vunpack.c.h.b16 %v666
  %v3083 = vunpack.c.l.b16 %v667
  %v3084 = vunpack.c.h.b16 %v667
  %v3085 = vunpack.c.l.b16 %v668
  %v3086 = vunpack.c.h.b16 %v668
  %v3087 = vunpack.c.l.b16 %v669
  %v3088 = vunpack.c.l.b16 %v670
  %v3089 = vunpack.c.h.b16 %v670
  %v3090 = vunpack.c.l.b16 %v671
  %v3091 = vunpack.c.h.b16 %v671
  %v3092 = vunpack.c.l.b16 %v672
  %v3093 = vunpack.c.h.b16 %v672
  %v3094 = vunpack.c.l.b16 %v673
  %v3095 = vunpack.c.l.b16 %v674
  %v3096 = vunpack.c.h.b16 %v674
  %v3097 = vunpack.c.l.b16 %v675
  %v3098 = vunpack.c.h.b16 %v675
  %v3099 = vunpack.c.l.b16 %v676
  %v3100 = vunpack.c.h.b16 %v676
  %v3101 = vunpack.c.l.b16 %v677
  %v3102 = vunpack.c.l.b16 %v678
  %v3103 = vunpack.c.h.b16 %v678
  %v3104 = vunpack.c.l.b16 %v679
  %v3105 = vunpack.c.h.b16 %v679
  %v3106 = vunpack.c.l.b16 %v680
  %v3107 = vunpack.c.h.b16 %v680
  %v3108 = vunpack.c.l.b16 %v681
  %v3109 = vunpack.c.l.b16 %v682
  %v3110 = vunpack.c.h.b16 %v682
  %v3111 = vunpack.c.l.b16 %v683
  %v3112 = vunpack.c.h.b16 %v683
  %v3113 = vunpack.c.l.b16 %v684
  %v3114 = vunpack.c.h.b16 %v684
  %v3115 = vunpack.c.l.b16 %v685
  %v3116 = vunpack.c.l.b16 %v686
  %v3117 = vunpack.c.h.b16 %v686
  %v3118 = vunpack.c.l.b16 %v687
  %v3119 = vunpack.c.h.b16 %v687
  %v3120 = vunpack.c.l.b16 %v688
  %v3121 = vunpack.c.h.b16 %v688
  %v3122 = vunpack.c.l.b16 %v689
  %v3123 = vunpack.c.l.b16 %v690
  %v3124 = vunpack.c.h.b16 %v690
  %v3125 = vunpack.c.l.b16 %v691
  %v3126 = vunpack.c.h.b16 %v691
  %v3127 = vunpack.c.l.b16 %v692
  %v3128 = vunpack.c.h.b16 %v692
  %v3129 = vunpack.c.l.b16 %v693
  %v3130 = vunpack.c.l.b16 %v694
  %v3131 = vunpack.c.h.b16 %v694
  %v3132 = vunpack.c.l.b16 %v695
  %v3133 = vunpack.c.h.b16 %v695
  %v3134 = vunpack.c.l.b16 %v696
  %v3135 = vunpack.c.h.b16 %v696
  %v3136 = vunpack.c.l.b16 %v697
  %v3137 = vunpack.c.l.b16 %v698
  %v3138 = vunpack.c.h.b16 %v698
  %v3139 = vunpack.c.l.b16 %v699
  %v3140 = vunpack.c.h.b16 %v699
  %v3141 = vunpack.c.l.b16 %v700
  %v3142 = vunpack.c.h.b16 %v700
  %v3143 = vunpack.c.l.b16 %v701
  %v3144 = vunpack.c.l.b16 %v702
  %v3145 = vunpack.c.h.b16 %v702
  %v3146 = vunpack.c.l.b16 %v703
  %v3147 = vunpack.c.h.b16 %v703
  %v3148 = vunpack.c.l.b16 %v704
  %v3149 = vunpack.c.h.b16 %v704
  %v3150 = vunpack.c.l.b16 %v705
  %v3151 = vunpack.c.l.b16 %v706
  %v3152 = vunpack.c.h.b16 %v706
  %v3153 = vunpack.c.l.b16 %v707
  %v3154 = vunpack.c.h.b16 %v707
  %v3155 = vunpack.c.l.b16 %v708
  %v3156 = vunpack.c.h.b16 %v708
  %v3157 = vunpack.c.l.b16 %v709
  %v3158 = vpack.c.b16 %v2157, %v2150
  %v3159 = vpack.c.b16 %v2158, %v2151
  %v3160 = vpack.c.b16 %v2159, %v2152
  %v3161 = vpack.c.b16 %v2160, %v2153
  %v3162 = vpack.c.b16 %v2161, %v2154
  %v3163 = vpack.c.b16 %v2162, %v2155
  %v3164 = vpack.c.b16 %v2163, %v2156
  %v3165 = vpack.c.b16 %v2171, %v2164
  %v3166 = vpack.c.b16 %v2172, %v2165
  %v3167 = vpack.c.b16 %v2173, %v2166
  %v3168 = vpack.c.b16 %v2174, %v2167
  %v3169 = vpack.c.b16 %v2175, %v2168
  %v3170 = vpack.c.b16 %v2176, %v2169
  %v3171 = vpack.c.b16 %v2177, %v2170
  %v3172 = vpack.c.b16 %v2185, %v2178
  %v3173 = vpack.c.b16 %v2186, %v2179
  %v3174 = vpack.c.b16 %v2187, %v2180
  %v3175 = vpack.c.b16 %v2188, %v2181
  %v3176 = vpack.c.b16 %v2189, %v2182
  %v3177 = vpack.c.b16 %v2190, %v2183
  %v3178 = vpack.c.b16 %v2191, %v2184
  %v3179 = vpack.c.b16 %v2199, %v2192
  %v3180 = vpack.c.b16 %v2200, %v2193
  %v3181 = vpack.c.b16 %v2201, %v2194
  %v3182 = vpack.c.b16 %v2202, %v2195
  %v3183 = vpack.c.b16 %v2203, %v2196
  %v3184 = vpack.c.b16 %v2204, %v2197
  %v3185 = vpack.c.b16 %v2205, %v2198
  %v3186 = vpack.c.b16 %v2213, %v2206
  %v3187 = vpack.c.b16 %v2214, %v2207
  %v3188 = vpack.c.b16 %v2215, %v2208
  %v3189 = vpack.c.b16 %v2216, %v2209
  %v3190 = vpack.c.b16 %v2217, %v2210
  %v3191 = vpack.c.b16 %v2218, %v2211
  %v3192 = vpack.c.b16 %v2219, %v2212
  %v3193 = vpack.c.b16 %v2227, %v2220
  %v3194 = vpack.c.b16 %v2228, %v2221
  %v3195 = vpack.c.b16 %v2229, %v2222
  %v3196 = vpack.c.b16 %v2230, %v2223
  %v3197 = vpack.c.b16 %v2231, %v2224
  %v3198 = vpack.c.b16 %v2232, %v2225
  %v3199 = vpack.c.b16 %v2233, %v2226
  %v3200 = vpack.c.b16 %v2241, %v2234
  %v3201 = vpack.c.b16 %v2242, %v2235
  %v3202 = vpack.c.b16 %v2243, %v2236
  %v3203 = vpack.c.b16 %v2244, %v2237
  %v3204 = vpack.c.b16 %v2245, %v2238
  %v3205 = vpack.c.b16 %v2246, %v2239
  %v3206 = vpack.c.b16 %v2247, %v2240
  %v3207 = vpack.c.b16 %v2255, %v2248
  %v3208 = vpack.c.b16 %v2256, %v2249
  %v3209 = vpack.c.b16 %v2257, %v2250
  %v3210 = vpack.c.b16 %v2258, %v2251
  %v3211 = vpack.c.b16 %v2259, %v2252
  %v3212 = vpack.c.b16 %v2260, %v2253
  %v3213 = vpack.c.b16 %v2261, %v2254
  %v3214 = vpack.c.b16 %v2269, %v2262
  %v3215 = vpack.c.b16 %v2270, %v2263
  %v3216 = vpack.c.b16 %v2271, %v2264
  %v3217 = vpack.c.b16 %v2272, %v2265
  %v3218 = vpack.c.b16 %v2273, %v2266
  %v3219 = vpack.c.b16 %v2274, %v2267
  %v3220 = vpack.c.b16 %v2275, %v2268
  %v3221 = vpack.c.b16 %v2283, %v2276
  %v3222 = vpack.c.b16 %v2284, %v2277
  %v3223 = vpack.c.b16 %v2285, %v2278
  %v3224 = vpack.c.b16 %v2286, %v2279
  %v3225 = vpack.c.b16 %v2287, %v2280
  %v3226 = vpack.c.b16 %v2288, %v2281
  %v3227 = vpack.c.b16 %v2289, %v2282
  %v3228 = vpack.c.b16 %v2297, %v2290
  %v3229 = vpack.c.b16 %v2298, %v2291
  %v3230 = vpack.c.b16 %v2299, %v2292
  %v3231 = vpack.c.b16 %v2300, %v2293
  %v3232 = vpack.c.b16 %v2301, %v2294
  %v3233 = vpack.c.b16 %v2302, %v2295
  %v3234 = vpack.c.b16 %v2303, %v2296
  %v3235 = vpack.c.b16 %v2311, %v2304
  %v3236 = vpack.c.b16 %v2312, %v2305
  %v3237 = vpack.c.b16 %v2313, %v2306
  %v3238 = vpack.c.b16 %v2314, %v2307
  %v3239 = vpack.c.b16 %v2315, %v2308
  %v3240 = vpack.c.b16 %v2316, %v2309
  %v3241 = vpack.c.b16 %v2317, %v2310
  %v3242 = vpack.c.b16 %v2325, %v2318
  %v3243 = vpack.c.b16 %v2326, %v2319
  %v3244 = vpack.c.b16 %v2327, %v2320
  %v3245 = vpack.c.b16 %v2328, %v2321
  %v3246 = vpack.c.b16 %v2329, %v2322
  %v3247 = vpack.c.b16 %v2330, %v2323
  %v3248 = vpack.c.b16 %v2331, %v2324
  %v3249 = vpack.c.b16 %v2339, %v2332
  %v3250 = vpack.c.b16 %v2340, %v2333
  %v3251 = vpack.c.b16 %v2341, %v2334
  %v3252 = vpack.c.b16 %v2342, %v2335
  %v3253 = vpack.c.b16 %v2343, %v2336
  %v3254 = vpack.c.b16 %v2344, %v2337
  %v3255 = vpack.c.b16 %v2345, %v2338
  %v3256 = vpack.c.b16 %v2353, %v2346
  %v3257 = vpack.c.b16 %v2354, %v2347
  %v3258 = vpack.c.b16 %v2355, %v2348
  %v3259 = vpack.c.b16 %v2356, %v2349
  %v3260 = vpack.c.b16 %v2357, %v2350
  %v3261 = vpack.c.b16 %v2358, %v2351
  %v3262 = vpack.c.b16 %v2359, %v2352
  %v3263 = vpack.c.b16 %v2367, %v2360
  %v3264 = vpack.c.b16 %v2368, %v2361
  %v3265 = vpack.c.b16 %v2369, %v2362
  %v3266 = vpack.c.b16 %v2370, %v2363
  %v3267 = vpack.c.b16 %v2371, %v2364
  %v3268 = vpack.c.b16 %v2372, %v2365
  %v3269 = vpack.c.b16 %v2373, %v2366
  %v3270 = vpack.c.b16 %v2381, %v2374
  %v3271 = vpack.c.b16 %v2382, %v2375
  %v3272 = vpack.c.b16 %v2383, %v2376
  %v3273 = vpack.c.b16 %v2384, %v2377
  %v3274 = vpack.c.b16 %v2385, %v2378
  %v3275 = vpack.c.b16 %v2386, %v2379
  %v3276 = vpack.c.b16 %v2387, %v2380
  %v3277 = vpack.c.b16 %v2395, %v2388
  %v3278 = vpack.c.b16 %v2396, %v2389
  %v3279 = vpack.c.b16 %v2397, %v2390
  %v3280 = vpack.c.b16 %v2398, %v2391
  %v3281 = vpack.c.b16 %v2399, %v2392
  %v3282 = vpack.c.b16 %v2400, %v2393
  %v3283 = vpack.c.b16 %v2401, %v2394
  %v3284 = vpack.c.b16 %v2409, %v2402
  %v3285 = vpack.c.b16 %v2410, %v2403
  %v3286 = vpack.c.b16 %v2411, %v2404
  %v3287 = vpack.c.b16 %v2412, %v2405
  %v3288 = vpack.c.b16 %v2413, %v2406
  %v3289 = vpack.c.b16 %v2414, %v2407
  %v3290 = vpack.c.b16 %v2415, %v2408
  %v3291 = vpack.c.b16 %v2423, %v2416
  %v3292 = vpack.c.b16 %v2424, %v2417
  %v3293 = vpack.c.b16 %v2425, %v2418
  %v3294 = vpack.c.b16 %v2426, %v2419
  %v3295 = vpack.c.b16 %v2427, %v2420
  %v3296 = vpack.c.b16 %v2428, %v2421
  %v3297 = vpack.c.b16 %v2429, %v2422
  %v3298 = vpack.c.b16 %v2437, %v2430
  %v3299 = vpack.c.b16 %v2438, %v2431
  %v3300 = vpack.c.b16 %v2439, %v2432
  %v3301 = vpack.c.b16 %v2440, %v2433
  %v3302 = vpack.c.b16 %v2441, %v2434
  %v3303 = vpack.c.b16 %v2442, %v2435
  %v3304 = vpack.c.b16 %v2443, %v2436
  %v3305 = vpack.c.b16 %v2451, %v2444
  %v3306 = vpack.c.b16 %v2452, %v2445
  %v3307 = vpack.c.b16 %v2453, %v2446
  %v3308 = vpack.c.b16 %v2454, %v2447
  %v3309 = vpack.c.b16 %v2455, %v2448
  %v3310 = vpack.c.b16 %v2456, %v2449
  %v3311 = vpack.c.b16 %v2457, %v2450
  %v3312 = vpack.c.b16 %v2465, %v2458
  %v3313 = vpack.c.b16 %v2466, %v2459
  %v3314 = vpack.c.b16 %v2467, %v2460
  %v3315 = vpack.c.b16 %v2468, %v2461
  %v3316 = vpack.c.b16 %v2469, %v2462
  %v3317 = vpack.c.b16 %v2470, %v2463
  %v3318 = vpack.c.b16 %v2471, %v2464
  %v3319 = vpack.c.b16 %v2479, %v2472
  %v3320 = vpack.c.b16 %v2480, %v2473
  %v3321 = vpack.c.b16 %v2481, %v2474
  %v3322 = vpack.c.b16 %v2482, %v2475
  %v3323 = vpack.c.b16 %v2483, %v2476
  %v3324 = vpack.c.b16 %v2484, %v2477
  %v3325 = vpack.c.b16 %v2485, %v2478
  %v3326 = vpack.c.b16 %v2493, %v2486
  %v3327 = vpack.c.b16 %v2494, %v2487
  %v3328 = vpack.c.b16 %v2495, %v2488
  %v3329 = vpack.c.b16 %v2496, %v2489
  %v3330 = vpack.c.b16 %v2497, %v2490
  %v3331 = vpack.c.b16 %v2498, %v2491
  %v3332 = vpack.c.b16 %v2499, %v2492
  %v3333 = vpack.c.b16 %v2507, %v2500
  %v3334 = vpack.c.b16 %v2508, %v2501
  %v3335 = vpack.c.b16 %v2509, %v2502
  %v3336 = vpack.c.b16 %v2510, %v2503
  %v3337 = vpack.c.b16 %v2511, %v2504
  %v3338 = vpack.c.b16 %v2512, %v2505
  %v3339 = vpack.c.b16 %v2513, %v2506
  %v3340 = vpack.c.b16 %v2521, %v2514
  %v3341 = vpack.c.b16 %v2522, %v2515
  %v3342 = vpack.c.b16 %v2523, %v2516
  %v3343 = vpack.c.b16 %v2524, %v2517
  %v3344 = vpack.c.b16 %v2525, %v2518
  %v3345 = vpack.c.b16 %v2526, %v2519
  %v3346 = vpack.c.b16 %v2527, %v2520
  %v3347 = vpack.c.b16 %v2535, %v2528
  %v3348 = vpack.c.b16 %v2536, %v2529
  %v3349 = vpack.c.b16 %v2537, %v2530
  %v3350 = vpack.c.b16 %v2538, %v2531
  %v3351 = vpack.c.b16 %v2539, %v2532
  %v3352 = vpack.c.b16 %v2540, %v2533
  %v3353 = vpack.c.b16 %v2541, %v2534
  %v3354 = vpack.c.b16 %v2549, %v2542
  %v3355 = vpack.c.b16 %v2550, %v2543
  %v3356 = vpack.c.b16 %v2551, %v2544
  %v3357 = vpack.c.b16 %v2552, %v2545
  %v3358 = vpack.c.b16 %v2553, %v2546
  %v3359 = vpack.c.b16 %v2554, %v2547
  %v3360 = vpack.c.b16 %v2555, %v2548
  %v3361 = vpack.c.b16 %v2563, %v2556
  %v3362 = vpack.c.b16 %v2564, %v2557
  %v3363 = vpack.c.b16 %v2565, %v2558
  %v3364 = vpack.c.b16 %v2566, %v2559
  %v3365 = vpack.c.b16 %v2567, %v2560
  %v3366 = vpack.c.b16 %v2568, %v2561
  %v3367 = vpack.c.b16 %v2569, %v2562
  %v3368 = vpack.c.b16 %v2577, %v2570
  %v3369 = vpack.c.b16 %v2578, %v2571
  %v3370 = vpack.c.b16 %v2579, %v2572
  %v3371 = vpack.c.b16 %v2580, %v2573
  %v3372 = vpack.c.b16 %v2581, %v2574
  %v3373 = vpack.c.b16 %v2582, %v2575
  %v3374 = vpack.c.b16 %v2583, %v2576
  %v3375 = vpack.c.b16 %v2591, %v2584
  %v3376 = vpack.c.b16 %v2592, %v2585
  %v3377 = vpack.c.b16 %v2593, %v2586
  %v3378 = vpack.c.b16 %v2594, %v2587
  %v3379 = vpack.c.b16 %v2595, %v2588
  %v3380 = vpack.c.b16 %v2596, %v2589
  %v3381 = vpack.c.b16 %v2597, %v2590
  %v3382 = vpack.c.b16 %v2605, %v2598
  %v3383 = vpack.c.b16 %v2606, %v2599
  %v3384 = vpack.c.b16 %v2607, %v2600
  %v3385 = vpack.c.b16 %v2608, %v2601
  %v3386 = vpack.c.b16 %v2609, %v2602
  %v3387 = vpack.c.b16 %v2610, %v2603
  %v3388 = vpack.c.b16 %v2611, %v2604
  %v3389 = vpack.c.b16 %v2619, %v2612
  %v3390 = vpack.c.b16 %v2620, %v2613
  %v3391 = vpack.c.b16 %v2621, %v2614
  %v3392 = vpack.c.b16 %v2622, %v2615
  %v3393 = vpack.c.b16 %v2623, %v2616
  %v3394 = vpack.c.b16 %v2624, %v2617
  %v3395 = vpack.c.b16 %v2625, %v2618
  %v3396 = vpack.c.b16 %v2633, %v2626
  %v3397 = vpack.c.b16 %v2634, %v2627
  %v3398 = vpack.c.b16 %v2635, %v2628
  %v3399 = vpack.c.b16 %v2636, %v2629
  %v3400 = vpack.c.b16 %v2637, %v2630
  %v3401 = vpack.c.b16 %v2638, %v2631
  %v3402 = vpack.c.b16 %v2639, %v2632
  %v3403 = vpack.c.b16 %v2647, %v2640
  %v3404 = vpack.c.b16 %v2648, %v2641
  %v3405 = vpack.c.b16 %v2649, %v2642
  %v3406 = vpack.c.b16 %v2650, %v2643
  %v3407 = vpack.c.b16 %v2651, %v2644
  %v3408 = vpack.c.b16 %v2652, %v2645
  %v3409 = vpack.c.b16 %v2653, %v2646
  %v3410 = vpack.c.b16 %v2661, %v2654
  %v3411 = vpack.c.b16 %v2662, %v2655
  %v3412 = vpack.c.b16 %v2663, %v2656
  %v3413 = vpack.c.b16 %v2664, %v2657
  %v3414 = vpack.c.b16 %v2665, %v2658
  %v3415 = vpack.c.b16 %v2666, %v2659
  %v3416 = vpack.c.b16 %v2667, %v2660
  %v3417 = vpack.c.b16 %v2675, %v2668
  %v3418 = vpack.c.b16 %v2676, %v2669
  %v3419 = vpack.c.b16 %v2677, %v2670
  %v3420 = vpack.c.b16 %v2678, %v2671
  %v3421 = vpack.c.b16 %v2679, %v2672
  %v3422 = vpack.c.b16 %v2680, %v2673
  %v3423 = vpack.c.b16 %v2681, %v2674
  %v3424 = vpack.c.b16 %v2689, %v2682
  %v3425 = vpack.c.b16 %v2690, %v2683
  %v3426 = vpack.c.b16 %v2691, %v2684
  %v3427 = vpack.c.b16 %v2692, %v2685
  %v3428 = vpack.c.b16 %v2693, %v2686
  %v3429 = vpack.c.b16 %v2694, %v2687
  %v3430 = vpack.c.b16 %v2695, %v2688
  %v3431 = vpack.c.b16 %v2703, %v2696
  %v3432 = vpack.c.b16 %v2704, %v2697
  %v3433 = vpack.c.b16 %v2705, %v2698
  %v3434 = vpack.c.b16 %v2706, %v2699
  %v3435 = vpack.c.b16 %v2707, %v2700
  %v3436 = vpack.c.b16 %v2708, %v2701
  %v3437 = vpack.c.b16 %v2709, %v2702
  %v3438 = vpack.c.b16 %v2717, %v2710
  %v3439 = vpack.c.b16 %v2718, %v2711
  %v3440 = vpack.c.b16 %v2719, %v2712
  %v3441 = vpack.c.b16 %v2720, %v2713
  %v3442 = vpack.c.b16 %v2721, %v2714
  %v3443 = vpack.c.b16 %v2722, %v2715
  %v3444 = vpack.c.b16 %v2723, %v2716
  %v3445 = vpack.c.b16 %v2731, %v2724
  %v3446 = vpack.c.b16 %v2732, %v2725
  %v3447 = vpack.c.b16 %v2733, %v2726
  %v3448 = vpack.c.b16 %v2734, %v2727
  %v3449 = vpack.c.b16 %v2735, %v2728
  %v3450 = vpack.c.b16 %v2736, %v2729
  %v3451 = vpack.c.b16 %v2737, %v2730
  %v3452 = vpack.c.b16 %v2745, %v2738
  %v3453 = vpack.c.b16 %v2746, %v2739
  %v3454 = vpack.c.b16 %v2747, %v2740
  %v3455 = vpack.c.b16 %v2748, %v2741
  %v3456 = vpack.c.b16 %v2749, %v2742
  %v3457 = vpack.c.b16 %v2750, %v2743
  %v3458 = vpack.c.b16 %v2751, %v2744
  %v3459 = vpack.c.b16 %v2759, %v2752
  %v3460 = vpack.c.b16 %v2760, %v2753
  %v3461 = vpack.c.b16 %v2761, %v2754
  %v3462 = vpack.c.b16 %v2762, %v2755
  %v3463 = vpack.c.b16 %v2763, %v2756
  %v3464 = vpack.c.b16 %v2764, %v2757
  %v3465 = vpack.c.b16 %v2765, %v2758
  %v3466 = vpack.c.b16 %v2773, %v2766
  %v3467 = vpack.c.b16 %v2774, %v2767
  %v3468 = vpack.c.b16 %v2775, %v2768
  %v3469 = vpack.c.b16 %v2776, %v2769
  %v3470 = vpack.c.b16 %v2777, %v2770
  %v3471 = vpack.c.b16 %v2778, %v2771
  %v3472 = vpack.c.b16 %v2779, %v2772
  %v3473 = vpack.c.b16 %v2787, %v2780
  %v3474 = vpack.c.b16 %v2788, %v2781
  %v3475 = vpack.c.b16 %v2789, %v2782
  %v3476 = vpack.c.b16 %v2790, %v2783
  %v3477 = vpack.c.b16 %v2791, %v2784
  %v3478 = vpack.c.b16 %v2792, %v2785
  %v3479 = vpack.c.b16 %v2793, %v2786
  %v3480 = vpack.c.b16 %v2801, %v2794
  %v3481 = vpack.c.b16 %v2802, %v2795
  %v3482 = vpack.c.b16 %v2803, %v2796
  %v3483 = vpack.c.b16 %v2804, %v2797
  %v3484 = vpack.c.b16 %v2805, %v2798
  %v3485 = vpack.c.b16 %v2806, %v2799
  %v3486 = vpack.c.b16 %v2807, %v2800
  %v3487 = vpack.c.b16 %v2815, %v2808
  %v3488 = vpack.c.b16 %v2816, %v2809
  %v3489 = vpack.c.b16 %v2817, %v2810
  %v3490 = vpack.c.b16 %v2818, %v2811
  %v3491 = vpack.c.b16 %v2819, %v2812
  %v3492 = vpack.c.b16 %v2820, %v2813
  %v3493 = vpack.c.b16 %v2821, %v2814
  %v3494 = vpack.c.b16 %v2829, %v2822
  %v3495 = vpack.c.b16 %v2830, %v2823
  %v3496 = vpack.c.b16 %v2831, %v2824
  %v3497 = vpack.c.b16 %v2832, %v2825
  %v3498 = vpack.c.b16 %v2833, %v2826
  %v3499 = vpack.c.b16 %v2834, %v2827
  %v3500 = vpack.c.b16 %v2835, %v2828
  %v3501 = vpack.c.b16 %v2843, %v2836
  %v3502 = vpack.c.b16 %v2844, %v2837
  %v3503 = vpack.c.b16 %v2845, %v2838
  %v3504 = vpack.c.b16 %v2846, %v2839
  %v3505 = vpack.c.b16 %v2847, %v2840
  %v3506 = vpack.c.b16 %v2848, %v2841
  %v3507 = vpack.c.b16 %v2849, %v2842
  %v3508 = vpack.c.b16 %v2857, %v2850
  %v3509 = vpack.c.b16 %v2858, %v2851
  %v3510 = vpack.c.b16 %v2859, %v2852
  %v3511 = vpack.c.b16 %v2860, %v2853
  %v3512 = vpack.c.b16 %v2861, %v2854
  %v3513 = vpack.c.b16 %v2862, %v2855
  %v3514 = vpack.c.b16 %v2863, %v2856
  %v3515 = vpack.c.b16 %v2871, %v2864
  %v3516 = vpack.c.b16 %v2872, %v2865
  %v3517 = vpack.c.b16 %v2873, %v2866
  %v3518 = vpack.c.b16 %v2874, %v2867
  %v3519 = vpack.c.b16 %v2875, %v2868
  %v3520 = vpack.c.b16 %v2876, %v2869
  %v3521 = vpack.c.b16 %v2877, %v2870
  %v3522 = vpack.c.b16 %v2885, %v2878
  %v3523 = vpack.c.b16 %v2886, %v2879
  %v3524 = vpack.c.b16 %v2887, %v2880
  %v3525 = vpack.c.b16 %v2888, %v2881
  %v3526 = vpack.c.b16 %v2889, %v2882
  %v3527 = vpack.c.b16 %v2890, %v2883
  %v3528 = vpack.c.b16 %v2891, %v2884
  %v3529 = vpack.c.b16 %v2899, %v2892
  %v3530 = vpack.c.b16 %v2900, %v2893
  %v3531 = vpack.c.b16 %v2901, %v2894
  %v3532 = vpack.c.b16 %v2902, %v2895
  %v3533 = vpack.c.b16 %v2903, %v2896
  %v3534 = vpack.c.b16 %v2904, %v2897
  %v3535 = vpack.c.b16 %v2905, %v2898
  %v3536 = vpack.c.b16 %v2913, %v2906
  %v3537 = vpack.c.b16 %v2914, %v2907
  %v3538 = vpack.c.b16 %v2915, %v2908
  %v3539 = vpack.c.b16 %v2916, %v2909
  %v3540 = vpack.c.b16 %v2917, %v2910
  %v3541 = vpack.c.b16 %v2918, %v2911
  %v3542 = vpack.c.b16 %v2919, %v2912
  %v3543 = vpack.c.b16 %v2927, %v2920
  %v3544 = vpack.c.b16 %v2928, %v2921
  %v3545 = vpack.c.b16 %v2929, %v2922
  %v3546 = vpack.c.b16 %v2930, %v2923
  %v3547 = vpack.c.b16 %v2931, %v2924
  %v3548 = vpack.c.b16 %v2932, %v2925
  %v3549 = vpack.c.b16 %v2933, %v2926
  %v3550 = vpack.c.b16 %v2941, %v2934
  %v3551 = vpack.c.b16 %v2942, %v2935
  %v3552 = vpack.c.b16 %v2943, %v2936
  %v3553 = vpack.c.b16 %v2944, %v2937
  %v3554 = vpack.c.b16 %v2945, %v2938
  %v3555 = vpack.c.b16 %v2946, %v2939
  %v3556 = vpack.c.b16 %v2947, %v2940
  %v3557 = vpack.c.b16 %v2955, %v2948
  %v3558 = vpack.c.b16 %v2956, %v2949
  %v3559 = vpack.c.b16 %v2957, %v2950
  %v3560 = vpack.c.b16 %v2958, %v2951
  %v3561 = vpack.c.b16 %v2959, %v2952
  %v3562 = vpack.c.b16 %v2960, %v2953
  %v3563 = vpack.c.b16 %v2961, %v2954
  %v3564 = vpack.c.b16 %v2969, %v2962
  %v3565 = vpack.c.b16 %v2970, %v2963
  %v3566 = vpack.c.b16 %v2971, %v2964
  %v3567 = vpack.c.b16 %v2972, %v2965
  %v3568 = vpack.c.b16 %v2973, %v2966
  %v3569 = vpack.c.b16 %v2974, %v2967
  %v3570 = vpack.c.b16 %v2975, %v2968
  %v3571 = vpack.c.b16 %v2983, %v2976
  %v3572 = vpack.c.b16 %v2984, %v2977
  %v3573 = vpack.c.b16 %v2985, %v2978
  %v3574 = vpack.c.b16 %v2986, %v2979
  %v3575 = vpack.c.b16 %v2987, %v2980
  %v3576 = vpack.c.b16 %v2988, %v2981
  %v3577 = vpack.c.b16 %v2989, %v2982
  %v3578 = vpack.c.b16 %v2997, %v2990
  %v3579 = vpack.c.b16 %v2998, %v2991
  %v3580 = vpack.c.b16 %v2999, %v2992
  %v3581 = vpack.c.b16 %v3000, %v2993
  %v3582 = vpack.c.b16 %v3001, %v2994
  %v3583 = vpack.c.b16 %v3002, %v2995
  %v3584 = vpack.c.b16 %v3003, %v2996
  %v3585 = vpack.c.b16 %v3011, %v3004
  %v3586 = vpack.c.b16 %v3012, %v3005
  %v3587 = vpack.c.b16 %v3013, %v3006
  %v3588 = vpack.c.b16 %v3014, %v3007
  %v3589 = vpack.c.b16 %v3015, %v3008
  %v3590 = vpack.c.b16 %v3016, %v3009
  %v3591 = vpack.c.b16 %v3017, %v3010
  %v3592 = vpack.c.b16 %v3025, %v3018
  %v3593 = vpack.c.b16 %v3026, %v3019
  %v3594 = vpack.c.b16 %v3027, %v3020
  %v3595 = vpack.c.b16 %v3028, %v3021
  %v3596 = vpack.c.b16 %v3029, %v3022
  %v3597 = vpack.c.b16 %v3030, %v3023
  %v3598 = vpack.c.b16 %v3031, %v3024
  %v3599 = vpack.c.b16 %v3039, %v3032
  %v3600 = vpack.c.b16 %v3040, %v3033
  %v3601 = vpack.c.b16 %v3041, %v3034
  %v3602 = vpack.c.b16 %v3042, %v3035
  %v3603 = vpack.c.b16 %v3043, %v3036
  %v3604 = vpack.c.b16 %v3044, %v3037
  %v3605 = vpack.c.b16 %v3045, %v3038
  %v3606 = vpack.c.b16 %v3053, %v3046
  %v3607 = vpack.c.b16 %v3054, %v3047
  %v3608 = vpack.c.b16 %v3055, %v3048
  %v3609 = vpack.c.b16 %v3056, %v3049
  %v3610 = vpack.c.b16 %v3057, %v3050
  %v3611 = vpack.c.b16 %v3058, %v3051
  %v3612 = vpack.c.b16 %v3059, %v3052
  %v3613 = vpack.c.b16 %v3067, %v3060
  %v3614 = vpack.c.b16 %v3068, %v3061
  %v3615 = vpack.c.b16 %v3069, %v3062
  %v3616 = vpack.c.b16 %v3070, %v3063
  %v3617 = vpack.c.b16 %v3071, %v3064
  %v3618 = vpack.c.b16 %v3072, %v3065
  %v3619 = vpack.c.b16 %v3073, %v3066
  %v3620 = vpack.c.b16 %v3081, %v3074
  %v3621 = vpack.c.b16 %v3082, %v3075
  %v3622 = vpack.c.b16 %v3083, %v3076
  %v3623 = vpack.c.b16 %v3084, %v3077
  %v3624 = vpack.c.b16 %v3085, %v3078
  %v3625 = vpack.c.b16 %v3086, %v3079
  %v3626 = vpack.c.b16 %v3087, %v3080
  %v3627 = vpack.c.b16 %v3095, %v3088
  %v3628 = vpack.c.b16 %v3096, %v3089
  %v3629 = vpack.c.b16 %v3097, %v3090
  %v3630 = vpack.c.b16 %v3098, %v3091
  %v3631 = vpack.c.b16 %v3099, %v3092
  %v3632 = vpack.c.b16 %v3100, %v3093
  %v3633 = vpack.c.b16 %v3101, %v3094
  %v3634 = vpack.c.b16 %v3109, %v3102
  %v3635 = vpack.c.b16 %v3110, %v3103
  %v3636 = vpack.c.b16 %v3111, %v3104
  %v3637 = vpack.c.b16 %v3112, %v3105
  %v3638 = vpack.c.b16 %v3113, %v3106
  %v3639 = vpack.c.b16 %v3114, %v3107
  %v3640 = vpack.c.b16 %v3115, %v3108
  %v3641 = vpack.c.b16 %v3123, %v3116
  %v3642 = vpack.c.b16 %v3124, %v3117
  %v3643 = vpack.c.b16 %v3125, %v3118
  %v3644 = vpack.c.b16 %v3126, %v3119
  %v3645 = vpack.c.b16 %v3127, %v3120
  %v3646 = vpack.c.b16 %v3128, %v3121
  %v3647 = vpack.c.b16 %v3129, %v3122
  %v3648 = vpack.c.b16 %v3137, %v3130
  %v3649 = vpack.c.b16 %v3138, %v3131
  %v3650 = vpack.c.b16 %v3139, %v3132
  %v3651 = vpack.c.b16 %v3140, %v3133
  %v3652 = vpack.c.b16 %v3141, %v3134
  %v3653 = vpack.c.b16 %v3142, %v3135
  %v3654 = vpack.c.b16 %v3143, %v3136
  %v3655 = vpack.c.b16 %v3151, %v3144
  %v3656 = vpack.c.b16 %v3152, %v3145
  %v3657 = vpack.c.b16 %v3153, %v3146
  %v3658 = vpack.c.b16 %v3154, %v3147
  %v3659 = vpack.c.b16 %v3155, %v3148
  %v3660 = vpack.c.b16 %v3156, %v3149
  %v3661 = vpack.c.b16 %v3157, %v3150
  %v4192 = vunpack.c.l.b16 %v36
  %v4193 = vunpack.c.l.b16 %v37
  %v4194 = vunpack.c.l.b16 %v38
  %v4195 = vunpack.c.l.b16 %v39
  %v4196 = vunpack.c.l.b16 %v40
  %v4197 = vunpack.c.l.b16 %v41
  %v4198 = vunpack.c.l.b16 %v42
  %v4199 = vunpack.c.l.b16 %v43
  %v4200 = vunpack.c.l.b16 %v44
  %v4201 = vunpack.c.l.b16 %v45
  %v4202 = vunpack.c.l.b16 %v46
  %v4203 = vunpack.c.l.b16 %v47
  %v4204 = vunpack.c.l.b16 %v48
  %v4205 = vunpack.c.l.b16 %v49
  %v4206 = vunpack.c.l.b16 %v50
  %v4207 = vunpack.c.l.b16 %v51
  %v4208 = vunpack.c.l.b16 %v52
  %v4209 = vunpack.c.l.b16 %v53
  %v4210 = vunpack.c.l.b16 %v54
  %v4211 = vunpack.c.l.b16 %v55
  %v4212 = vunpack.c.l.b16 %v56
  %v4213 = vunpack.c.l.b16 %v57
  %v4214 = vunpack.c.l.b16 %v58
  %v4215 = vunpack.c.l.b16 %v59
  %v4216 = vunpack.c.l.b16 %v60
  %v4217 = vunpack.c.l.b16 %v61
  %v4218 = vunpack.c.l.b16 %v62
  %v4219 = vunpack.c.l.b16 %v63
  %v4220 = vunpack.c.l.b16 %v64
  %v4221 = vunpack.c.l.b16 %v65
  %v4222 = vunpack.c.l.b16 %v66
  %v4223 = vunpack.c.l.b16 %v67
  %v4224 = vunpack.c.l.b16 %v68
  %v4225 = vunpack.c.l.b16 %v69
  %v4226 = vunpack.c.l.b16 %v70
  %v4227 = vunpack.c.l.b16 %v71
  %v4228 = vunpack.c.l.b16 %v72
  %v4229 = vunpack.c.l.b16 %v73
  %v4230 = vunpack.c.l.b16 %v74
  %v4231 = vunpack.c.l.b16 %v75
  %v4232 = vunpack.c.l.b16 %v76
  %v4233 = vunpack.c.l.b16 %v77
  %v4234 = vunpack.c.l.b16 %v78
  %v4235 = vunpack.c.l.b16 %v79
  %v4236 = vunpack.c.l.b16 %v80
  %v4237 = vunpack.c.l.b16 %v81
  %v4238 = vunpack.c.l.b16 %v82
  %v4239 = vunpack.c.l.b16 %v83
  %v4240 = vunpack.c.l.b16 %v84
  %v4241 = vunpack.c.l.b16 %v85
  %v4242 = vunpack.c.l.b16 %v86
  %v4243 = vunpack.c.l.b16 %v87
  %v4244 = vunpack.c.l.b16 %v88
  %v4245 = vunpack.c.l.b16 %v89
  %v4246 = vunpack.c.l.b16 %v90
  %v4247 = vunpack.c.l.b16 %v91
  %v4248 = vunpack.c.l.b16 %v92
  %v4249 = vunpack.c.l.b16 %v93
  %v4250 = vunpack.c.l.b16 %v94
  %v4251 = vunpack.c.l.b16 %v95
  %v4252 = vunpack.c.l.b16 %v96
  %v4253 = vunpack.c.l.b16 %v97
  %v4254 = vunpack.c.l.b16 %v98
  %v4255 = vunpack.c.l.b16 %v99
  %v4256 = vunpack.c.l.b16 %v100
  %v4257 = vunpack.c.l.b16 %v101
  %v4258 = vunpack.c.l.b16 %v102
  %v4259 = vunpack.c.l.b16 %v103
  %v4260 = vunpack.c.l.b16 %v104
  %v4261 = vunpack.c.l.b16 %v105
  %v4262 = vunpack.c.l.b16 %v106
  %v4263 = vunpack.c.l.b16 %v107
  %v4264 = vunpack.c.l.b16 %v108
  %v4265 = vunpack.c.l.b16 %v109
  %v4266 = vunpack.c.l.b16 %v110
  %v4267 = vunpack.c.l.b16 %v111
  %v4268 = vunpack.c.l.b16 %v112
  %v4269 = vunpack.c.l.b16 %v113
  %v4270 = vunpack.c.l.b16 %v114
  %v4271 = vunpack.c.l.b16 %v115
  %v4272 = vunpack.c.l.b16 %v116
  %v4273 = vunpack.c.l.b16 %v117
  %v4274 = vunpack.c.l.b16 %v118
  %v4275 = vunpack.c.l.b16 %v119
  %v4276 = vunpack.c.l.b16 %v120
  %v4277 = vunpack.c.l.b16 %v121
  %v4278 = vunpack.c.l.b16 %v122
  %v4279 = vunpack.c.l.b16 %v123
  %v4280 = vunpack.c.l.b16 %v124
  %v4281 = vunpack.c.l.b16 %v125
  %v4282 = vunpack.c.l.b16 %v126
  %v4283 = vunpack.c.l.b16 %v127
  %v4284 = vunpack.c.l.b16 %v128
  %v4285 = vunpack.c.l.b16 %v129
  %v4286 = vunpack.c.l.b16 %v130
  %v4287 = vunpack.c.l.b16 %v131
  %v4288 = vunpack.c.l.b16 %v132
  %v4289 = vunpack.c.l.b16 %v133
  %v4290 = vpack.c.b16 %v4193, %v4192
  %v4291 = vpack.c.b16 %v4195, %v4194
  %v4292 = vpack.c.b16 %v4197, %v4196
  %v4293 = vpack.c.b16 %v4199, %v4198
  %v4294 = vpack.c.b16 %v4201, %v4200
  %v4295 = vpack.c.b16 %v4203, %v4202
  %v4296 = vpack.c.b16 %v4205, %v4204
  %v4297 = vpack.c.b16 %v4207, %v4206
  %v4298 = vpack.c.b16 %v4209, %v4208
  %v4299 = vpack.c.b16 %v4211, %v4210
  %v4300 = vpack.c.b16 %v4213, %v4212
  %v4301 = vpack.c.b16 %v4215, %v4214
  %v4302 = vpack.c.b16 %v4217, %v4216
  %v4303 = vpack.c.b16 %v4219, %v4218
  %v4304 = vpack.c.b16 %v4221, %v4220
  %v4305 = vpack.c.b16 %v4223, %v4222
  %v4306 = vpack.c.b16 %v4225, %v4224
  %v4307 = vpack.c.b16 %v4227, %v4226
  %v4308 = vpack.c.b16 %v4229, %v4228
  %v4309 = vpack.c.b16 %v4231, %v4230
  %v4310 = vpack.c.b16 %v4233, %v4232
  %v4311 = vpack.c.b16 %v4235, %v4234
  %v4312 = vpack.c.b16 %v4237, %v4236
  %v4313 = vpack.c.b16 %v4239, %v4238
  %v4314 = vpack.c.b16 %v4241, %v4240
  %v4315 = vpack.c.b16 %v4243, %v4242
  %v4316 = vpack.c.b16 %v4245, %v4244
  %v4317 = vpack.c.b16 %v4247, %v4246
  %v4318 = vpack.c.b16 %v4249, %v4248
  %v4319 = vpack.c.b16 %v4251, %v4250
  %v4320 = vpack.c.b16 %v4253, %v4252
  %v4321 = vpack.c.b16 %v4255, %v4254
  %v4322 = vpack.c.b16 %v4257, %v4256
  %v4323 = vpack.c.b16 %v4259, %v4258
  %v4324 = vpack.c.b16 %v4261, %v4260
  %v4325 = vpack.c.b16 %v4263, %v4262
  %v4326 = vpack.c.b16 %v4265, %v4264
  %v4327 = vpack.c.b16 %v4267, %v4266
  %v4328 = vpack.c.b16 %v4269, %v4268
  %v4329 = vpack.c.b16 %v4271, %v4270
  %v4330 = vpack.c.b16 %v4273, %v4272
  %v4331 = vpack.c.b16 %v4275, %v4274
  %v4332 = vpack.c.b16 %v4277, %v4276
  %v4333 = vpack.c.b16 %v4279, %v4278
  %v4334 = vpack.c.b16 %v4281, %v4280
  %v4335 = vpack.c.b16 %v4283, %v4282
  %v4336 = vpack.c.b16 %v4285, %v4284
  %v4337 = vpack.c.b16 %v4287, %v4286
  %v4338 = vpack.c.b16 %v4289, %v4288
  %vm4388 = vcmask 130048
  %v4390 = vsel %vm4388, %v3164, 0
  %v4393 = vsel %vm4388, %v3171, 0
  %v4396 = vsel %vm4388, %v3178, 0
  %v4399 = vsel %vm4388, %v3185, 0
  %v4402 = vsel %vm4388, %v3192, 0
  %v4405 = vsel %vm4388, %v3199, 0
  %v4408 = vsel %vm4388, %v3206, 0
  %v4411 = vsel %vm4388, %v3213, 0
  %v4414 = vsel %vm4388, %v3220, 0
  %v4417 = vsel %vm4388, %v3227, 0
  %v4420 = vsel %vm4388, %v3234, 0
  %v4423 = vsel %vm4388, %v3241, 0
  %v4426 = vsel %vm4388, %v3248, 0
  %v4429 = vsel %vm4388, %v3255, 0
  %v4432 = vsel %vm4388, %v3262, 0
  %v4435 = vsel %vm4388, %v3269, 0
  %v4438 = vsel %vm4388, %v3276, 0
  %v4441 = vsel %vm4388, %v3283, 0
  %v4444 = vsel %vm4388, %v3290, 0
  %v4447 = vsel %vm4388, %v3297, 0
  %v4450 = vsel %vm4388, %v3304, 0
  %v4453 = vsel %vm4388, %v3311, 0
  %v4456 = vsel %vm4388, %v3318, 0
  %v4459 = vsel %vm4388, %v3325, 0
  %v4462 = vsel %vm4388, %v3332, 0
  %v4465 = vsel %vm4388, %v3339, 0
  %v4468 = vsel %vm4388, %v3346, 0
  %v4471 = vsel %vm4388, %v3353, 0
  %v4474 = vsel %vm4388, %v3360, 0
  %v4477 = vsel %vm4388, %v3367, 0
  %v4480 = vsel %vm4388, %v3374, 0
  %v4483 = vsel %vm4388, %v3381, 0
  %v4486 = vsel %vm4388, %v3388, 0
  %v4489 = vsel %vm4388, %v3395, 0
  %v4492 = vsel %vm4388, %v3402, 0
  %v4495 = vsel %vm4388, %v3409, 0
  %v4498 = vsel %vm4388, %v3416, 0
  %v4501 = vsel %vm4388, %v3423, 0
  %v4504 = vsel %vm4388, %v3430, 0
  %v4507 = vsel %vm4388, %v3437, 0
  %v4510 = vsel %vm4388, %v3444, 0
  %v4513 = vsel %vm4388, %v3451, 0
  %v4516 = vsel %vm4388, %v3458, 0
  %v4519 = vsel %vm4388, %v3465, 0
  %v4522 = vsel %vm4388, %v3472, 0
  %v4525 = vsel %vm4388, %v3479, 0
  %v4528 = vsel %vm4388, %v3486, 0
  %v4531 = vsel %vm4388, %v3493, 0
  %v4534 = vsel %vm4388, %v3500, 0
  %v4537 = vsel %vm4388, %v3507, 0
  %v4540 = vsel %vm4388, %v3514, 0
  %v4543 = vsel %vm4388, %v3521, 0
  %v4546 = vsel %vm4388, %v3528, 0
  %v4549 = vsel %vm4388, %v3535, 0
  %v4552 = vsel %vm4388, %v3542, 0
  %v4555 = vsel %vm4388, %v3549, 0
  %v4558 = vsel %vm4388, %v3556, 0
  %v4561 = vsel %vm4388, %v3563, 0
  %v4564 = vsel %vm4388, %v3570, 0
  %v4567 = vsel %vm4388, %v3577, 0
  %v4570 = vsel %vm4388, %v3584, 0
  %v4573 = vsel %vm4388, %v3591, 0
  %v4576 = vsel %vm4388, %v3598, 0
  %v4579 = vsel %vm4388, %v3605, 0
  %v4582 = vsel %vm4388, %v3612, 0
  %v4585 = vsel %vm4388, %v3619, 0
  %v4588 = vsel %vm4388, %v3626, 0
  %v4591 = vsel %vm4388, %v3633, 0
  %v4594 = vsel %vm4388, %v3640, 0
  %v4597 = vsel %vm4388, %v3647, 0
  %v4600 = vsel %vm4388, %v3654, 0
  %v4603 = vsel %vm4388, %v3661, 0
  %4605 = vmatprep.subr.bf16.mxu0 0
  %4606 = vmatpush1.bf16.msra.mxu0 %v4297
  %4607 = vmatprep.subr.bf16.mxu0 0
  %4608 = vmatpush1.bf16.msra.mxu0 %v4296
  %4609 = vmatprep.subr.bf16.mxu0 0
  %4610 = vmatpush1.bf16.msra.mxu0 %v4295
  %4611 = vmatprep.subr.bf16.mxu0 0
  %4612 = vmatpush1.bf16.msra.mxu0 %v4294
  %4613 = vmatprep.subr.bf16.mxu0 0
  %4614 = vmatpush1.bf16.msra.mxu0 %v4293
  %4615 = vmatprep.subr.bf16.mxu0 0
  %4616 = vmatpush1.bf16.msra.mxu0 %v4292
  %4617 = vmatprep.subr.bf16.mxu0 0
  %4618 = vmatpush1.bf16.msra.mxu0 %v4291
  %4619 = vmatprep.subr.bf16.mxu0 0
  %4620 = vmatpush1.bf16.msra.mxu0 %v4290
  %4621 = vmatprep.subr.bf16.mxu0 0
  %4622 = vmatpush2.bf16.msra.mxu0 %v4305
  %4623 = vmatprep.subr.bf16.mxu0 0
  %4624 = vmatpush2.bf16.msra.mxu0 %v4304
  %4625 = vmatprep.subr.bf16.mxu0 0
  %4626 = vmatpush2.bf16.msra.mxu0 %v4303
  %4627 = vmatprep.subr.bf16.mxu0 0
  %4628 = vmatpush2.bf16.msra.mxu0 %v4302
  %4629 = vmatprep.subr.bf16.mxu0 0
  %4630 = vmatpush2.bf16.msra.mxu0 %v4301
  %4631 = vmatprep.subr.bf16.mxu0 0
  %4632 = vmatpush2.bf16.msra.mxu0 %v4300
  %4633 = vmatprep.subr.bf16.mxu0 0
  %4634 = vmatpush2.bf16.msra.mxu0 %v4299
  %4635 = vmatprep.subr.bf16.mxu0 0
  %4636 = vmatpush2.bf16.msra.mxu0 %v4298
  %4637 = vmatprep.mubr.bf16.mxu0 %v3159
  %4638 = vmatmul.mubr.bf16.gmra.mxu0 %v3158
  %v4639 = vpop.f32.mrf.mxu0
  %v4640 = vadd.f32 %v857, %v4639
  %v4641 = vpop.f32.mrf.mxu0
  %v4642 = vpop.f32.mrf.mxu0
  %v4643 = vadd.f32 %v862, %v4642
  %v4644 = vpop.f32.mrf.mxu0
  %4645 = vmatprep.mubr.bf16.mxu0 %v3166
  %4646 = vmatmul.mubr.bf16.gmra.mxu0 %v3165
  %v4647 = vpop.f32.mrf.mxu0
  %v4648 = vadd.f32 %v867, %v4647
  %v4649 = vpop.f32.mrf.mxu0
  %v4650 = vpop.f32.mrf.mxu0
  %v4651 = vadd.f32 %v872, %v4650
  %v4652 = vpop.f32.mrf.mxu0
  %4653 = vmatprep.mubr.bf16.mxu0 %v3173
  %4654 = vmatmul.mubr.bf16.gmra.mxu0 %v3172
  %v4655 = vpop.f32.mrf.mxu0
  %v4656 = vadd.f32 %v877, %v4655
  %v4657 = vpop.f32.mrf.mxu0
  %v4658 = vpop.f32.mrf.mxu0
  %v4659 = vadd.f32 %v882, %v4658
  %v4660 = vpop.f32.mrf.mxu0
  %4661 = vmatprep.mubr.bf16.mxu0 %v3180
  %4662 = vmatmul.mubr.bf16.gmra.mxu0 %v3179
  %v4663 = vpop.f32.mrf.mxu0
  %v4664 = vadd.f32 %v887, %v4663
  %v4665 = vpop.f32.mrf.mxu0
  %v4666 = vpop.f32.mrf.mxu0
  %v4667 = vadd.f32 %v892, %v4666
  %v4668 = vpop.f32.mrf.mxu0
  %4669 = vmatprep.mubr.bf16.mxu0 %v3187
  %4670 = vmatmul.mubr.bf16.gmra.mxu0 %v3186
  %v4671 = vpop.f32.mrf.mxu0
  %v4672 = vadd.f32 %v897, %v4671
  %v4673 = vpop.f32.mrf.mxu0
  %v4674 = vpop.f32.mrf.mxu0
  %v4675 = vadd.f32 %v902, %v4674
  %v4676 = vpop.f32.mrf.mxu0
  %4677 = vmatprep.mubr.bf16.mxu0 %v3194
  %4678 = vmatmul.mubr.bf16.gmra.mxu0 %v3193
  %v4679 = vpop.f32.mrf.mxu0
  %v4680 = vadd.f32 %v907, %v4679
  %v4681 = vpop.f32.mrf.mxu0
  %v4682 = vpop.f32.mrf.mxu0
  %v4683 = vadd.f32 %v912, %v4682
  %v4684 = vpop.f32.mrf.mxu0
  %4685 = vmatprep.mubr.bf16.mxu0 %v3201
  %4686 = vmatmul.mubr.bf16.gmra.mxu0 %v3200
  %v4687 = vpop.f32.mrf.mxu0
  %v4688 = vadd.f32 %v917, %v4687
  %v4689 = vpop.f32.mrf.mxu0
  %v4690 = vpop.f32.mrf.mxu0
  %v4691 = vadd.f32 %v922, %v4690
  %v4692 = vpop.f32.mrf.mxu0
  %4693 = vmatprep.mubr.bf16.mxu0 %v3208
  %4694 = vmatmul.mubr.bf16.gmra.mxu0 %v3207
  %v4695 = vpop.f32.mrf.mxu0
  %v4696 = vadd.f32 %v927, %v4695
  %v4697 = vpop.f32.mrf.mxu0
  %v4698 = vpop.f32.mrf.mxu0
  %v4699 = vadd.f32 %v932, %v4698
  %v4700 = vpop.f32.mrf.mxu0
  %4701 = vmatprep.mubr.bf16.mxu0 %v3215
  %4702 = vmatmul.mubr.bf16.gmra.mxu0 %v3214
  %v4703 = vpop.f32.mrf.mxu0
  %v4704 = vadd.f32 %v937, %v4703
  %v4705 = vpop.f32.mrf.mxu0
  %v4706 = vpop.f32.mrf.mxu0
  %v4707 = vadd.f32 %v942, %v4706
  %v4708 = vpop.f32.mrf.mxu0
  %4709 = vmatprep.mubr.bf16.mxu0 %v3222
  %4710 = vmatmul.mubr.bf16.gmra.mxu0 %v3221
  %v4711 = vpop.f32.mrf.mxu0
  %v4712 = vadd.f32 %v947, %v4711
  %v4713 = vpop.f32.mrf.mxu0
  %v4714 = vpop.f32.mrf.mxu0
  %v4715 = vadd.f32 %v952, %v4714
  %v4716 = vpop.f32.mrf.mxu0
  %4717 = vmatprep.mubr.bf16.mxu0 %v3229
  %4718 = vmatmul.mubr.bf16.gmra.mxu0 %v3228
  %v4719 = vpop.f32.mrf.mxu0
  %v4720 = vadd.f32 %v957, %v4719
  %v4721 = vpop.f32.mrf.mxu0
  %v4722 = vpop.f32.mrf.mxu0
  %v4723 = vadd.f32 %v962, %v4722
  %v4724 = vpop.f32.mrf.mxu0
  %4725 = vmatprep.mubr.bf16.mxu0 %v3236
  %4726 = vmatmul.mubr.bf16.gmra.mxu0 %v3235
  %v4727 = vpop.f32.mrf.mxu0
  %v4728 = vadd.f32 %v967, %v4727
  %v4729 = vpop.f32.mrf.mxu0
  %v4730 = vpop.f32.mrf.mxu0
  %v4731 = vadd.f32 %v972, %v4730
  %v4732 = vpop.f32.mrf.mxu0
  %4733 = vmatprep.mubr.bf16.mxu0 %v3243
  %4734 = vmatmul.mubr.bf16.gmra.mxu0 %v3242
  %v4735 = vpop.f32.mrf.mxu0
  %v4736 = vadd.f32 %v977, %v4735
  %v4737 = vpop.f32.mrf.mxu0
  %v4738 = vpop.f32.mrf.mxu0
  %v4739 = vadd.f32 %v982, %v4738
  %v4740 = vpop.f32.mrf.mxu0
  %4741 = vmatprep.mubr.bf16.mxu0 %v3250
  %4742 = vmatmul.mubr.bf16.gmra.mxu0 %v3249
  %v4743 = vpop.f32.mrf.mxu0
  %v4744 = vadd.f32 %v987, %v4743
  %v4745 = vpop.f32.mrf.mxu0
  %v4746 = vpop.f32.mrf.mxu0
  %v4747 = vadd.f32 %v992, %v4746
  %v4748 = vpop.f32.mrf.mxu0
  %4749 = vmatprep.mubr.bf16.mxu0 %v3257
  %4750 = vmatmul.mubr.bf16.gmra.mxu0 %v3256
  %v4751 = vpop.f32.mrf.mxu0
  %v4752 = vadd.f32 %v997, %v4751
  %v4753 = vpop.f32.mrf.mxu0
  %v4754 = vpop.f32.mrf.mxu0
  %v4755 = vadd.f32 %v1002, %v4754
  %v4756 = vpop.f32.mrf.mxu0
  %4757 = vmatprep.mubr.bf16.mxu0 %v3264
  %4758 = vmatmul.mubr.bf16.gmra.mxu0 %v3263
  %v4759 = vpop.f32.mrf.mxu0
  %v4760 = vadd.f32 %v1007, %v4759
  %v4761 = vpop.f32.mrf.mxu0
  %v4762 = vpop.f32.mrf.mxu0
  %v4763 = vadd.f32 %v1012, %v4762
  %v4764 = vpop.f32.mrf.mxu0
  %4765 = vmatprep.mubr.bf16.mxu0 %v3271
  %4766 = vmatmul.mubr.bf16.gmra.mxu0 %v3270
  %v4767 = vpop.f32.mrf.mxu0
  %v4768 = vadd.f32 %v1017, %v4767
  %v4769 = vpop.f32.mrf.mxu0
  %v4770 = vpop.f32.mrf.mxu0
  %v4771 = vadd.f32 %v1022, %v4770
  %v4772 = vpop.f32.mrf.mxu0
  %4773 = vmatprep.mubr.bf16.mxu0 %v3278
  %4774 = vmatmul.mubr.bf16.gmra.mxu0 %v3277
  %v4775 = vpop.f32.mrf.mxu0
  %v4776 = vadd.f32 %v1027, %v4775
  %v4777 = vpop.f32.mrf.mxu0
  %v4778 = vpop.f32.mrf.mxu0
  %v4779 = vadd.f32 %v1032, %v4778
  %v4780 = vpop.f32.mrf.mxu0
  %4781 = vmatprep.mubr.bf16.mxu0 %v3285
  %4782 = vmatmul.mubr.bf16.gmra.mxu0 %v3284
  %v4783 = vpop.f32.mrf.mxu0
  %v4784 = vadd.f32 %v1037, %v4783
  %v4785 = vpop.f32.mrf.mxu0
  %v4786 = vpop.f32.mrf.mxu0
  %v4787 = vadd.f32 %v1042, %v4786
  %v4788 = vpop.f32.mrf.mxu0
  %4789 = vmatprep.mubr.bf16.mxu0 %v3292
  %4790 = vmatmul.mubr.bf16.gmra.mxu0 %v3291
  %v4791 = vpop.f32.mrf.mxu0
  %v4792 = vadd.f32 %v1047, %v4791
  %v4793 = vpop.f32.mrf.mxu0
  %v4794 = vpop.f32.mrf.mxu0
  %v4795 = vadd.f32 %v1052, %v4794
  %v4796 = vpop.f32.mrf.mxu0
  %4797 = vmatprep.mubr.bf16.mxu0 %v3299
  %4798 = vmatmul.mubr.bf16.gmra.mxu0 %v3298
  %v4799 = vpop.f32.mrf.mxu0
  %v4800 = vadd.f32 %v1057, %v4799
  %v4801 = vpop.f32.mrf.mxu0
  %v4802 = vpop.f32.mrf.mxu0
  %v4803 = vadd.f32 %v1062, %v4802
  %v4804 = vpop.f32.mrf.mxu0
  %4805 = vmatprep.mubr.bf16.mxu0 %v3306
  %4806 = vmatmul.mubr.bf16.gmra.mxu0 %v3305
  %v4807 = vpop.f32.mrf.mxu0
  %v4808 = vadd.f32 %v1067, %v4807
  %v4809 = vpop.f32.mrf.mxu0
  %v4810 = vpop.f32.mrf.mxu0
  %v4811 = vadd.f32 %v1072, %v4810
  %v4812 = vpop.f32.mrf.mxu0
  %4813 = vmatprep.mubr.bf16.mxu0 %v3313
  %4814 = vmatmul.mubr.bf16.gmra.mxu0 %v3312
  %v4815 = vpop.f32.mrf.mxu0
  %v4816 = vadd.f32 %v1077, %v4815
  %v4817 = vpop.f32.mrf.mxu0
  %v4818 = vpop.f32.mrf.mxu0
  %v4819 = vadd.f32 %v1082, %v4818
  %v4820 = vpop.f32.mrf.mxu0
  %4821 = vmatprep.mubr.bf16.mxu0 %v3320
  %4822 = vmatmul.mubr.bf16.gmra.mxu0 %v3319
  %v4823 = vpop.f32.mrf.mxu0
  %v4824 = vadd.f32 %v1087, %v4823
  %v4825 = vpop.f32.mrf.mxu0
  %v4826 = vpop.f32.mrf.mxu0
  %v4827 = vadd.f32 %v1092, %v4826
  %v4828 = vpop.f32.mrf.mxu0
  %4829 = vmatprep.mubr.bf16.mxu0 %v3327
  %4830 = vmatmul.mubr.bf16.gmra.mxu0 %v3326
  %v4831 = vpop.f32.mrf.mxu0
  %v4832 = vadd.f32 %v1097, %v4831
  %v4833 = vpop.f32.mrf.mxu0
  %v4834 = vpop.f32.mrf.mxu0
  %v4835 = vadd.f32 %v1102, %v4834
  %v4836 = vpop.f32.mrf.mxu0
  %4837 = vmatprep.mubr.bf16.mxu0 %v3334
  %4838 = vmatmul.mubr.bf16.gmra.mxu0 %v3333
  %v4839 = vpop.f32.mrf.mxu0
  %v4840 = vadd.f32 %v1107, %v4839
  %v4841 = vpop.f32.mrf.mxu0
  %v4842 = vpop.f32.mrf.mxu0
  %v4843 = vadd.f32 %v1112, %v4842
  %v4844 = vpop.f32.mrf.mxu0
  %4845 = vmatprep.mubr.bf16.mxu0 %v3341
  %4846 = vmatmul.mubr.bf16.gmra.mxu0 %v3340
  %v4847 = vpop.f32.mrf.mxu0
  %v4848 = vadd.f32 %v1117, %v4847
  %v4849 = vpop.f32.mrf.mxu0
  %v4850 = vpop.f32.mrf.mxu0
  %v4851 = vadd.f32 %v1122, %v4850
  %v4852 = vpop.f32.mrf.mxu0
  %4853 = vmatprep.mubr.bf16.mxu0 %v3348
  %4854 = vmatmul.mubr.bf16.gmra.mxu0 %v3347
  %v4855 = vpop.f32.mrf.mxu0
  %v4856 = vadd.f32 %v1127, %v4855
  %v4857 = vpop.f32.mrf.mxu0
  %v4858 = vpop.f32.mrf.mxu0
  %v4859 = vadd.f32 %v1132, %v4858
  %v4860 = vpop.f32.mrf.mxu0
  %4861 = vmatprep.mubr.bf16.mxu0 %v3355
  %4862 = vmatmul.mubr.bf16.gmra.mxu0 %v3354
  %v4863 = vpop.f32.mrf.mxu0
  %v4864 = vadd.f32 %v1137, %v4863
  %v4865 = vpop.f32.mrf.mxu0
  %v4866 = vpop.f32.mrf.mxu0
  %v4867 = vadd.f32 %v1142, %v4866
  %v4868 = vpop.f32.mrf.mxu0
  %4869 = vmatprep.mubr.bf16.mxu0 %v3362
  %4870 = vmatmul.mubr.bf16.gmra.mxu0 %v3361
  %v4871 = vpop.f32.mrf.mxu0
  %v4872 = vadd.f32 %v1147, %v4871
  %v4873 = vpop.f32.mrf.mxu0
  %v4874 = vpop.f32.mrf.mxu0
  %v4875 = vadd.f32 %v1152, %v4874
  %v4876 = vpop.f32.mrf.mxu0
  %4877 = vmatprep.mubr.bf16.mxu0 %v3369
  %4878 = vmatmul.mubr.bf16.gmra.mxu0 %v3368
  %v4879 = vpop.f32.mrf.mxu0
  %v4880 = vadd.f32 %v1157, %v4879
  %v4881 = vpop.f32.mrf.mxu0
  %v4882 = vpop.f32.mrf.mxu0
  %v4883 = vadd.f32 %v1162, %v4882
  %v4884 = vpop.f32.mrf.mxu0
  %4885 = vmatprep.mubr.bf16.mxu0 %v3376
  %4886 = vmatmul.mubr.bf16.gmra.mxu0 %v3375
  %v4887 = vpop.f32.mrf.mxu0
  %v4888 = vadd.f32 %v1167, %v4887
  %v4889 = vpop.f32.mrf.mxu0
  %v4890 = vpop.f32.mrf.mxu0
  %v4891 = vadd.f32 %v1172, %v4890
  %v4892 = vpop.f32.mrf.mxu0
  %4893 = vmatprep.mubr.bf16.mxu0 %v3383
  %4894 = vmatmul.mubr.bf16.gmra.mxu0 %v3382
  %v4895 = vpop.f32.mrf.mxu0
  %v4896 = vadd.f32 %v1177, %v4895
  %v4897 = vpop.f32.mrf.mxu0
  %v4898 = vpop.f32.mrf.mxu0
  %v4899 = vadd.f32 %v1182, %v4898
  %v4900 = vpop.f32.mrf.mxu0
  %4901 = vmatprep.mubr.bf16.mxu0 %v3390
  %4902 = vmatmul.mubr.bf16.gmra.mxu0 %v3389
  %v4903 = vpop.f32.mrf.mxu0
  %v4904 = vadd.f32 %v1187, %v4903
  %v4905 = vpop.f32.mrf.mxu0
  %v4906 = vpop.f32.mrf.mxu0
  %v4907 = vadd.f32 %v1192, %v4906
  %v4908 = vpop.f32.mrf.mxu0
  %4909 = vmatprep.mubr.bf16.mxu0 %v3397
  %4910 = vmatmul.mubr.bf16.gmra.mxu0 %v3396
  %v4911 = vpop.f32.mrf.mxu0
  %v4912 = vadd.f32 %v1197, %v4911
  %v4913 = vpop.f32.mrf.mxu0
  %v4914 = vpop.f32.mrf.mxu0
  %v4915 = vadd.f32 %v1202, %v4914
  %v4916 = vpop.f32.mrf.mxu0
  %4917 = vmatprep.mubr.bf16.mxu0 %v3404
  %4918 = vmatmul.mubr.bf16.gmra.mxu0 %v3403
  %v4919 = vpop.f32.mrf.mxu0
  %v4920 = vadd.f32 %v1207, %v4919
  %v4921 = vpop.f32.mrf.mxu0
  %v4922 = vpop.f32.mrf.mxu0
  %v4923 = vadd.f32 %v1212, %v4922
  %v4924 = vpop.f32.mrf.mxu0
  %4925 = vmatprep.mubr.bf16.mxu0 %v3411
  %4926 = vmatmul.mubr.bf16.gmra.mxu0 %v3410
  %v4927 = vpop.f32.mrf.mxu0
  %v4928 = vadd.f32 %v1217, %v4927
  %v4929 = vpop.f32.mrf.mxu0
  %v4930 = vpop.f32.mrf.mxu0
  %v4931 = vadd.f32 %v1222, %v4930
  %v4932 = vpop.f32.mrf.mxu0
  %4933 = vmatprep.mubr.bf16.mxu0 %v3418
  %4934 = vmatmul.mubr.bf16.gmra.mxu0 %v3417
  %v4935 = vpop.f32.mrf.mxu0
  %v4936 = vadd.f32 %v1227, %v4935
  %v4937 = vpop.f32.mrf.mxu0
  %v4938 = vpop.f32.mrf.mxu0
  %v4939 = vadd.f32 %v1232, %v4938
  %v4940 = vpop.f32.mrf.mxu0
  %4941 = vmatprep.mubr.bf16.mxu0 %v3425
  %4942 = vmatmul.mubr.bf16.gmra.mxu0 %v3424
  %v4943 = vpop.f32.mrf.mxu0
  %v4944 = vadd.f32 %v1237, %v4943
  %v4945 = vpop.f32.mrf.mxu0
  %v4946 = vpop.f32.mrf.mxu0
  %v4947 = vadd.f32 %v1242, %v4946
  %v4948 = vpop.f32.mrf.mxu0
  %4949 = vmatprep.mubr.bf16.mxu0 %v3432
  %4950 = vmatmul.mubr.bf16.gmra.mxu0 %v3431
  %v4951 = vpop.f32.mrf.mxu0
  %v4952 = vadd.f32 %v1247, %v4951
  %v4953 = vpop.f32.mrf.mxu0
  %v4954 = vpop.f32.mrf.mxu0
  %v4955 = vadd.f32 %v1252, %v4954
  %v4956 = vpop.f32.mrf.mxu0
  %4957 = vmatprep.mubr.bf16.mxu0 %v3439
  %4958 = vmatmul.mubr.bf16.gmra.mxu0 %v3438
  %v4959 = vpop.f32.mrf.mxu0
  %v4960 = vadd.f32 %v1257, %v4959
  %v4961 = vpop.f32.mrf.mxu0
  %v4962 = vpop.f32.mrf.mxu0
  %v4963 = vadd.f32 %v1262, %v4962
  %v4964 = vpop.f32.mrf.mxu0
  %4965 = vmatprep.mubr.bf16.mxu0 %v3446
  %4966 = vmatmul.mubr.bf16.gmra.mxu0 %v3445
  %v4967 = vpop.f32.mrf.mxu0
  %v4968 = vadd.f32 %v1267, %v4967
  %v4969 = vpop.f32.mrf.mxu0
  %v4970 = vpop.f32.mrf.mxu0
  %v4971 = vadd.f32 %v1272, %v4970
  %v4972 = vpop.f32.mrf.mxu0
  %4973 = vmatprep.mubr.bf16.mxu0 %v3453
  %4974 = vmatmul.mubr.bf16.gmra.mxu0 %v3452
  %v4975 = vpop.f32.mrf.mxu0
  %v4976 = vadd.f32 %v1277, %v4975
  %v4977 = vpop.f32.mrf.mxu0
  %v4978 = vpop.f32.mrf.mxu0
  %v4979 = vadd.f32 %v1282, %v4978
  %v4980 = vpop.f32.mrf.mxu0
  %4981 = vmatprep.mubr.bf16.mxu0 %v3460
  %4982 = vmatmul.mubr.bf16.gmra.mxu0 %v3459
  %v4983 = vpop.f32.mrf.mxu0
  %v4984 = vadd.f32 %v1287, %v4983
  %v4985 = vpop.f32.mrf.mxu0
  %v4986 = vpop.f32.mrf.mxu0
  %v4987 = vadd.f32 %v1292, %v4986
  %v4988 = vpop.f32.mrf.mxu0
  %4989 = vmatprep.mubr.bf16.mxu0 %v3467
  %4990 = vmatmul.mubr.bf16.gmra.mxu0 %v3466
  %v4991 = vpop.f32.mrf.mxu0
  %v4992 = vadd.f32 %v1297, %v4991
  %v4993 = vpop.f32.mrf.mxu0
  %v4994 = vpop.f32.mrf.mxu0
  %v4995 = vadd.f32 %v1302, %v4994
  %v4996 = vpop.f32.mrf.mxu0
  %4997 = vmatprep.mubr.bf16.mxu0 %v3474
  %4998 = vmatmul.mubr.bf16.gmra.mxu0 %v3473
  %v4999 = vpop.f32.mrf.mxu0
  %v5000 = vadd.f32 %v1307, %v4999
  %v5001 = vpop.f32.mrf.mxu0
  %v5002 = vpop.f32.mrf.mxu0
  %v5003 = vadd.f32 %v1312, %v5002
  %v5004 = vpop.f32.mrf.mxu0
  %5005 = vmatprep.mubr.bf16.mxu0 %v3481
  %5006 = vmatmul.mubr.bf16.gmra.mxu0 %v3480
  %v5007 = vpop.f32.mrf.mxu0
  %v5008 = vadd.f32 %v1317, %v5007
  %v5009 = vpop.f32.mrf.mxu0
  %v5010 = vpop.f32.mrf.mxu0
  %v5011 = vadd.f32 %v1322, %v5010
  %v5012 = vpop.f32.mrf.mxu0
  %5013 = vmatprep.mubr.bf16.mxu0 %v3488
  %5014 = vmatmul.mubr.bf16.gmra.mxu0 %v3487
  %v5015 = vpop.f32.mrf.mxu0
  %v5016 = vadd.f32 %v1327, %v5015
  %v5017 = vpop.f32.mrf.mxu0
  %v5018 = vpop.f32.mrf.mxu0
  %v5019 = vadd.f32 %v1332, %v5018
  %v5020 = vpop.f32.mrf.mxu0
  %5021 = vmatprep.mubr.bf16.mxu0 %v3495
  %5022 = vmatmul.mubr.bf16.gmra.mxu0 %v3494
  %v5023 = vpop.f32.mrf.mxu0
  %v5024 = vadd.f32 %v1337, %v5023
  %v5025 = vpop.f32.mrf.mxu0
  %v5026 = vpop.f32.mrf.mxu0
  %v5027 = vadd.f32 %v1342, %v5026
  %v5028 = vpop.f32.mrf.mxu0
  %5029 = vmatprep.mubr.bf16.mxu0 %v3502
  %5030 = vmatmul.mubr.bf16.gmra.mxu0 %v3501
  %v5031 = vpop.f32.mrf.mxu0
  %v5032 = vadd.f32 %v1347, %v5031
  %v5033 = vpop.f32.mrf.mxu0
  %v5034 = vpop.f32.mrf.mxu0
  %v5035 = vadd.f32 %v1352, %v5034
  %v5036 = vpop.f32.mrf.mxu0
  %5037 = vmatprep.mubr.bf16.mxu0 %v3509
  %5038 = vmatmul.mubr.bf16.gmra.mxu0 %v3508
  %v5039 = vpop.f32.mrf.mxu0
  %v5040 = vadd.f32 %v1357, %v5039
  %v5041 = vpop.f32.mrf.mxu0
  %v5042 = vpop.f32.mrf.mxu0
  %v5043 = vadd.f32 %v1362, %v5042
  %v5044 = vpop.f32.mrf.mxu0
  %5045 = vmatprep.mubr.bf16.mxu0 %v3516
  %5046 = vmatmul.mubr.bf16.gmra.mxu0 %v3515
  %v5047 = vpop.f32.mrf.mxu0
  %v5048 = vadd.f32 %v1367, %v5047
  %v5049 = vpop.f32.mrf.mxu0
  %v5050 = vpop.f32.mrf.mxu0
  %v5051 = vadd.f32 %v1372, %v5050
  %v5052 = vpop.f32.mrf.mxu0
  %5053 = vmatprep.mubr.bf16.mxu0 %v3523
  %5054 = vmatmul.mubr.bf16.gmra.mxu0 %v3522
  %v5055 = vpop.f32.mrf.mxu0
  %v5056 = vadd.f32 %v1377, %v5055
  %v5057 = vpop.f32.mrf.mxu0
  %v5058 = vpop.f32.mrf.mxu0
  %v5059 = vadd.f32 %v1382, %v5058
  %v5060 = vpop.f32.mrf.mxu0
  %5061 = vmatprep.mubr.bf16.mxu0 %v3530
  %5062 = vmatmul.mubr.bf16.gmra.mxu0 %v3529
  %v5063 = vpop.f32.mrf.mxu0
  %v5064 = vadd.f32 %v1387, %v5063
  %v5065 = vpop.f32.mrf.mxu0
  %v5066 = vpop.f32.mrf.mxu0
  %v5067 = vadd.f32 %v1392, %v5066
  %v5068 = vpop.f32.mrf.mxu0
  %5069 = vmatprep.mubr.bf16.mxu0 %v3537
  %5070 = vmatmul.mubr.bf16.gmra.mxu0 %v3536
  %v5071 = vpop.f32.mrf.mxu0
  %v5072 = vadd.f32 %v1397, %v5071
  %v5073 = vpop.f32.mrf.mxu0
  %v5074 = vpop.f32.mrf.mxu0
  %v5075 = vadd.f32 %v1402, %v5074
  %v5076 = vpop.f32.mrf.mxu0
  %5077 = vmatprep.mubr.bf16.mxu0 %v3544
  %5078 = vmatmul.mubr.bf16.gmra.mxu0 %v3543
  %v5079 = vpop.f32.mrf.mxu0
  %v5080 = vadd.f32 %v1407, %v5079
  %v5081 = vpop.f32.mrf.mxu0
  %v5082 = vpop.f32.mrf.mxu0
  %v5083 = vadd.f32 %v1412, %v5082
  %v5084 = vpop.f32.mrf.mxu0
  %5085 = vmatprep.mubr.bf16.mxu0 %v3551
  %5086 = vmatmul.mubr.bf16.gmra.mxu0 %v3550
  %v5087 = vpop.f32.mrf.mxu0
  %v5088 = vadd.f32 %v1417, %v5087
  %v5089 = vpop.f32.mrf.mxu0
  %v5090 = vpop.f32.mrf.mxu0
  %v5091 = vadd.f32 %v1422, %v5090
  %v5092 = vpop.f32.mrf.mxu0
  %5093 = vmatprep.mubr.bf16.mxu0 %v3558
  %5094 = vmatmul.mubr.bf16.gmra.mxu0 %v3557
  %v5095 = vpop.f32.mrf.mxu0
  %v5096 = vadd.f32 %v1427, %v5095
  %v5097 = vpop.f32.mrf.mxu0
  %v5098 = vpop.f32.mrf.mxu0
  %v5099 = vadd.f32 %v1432, %v5098
  %v5100 = vpop.f32.mrf.mxu0
  %5101 = vmatprep.mubr.bf16.mxu0 %v3565
  %5102 = vmatmul.mubr.bf16.gmra.mxu0 %v3564
  %v5103 = vpop.f32.mrf.mxu0
  %v5104 = vadd.f32 %v1437, %v5103
  %v5105 = vpop.f32.mrf.mxu0
  %v5106 = vpop.f32.mrf.mxu0
  %v5107 = vadd.f32 %v1442, %v5106
  %v5108 = vpop.f32.mrf.mxu0
  %5109 = vmatprep.mubr.bf16.mxu0 %v3572
  %5110 = vmatmul.mubr.bf16.gmra.mxu0 %v3571
  %v5111 = vpop.f32.mrf.mxu0
  %v5112 = vadd.f32 %v1447, %v5111
  %v5113 = vpop.f32.mrf.mxu0
  %v5114 = vpop.f32.mrf.mxu0
  %v5115 = vadd.f32 %v1452, %v5114
  %v5116 = vpop.f32.mrf.mxu0
  %5117 = vmatprep.mubr.bf16.mxu0 %v3579
  %5118 = vmatmul.mubr.bf16.gmra.mxu0 %v3578
  %v5119 = vpop.f32.mrf.mxu0
  %v5120 = vadd.f32 %v1457, %v5119
  %v5121 = vpop.f32.mrf.mxu0
  %v5122 = vpop.f32.mrf.mxu0
  %v5123 = vadd.f32 %v1462, %v5122
  %v5124 = vpop.f32.mrf.mxu0
  %5125 = vmatprep.mubr.bf16.mxu0 %v3586
  %5126 = vmatmul.mubr.bf16.gmra.mxu0 %v3585
  %v5127 = vpop.f32.mrf.mxu0
  %v5128 = vadd.f32 %v1467, %v5127
  %v5129 = vpop.f32.mrf.mxu0
  %v5130 = vpop.f32.mrf.mxu0
  %v5131 = vadd.f32 %v1472, %v5130
  %v5132 = vpop.f32.mrf.mxu0
  %5133 = vmatprep.mubr.bf16.mxu0 %v3593
  %5134 = vmatmul.mubr.bf16.gmra.mxu0 %v3592
  %v5135 = vpop.f32.mrf.mxu0
  %v5136 = vadd.f32 %v1477, %v5135
  %v5137 = vpop.f32.mrf.mxu0
  %v5138 = vpop.f32.mrf.mxu0
  %v5139 = vadd.f32 %v1482, %v5138
  %v5140 = vpop.f32.mrf.mxu0
  %5141 = vmatprep.mubr.bf16.mxu0 %v3600
  %5142 = vmatmul.mubr.bf16.gmra.mxu0 %v3599
  %v5143 = vpop.f32.mrf.mxu0
  %v5144 = vadd.f32 %v1487, %v5143
  %v5145 = vpop.f32.mrf.mxu0
  %v5146 = vpop.f32.mrf.mxu0
  %v5147 = vadd.f32 %v1492, %v5146
  %v5148 = vpop.f32.mrf.mxu0
  %5149 = vmatprep.mubr.bf16.mxu0 %v3607
  %5150 = vmatmul.mubr.bf16.gmra.mxu0 %v3606
  %v5151 = vpop.f32.mrf.mxu0
  %v5152 = vadd.f32 %v1497, %v5151
  %v5153 = vpop.f32.mrf.mxu0
  %v5154 = vpop.f32.mrf.mxu0
  %v5155 = vadd.f32 %v1502, %v5154
  %v5156 = vpop.f32.mrf.mxu0
  %5157 = vmatprep.mubr.bf16.mxu0 %v3614
  %5158 = vmatmul.mubr.bf16.gmra.mxu0 %v3613
  %v5159 = vpop.f32.mrf.mxu0
  %v5160 = vadd.f32 %v1507, %v5159
  %v5161 = vpop.f32.mrf.mxu0
  %v5162 = vpop.f32.mrf.mxu0
  %v5163 = vadd.f32 %v1512, %v5162
  %v5164 = vpop.f32.mrf.mxu0
  %5165 = vmatprep.mubr.bf16.mxu0 %v3621
  %5166 = vmatmul.mubr.bf16.gmra.mxu0 %v3620
  %v5167 = vpop.f32.mrf.mxu0
  %v5168 = vadd.f32 %v1517, %v5167
  %v5169 = vpop.f32.mrf.mxu0
  %v5170 = vpop.f32.mrf.mxu0
  %v5171 = vadd.f32 %v1522, %v5170
  %v5172 = vpop.f32.mrf.mxu0
  %5173 = vmatprep.mubr.bf16.mxu0 %v3628
  %5174 = vmatmul.mubr.bf16.gmra.mxu0 %v3627
  %v5175 = vpop.f32.mrf.mxu0
  %v5176 = vadd.f32 %v1527, %v5175
  %v5177 = vpop.f32.mrf.mxu0
  %v5178 = vpop.f32.mrf.mxu0
  %v5179 = vadd.f32 %v1532, %v5178
  %v5180 = vpop.f32.mrf.mxu0
  %5181 = vmatprep.mubr.bf16.mxu0 %v3635
  %5182 = vmatmul.mubr.bf16.gmra.mxu0 %v3634
  %v5183 = vpop.f32.mrf.mxu0
  %v5184 = vadd.f32 %v1537, %v5183
  %v5185 = vpop.f32.mrf.mxu0
  %v5186 = vpop.f32.mrf.mxu0
  %v5187 = vadd.f32 %v1542, %v5186
  %v5188 = vpop.f32.mrf.mxu0
  %5189 = vmatprep.mubr.bf16.mxu0 %v3642
  %5190 = vmatmul.mubr.bf16.gmra.mxu0 %v3641
  %v5191 = vpop.f32.mrf.mxu0
  %v5192 = vadd.f32 %v1547, %v5191
  %v5193 = vpop.f32.mrf.mxu0
  %v5194 = vpop.f32.mrf.mxu0
  %v5195 = vadd.f32 %v1552, %v5194
  %v5196 = vpop.f32.mrf.mxu0
  %5197 = vmatprep.mubr.bf16.mxu0 %v3649
  %5198 = vmatmul.mubr.bf16.gmra.mxu0 %v3648
  %v5199 = vpop.f32.mrf.mxu0
  %v5200 = vadd.f32 %v1557, %v5199
  %v5201 = vpop.f32.mrf.mxu0
  %v5202 = vpop.f32.mrf.mxu0
  %v5203 = vadd.f32 %v1562, %v5202
  %v5204 = vpop.f32.mrf.mxu0
  %5205 = vmatprep.mubr.bf16.mxu0 %v3656
  %5206 = vmatmul.mubr.bf16.gmra.mxu0 %v3655
  %v5207 = vpop.f32.mrf.mxu0
  %v5208 = vadd.f32 %v1567, %v5207
  %v5209 = vpop.f32.mrf.mxu0
  %v5210 = vpop.f32.mrf.mxu0
  %v5211 = vadd.f32 %v1572, %v5210
  %v5212 = vpop.f32.mrf.mxu0
  %5213 = vdwg.mxu0
  %5214 = vmatprep.subr.bf16.mxu0 0
  %5215 = vmatpush1.bf16.msra.mxu0 %v4313
  %5216 = vmatprep.subr.bf16.mxu0 0
  %5217 = vmatpush1.bf16.msra.mxu0 %v4312
  %5218 = vmatprep.subr.bf16.mxu0 0
  %5219 = vmatpush1.bf16.msra.mxu0 %v4311
  %5220 = vmatprep.subr.bf16.mxu0 0
  %5221 = vmatpush1.bf16.msra.mxu0 %v4310
  %5222 = vmatprep.subr.bf16.mxu0 0
  %5223 = vmatpush1.bf16.msra.mxu0 %v4309
  %5224 = vmatprep.subr.bf16.mxu0 0
  %5225 = vmatpush1.bf16.msra.mxu0 %v4308
  %5226 = vmatprep.subr.bf16.mxu0 0
  %5227 = vmatpush1.bf16.msra.mxu0 %v4307
  %5228 = vmatprep.subr.bf16.mxu0 0
  %5229 = vmatpush1.bf16.msra.mxu0 %v4306
  %5230 = vmatprep.subr.bf16.mxu0 0
  %5231 = vmatpush2.bf16.msra.mxu0 %v4321
  %5232 = vmatprep.subr.bf16.mxu0 0
  %5233 = vmatpush2.bf16.msra.mxu0 %v4320
  %5234 = vmatprep.subr.bf16.mxu0 0
  %5235 = vmatpush2.bf16.msra.mxu0 %v4319
  %5236 = vmatprep.subr.bf16.mxu0 0
  %5237 = vmatpush2.bf16.msra.mxu0 %v4318
  %5238 = vmatprep.subr.bf16.mxu0 0
  %5239 = vmatpush2.bf16.msra.mxu0 %v4317
  %5240 = vmatprep.subr.bf16.mxu0 0
  %5241 = vmatpush2.bf16.msra.mxu0 %v4316
  %5242 = vmatprep.subr.bf16.mxu0 0
  %5243 = vmatpush2.bf16.msra.mxu0 %v4315
  %5244 = vmatprep.subr.bf16.mxu0 0
  %5245 = vmatpush2.bf16.msra.mxu0 %v4314
  %5246 = vmatprep.mubr.bf16.mxu0 %v3161
  %5247 = vmatmul.mubr.bf16.gmra.mxu0 %v3160
  %v5248 = vpop.f32.mrf.mxu0
  %v5249 = vadd.f32 %v4640, %v5248
  %v5250 = vpop.f32.mrf.mxu0
  %v5251 = vpop.f32.mrf.mxu0
  %v5252 = vadd.f32 %v4643, %v5251
  %v5253 = vpop.f32.mrf.mxu0
  %5254 = vmatprep.mubr.bf16.mxu0 %v3168
  %5255 = vmatmul.mubr.bf16.gmra.mxu0 %v3167
  %v5256 = vpop.f32.mrf.mxu0
  %v5257 = vadd.f32 %v4648, %v5256
  %v5258 = vpop.f32.mrf.mxu0
  %v5259 = vpop.f32.mrf.mxu0
  %v5260 = vadd.f32 %v4651, %v5259
  %v5261 = vpop.f32.mrf.mxu0
  %5262 = vmatprep.mubr.bf16.mxu0 %v3175
  %5263 = vmatmul.mubr.bf16.gmra.mxu0 %v3174
  %v5264 = vpop.f32.mrf.mxu0
  %v5265 = vadd.f32 %v4656, %v5264
  %v5266 = vpop.f32.mrf.mxu0
  %v5267 = vpop.f32.mrf.mxu0
  %v5268 = vadd.f32 %v4659, %v5267
  %v5269 = vpop.f32.mrf.mxu0
  %5270 = vmatprep.mubr.bf16.mxu0 %v3182
  %5271 = vmatmul.mubr.bf16.gmra.mxu0 %v3181
  %v5272 = vpop.f32.mrf.mxu0
  %v5273 = vadd.f32 %v4664, %v5272
  %v5274 = vpop.f32.mrf.mxu0
  %v5275 = vpop.f32.mrf.mxu0
  %v5276 = vadd.f32 %v4667, %v5275
  %v5277 = vpop.f32.mrf.mxu0
  %5278 = vmatprep.mubr.bf16.mxu0 %v3189
  %5279 = vmatmul.mubr.bf16.gmra.mxu0 %v3188
  %v5280 = vpop.f32.mrf.mxu0
  %v5281 = vadd.f32 %v4672, %v5280
  %v5282 = vpop.f32.mrf.mxu0
  %v5283 = vpop.f32.mrf.mxu0
  %v5284 = vadd.f32 %v4675, %v5283
  %v5285 = vpop.f32.mrf.mxu0
  %5286 = vmatprep.mubr.bf16.mxu0 %v3196
  %5287 = vmatmul.mubr.bf16.gmra.mxu0 %v3195
  %v5288 = vpop.f32.mrf.mxu0
  %v5289 = vadd.f32 %v4680, %v5288
  %v5290 = vpop.f32.mrf.mxu0
  %v5291 = vpop.f32.mrf.mxu0
  %v5292 = vadd.f32 %v4683, %v5291
  %v5293 = vpop.f32.mrf.mxu0
  %5294 = vmatprep.mubr.bf16.mxu0 %v3203
  %5295 = vmatmul.mubr.bf16.gmra.mxu0 %v3202
  %v5296 = vpop.f32.mrf.mxu0
  %v5297 = vadd.f32 %v4688, %v5296
  %v5298 = vpop.f32.mrf.mxu0
  %v5299 = vpop.f32.mrf.mxu0
  %v5300 = vadd.f32 %v4691, %v5299
  %v5301 = vpop.f32.mrf.mxu0
  %5302 = vmatprep.mubr.bf16.mxu0 %v3210
  %5303 = vmatmul.mubr.bf16.gmra.mxu0 %v3209
  %v5304 = vpop.f32.mrf.mxu0
  %v5305 = vadd.f32 %v4696, %v5304
  %v5306 = vpop.f32.mrf.mxu0
  %v5307 = vpop.f32.mrf.mxu0
  %v5308 = vadd.f32 %v4699, %v5307
  %v5309 = vpop.f32.mrf.mxu0
  %5310 = vmatprep.mubr.bf16.mxu0 %v3217
  %5311 = vmatmul.mubr.bf16.gmra.mxu0 %v3216
  %v5312 = vpop.f32.mrf.mxu0
  %v5313 = vadd.f32 %v4704, %v5312
  %v5314 = vpop.f32.mrf.mxu0
  %v5315 = vpop.f32.mrf.mxu0
  %v5316 = vadd.f32 %v4707, %v5315
  %v5317 = vpop.f32.mrf.mxu0
  %5318 = vmatprep.mubr.bf16.mxu0 %v3224
  %5319 = vmatmul.mubr.bf16.gmra.mxu0 %v3223
  %v5320 = vpop.f32.mrf.mxu0
  %v5321 = vadd.f32 %v4712, %v5320
  %v5322 = vpop.f32.mrf.mxu0
  %v5323 = vpop.f32.mrf.mxu0
  %v5324 = vadd.f32 %v4715, %v5323
  %v5325 = vpop.f32.mrf.mxu0
  %5326 = vmatprep.mubr.bf16.mxu0 %v3231
  %5327 = vmatmul.mubr.bf16.gmra.mxu0 %v3230
  %v5328 = vpop.f32.mrf.mxu0
  %v5329 = vadd.f32 %v4720, %v5328
  %v5330 = vpop.f32.mrf.mxu0
  %v5331 = vpop.f32.mrf.mxu0
  %v5332 = vadd.f32 %v4723, %v5331
  %v5333 = vpop.f32.mrf.mxu0
  %5334 = vmatprep.mubr.bf16.mxu0 %v3238
  %5335 = vmatmul.mubr.bf16.gmra.mxu0 %v3237
  %v5336 = vpop.f32.mrf.mxu0
  %v5337 = vadd.f32 %v4728, %v5336
  %v5338 = vpop.f32.mrf.mxu0
  %v5339 = vpop.f32.mrf.mxu0
  %v5340 = vadd.f32 %v4731, %v5339
  %v5341 = vpop.f32.mrf.mxu0
  %5342 = vmatprep.mubr.bf16.mxu0 %v3245
  %5343 = vmatmul.mubr.bf16.gmra.mxu0 %v3244
  %v5344 = vpop.f32.mrf.mxu0
  %v5345 = vadd.f32 %v4736, %v5344
  %v5346 = vpop.f32.mrf.mxu0
  %v5347 = vpop.f32.mrf.mxu0
  %v5348 = vadd.f32 %v4739, %v5347
  %v5349 = vpop.f32.mrf.mxu0
  %5350 = vmatprep.mubr.bf16.mxu0 %v3252
  %5351 = vmatmul.mubr.bf16.gmra.mxu0 %v3251
  %v5352 = vpop.f32.mrf.mxu0
  %v5353 = vadd.f32 %v4744, %v5352
  %v5354 = vpop.f32.mrf.mxu0
  %v5355 = vpop.f32.mrf.mxu0
  %v5356 = vadd.f32 %v4747, %v5355
  %v5357 = vpop.f32.mrf.mxu0
  %5358 = vmatprep.mubr.bf16.mxu0 %v3259
  %5359 = vmatmul.mubr.bf16.gmra.mxu0 %v3258
  %v5360 = vpop.f32.mrf.mxu0
  %v5361 = vadd.f32 %v4752, %v5360
  %v5362 = vpop.f32.mrf.mxu0
  %v5363 = vpop.f32.mrf.mxu0
  %v5364 = vadd.f32 %v4755, %v5363
  %v5365 = vpop.f32.mrf.mxu0
  %5366 = vmatprep.mubr.bf16.mxu0 %v3266
  %5367 = vmatmul.mubr.bf16.gmra.mxu0 %v3265
  %v5368 = vpop.f32.mrf.mxu0
  %v5369 = vadd.f32 %v4760, %v5368
  %v5370 = vpop.f32.mrf.mxu0
  %v5371 = vpop.f32.mrf.mxu0
  %v5372 = vadd.f32 %v4763, %v5371
  %v5373 = vpop.f32.mrf.mxu0
  %5374 = vmatprep.mubr.bf16.mxu0 %v3273
  %5375 = vmatmul.mubr.bf16.gmra.mxu0 %v3272
  %v5376 = vpop.f32.mrf.mxu0
  %v5377 = vadd.f32 %v4768, %v5376
  %v5378 = vpop.f32.mrf.mxu0
  %v5379 = vpop.f32.mrf.mxu0
  %v5380 = vadd.f32 %v4771, %v5379
  %v5381 = vpop.f32.mrf.mxu0
  %5382 = vmatprep.mubr.bf16.mxu0 %v3280
  %5383 = vmatmul.mubr.bf16.gmra.mxu0 %v3279
  %v5384 = vpop.f32.mrf.mxu0
  %v5385 = vadd.f32 %v4776, %v5384
  %v5386 = vpop.f32.mrf.mxu0
  %v5387 = vpop.f32.mrf.mxu0
  %v5388 = vadd.f32 %v4779, %v5387
  %v5389 = vpop.f32.mrf.mxu0
  %5390 = vmatprep.mubr.bf16.mxu0 %v3287
  %5391 = vmatmul.mubr.bf16.gmra.mxu0 %v3286
  %v5392 = vpop.f32.mrf.mxu0
  %v5393 = vadd.f32 %v4784, %v5392
  %v5394 = vpop.f32.mrf.mxu0
  %v5395 = vpop.f32.mrf.mxu0
  %v5396 = vadd.f32 %v4787, %v5395
  %v5397 = vpop.f32.mrf.mxu0
  %5398 = vmatprep.mubr.bf16.mxu0 %v3294
  %5399 = vmatmul.mubr.bf16.gmra.mxu0 %v3293
  %v5400 = vpop.f32.mrf.mxu0
  %v5401 = vadd.f32 %v4792, %v5400
  %v5402 = vpop.f32.mrf.mxu0
  %v5403 = vpop.f32.mrf.mxu0
  %v5404 = vadd.f32 %v4795, %v5403
  %v5405 = vpop.f32.mrf.mxu0
  %5406 = vmatprep.mubr.bf16.mxu0 %v3301
  %5407 = vmatmul.mubr.bf16.gmra.mxu0 %v3300
  %v5408 = vpop.f32.mrf.mxu0
  %v5409 = vadd.f32 %v4800, %v5408
  %v5410 = vpop.f32.mrf.mxu0
  %v5411 = vpop.f32.mrf.mxu0
  %v5412 = vadd.f32 %v4803, %v5411
  %v5413 = vpop.f32.mrf.mxu0
  %5414 = vmatprep.mubr.bf16.mxu0 %v3308
  %5415 = vmatmul.mubr.bf16.gmra.mxu0 %v3307
  %v5416 = vpop.f32.mrf.mxu0
  %v5417 = vadd.f32 %v4808, %v5416
  %v5418 = vpop.f32.mrf.mxu0
  %v5419 = vpop.f32.mrf.mxu0
  %v5420 = vadd.f32 %v4811, %v5419
  %v5421 = vpop.f32.mrf.mxu0
  %5422 = vmatprep.mubr.bf16.mxu0 %v3315
  %5423 = vmatmul.mubr.bf16.gmra.mxu0 %v3314
  %v5424 = vpop.f32.mrf.mxu0
  %v5425 = vadd.f32 %v4816, %v5424
  %v5426 = vpop.f32.mrf.mxu0
  %v5427 = vpop.f32.mrf.mxu0
  %v5428 = vadd.f32 %v4819, %v5427
  %v5429 = vpop.f32.mrf.mxu0
  %5430 = vmatprep.mubr.bf16.mxu0 %v3322
  %5431 = vmatmul.mubr.bf16.gmra.mxu0 %v3321
  %v5432 = vpop.f32.mrf.mxu0
  %v5433 = vadd.f32 %v4824, %v5432
  %v5434 = vpop.f32.mrf.mxu0
  %v5435 = vpop.f32.mrf.mxu0
  %v5436 = vadd.f32 %v4827, %v5435
  %v5437 = vpop.f32.mrf.mxu0
  %5438 = vmatprep.mubr.bf16.mxu0 %v3329
  %5439 = vmatmul.mubr.bf16.gmra.mxu0 %v3328
  %v5440 = vpop.f32.mrf.mxu0
  %v5441 = vadd.f32 %v4832, %v5440
  %v5442 = vpop.f32.mrf.mxu0
  %v5443 = vpop.f32.mrf.mxu0
  %v5444 = vadd.f32 %v4835, %v5443
  %v5445 = vpop.f32.mrf.mxu0
  %5446 = vmatprep.mubr.bf16.mxu0 %v3336
  %5447 = vmatmul.mubr.bf16.gmra.mxu0 %v3335
  %v5448 = vpop.f32.mrf.mxu0
  %v5449 = vadd.f32 %v4840, %v5448
  %v5450 = vpop.f32.mrf.mxu0
  %v5451 = vpop.f32.mrf.mxu0
  %v5452 = vadd.f32 %v4843, %v5451
  %v5453 = vpop.f32.mrf.mxu0
  %5454 = vmatprep.mubr.bf16.mxu0 %v3343
  %5455 = vmatmul.mubr.bf16.gmra.mxu0 %v3342
  %v5456 = vpop.f32.mrf.mxu0
  %v5457 = vadd.f32 %v4848, %v5456
  %v5458 = vpop.f32.mrf.mxu0
  %v5459 = vpop.f32.mrf.mxu0
  %v5460 = vadd.f32 %v4851, %v5459
  %v5461 = vpop.f32.mrf.mxu0
  %5462 = vmatprep.mubr.bf16.mxu0 %v3350
  %5463 = vmatmul.mubr.bf16.gmra.mxu0 %v3349
  %v5464 = vpop.f32.mrf.mxu0
  %v5465 = vadd.f32 %v4856, %v5464
  %v5466 = vpop.f32.mrf.mxu0
  %v5467 = vpop.f32.mrf.mxu0
  %v5468 = vadd.f32 %v4859, %v5467
  %v5469 = vpop.f32.mrf.mxu0
  %5470 = vmatprep.mubr.bf16.mxu0 %v3357
  %5471 = vmatmul.mubr.bf16.gmra.mxu0 %v3356
  %v5472 = vpop.f32.mrf.mxu0
  %v5473 = vadd.f32 %v4864, %v5472
  %v5474 = vpop.f32.mrf.mxu0
  %v5475 = vpop.f32.mrf.mxu0
  %v5476 = vadd.f32 %v4867, %v5475
  %v5477 = vpop.f32.mrf.mxu0
  %5478 = vmatprep.mubr.bf16.mxu0 %v3364
  %5479 = vmatmul.mubr.bf16.gmra.mxu0 %v3363
  %v5480 = vpop.f32.mrf.mxu0
  %v5481 = vadd.f32 %v4872, %v5480
  %v5482 = vpop.f32.mrf.mxu0
  %v5483 = vpop.f32.mrf.mxu0
  %v5484 = vadd.f32 %v4875, %v5483
  %v5485 = vpop.f32.mrf.mxu0
  %5486 = vmatprep.mubr.bf16.mxu0 %v3371
  %5487 = vmatmul.mubr.bf16.gmra.mxu0 %v3370
  %v5488 = vpop.f32.mrf.mxu0
  %v5489 = vadd.f32 %v4880, %v5488
  %v5490 = vpop.f32.mrf.mxu0
  %v5491 = vpop.f32.mrf.mxu0
  %v5492 = vadd.f32 %v4883, %v5491
  %v5493 = vpop.f32.mrf.mxu0
  %5494 = vmatprep.mubr.bf16.mxu0 %v3378
  %5495 = vmatmul.mubr.bf16.gmra.mxu0 %v3377
  %v5496 = vpop.f32.mrf.mxu0
  %v5497 = vadd.f32 %v4888, %v5496
  %v5498 = vpop.f32.mrf.mxu0
  %v5499 = vpop.f32.mrf.mxu0
  %v5500 = vadd.f32 %v4891, %v5499
  %v5501 = vpop.f32.mrf.mxu0
  %5502 = vmatprep.mubr.bf16.mxu0 %v3385
  %5503 = vmatmul.mubr.bf16.gmra.mxu0 %v3384
  %v5504 = vpop.f32.mrf.mxu0
  %v5505 = vadd.f32 %v4896, %v5504
  %v5506 = vpop.f32.mrf.mxu0
  %v5507 = vpop.f32.mrf.mxu0
  %v5508 = vadd.f32 %v4899, %v5507
  %v5509 = vpop.f32.mrf.mxu0
  %5510 = vmatprep.mubr.bf16.mxu0 %v3392
  %5511 = vmatmul.mubr.bf16.gmra.mxu0 %v3391
  %v5512 = vpop.f32.mrf.mxu0
  %v5513 = vadd.f32 %v4904, %v5512
  %v5514 = vpop.f32.mrf.mxu0
  %v5515 = vpop.f32.mrf.mxu0
  %v5516 = vadd.f32 %v4907, %v5515
  %v5517 = vpop.f32.mrf.mxu0
  %5518 = vmatprep.mubr.bf16.mxu0 %v3399
  %5519 = vmatmul.mubr.bf16.gmra.mxu0 %v3398
  %v5520 = vpop.f32.mrf.mxu0
  %v5521 = vadd.f32 %v4912, %v5520
  %v5522 = vpop.f32.mrf.mxu0
  %v5523 = vpop.f32.mrf.mxu0
  %v5524 = vadd.f32 %v4915, %v5523
  %v5525 = vpop.f32.mrf.mxu0
  %5526 = vmatprep.mubr.bf16.mxu0 %v3406
  %5527 = vmatmul.mubr.bf16.gmra.mxu0 %v3405
  %v5528 = vpop.f32.mrf.mxu0
  %v5529 = vadd.f32 %v4920, %v5528
  %v5530 = vpop.f32.mrf.mxu0
  %v5531 = vpop.f32.mrf.mxu0
  %v5532 = vadd.f32 %v4923, %v5531
  %v5533 = vpop.f32.mrf.mxu0
  %5534 = vmatprep.mubr.bf16.mxu0 %v3413
  %5535 = vmatmul.mubr.bf16.gmra.mxu0 %v3412
  %v5536 = vpop.f32.mrf.mxu0
  %v5537 = vadd.f32 %v4928, %v5536
  %v5538 = vpop.f32.mrf.mxu0
  %v5539 = vpop.f32.mrf.mxu0
  %v5540 = vadd.f32 %v4931, %v5539
  %v5541 = vpop.f32.mrf.mxu0
  %5542 = vmatprep.mubr.bf16.mxu0 %v3420
  %5543 = vmatmul.mubr.bf16.gmra.mxu0 %v3419
  %v5544 = vpop.f32.mrf.mxu0
  %v5545 = vadd.f32 %v4936, %v5544
  %v5546 = vpop.f32.mrf.mxu0
  %v5547 = vpop.f32.mrf.mxu0
  %v5548 = vadd.f32 %v4939, %v5547
  %v5549 = vpop.f32.mrf.mxu0
  %5550 = vmatprep.mubr.bf16.mxu0 %v3427
  %5551 = vmatmul.mubr.bf16.gmra.mxu0 %v3426
  %v5552 = vpop.f32.mrf.mxu0
  %v5553 = vadd.f32 %v4944, %v5552
  %v5554 = vpop.f32.mrf.mxu0
  %v5555 = vpop.f32.mrf.mxu0
  %v5556 = vadd.f32 %v4947, %v5555
  %v5557 = vpop.f32.mrf.mxu0
  %5558 = vmatprep.mubr.bf16.mxu0 %v3434
  %5559 = vmatmul.mubr.bf16.gmra.mxu0 %v3433
  %v5560 = vpop.f32.mrf.mxu0
  %v5561 = vadd.f32 %v4952, %v5560
  %v5562 = vpop.f32.mrf.mxu0
  %v5563 = vpop.f32.mrf.mxu0
  %v5564 = vadd.f32 %v4955, %v5563
  %v5565 = vpop.f32.mrf.mxu0
  %5566 = vmatprep.mubr.bf16.mxu0 %v3441
  %5567 = vmatmul.mubr.bf16.gmra.mxu0 %v3440
  %v5568 = vpop.f32.mrf.mxu0
  %v5569 = vadd.f32 %v4960, %v5568
  %v5570 = vpop.f32.mrf.mxu0
  %v5571 = vpop.f32.mrf.mxu0
  %v5572 = vadd.f32 %v4963, %v5571
  %v5573 = vpop.f32.mrf.mxu0
  %5574 = vmatprep.mubr.bf16.mxu0 %v3448
  %5575 = vmatmul.mubr.bf16.gmra.mxu0 %v3447
  %v5576 = vpop.f32.mrf.mxu0
  %v5577 = vadd.f32 %v4968, %v5576
  %v5578 = vpop.f32.mrf.mxu0
  %v5579 = vpop.f32.mrf.mxu0
  %v5580 = vadd.f32 %v4971, %v5579
  %v5581 = vpop.f32.mrf.mxu0
  %5582 = vmatprep.mubr.bf16.mxu0 %v3455
  %5583 = vmatmul.mubr.bf16.gmra.mxu0 %v3454
  %v5584 = vpop.f32.mrf.mxu0
  %v5585 = vadd.f32 %v4976, %v5584
  %v5586 = vpop.f32.mrf.mxu0
  %v5587 = vpop.f32.mrf.mxu0
  %v5588 = vadd.f32 %v4979, %v5587
  %v5589 = vpop.f32.mrf.mxu0
  %5590 = vmatprep.mubr.bf16.mxu0 %v3462
  %5591 = vmatmul.mubr.bf16.gmra.mxu0 %v3461
  %v5592 = vpop.f32.mrf.mxu0
  %v5593 = vadd.f32 %v4984, %v5592
  %v5594 = vpop.f32.mrf.mxu0
  %v5595 = vpop.f32.mrf.mxu0
  %v5596 = vadd.f32 %v4987, %v5595
  %v5597 = vpop.f32.mrf.mxu0
  %5598 = vmatprep.mubr.bf16.mxu0 %v3469
  %5599 = vmatmul.mubr.bf16.gmra.mxu0 %v3468
  %v5600 = vpop.f32.mrf.mxu0
  %v5601 = vadd.f32 %v4992, %v5600
  %v5602 = vpop.f32.mrf.mxu0
  %v5603 = vpop.f32.mrf.mxu0
  %v5604 = vadd.f32 %v4995, %v5603
  %v5605 = vpop.f32.mrf.mxu0
  %5606 = vmatprep.mubr.bf16.mxu0 %v3476
  %5607 = vmatmul.mubr.bf16.gmra.mxu0 %v3475
  %v5608 = vpop.f32.mrf.mxu0
  %v5609 = vadd.f32 %v5000, %v5608
  %v5610 = vpop.f32.mrf.mxu0
  %v5611 = vpop.f32.mrf.mxu0
  %v5612 = vadd.f32 %v5003, %v5611
  %v5613 = vpop.f32.mrf.mxu0
  %5614 = vmatprep.mubr.bf16.mxu0 %v3483
  %5615 = vmatmul.mubr.bf16.gmra.mxu0 %v3482
  %v5616 = vpop.f32.mrf.mxu0
  %v5617 = vadd.f32 %v5008, %v5616
  %v5618 = vpop.f32.mrf.mxu0
  %v5619 = vpop.f32.mrf.mxu0
  %v5620 = vadd.f32 %v5011, %v5619
  %v5621 = vpop.f32.mrf.mxu0
  %5622 = vmatprep.mubr.bf16.mxu0 %v3490
  %5623 = vmatmul.mubr.bf16.gmra.mxu0 %v3489
  %v5624 = vpop.f32.mrf.mxu0
  %v5625 = vadd.f32 %v5016, %v5624
  %v5626 = vpop.f32.mrf.mxu0
  %v5627 = vpop.f32.mrf.mxu0
  %v5628 = vadd.f32 %v5019, %v5627
  %v5629 = vpop.f32.mrf.mxu0
  %5630 = vmatprep.mubr.bf16.mxu0 %v3497
  %5631 = vmatmul.mubr.bf16.gmra.mxu0 %v3496
  %v5632 = vpop.f32.mrf.mxu0
  %v5633 = vadd.f32 %v5024, %v5632
  %v5634 = vpop.f32.mrf.mxu0
  %v5635 = vpop.f32.mrf.mxu0
  %v5636 = vadd.f32 %v5027, %v5635
  %v5637 = vpop.f32.mrf.mxu0
  %5638 = vmatprep.mubr.bf16.mxu0 %v3504
  %5639 = vmatmul.mubr.bf16.gmra.mxu0 %v3503
  %v5640 = vpop.f32.mrf.mxu0
  %v5641 = vadd.f32 %v5032, %v5640
  %v5642 = vpop.f32.mrf.mxu0
  %v5643 = vpop.f32.mrf.mxu0
  %v5644 = vadd.f32 %v5035, %v5643
  %v5645 = vpop.f32.mrf.mxu0
  %5646 = vmatprep.mubr.bf16.mxu0 %v3511
  %5647 = vmatmul.mubr.bf16.gmra.mxu0 %v3510
  %v5648 = vpop.f32.mrf.mxu0
  %v5649 = vadd.f32 %v5040, %v5648
  %v5650 = vpop.f32.mrf.mxu0
  %v5651 = vpop.f32.mrf.mxu0
  %v5652 = vadd.f32 %v5043, %v5651
  %v5653 = vpop.f32.mrf.mxu0
  %5654 = vmatprep.mubr.bf16.mxu0 %v3518
  %5655 = vmatmul.mubr.bf16.gmra.mxu0 %v3517
  %v5656 = vpop.f32.mrf.mxu0
  %v5657 = vadd.f32 %v5048, %v5656
  %v5658 = vpop.f32.mrf.mxu0
  %v5659 = vpop.f32.mrf.mxu0
  %v5660 = vadd.f32 %v5051, %v5659
  %v5661 = vpop.f32.mrf.mxu0
  %5662 = vmatprep.mubr.bf16.mxu0 %v3525
  %5663 = vmatmul.mubr.bf16.gmra.mxu0 %v3524
  %v5664 = vpop.f32.mrf.mxu0
  %v5665 = vadd.f32 %v5056, %v5664
  %v5666 = vpop.f32.mrf.mxu0
  %v5667 = vpop.f32.mrf.mxu0
  %v5668 = vadd.f32 %v5059, %v5667
  %v5669 = vpop.f32.mrf.mxu0
  %5670 = vmatprep.mubr.bf16.mxu0 %v3532
  %5671 = vmatmul.mubr.bf16.gmra.mxu0 %v3531
  %v5672 = vpop.f32.mrf.mxu0
  %v5673 = vadd.f32 %v5064, %v5672
  %v5674 = vpop.f32.mrf.mxu0
  %v5675 = vpop.f32.mrf.mxu0
  %v5676 = vadd.f32 %v5067, %v5675
  %v5677 = vpop.f32.mrf.mxu0
  %5678 = vmatprep.mubr.bf16.mxu0 %v3539
  %5679 = vmatmul.mubr.bf16.gmra.mxu0 %v3538
  %v5680 = vpop.f32.mrf.mxu0
  %v5681 = vadd.f32 %v5072, %v5680
  %v5682 = vpop.f32.mrf.mxu0
  %v5683 = vpop.f32.mrf.mxu0
  %v5684 = vadd.f32 %v5075, %v5683
  %v5685 = vpop.f32.mrf.mxu0
  %5686 = vmatprep.mubr.bf16.mxu0 %v3546
  %5687 = vmatmul.mubr.bf16.gmra.mxu0 %v3545
  %v5688 = vpop.f32.mrf.mxu0
  %v5689 = vadd.f32 %v5080, %v5688
  %v5690 = vpop.f32.mrf.mxu0
  %v5691 = vpop.f32.mrf.mxu0
  %v5692 = vadd.f32 %v5083, %v5691
  %v5693 = vpop.f32.mrf.mxu0
  %5694 = vmatprep.mubr.bf16.mxu0 %v3553
  %5695 = vmatmul.mubr.bf16.gmra.mxu0 %v3552
  %v5696 = vpop.f32.mrf.mxu0
  %v5697 = vadd.f32 %v5088, %v5696
  %v5698 = vpop.f32.mrf.mxu0
  %v5699 = vpop.f32.mrf.mxu0
  %v5700 = vadd.f32 %v5091, %v5699
  %v5701 = vpop.f32.mrf.mxu0
  %5702 = vmatprep.mubr.bf16.mxu0 %v3560
  %5703 = vmatmul.mubr.bf16.gmra.mxu0 %v3559
  %v5704 = vpop.f32.mrf.mxu0
  %v5705 = vadd.f32 %v5096, %v5704
  %v5706 = vpop.f32.mrf.mxu0
  %v5707 = vpop.f32.mrf.mxu0
  %v5708 = vadd.f32 %v5099, %v5707
  %v5709 = vpop.f32.mrf.mxu0
  %5710 = vmatprep.mubr.bf16.mxu0 %v3567
  %5711 = vmatmul.mubr.bf16.gmra.mxu0 %v3566
  %v5712 = vpop.f32.mrf.mxu0
  %v5713 = vadd.f32 %v5104, %v5712
  %v5714 = vpop.f32.mrf.mxu0
  %v5715 = vpop.f32.mrf.mxu0
  %v5716 = vadd.f32 %v5107, %v5715
  %v5717 = vpop.f32.mrf.mxu0
  %5718 = vmatprep.mubr.bf16.mxu0 %v3574
  %5719 = vmatmul.mubr.bf16.gmra.mxu0 %v3573
  %v5720 = vpop.f32.mrf.mxu0
  %v5721 = vadd.f32 %v5112, %v5720
  %v5722 = vpop.f32.mrf.mxu0
  %v5723 = vpop.f32.mrf.mxu0
  %v5724 = vadd.f32 %v5115, %v5723
  %v5725 = vpop.f32.mrf.mxu0
  %5726 = vmatprep.mubr.bf16.mxu0 %v3581
  %5727 = vmatmul.mubr.bf16.gmra.mxu0 %v3580
  %v5728 = vpop.f32.mrf.mxu0
  %v5729 = vadd.f32 %v5120, %v5728
  %v5730 = vpop.f32.mrf.mxu0
  %v5731 = vpop.f32.mrf.mxu0
  %v5732 = vadd.f32 %v5123, %v5731
  %v5733 = vpop.f32.mrf.mxu0
  %5734 = vmatprep.mubr.bf16.mxu0 %v3588
  %5735 = vmatmul.mubr.bf16.gmra.mxu0 %v3587
  %v5736 = vpop.f32.mrf.mxu0
  %v5737 = vadd.f32 %v5128, %v5736
  %v5738 = vpop.f32.mrf.mxu0
  %v5739 = vpop.f32.mrf.mxu0
  %v5740 = vadd.f32 %v5131, %v5739
  %v5741 = vpop.f32.mrf.mxu0
  %5742 = vmatprep.mubr.bf16.mxu0 %v3595
  %5743 = vmatmul.mubr.bf16.gmra.mxu0 %v3594
  %v5744 = vpop.f32.mrf.mxu0
  %v5745 = vadd.f32 %v5136, %v5744
  %v5746 = vpop.f32.mrf.mxu0
  %v5747 = vpop.f32.mrf.mxu0
  %v5748 = vadd.f32 %v5139, %v5747
  %v5749 = vpop.f32.mrf.mxu0
  %5750 = vmatprep.mubr.bf16.mxu0 %v3602
  %5751 = vmatmul.mubr.bf16.gmra.mxu0 %v3601
  %v5752 = vpop.f32.mrf.mxu0
  %v5753 = vadd.f32 %v5144, %v5752
  %v5754 = vpop.f32.mrf.mxu0
  %v5755 = vpop.f32.mrf.mxu0
  %v5756 = vadd.f32 %v5147, %v5755
  %v5757 = vpop.f32.mrf.mxu0
  %5758 = vmatprep.mubr.bf16.mxu0 %v3609
  %5759 = vmatmul.mubr.bf16.gmra.mxu0 %v3608
  %v5760 = vpop.f32.mrf.mxu0
  %v5761 = vadd.f32 %v5152, %v5760
  %v5762 = vpop.f32.mrf.mxu0
  %v5763 = vpop.f32.mrf.mxu0
  %v5764 = vadd.f32 %v5155, %v5763
  %v5765 = vpop.f32.mrf.mxu0
  %5766 = vmatprep.mubr.bf16.mxu0 %v3616
  %5767 = vmatmul.mubr.bf16.gmra.mxu0 %v3615
  %v5768 = vpop.f32.mrf.mxu0
  %v5769 = vadd.f32 %v5160, %v5768
  %v5770 = vpop.f32.mrf.mxu0
  %v5771 = vpop.f32.mrf.mxu0
  %v5772 = vadd.f32 %v5163, %v5771
  %v5773 = vpop.f32.mrf.mxu0
  %5774 = vmatprep.mubr.bf16.mxu0 %v3623
  %5775 = vmatmul.mubr.bf16.gmra.mxu0 %v3622
  %v5776 = vpop.f32.mrf.mxu0
  %v5777 = vadd.f32 %v5168, %v5776
  %v5778 = vpop.f32.mrf.mxu0
  %v5779 = vpop.f32.mrf.mxu0
  %v5780 = vadd.f32 %v5171, %v5779
  %v5781 = vpop.f32.mrf.mxu0
  %5782 = vmatprep.mubr.bf16.mxu0 %v3630
  %5783 = vmatmul.mubr.bf16.gmra.mxu0 %v3629
  %v5784 = vpop.f32.mrf.mxu0
  %v5785 = vadd.f32 %v5176, %v5784
  %v5786 = vpop.f32.mrf.mxu0
  %v5787 = vpop.f32.mrf.mxu0
  %v5788 = vadd.f32 %v5179, %v5787
  %v5789 = vpop.f32.mrf.mxu0
  %5790 = vmatprep.mubr.bf16.mxu0 %v3637
  %5791 = vmatmul.mubr.bf16.gmra.mxu0 %v3636
  %v5792 = vpop.f32.mrf.mxu0
  %v5793 = vadd.f32 %v5184, %v5792
  %v5794 = vpop.f32.mrf.mxu0
  %v5795 = vpop.f32.mrf.mxu0
  %v5796 = vadd.f32 %v5187, %v5795
  %v5797 = vpop.f32.mrf.mxu0
  %5798 = vmatprep.mubr.bf16.mxu0 %v3644
  %5799 = vmatmul.mubr.bf16.gmra.mxu0 %v3643
  %v5800 = vpop.f32.mrf.mxu0
  %v5801 = vadd.f32 %v5192, %v5800
  %v5802 = vpop.f32.mrf.mxu0
  %v5803 = vpop.f32.mrf.mxu0
  %v5804 = vadd.f32 %v5195, %v5803
  %v5805 = vpop.f32.mrf.mxu0
  %5806 = vmatprep.mubr.bf16.mxu0 %v3651
  %5807 = vmatmul.mubr.bf16.gmra.mxu0 %v3650
  %v5808 = vpop.f32.mrf.mxu0
  %v5809 = vadd.f32 %v5200, %v5808
  %v5810 = vpop.f32.mrf.mxu0
  %v5811 = vpop.f32.mrf.mxu0
  %v5812 = vadd.f32 %v5203, %v5811
  %v5813 = vpop.f32.mrf.mxu0
  %5814 = vmatprep.mubr.bf16.mxu0 %v3658
  %5815 = vmatmul.mubr.bf16.gmra.mxu0 %v3657
  %v5816 = vpop.f32.mrf.mxu0
  %v5817 = vadd.f32 %v5208, %v5816
  %v5818 = vpop.f32.mrf.mxu0
  %v5819 = vpop.f32.mrf.mxu0
  %v5820 = vadd.f32 %v5211, %v5819
  %v5821 = vpop.f32.mrf.mxu0
  %5822 = vdwg.mxu0
  %5823 = vmatprep.subr.bf16.mxu0 0
  %5824 = vmatpush1.bf16.msra.mxu0 %v4329
  %5825 = vmatprep.subr.bf16.mxu0 0
  %5826 = vmatpush1.bf16.msra.mxu0 %v4328
  %5827 = vmatprep.subr.bf16.mxu0 0
  %5828 = vmatpush1.bf16.msra.mxu0 %v4327
  %5829 = vmatprep.subr.bf16.mxu0 0
  %5830 = vmatpush1.bf16.msra.mxu0 %v4326
  %5831 = vmatprep.subr.bf16.mxu0 0
  %5832 = vmatpush1.bf16.msra.mxu0 %v4325
  %5833 = vmatprep.subr.bf16.mxu0 0
  %5834 = vmatpush1.bf16.msra.mxu0 %v4324
  %5835 = vmatprep.subr.bf16.mxu0 0
  %5836 = vmatpush1.bf16.msra.mxu0 %v4323
  %5837 = vmatprep.subr.bf16.mxu0 0
  %5838 = vmatpush1.bf16.msra.mxu0 %v4322
  %5839 = vmatprep.subr.bf16.mxu0 0
  %5840 = vmatpush2.bf16.msra.mxu0 %v4337
  %5841 = vmatprep.subr.bf16.mxu0 0
  %5842 = vmatpush2.bf16.msra.mxu0 %v4336
  %5843 = vmatprep.subr.bf16.mxu0 0
  %5844 = vmatpush2.bf16.msra.mxu0 %v4335
  %5845 = vmatprep.subr.bf16.mxu0 0
  %5846 = vmatpush2.bf16.msra.mxu0 %v4334
  %5847 = vmatprep.subr.bf16.mxu0 0
  %5848 = vmatpush2.bf16.msra.mxu0 %v4333
  %5849 = vmatprep.subr.bf16.mxu0 0
  %5850 = vmatpush2.bf16.msra.mxu0 %v4332
  %5851 = vmatprep.subr.bf16.mxu0 0
  %5852 = vmatpush2.bf16.msra.mxu0 %v4331
  %5853 = vmatprep.subr.bf16.mxu0 0
  %5854 = vmatpush2.bf16.msra.mxu0 %v4330
  %5855 = vmatprep.mubr.bf16.mxu0 %v3163
  %5856 = vmatmul.mubr.bf16.gmra.mxu0 %v3162
  %v5857 = vpop.f32.mrf.mxu0
  %v5858 = vadd.f32 %v5249, %v5857
  %v5859 = vpop.f32.mrf.mxu0
  %v5860 = vpop.f32.mrf.mxu0
  %v5861 = vadd.f32 %v5252, %v5860
  %v5862 = vpop.f32.mrf.mxu0
  %5863 = vmatprep.mubr.bf16.mxu0 %v3170
  %5864 = vmatmul.mubr.bf16.gmra.mxu0 %v3169
  %v5865 = vpop.f32.mrf.mxu0
  %v5866 = vadd.f32 %v5257, %v5865
  %v5867 = vpop.f32.mrf.mxu0
  %v5868 = vpop.f32.mrf.mxu0
  %v5869 = vadd.f32 %v5260, %v5868
  %v5870 = vpop.f32.mrf.mxu0
  %5871 = vmatprep.mubr.bf16.mxu0 %v3177
  %5872 = vmatmul.mubr.bf16.gmra.mxu0 %v3176
  %v5873 = vpop.f32.mrf.mxu0
  %v5874 = vadd.f32 %v5265, %v5873
  %v5875 = vpop.f32.mrf.mxu0
  %v5876 = vpop.f32.mrf.mxu0
  %v5877 = vadd.f32 %v5268, %v5876
  %v5878 = vpop.f32.mrf.mxu0
  %5879 = vmatprep.mubr.bf16.mxu0 %v3184
  %5880 = vmatmul.mubr.bf16.gmra.mxu0 %v3183
  %v5881 = vpop.f32.mrf.mxu0
  %v5882 = vadd.f32 %v5273, %v5881
  %v5883 = vpop.f32.mrf.mxu0
  %v5884 = vpop.f32.mrf.mxu0
  %v5885 = vadd.f32 %v5276, %v5884
  %v5886 = vpop.f32.mrf.mxu0
  %5887 = vmatprep.mubr.bf16.mxu0 %v3191
  %5888 = vmatmul.mubr.bf16.gmra.mxu0 %v3190
  %v5889 = vpop.f32.mrf.mxu0
  %v5890 = vadd.f32 %v5281, %v5889
  %v5891 = vpop.f32.mrf.mxu0
  %v5892 = vpop.f32.mrf.mxu0
  %v5893 = vadd.f32 %v5284, %v5892
  %v5894 = vpop.f32.mrf.mxu0
  %5895 = vmatprep.mubr.bf16.mxu0 %v3198
  %5896 = vmatmul.mubr.bf16.gmra.mxu0 %v3197
  %v5897 = vpop.f32.mrf.mxu0
  %v5898 = vadd.f32 %v5289, %v5897
  %v5899 = vpop.f32.mrf.mxu0
  %v5900 = vpop.f32.mrf.mxu0
  %v5901 = vadd.f32 %v5292, %v5900
  %v5902 = vpop.f32.mrf.mxu0
  %5903 = vmatprep.mubr.bf16.mxu0 %v3205
  %5904 = vmatmul.mubr.bf16.gmra.mxu0 %v3204
  %v5905 = vpop.f32.mrf.mxu0
  %v5906 = vadd.f32 %v5297, %v5905
  %v5907 = vpop.f32.mrf.mxu0
  %v5908 = vpop.f32.mrf.mxu0
  %v5909 = vadd.f32 %v5300, %v5908
  %v5910 = vpop.f32.mrf.mxu0
  %5911 = vmatprep.mubr.bf16.mxu0 %v3212
  %5912 = vmatmul.mubr.bf16.gmra.mxu0 %v3211
  %v5913 = vpop.f32.mrf.mxu0
  %v5914 = vadd.f32 %v5305, %v5913
  %v5915 = vpop.f32.mrf.mxu0
  %v5916 = vpop.f32.mrf.mxu0
  %v5917 = vadd.f32 %v5308, %v5916
  %v5918 = vpop.f32.mrf.mxu0
  %5919 = vmatprep.mubr.bf16.mxu0 %v3219
  %5920 = vmatmul.mubr.bf16.gmra.mxu0 %v3218
  %v5921 = vpop.f32.mrf.mxu0
  %v5922 = vadd.f32 %v5313, %v5921
  %v5923 = vpop.f32.mrf.mxu0
  %v5924 = vpop.f32.mrf.mxu0
  %v5925 = vadd.f32 %v5316, %v5924
  %v5926 = vpop.f32.mrf.mxu0
  %5927 = vmatprep.mubr.bf16.mxu0 %v3226
  %5928 = vmatmul.mubr.bf16.gmra.mxu0 %v3225
  %v5929 = vpop.f32.mrf.mxu0
  %v5930 = vadd.f32 %v5321, %v5929
  %v5931 = vpop.f32.mrf.mxu0
  %v5932 = vpop.f32.mrf.mxu0
  %v5933 = vadd.f32 %v5324, %v5932
  %v5934 = vpop.f32.mrf.mxu0
  %5935 = vmatprep.mubr.bf16.mxu0 %v3233
  %5936 = vmatmul.mubr.bf16.gmra.mxu0 %v3232
  %v5937 = vpop.f32.mrf.mxu0
  %v5938 = vadd.f32 %v5329, %v5937
  %v5939 = vpop.f32.mrf.mxu0
  %v5940 = vpop.f32.mrf.mxu0
  %v5941 = vadd.f32 %v5332, %v5940
  %v5942 = vpop.f32.mrf.mxu0
  %5943 = vmatprep.mubr.bf16.mxu0 %v3240
  %5944 = vmatmul.mubr.bf16.gmra.mxu0 %v3239
  %v5945 = vpop.f32.mrf.mxu0
  %v5946 = vadd.f32 %v5337, %v5945
  %v5947 = vpop.f32.mrf.mxu0
  %v5948 = vpop.f32.mrf.mxu0
  %v5949 = vadd.f32 %v5340, %v5948
  %v5950 = vpop.f32.mrf.mxu0
  %5951 = vmatprep.mubr.bf16.mxu0 %v3247
  %5952 = vmatmul.mubr.bf16.gmra.mxu0 %v3246
  %v5953 = vpop.f32.mrf.mxu0
  %v5954 = vadd.f32 %v5345, %v5953
  %v5955 = vpop.f32.mrf.mxu0
  %v5956 = vpop.f32.mrf.mxu0
  %v5957 = vadd.f32 %v5348, %v5956
  %v5958 = vpop.f32.mrf.mxu0
  %5959 = vmatprep.mubr.bf16.mxu0 %v3254
  %5960 = vmatmul.mubr.bf16.gmra.mxu0 %v3253
  %v5961 = vpop.f32.mrf.mxu0
  %v5962 = vadd.f32 %v5353, %v5961
  %v5963 = vpop.f32.mrf.mxu0
  %v5964 = vpop.f32.mrf.mxu0
  %v5965 = vadd.f32 %v5356, %v5964
  %v5966 = vpop.f32.mrf.mxu0
  %5967 = vmatprep.mubr.bf16.mxu0 %v3261
  %5968 = vmatmul.mubr.bf16.gmra.mxu0 %v3260
  %v5969 = vpop.f32.mrf.mxu0
  %v5970 = vadd.f32 %v5361, %v5969
  %v5971 = vpop.f32.mrf.mxu0
  %v5972 = vpop.f32.mrf.mxu0
  %v5973 = vadd.f32 %v5364, %v5972
  %v5974 = vpop.f32.mrf.mxu0
  %5975 = vmatprep.mubr.bf16.mxu0 %v3268
  %5976 = vmatmul.mubr.bf16.gmra.mxu0 %v3267
  %v5977 = vpop.f32.mrf.mxu0
  %v5978 = vadd.f32 %v5369, %v5977
  %v5979 = vpop.f32.mrf.mxu0
  %v5980 = vpop.f32.mrf.mxu0
  %v5981 = vadd.f32 %v5372, %v5980
  %v5982 = vpop.f32.mrf.mxu0
  %5983 = vmatprep.mubr.bf16.mxu0 %v3275
  %5984 = vmatmul.mubr.bf16.gmra.mxu0 %v3274
  %v5985 = vpop.f32.mrf.mxu0
  %v5986 = vadd.f32 %v5377, %v5985
  %v5987 = vpop.f32.mrf.mxu0
  %v5988 = vpop.f32.mrf.mxu0
  %v5989 = vadd.f32 %v5380, %v5988
  %v5990 = vpop.f32.mrf.mxu0
  %5991 = vmatprep.mubr.bf16.mxu0 %v3282
  %5992 = vmatmul.mubr.bf16.gmra.mxu0 %v3281
  %v5993 = vpop.f32.mrf.mxu0
  %v5994 = vadd.f32 %v5385, %v5993
  %v5995 = vpop.f32.mrf.mxu0
  %v5996 = vpop.f32.mrf.mxu0
  %v5997 = vadd.f32 %v5388, %v5996
  %v5998 = vpop.f32.mrf.mxu0
  %5999 = vmatprep.mubr.bf16.mxu0 %v3289
  %6000 = vmatmul.mubr.bf16.gmra.mxu0 %v3288
  %v6001 = vpop.f32.mrf.mxu0
  %v6002 = vadd.f32 %v5393, %v6001
  %v6003 = vpop.f32.mrf.mxu0
  %v6004 = vpop.f32.mrf.mxu0
  %v6005 = vadd.f32 %v5396, %v6004
  %v6006 = vpop.f32.mrf.mxu0
  %6007 = vmatprep.mubr.bf16.mxu0 %v3296
  %6008 = vmatmul.mubr.bf16.gmra.mxu0 %v3295
  %v6009 = vpop.f32.mrf.mxu0
  %v6010 = vadd.f32 %v5401, %v6009
  %v6011 = vpop.f32.mrf.mxu0
  %v6012 = vpop.f32.mrf.mxu0
  %v6013 = vadd.f32 %v5404, %v6012
  %v6014 = vpop.f32.mrf.mxu0
  %6015 = vmatprep.mubr.bf16.mxu0 %v3303
  %6016 = vmatmul.mubr.bf16.gmra.mxu0 %v3302
  %v6017 = vpop.f32.mrf.mxu0
  %v6018 = vadd.f32 %v5409, %v6017
  %v6019 = vpop.f32.mrf.mxu0
  %v6020 = vpop.f32.mrf.mxu0
  %v6021 = vadd.f32 %v5412, %v6020
  %v6022 = vpop.f32.mrf.mxu0
  %6023 = vmatprep.mubr.bf16.mxu0 %v3310
  %6024 = vmatmul.mubr.bf16.gmra.mxu0 %v3309
  %v6025 = vpop.f32.mrf.mxu0
  %v6026 = vadd.f32 %v5417, %v6025
  %v6027 = vpop.f32.mrf.mxu0
  %v6028 = vpop.f32.mrf.mxu0
  %v6029 = vadd.f32 %v5420, %v6028
  %v6030 = vpop.f32.mrf.mxu0
  %6031 = vmatprep.mubr.bf16.mxu0 %v3317
  %6032 = vmatmul.mubr.bf16.gmra.mxu0 %v3316
  %v6033 = vpop.f32.mrf.mxu0
  %v6034 = vadd.f32 %v5425, %v6033
  %v6035 = vpop.f32.mrf.mxu0
  %v6036 = vpop.f32.mrf.mxu0
  %v6037 = vadd.f32 %v5428, %v6036
  %v6038 = vpop.f32.mrf.mxu0
  %6039 = vmatprep.mubr.bf16.mxu0 %v3324
  %6040 = vmatmul.mubr.bf16.gmra.mxu0 %v3323
  %v6041 = vpop.f32.mrf.mxu0
  %v6042 = vadd.f32 %v5433, %v6041
  %v6043 = vpop.f32.mrf.mxu0
  %v6044 = vpop.f32.mrf.mxu0
  %v6045 = vadd.f32 %v5436, %v6044
  %v6046 = vpop.f32.mrf.mxu0
  %6047 = vmatprep.mubr.bf16.mxu0 %v3331
  %6048 = vmatmul.mubr.bf16.gmra.mxu0 %v3330
  %v6049 = vpop.f32.mrf.mxu0
  %v6050 = vadd.f32 %v5441, %v6049
  %v6051 = vpop.f32.mrf.mxu0
  %v6052 = vpop.f32.mrf.mxu0
  %v6053 = vadd.f32 %v5444, %v6052
  %v6054 = vpop.f32.mrf.mxu0
  %6055 = vmatprep.mubr.bf16.mxu0 %v3338
  %6056 = vmatmul.mubr.bf16.gmra.mxu0 %v3337
  %v6057 = vpop.f32.mrf.mxu0
  %v6058 = vadd.f32 %v5449, %v6057
  %v6059 = vpop.f32.mrf.mxu0
  %v6060 = vpop.f32.mrf.mxu0
  %v6061 = vadd.f32 %v5452, %v6060
  %v6062 = vpop.f32.mrf.mxu0
  %6063 = vmatprep.mubr.bf16.mxu0 %v3345
  %6064 = vmatmul.mubr.bf16.gmra.mxu0 %v3344
  %v6065 = vpop.f32.mrf.mxu0
  %v6066 = vadd.f32 %v5457, %v6065
  %v6067 = vpop.f32.mrf.mxu0
  %v6068 = vpop.f32.mrf.mxu0
  %v6069 = vadd.f32 %v5460, %v6068
  %v6070 = vpop.f32.mrf.mxu0
  %6071 = vmatprep.mubr.bf16.mxu0 %v3352
  %6072 = vmatmul.mubr.bf16.gmra.mxu0 %v3351
  %v6073 = vpop.f32.mrf.mxu0
  %v6074 = vadd.f32 %v5465, %v6073
  %v6075 = vpop.f32.mrf.mxu0
  %v6076 = vpop.f32.mrf.mxu0
  %v6077 = vadd.f32 %v5468, %v6076
  %v6078 = vpop.f32.mrf.mxu0
  %6079 = vmatprep.mubr.bf16.mxu0 %v3359
  %6080 = vmatmul.mubr.bf16.gmra.mxu0 %v3358
  %v6081 = vpop.f32.mrf.mxu0
  %v6082 = vadd.f32 %v5473, %v6081
  %v6083 = vpop.f32.mrf.mxu0
  %v6084 = vpop.f32.mrf.mxu0
  %v6085 = vadd.f32 %v5476, %v6084
  %v6086 = vpop.f32.mrf.mxu0
  %6087 = vmatprep.mubr.bf16.mxu0 %v3366
  %6088 = vmatmul.mubr.bf16.gmra.mxu0 %v3365
  %v6089 = vpop.f32.mrf.mxu0
  %v6090 = vadd.f32 %v5481, %v6089
  %v6091 = vpop.f32.mrf.mxu0
  %v6092 = vpop.f32.mrf.mxu0
  %v6093 = vadd.f32 %v5484, %v6092
  %v6094 = vpop.f32.mrf.mxu0
  %6095 = vmatprep.mubr.bf16.mxu0 %v3373
  %6096 = vmatmul.mubr.bf16.gmra.mxu0 %v3372
  %v6097 = vpop.f32.mrf.mxu0
  %v6098 = vadd.f32 %v5489, %v6097
  %v6099 = vpop.f32.mrf.mxu0
  %v6100 = vpop.f32.mrf.mxu0
  %v6101 = vadd.f32 %v5492, %v6100
  %v6102 = vpop.f32.mrf.mxu0
  %6103 = vmatprep.mubr.bf16.mxu0 %v3380
  %6104 = vmatmul.mubr.bf16.gmra.mxu0 %v3379
  %v6105 = vpop.f32.mrf.mxu0
  %v6106 = vadd.f32 %v5497, %v6105
  %v6107 = vpop.f32.mrf.mxu0
  %v6108 = vpop.f32.mrf.mxu0
  %v6109 = vadd.f32 %v5500, %v6108
  %v6110 = vpop.f32.mrf.mxu0
  %6111 = vmatprep.mubr.bf16.mxu0 %v3387
  %6112 = vmatmul.mubr.bf16.gmra.mxu0 %v3386
  %v6113 = vpop.f32.mrf.mxu0
  %v6114 = vadd.f32 %v5505, %v6113
  %v6115 = vpop.f32.mrf.mxu0
  %v6116 = vpop.f32.mrf.mxu0
  %v6117 = vadd.f32 %v5508, %v6116
  %v6118 = vpop.f32.mrf.mxu0
  %6119 = vmatprep.mubr.bf16.mxu0 %v3394
  %6120 = vmatmul.mubr.bf16.gmra.mxu0 %v3393
  %v6121 = vpop.f32.mrf.mxu0
  %v6122 = vadd.f32 %v5513, %v6121
  %v6123 = vpop.f32.mrf.mxu0
  %v6124 = vpop.f32.mrf.mxu0
  %v6125 = vadd.f32 %v5516, %v6124
  %v6126 = vpop.f32.mrf.mxu0
  %6127 = vmatprep.mubr.bf16.mxu0 %v3401
  %6128 = vmatmul.mubr.bf16.gmra.mxu0 %v3400
  %v6129 = vpop.f32.mrf.mxu0
  %v6130 = vadd.f32 %v5521, %v6129
  %v6131 = vpop.f32.mrf.mxu0
  %v6132 = vpop.f32.mrf.mxu0
  %v6133 = vadd.f32 %v5524, %v6132
  %v6134 = vpop.f32.mrf.mxu0
  %6135 = vmatprep.mubr.bf16.mxu0 %v3408
  %6136 = vmatmul.mubr.bf16.gmra.mxu0 %v3407
  %v6137 = vpop.f32.mrf.mxu0
  %v6138 = vadd.f32 %v5529, %v6137
  %v6139 = vpop.f32.mrf.mxu0
  %v6140 = vpop.f32.mrf.mxu0
  %v6141 = vadd.f32 %v5532, %v6140
  %v6142 = vpop.f32.mrf.mxu0
  %6143 = vmatprep.mubr.bf16.mxu0 %v3415
  %6144 = vmatmul.mubr.bf16.gmra.mxu0 %v3414
  %v6145 = vpop.f32.mrf.mxu0
  %v6146 = vadd.f32 %v5537, %v6145
  %v6147 = vpop.f32.mrf.mxu0
  %v6148 = vpop.f32.mrf.mxu0
  %v6149 = vadd.f32 %v5540, %v6148
  %v6150 = vpop.f32.mrf.mxu0
  %6151 = vmatprep.mubr.bf16.mxu0 %v3422
  %6152 = vmatmul.mubr.bf16.gmra.mxu0 %v3421
  %v6153 = vpop.f32.mrf.mxu0
  %v6154 = vadd.f32 %v5545, %v6153
  %v6155 = vpop.f32.mrf.mxu0
  %v6156 = vpop.f32.mrf.mxu0
  %v6157 = vadd.f32 %v5548, %v6156
  %v6158 = vpop.f32.mrf.mxu0
  %6159 = vmatprep.mubr.bf16.mxu0 %v3429
  %6160 = vmatmul.mubr.bf16.gmra.mxu0 %v3428
  %v6161 = vpop.f32.mrf.mxu0
  %v6162 = vadd.f32 %v5553, %v6161
  %v6163 = vpop.f32.mrf.mxu0
  %v6164 = vpop.f32.mrf.mxu0
  %v6165 = vadd.f32 %v5556, %v6164
  %v6166 = vpop.f32.mrf.mxu0
  %6167 = vmatprep.mubr.bf16.mxu0 %v3436
  %6168 = vmatmul.mubr.bf16.gmra.mxu0 %v3435
  %v6169 = vpop.f32.mrf.mxu0
  %v6170 = vadd.f32 %v5561, %v6169
  %v6171 = vpop.f32.mrf.mxu0
  %v6172 = vpop.f32.mrf.mxu0
  %v6173 = vadd.f32 %v5564, %v6172
  %v6174 = vpop.f32.mrf.mxu0
  %6175 = vmatprep.mubr.bf16.mxu0 %v3443
  %6176 = vmatmul.mubr.bf16.gmra.mxu0 %v3442
  %v6177 = vpop.f32.mrf.mxu0
  %v6178 = vadd.f32 %v5569, %v6177
  %v6179 = vpop.f32.mrf.mxu0
  %v6180 = vpop.f32.mrf.mxu0
  %v6181 = vadd.f32 %v5572, %v6180
  %v6182 = vpop.f32.mrf.mxu0
  %6183 = vmatprep.mubr.bf16.mxu0 %v3450
  %6184 = vmatmul.mubr.bf16.gmra.mxu0 %v3449
  %v6185 = vpop.f32.mrf.mxu0
  %v6186 = vadd.f32 %v5577, %v6185
  %v6187 = vpop.f32.mrf.mxu0
  %v6188 = vpop.f32.mrf.mxu0
  %v6189 = vadd.f32 %v5580, %v6188
  %v6190 = vpop.f32.mrf.mxu0
  %6191 = vmatprep.mubr.bf16.mxu0 %v3457
  %6192 = vmatmul.mubr.bf16.gmra.mxu0 %v3456
  %v6193 = vpop.f32.mrf.mxu0
  %v6194 = vadd.f32 %v5585, %v6193
  %v6195 = vpop.f32.mrf.mxu0
  %v6196 = vpop.f32.mrf.mxu0
  %v6197 = vadd.f32 %v5588, %v6196
  %v6198 = vpop.f32.mrf.mxu0
  %6199 = vmatprep.mubr.bf16.mxu0 %v3464
  %6200 = vmatmul.mubr.bf16.gmra.mxu0 %v3463
  %v6201 = vpop.f32.mrf.mxu0
  %v6202 = vadd.f32 %v5593, %v6201
  %v6203 = vpop.f32.mrf.mxu0
  %v6204 = vpop.f32.mrf.mxu0
  %v6205 = vadd.f32 %v5596, %v6204
  %v6206 = vpop.f32.mrf.mxu0
  %6207 = vmatprep.mubr.bf16.mxu0 %v3471
  %6208 = vmatmul.mubr.bf16.gmra.mxu0 %v3470
  %v6209 = vpop.f32.mrf.mxu0
  %v6210 = vadd.f32 %v5601, %v6209
  %v6211 = vpop.f32.mrf.mxu0
  %v6212 = vpop.f32.mrf.mxu0
  %v6213 = vadd.f32 %v5604, %v6212
  %v6214 = vpop.f32.mrf.mxu0
  %6215 = vmatprep.mubr.bf16.mxu0 %v3478
  %6216 = vmatmul.mubr.bf16.gmra.mxu0 %v3477
  %v6217 = vpop.f32.mrf.mxu0
  %v6218 = vadd.f32 %v5609, %v6217
  %v6219 = vpop.f32.mrf.mxu0
  %v6220 = vpop.f32.mrf.mxu0
  %v6221 = vadd.f32 %v5612, %v6220
  %v6222 = vpop.f32.mrf.mxu0
  %6223 = vmatprep.mubr.bf16.mxu0 %v3485
  %6224 = vmatmul.mubr.bf16.gmra.mxu0 %v3484
  %v6225 = vpop.f32.mrf.mxu0
  %v6226 = vadd.f32 %v5617, %v6225
  %v6227 = vpop.f32.mrf.mxu0
  %v6228 = vpop.f32.mrf.mxu0
  %v6229 = vadd.f32 %v5620, %v6228
  %v6230 = vpop.f32.mrf.mxu0
  %6231 = vmatprep.mubr.bf16.mxu0 %v3492
  %6232 = vmatmul.mubr.bf16.gmra.mxu0 %v3491
  %v6233 = vpop.f32.mrf.mxu0
  %v6234 = vadd.f32 %v5625, %v6233
  %v6235 = vpop.f32.mrf.mxu0
  %v6236 = vpop.f32.mrf.mxu0
  %v6237 = vadd.f32 %v5628, %v6236
  %v6238 = vpop.f32.mrf.mxu0
  %6239 = vmatprep.mubr.bf16.mxu0 %v3499
  %6240 = vmatmul.mubr.bf16.gmra.mxu0 %v3498
  %v6241 = vpop.f32.mrf.mxu0
  %v6242 = vadd.f32 %v5633, %v6241
  %v6243 = vpop.f32.mrf.mxu0
  %v6244 = vpop.f32.mrf.mxu0
  %v6245 = vadd.f32 %v5636, %v6244
  %v6246 = vpop.f32.mrf.mxu0
  %6247 = vmatprep.mubr.bf16.mxu0 %v3506
  %6248 = vmatmul.mubr.bf16.gmra.mxu0 %v3505
  %v6249 = vpop.f32.mrf.mxu0
  %v6250 = vadd.f32 %v5641, %v6249
  %v6251 = vpop.f32.mrf.mxu0
  %v6252 = vpop.f32.mrf.mxu0
  %v6253 = vadd.f32 %v5644, %v6252
  %v6254 = vpop.f32.mrf.mxu0
  %6255 = vmatprep.mubr.bf16.mxu0 %v3513
  %6256 = vmatmul.mubr.bf16.gmra.mxu0 %v3512
  %v6257 = vpop.f32.mrf.mxu0
  %v6258 = vadd.f32 %v5649, %v6257
  %v6259 = vpop.f32.mrf.mxu0
  %v6260 = vpop.f32.mrf.mxu0
  %v6261 = vadd.f32 %v5652, %v6260
  %v6262 = vpop.f32.mrf.mxu0
  %6263 = vmatprep.mubr.bf16.mxu0 %v3520
  %6264 = vmatmul.mubr.bf16.gmra.mxu0 %v3519
  %v6265 = vpop.f32.mrf.mxu0
  %v6266 = vadd.f32 %v5657, %v6265
  %v6267 = vpop.f32.mrf.mxu0
  %v6268 = vpop.f32.mrf.mxu0
  %v6269 = vadd.f32 %v5660, %v6268
  %v6270 = vpop.f32.mrf.mxu0
  %6271 = vmatprep.mubr.bf16.mxu0 %v3527
  %6272 = vmatmul.mubr.bf16.gmra.mxu0 %v3526
  %v6273 = vpop.f32.mrf.mxu0
  %v6274 = vadd.f32 %v5665, %v6273
  %v6275 = vpop.f32.mrf.mxu0
  %v6276 = vpop.f32.mrf.mxu0
  %v6277 = vadd.f32 %v5668, %v6276
  %v6278 = vpop.f32.mrf.mxu0
  %6279 = vmatprep.mubr.bf16.mxu0 %v3534
  %6280 = vmatmul.mubr.bf16.gmra.mxu0 %v3533
  %v6281 = vpop.f32.mrf.mxu0
  %v6282 = vadd.f32 %v5673, %v6281
  %v6283 = vpop.f32.mrf.mxu0
  %v6284 = vpop.f32.mrf.mxu0
  %v6285 = vadd.f32 %v5676, %v6284
  %v6286 = vpop.f32.mrf.mxu0
  %6287 = vmatprep.mubr.bf16.mxu0 %v3541
  %6288 = vmatmul.mubr.bf16.gmra.mxu0 %v3540
  %v6289 = vpop.f32.mrf.mxu0
  %v6290 = vadd.f32 %v5681, %v6289
  %v6291 = vpop.f32.mrf.mxu0
  %v6292 = vpop.f32.mrf.mxu0
  %v6293 = vadd.f32 %v5684, %v6292
  %v6294 = vpop.f32.mrf.mxu0
  %6295 = vmatprep.mubr.bf16.mxu0 %v3548
  %6296 = vmatmul.mubr.bf16.gmra.mxu0 %v3547
  %v6297 = vpop.f32.mrf.mxu0
  %v6298 = vadd.f32 %v5689, %v6297
  %v6299 = vpop.f32.mrf.mxu0
  %v6300 = vpop.f32.mrf.mxu0
  %v6301 = vadd.f32 %v5692, %v6300
  %v6302 = vpop.f32.mrf.mxu0
  %6303 = vmatprep.mubr.bf16.mxu0 %v3555
  %6304 = vmatmul.mubr.bf16.gmra.mxu0 %v3554
  %v6305 = vpop.f32.mrf.mxu0
  %v6306 = vadd.f32 %v5697, %v6305
  %v6307 = vpop.f32.mrf.mxu0
  %v6308 = vpop.f32.mrf.mxu0
  %v6309 = vadd.f32 %v5700, %v6308
  %v6310 = vpop.f32.mrf.mxu0
  %6311 = vmatprep.mubr.bf16.mxu0 %v3562
  %6312 = vmatmul.mubr.bf16.gmra.mxu0 %v3561
  %v6313 = vpop.f32.mrf.mxu0
  %v6314 = vadd.f32 %v5705, %v6313
  %v6315 = vpop.f32.mrf.mxu0
  %v6316 = vpop.f32.mrf.mxu0
  %v6317 = vadd.f32 %v5708, %v6316
  %v6318 = vpop.f32.mrf.mxu0
  %6319 = vmatprep.mubr.bf16.mxu0 %v3569
  %6320 = vmatmul.mubr.bf16.gmra.mxu0 %v3568
  %v6321 = vpop.f32.mrf.mxu0
  %v6322 = vadd.f32 %v5713, %v6321
  %v6323 = vpop.f32.mrf.mxu0
  %v6324 = vpop.f32.mrf.mxu0
  %v6325 = vadd.f32 %v5716, %v6324
  %v6326 = vpop.f32.mrf.mxu0
  %6327 = vmatprep.mubr.bf16.mxu0 %v3576
  %6328 = vmatmul.mubr.bf16.gmra.mxu0 %v3575
  %v6329 = vpop.f32.mrf.mxu0
  %v6330 = vadd.f32 %v5721, %v6329
  %v6331 = vpop.f32.mrf.mxu0
  %v6332 = vpop.f32.mrf.mxu0
  %v6333 = vadd.f32 %v5724, %v6332
  %v6334 = vpop.f32.mrf.mxu0
  %6335 = vmatprep.mubr.bf16.mxu0 %v3583
  %6336 = vmatmul.mubr.bf16.gmra.mxu0 %v3582
  %v6337 = vpop.f32.mrf.mxu0
  %v6338 = vadd.f32 %v5729, %v6337
  %v6339 = vpop.f32.mrf.mxu0
  %v6340 = vpop.f32.mrf.mxu0
  %v6341 = vadd.f32 %v5732, %v6340
  %v6342 = vpop.f32.mrf.mxu0
  %6343 = vmatprep.mubr.bf16.mxu0 %v3590
  %6344 = vmatmul.mubr.bf16.gmra.mxu0 %v3589
  %v6345 = vpop.f32.mrf.mxu0
  %v6346 = vadd.f32 %v5737, %v6345
  %v6347 = vpop.f32.mrf.mxu0
  %v6348 = vpop.f32.mrf.mxu0
  %v6349 = vadd.f32 %v5740, %v6348
  %v6350 = vpop.f32.mrf.mxu0
  %6351 = vmatprep.mubr.bf16.mxu0 %v3597
  %6352 = vmatmul.mubr.bf16.gmra.mxu0 %v3596
  %v6353 = vpop.f32.mrf.mxu0
  %v6354 = vadd.f32 %v5745, %v6353
  %v6355 = vpop.f32.mrf.mxu0
  %v6356 = vpop.f32.mrf.mxu0
  %v6357 = vadd.f32 %v5748, %v6356
  %v6358 = vpop.f32.mrf.mxu0
  %6359 = vmatprep.mubr.bf16.mxu0 %v3604
  %6360 = vmatmul.mubr.bf16.gmra.mxu0 %v3603
  %v6361 = vpop.f32.mrf.mxu0
  %v6362 = vadd.f32 %v5753, %v6361
  %v6363 = vpop.f32.mrf.mxu0
  %v6364 = vpop.f32.mrf.mxu0
  %v6365 = vadd.f32 %v5756, %v6364
  %v6366 = vpop.f32.mrf.mxu0
  %6367 = vmatprep.mubr.bf16.mxu0 %v3611
  %6368 = vmatmul.mubr.bf16.gmra.mxu0 %v3610
  %v6369 = vpop.f32.mrf.mxu0
  %v6370 = vadd.f32 %v5761, %v6369
  %v6371 = vpop.f32.mrf.mxu0
  %v6372 = vpop.f32.mrf.mxu0
  %v6373 = vadd.f32 %v5764, %v6372
  %v6374 = vpop.f32.mrf.mxu0
  %6375 = vmatprep.mubr.bf16.mxu0 %v3618
  %6376 = vmatmul.mubr.bf16.gmra.mxu0 %v3617
  %v6377 = vpop.f32.mrf.mxu0
  %v6378 = vadd.f32 %v5769, %v6377
  %v6379 = vpop.f32.mrf.mxu0
  %v6380 = vpop.f32.mrf.mxu0
  %v6381 = vadd.f32 %v5772, %v6380
  %v6382 = vpop.f32.mrf.mxu0
  %6383 = vmatprep.mubr.bf16.mxu0 %v3625
  %6384 = vmatmul.mubr.bf16.gmra.mxu0 %v3624
  %v6385 = vpop.f32.mrf.mxu0
  %v6386 = vadd.f32 %v5777, %v6385
  %v6387 = vpop.f32.mrf.mxu0
  %v6388 = vpop.f32.mrf.mxu0
  %v6389 = vadd.f32 %v5780, %v6388
  %v6390 = vpop.f32.mrf.mxu0
  %6391 = vmatprep.mubr.bf16.mxu0 %v3632
  %6392 = vmatmul.mubr.bf16.gmra.mxu0 %v3631
  %v6393 = vpop.f32.mrf.mxu0
  %v6394 = vadd.f32 %v5785, %v6393
  %v6395 = vpop.f32.mrf.mxu0
  %v6396 = vpop.f32.mrf.mxu0
  %v6397 = vadd.f32 %v5788, %v6396
  %v6398 = vpop.f32.mrf.mxu0
  %6399 = vmatprep.mubr.bf16.mxu0 %v3639
  %6400 = vmatmul.mubr.bf16.gmra.mxu0 %v3638
  %v6401 = vpop.f32.mrf.mxu0
  %v6402 = vadd.f32 %v5793, %v6401
  %v6403 = vpop.f32.mrf.mxu0
  %v6404 = vpop.f32.mrf.mxu0
  %v6405 = vadd.f32 %v5796, %v6404
  %v6406 = vpop.f32.mrf.mxu0
  %6407 = vmatprep.mubr.bf16.mxu0 %v3646
  %6408 = vmatmul.mubr.bf16.gmra.mxu0 %v3645
  %v6409 = vpop.f32.mrf.mxu0
  %v6410 = vadd.f32 %v5801, %v6409
  %v6411 = vpop.f32.mrf.mxu0
  %v6412 = vpop.f32.mrf.mxu0
  %v6413 = vadd.f32 %v5804, %v6412
  %v6414 = vpop.f32.mrf.mxu0
  %6415 = vmatprep.mubr.bf16.mxu0 %v3653
  %6416 = vmatmul.mubr.bf16.gmra.mxu0 %v3652
  %v6417 = vpop.f32.mrf.mxu0
  %v6418 = vadd.f32 %v5809, %v6417
  %v6419 = vpop.f32.mrf.mxu0
  %v6420 = vpop.f32.mrf.mxu0
  %v6421 = vadd.f32 %v5812, %v6420
  %v6422 = vpop.f32.mrf.mxu0
  %6423 = vmatprep.mubr.bf16.mxu0 %v3660
  %6424 = vmatmul.mubr.bf16.gmra.mxu0 %v3659
  %v6425 = vpop.f32.mrf.mxu0
  %v6426 = vadd.f32 %v5817, %v6425
  %v6427 = vpop.f32.mrf.mxu0
  %v6428 = vpop.f32.mrf.mxu0
  %v6429 = vadd.f32 %v5820, %v6428
  %v6430 = vpop.f32.mrf.mxu0
  %6431 = vdwg.mxu0
  %6432 = vmatprep.subr.bf16.mxu0 0
  %6433 = vmatpush1.bf16.msra.mxu0 0
  %6434 = vmatprep.subr.bf16.mxu0 0
  %6435 = vmatpush1.bf16.msra.mxu0 0
  %6436 = vmatprep.subr.bf16.mxu0 0
  %6437 = vmatpush1.bf16.msra.mxu0 0
  %6438 = vmatprep.subr.bf16.mxu0 0
  %6439 = vmatpush1.bf16.msra.mxu0 0
  %6440 = vmatprep.subr.bf16.mxu0 0
  %6441 = vmatpush1.bf16.msra.mxu0 0
  %6442 = vmatprep.subr.bf16.mxu0 0
  %6443 = vmatpush1.bf16.msra.mxu0 0
  %6444 = vmatprep.subr.bf16.mxu0 0
  %6445 = vmatpush1.bf16.msra.mxu0 0
  %6446 = vmatprep.subr.bf16.mxu0 0
  %6447 = vmatpush1.bf16.msra.mxu0 %v4338
  %6448 = vmatprep.subr.bf16.mxu0 0
  %6449 = vmatpush2.bf16.msra.mxu0 0
  %6450 = vmatprep.subr.bf16.mxu0 0
  %6451 = vmatpush2.bf16.msra.mxu0 0
  %6452 = vmatprep.subr.bf16.mxu0 0
  %6453 = vmatpush2.bf16.msra.mxu0 0
  %6454 = vmatprep.subr.bf16.mxu0 0
  %6455 = vmatpush2.bf16.msra.mxu0 0
  %6456 = vmatprep.subr.bf16.mxu0 0
  %6457 = vmatpush2.bf16.msra.mxu0 0
  %6458 = vmatprep.subr.bf16.mxu0 0
  %6459 = vmatpush2.bf16.msra.mxu0 0
  %6460 = vmatprep.subr.bf16.mxu0 0
  %6461 = vmatpush2.bf16.msra.mxu0 0
  %6462 = vmatprep.subr.bf16.mxu0 0
  %6463 = vmatpush2.bf16.msra.mxu0 0
  %6464 = vmatprep.mubr.bf16.mxu0 0
  %6465 = vmatmul.mubr.bf16.gmra.mxu0 %v4390
  %v6466 = vpop.f32.mrf.mxu0
  %v6467 = vadd.f32 %v5858, %v6466
  %v6468 = vpop.f32.mrf.mxu0
  %v6469 = vpop.f32.mrf.mxu0
  %v6470 = vadd.f32 %v5861, %v6469
  %v6471 = vpop.f32.mrf.mxu0
  %6472 = vmatprep.mubr.bf16.mxu0 0
  %6473 = vmatmul.mubr.bf16.gmra.mxu0 %v4393
  %v6474 = vpop.f32.mrf.mxu0
  %v6475 = vadd.f32 %v5866, %v6474
  %v6476 = vpop.f32.mrf.mxu0
  %v6477 = vpop.f32.mrf.mxu0
  %v6478 = vadd.f32 %v5869, %v6477
  %v6479 = vpop.f32.mrf.mxu0
  %6480 = vmatprep.mubr.bf16.mxu0 0
  %6481 = vmatmul.mubr.bf16.gmra.mxu0 %v4396
  %v6482 = vpop.f32.mrf.mxu0
  %v6483 = vadd.f32 %v5874, %v6482
  %v6484 = vpop.f32.mrf.mxu0
  %v6485 = vpop.f32.mrf.mxu0
  %v6486 = vadd.f32 %v5877, %v6485
  %v6487 = vpop.f32.mrf.mxu0
  %6488 = vmatprep.mubr.bf16.mxu0 0
  %6489 = vmatmul.mubr.bf16.gmra.mxu0 %v4399
  %v6490 = vpop.f32.mrf.mxu0
  %v6491 = vadd.f32 %v5882, %v6490
  %v6492 = vpop.f32.mrf.mxu0
  %v6493 = vpop.f32.mrf.mxu0
  %v6494 = vadd.f32 %v5885, %v6493
  %v6495 = vpop.f32.mrf.mxu0
  %6496 = vmatprep.mubr.bf16.mxu0 0
  %6497 = vmatmul.mubr.bf16.gmra.mxu0 %v4402
  %v6498 = vpop.f32.mrf.mxu0
  %v6499 = vadd.f32 %v5890, %v6498
  %v6500 = vpop.f32.mrf.mxu0
  %v6501 = vpop.f32.mrf.mxu0
  %v6502 = vadd.f32 %v5893, %v6501
  %v6503 = vpop.f32.mrf.mxu0
  %6504 = vmatprep.mubr.bf16.mxu0 0
  %6505 = vmatmul.mubr.bf16.gmra.mxu0 %v4405
  %v6506 = vpop.f32.mrf.mxu0
  %v6507 = vadd.f32 %v5898, %v6506
  %v6508 = vpop.f32.mrf.mxu0
  %v6509 = vpop.f32.mrf.mxu0
  %v6510 = vadd.f32 %v5901, %v6509
  %v6511 = vpop.f32.mrf.mxu0
  %6512 = vmatprep.mubr.bf16.mxu0 0
  %6513 = vmatmul.mubr.bf16.gmra.mxu0 %v4408
  %v6514 = vpop.f32.mrf.mxu0
  %v6515 = vadd.f32 %v5906, %v6514
  %v6516 = vpop.f32.mrf.mxu0
  %v6517 = vpop.f32.mrf.mxu0
  %v6518 = vadd.f32 %v5909, %v6517
  %v6519 = vpop.f32.mrf.mxu0
  %6520 = vmatprep.mubr.bf16.mxu0 0
  %6521 = vmatmul.mubr.bf16.gmra.mxu0 %v4411
  %v6522 = vpop.f32.mrf.mxu0
  %v6523 = vadd.f32 %v5914, %v6522
  %v6524 = vpop.f32.mrf.mxu0
  %v6525 = vpop.f32.mrf.mxu0
  %v6526 = vadd.f32 %v5917, %v6525
  %v6527 = vpop.f32.mrf.mxu0
  %6528 = vmatprep.mubr.bf16.mxu0 0
  %6529 = vmatmul.mubr.bf16.gmra.mxu0 %v4414
  %v6530 = vpop.f32.mrf.mxu0
  %v6531 = vadd.f32 %v5922, %v6530
  %v6532 = vpop.f32.mrf.mxu0
  %v6533 = vpop.f32.mrf.mxu0
  %v6534 = vadd.f32 %v5925, %v6533
  %v6535 = vpop.f32.mrf.mxu0
  %6536 = vmatprep.mubr.bf16.mxu0 0
  %6537 = vmatmul.mubr.bf16.gmra.mxu0 %v4417
  %v6538 = vpop.f32.mrf.mxu0
  %v6539 = vadd.f32 %v5930, %v6538
  %v6540 = vpop.f32.mrf.mxu0
  %v6541 = vpop.f32.mrf.mxu0
  %v6542 = vadd.f32 %v5933, %v6541
  %v6543 = vpop.f32.mrf.mxu0
  %6544 = vmatprep.mubr.bf16.mxu0 0
  %6545 = vmatmul.mubr.bf16.gmra.mxu0 %v4420
  %v6546 = vpop.f32.mrf.mxu0
  %v6547 = vadd.f32 %v5938, %v6546
  %v6548 = vpop.f32.mrf.mxu0
  %v6549 = vpop.f32.mrf.mxu0
  %v6550 = vadd.f32 %v5941, %v6549
  %v6551 = vpop.f32.mrf.mxu0
  %6552 = vmatprep.mubr.bf16.mxu0 0
  %6553 = vmatmul.mubr.bf16.gmra.mxu0 %v4423
  %v6554 = vpop.f32.mrf.mxu0
  %v6555 = vadd.f32 %v5946, %v6554
  %v6556 = vpop.f32.mrf.mxu0
  %v6557 = vpop.f32.mrf.mxu0
  %v6558 = vadd.f32 %v5949, %v6557
  %v6559 = vpop.f32.mrf.mxu0
  %6560 = vmatprep.mubr.bf16.mxu0 0
  %6561 = vmatmul.mubr.bf16.gmra.mxu0 %v4426
  %v6562 = vpop.f32.mrf.mxu0
  %v6563 = vadd.f32 %v5954, %v6562
  %v6564 = vpop.f32.mrf.mxu0
  %v6565 = vpop.f32.mrf.mxu0
  %v6566 = vadd.f32 %v5957, %v6565
  %v6567 = vpop.f32.mrf.mxu0
  %6568 = vmatprep.mubr.bf16.mxu0 0
  %6569 = vmatmul.mubr.bf16.gmra.mxu0 %v4429
  %v6570 = vpop.f32.mrf.mxu0
  %v6571 = vadd.f32 %v5962, %v6570
  %v6572 = vpop.f32.mrf.mxu0
  %v6573 = vpop.f32.mrf.mxu0
  %v6574 = vadd.f32 %v5965, %v6573
  %v6575 = vpop.f32.mrf.mxu0
  %6576 = vmatprep.mubr.bf16.mxu0 0
  %6577 = vmatmul.mubr.bf16.gmra.mxu0 %v4432
  %v6578 = vpop.f32.mrf.mxu0
  %v6579 = vadd.f32 %v5970, %v6578
  %v6580 = vpop.f32.mrf.mxu0
  %v6581 = vpop.f32.mrf.mxu0
  %v6582 = vadd.f32 %v5973, %v6581
  %v6583 = vpop.f32.mrf.mxu0
  %6584 = vmatprep.mubr.bf16.mxu0 0
  %6585 = vmatmul.mubr.bf16.gmra.mxu0 %v4435
  %v6586 = vpop.f32.mrf.mxu0
  %v6587 = vadd.f32 %v5978, %v6586
  %v6588 = vpop.f32.mrf.mxu0
  %v6589 = vpop.f32.mrf.mxu0
  %v6590 = vadd.f32 %v5981, %v6589
  %v6591 = vpop.f32.mrf.mxu0
  %6592 = vmatprep.mubr.bf16.mxu0 0
  %6593 = vmatmul.mubr.bf16.gmra.mxu0 %v4438
  %v6594 = vpop.f32.mrf.mxu0
  %v6595 = vadd.f32 %v5986, %v6594
  %v6596 = vpop.f32.mrf.mxu0
  %v6597 = vpop.f32.mrf.mxu0
  %v6598 = vadd.f32 %v5989, %v6597
  %v6599 = vpop.f32.mrf.mxu0
  %6600 = vmatprep.mubr.bf16.mxu0 0
  %6601 = vmatmul.mubr.bf16.gmra.mxu0 %v4441
  %v6602 = vpop.f32.mrf.mxu0
  %v6603 = vadd.f32 %v5994, %v6602
  %v6604 = vpop.f32.mrf.mxu0
  %v6605 = vpop.f32.mrf.mxu0
  %v6606 = vadd.f32 %v5997, %v6605
  %v6607 = vpop.f32.mrf.mxu0
  %6608 = vmatprep.mubr.bf16.mxu0 0
  %6609 = vmatmul.mubr.bf16.gmra.mxu0 %v4444
  %v6610 = vpop.f32.mrf.mxu0
  %v6611 = vadd.f32 %v6002, %v6610
  %v6612 = vpop.f32.mrf.mxu0
  %v6613 = vpop.f32.mrf.mxu0
  %v6614 = vadd.f32 %v6005, %v6613
  %v6615 = vpop.f32.mrf.mxu0
  %6616 = vmatprep.mubr.bf16.mxu0 0
  %6617 = vmatmul.mubr.bf16.gmra.mxu0 %v4447
  %v6618 = vpop.f32.mrf.mxu0
  %v6619 = vadd.f32 %v6010, %v6618
  %v6620 = vpop.f32.mrf.mxu0
  %v6621 = vpop.f32.mrf.mxu0
  %v6622 = vadd.f32 %v6013, %v6621
  %v6623 = vpop.f32.mrf.mxu0
  %6624 = vmatprep.mubr.bf16.mxu0 0
  %6625 = vmatmul.mubr.bf16.gmra.mxu0 %v4450
  %v6626 = vpop.f32.mrf.mxu0
  %v6627 = vadd.f32 %v6018, %v6626
  %v6628 = vpop.f32.mrf.mxu0
  %v6629 = vpop.f32.mrf.mxu0
  %v6630 = vadd.f32 %v6021, %v6629
  %v6631 = vpop.f32.mrf.mxu0
  %6632 = vmatprep.mubr.bf16.mxu0 0
  %6633 = vmatmul.mubr.bf16.gmra.mxu0 %v4453
  %v6634 = vpop.f32.mrf.mxu0
  %v6635 = vadd.f32 %v6026, %v6634
  %v6636 = vpop.f32.mrf.mxu0
  %v6637 = vpop.f32.mrf.mxu0
  %v6638 = vadd.f32 %v6029, %v6637
  %v6639 = vpop.f32.mrf.mxu0
  %6640 = vmatprep.mubr.bf16.mxu0 0
  %6641 = vmatmul.mubr.bf16.gmra.mxu0 %v4456
  %v6642 = vpop.f32.mrf.mxu0
  %v6643 = vadd.f32 %v6034, %v6642
  %v6644 = vpop.f32.mrf.mxu0
  %v6645 = vpop.f32.mrf.mxu0
  %v6646 = vadd.f32 %v6037, %v6645
  %v6647 = vpop.f32.mrf.mxu0
  %6648 = vmatprep.mubr.bf16.mxu0 0
  %6649 = vmatmul.mubr.bf16.gmra.mxu0 %v4459
  %v6650 = vpop.f32.mrf.mxu0
  %v6651 = vadd.f32 %v6042, %v6650
  %v6652 = vpop.f32.mrf.mxu0
  %v6653 = vpop.f32.mrf.mxu0
  %v6654 = vadd.f32 %v6045, %v6653
  %v6655 = vpop.f32.mrf.mxu0
  %6656 = vmatprep.mubr.bf16.mxu0 0
  %6657 = vmatmul.mubr.bf16.gmra.mxu0 %v4462
  %v6658 = vpop.f32.mrf.mxu0
  %v6659 = vadd.f32 %v6050, %v6658
  %v6660 = vpop.f32.mrf.mxu0
  %v6661 = vpop.f32.mrf.mxu0
  %v6662 = vadd.f32 %v6053, %v6661
  %v6663 = vpop.f32.mrf.mxu0
  %6664 = vmatprep.mubr.bf16.mxu0 0
  %6665 = vmatmul.mubr.bf16.gmra.mxu0 %v4465
  %v6666 = vpop.f32.mrf.mxu0
  %v6667 = vadd.f32 %v6058, %v6666
  %v6668 = vpop.f32.mrf.mxu0
  %v6669 = vpop.f32.mrf.mxu0
  %v6670 = vadd.f32 %v6061, %v6669
  %v6671 = vpop.f32.mrf.mxu0
  %6672 = vmatprep.mubr.bf16.mxu0 0
  %6673 = vmatmul.mubr.bf16.gmra.mxu0 %v4468
  %v6674 = vpop.f32.mrf.mxu0
  %v6675 = vadd.f32 %v6066, %v6674
  %v6676 = vpop.f32.mrf.mxu0
  %v6677 = vpop.f32.mrf.mxu0
  %v6678 = vadd.f32 %v6069, %v6677
  %v6679 = vpop.f32.mrf.mxu0
  %6680 = vmatprep.mubr.bf16.mxu0 0
  %6681 = vmatmul.mubr.bf16.gmra.mxu0 %v4471
  %v6682 = vpop.f32.mrf.mxu0
  %v6683 = vadd.f32 %v6074, %v6682
  %v6684 = vpop.f32.mrf.mxu0
  %v6685 = vpop.f32.mrf.mxu0
  %v6686 = vadd.f32 %v6077, %v6685
  %v6687 = vpop.f32.mrf.mxu0
  %6688 = vmatprep.mubr.bf16.mxu0 0
  %6689 = vmatmul.mubr.bf16.gmra.mxu0 %v4474
  %v6690 = vpop.f32.mrf.mxu0
  %v6691 = vadd.f32 %v6082, %v6690
  %v6692 = vpop.f32.mrf.mxu0
  %v6693 = vpop.f32.mrf.mxu0
  %v6694 = vadd.f32 %v6085, %v6693
  %v6695 = vpop.f32.mrf.mxu0
  %6696 = vmatprep.mubr.bf16.mxu0 0
  %6697 = vmatmul.mubr.bf16.gmra.mxu0 %v4477
  %v6698 = vpop.f32.mrf.mxu0
  %v6699 = vadd.f32 %v6090, %v6698
  %v6700 = vpop.f32.mrf.mxu0
  %v6701 = vpop.f32.mrf.mxu0
  %v6702 = vadd.f32 %v6093, %v6701
  %v6703 = vpop.f32.mrf.mxu0
  %6704 = vmatprep.mubr.bf16.mxu0 0
  %6705 = vmatmul.mubr.bf16.gmra.mxu0 %v4480
  %v6706 = vpop.f32.mrf.mxu0
  %v6707 = vadd.f32 %v6098, %v6706
  %v6708 = vpop.f32.mrf.mxu0
  %v6709 = vpop.f32.mrf.mxu0
  %v6710 = vadd.f32 %v6101, %v6709
  %v6711 = vpop.f32.mrf.mxu0
  %6712 = vmatprep.mubr.bf16.mxu0 0
  %6713 = vmatmul.mubr.bf16.gmra.mxu0 %v4483
  %v6714 = vpop.f32.mrf.mxu0
  %v6715 = vadd.f32 %v6106, %v6714
  %v6716 = vpop.f32.mrf.mxu0
  %v6717 = vpop.f32.mrf.mxu0
  %v6718 = vadd.f32 %v6109, %v6717
  %v6719 = vpop.f32.mrf.mxu0
  %6720 = vmatprep.mubr.bf16.mxu0 0
  %6721 = vmatmul.mubr.bf16.gmra.mxu0 %v4486
  %v6722 = vpop.f32.mrf.mxu0
  %v6723 = vadd.f32 %v6114, %v6722
  %v6724 = vpop.f32.mrf.mxu0
  %v6725 = vpop.f32.mrf.mxu0
  %v6726 = vadd.f32 %v6117, %v6725
  %v6727 = vpop.f32.mrf.mxu0
  %6728 = vmatprep.mubr.bf16.mxu0 0
  %6729 = vmatmul.mubr.bf16.gmra.mxu0 %v4489
  %v6730 = vpop.f32.mrf.mxu0
  %v6731 = vadd.f32 %v6122, %v6730
  %v6732 = vpop.f32.mrf.mxu0
  %v6733 = vpop.f32.mrf.mxu0
  %v6734 = vadd.f32 %v6125, %v6733
  %v6735 = vpop.f32.mrf.mxu0
  %6736 = vmatprep.mubr.bf16.mxu0 0
  %6737 = vmatmul.mubr.bf16.gmra.mxu0 %v4492
  %v6738 = vpop.f32.mrf.mxu0
  %v6739 = vadd.f32 %v6130, %v6738
  %v6740 = vpop.f32.mrf.mxu0
  %v6741 = vpop.f32.mrf.mxu0
  %v6742 = vadd.f32 %v6133, %v6741
  %v6743 = vpop.f32.mrf.mxu0
  %6744 = vmatprep.mubr.bf16.mxu0 0
  %6745 = vmatmul.mubr.bf16.gmra.mxu0 %v4495
  %v6746 = vpop.f32.mrf.mxu0
  %v6747 = vadd.f32 %v6138, %v6746
  %v6748 = vpop.f32.mrf.mxu0
  %v6749 = vpop.f32.mrf.mxu0
  %v6750 = vadd.f32 %v6141, %v6749
  %v6751 = vpop.f32.mrf.mxu0
  %6752 = vmatprep.mubr.bf16.mxu0 0
  %6753 = vmatmul.mubr.bf16.gmra.mxu0 %v4498
  %v6754 = vpop.f32.mrf.mxu0
  %v6755 = vadd.f32 %v6146, %v6754
  %v6756 = vpop.f32.mrf.mxu0
  %v6757 = vpop.f32.mrf.mxu0
  %v6758 = vadd.f32 %v6149, %v6757
  %v6759 = vpop.f32.mrf.mxu0
  %6760 = vmatprep.mubr.bf16.mxu0 0
  %6761 = vmatmul.mubr.bf16.gmra.mxu0 %v4501
  %v6762 = vpop.f32.mrf.mxu0
  %v6763 = vadd.f32 %v6154, %v6762
  %v6764 = vpop.f32.mrf.mxu0
  %v6765 = vpop.f32.mrf.mxu0
  %v6766 = vadd.f32 %v6157, %v6765
  %v6767 = vpop.f32.mrf.mxu0
  %6768 = vmatprep.mubr.bf16.mxu0 0
  %6769 = vmatmul.mubr.bf16.gmra.mxu0 %v4504
  %v6770 = vpop.f32.mrf.mxu0
  %v6771 = vadd.f32 %v6162, %v6770
  %v6772 = vpop.f32.mrf.mxu0
  %v6773 = vpop.f32.mrf.mxu0
  %v6774 = vadd.f32 %v6165, %v6773
  %v6775 = vpop.f32.mrf.mxu0
  %6776 = vmatprep.mubr.bf16.mxu0 0
  %6777 = vmatmul.mubr.bf16.gmra.mxu0 %v4507
  %v6778 = vpop.f32.mrf.mxu0
  %v6779 = vadd.f32 %v6170, %v6778
  %v6780 = vpop.f32.mrf.mxu0
  %v6781 = vpop.f32.mrf.mxu0
  %v6782 = vadd.f32 %v6173, %v6781
  %v6783 = vpop.f32.mrf.mxu0
  %6784 = vmatprep.mubr.bf16.mxu0 0
  %6785 = vmatmul.mubr.bf16.gmra.mxu0 %v4510
  %v6786 = vpop.f32.mrf.mxu0
  %v6787 = vadd.f32 %v6178, %v6786
  %v6788 = vpop.f32.mrf.mxu0
  %v6789 = vpop.f32.mrf.mxu0
  %v6790 = vadd.f32 %v6181, %v6789
  %v6791 = vpop.f32.mrf.mxu0
  %6792 = vmatprep.mubr.bf16.mxu0 0
  %6793 = vmatmul.mubr.bf16.gmra.mxu0 %v4513
  %v6794 = vpop.f32.mrf.mxu0
  %v6795 = vadd.f32 %v6186, %v6794
  %v6796 = vpop.f32.mrf.mxu0
  %v6797 = vpop.f32.mrf.mxu0
  %v6798 = vadd.f32 %v6189, %v6797
  %v6799 = vpop.f32.mrf.mxu0
  %6800 = vmatprep.mubr.bf16.mxu0 0
  %6801 = vmatmul.mubr.bf16.gmra.mxu0 %v4516
  %v6802 = vpop.f32.mrf.mxu0
  %v6803 = vadd.f32 %v6194, %v6802
  %v6804 = vpop.f32.mrf.mxu0
  %v6805 = vpop.f32.mrf.mxu0
  %v6806 = vadd.f32 %v6197, %v6805
  %v6807 = vpop.f32.mrf.mxu0
  %6808 = vmatprep.mubr.bf16.mxu0 0
  %6809 = vmatmul.mubr.bf16.gmra.mxu0 %v4519
  %v6810 = vpop.f32.mrf.mxu0
  %v6811 = vadd.f32 %v6202, %v6810
  %v6812 = vpop.f32.mrf.mxu0
  %v6813 = vpop.f32.mrf.mxu0
  %v6814 = vadd.f32 %v6205, %v6813
  %v6815 = vpop.f32.mrf.mxu0
  %6816 = vmatprep.mubr.bf16.mxu0 0
  %6817 = vmatmul.mubr.bf16.gmra.mxu0 %v4522
  %v6818 = vpop.f32.mrf.mxu0
  %v6819 = vadd.f32 %v6210, %v6818
  %v6820 = vpop.f32.mrf.mxu0
  %v6821 = vpop.f32.mrf.mxu0
  %v6822 = vadd.f32 %v6213, %v6821
  %v6823 = vpop.f32.mrf.mxu0
  %6824 = vmatprep.mubr.bf16.mxu0 0
  %6825 = vmatmul.mubr.bf16.gmra.mxu0 %v4525
  %v6826 = vpop.f32.mrf.mxu0
  %v6827 = vadd.f32 %v6218, %v6826
  %v6828 = vpop.f32.mrf.mxu0
  %v6829 = vpop.f32.mrf.mxu0
  %v6830 = vadd.f32 %v6221, %v6829
  %v6831 = vpop.f32.mrf.mxu0
  %6832 = vmatprep.mubr.bf16.mxu0 0
  %6833 = vmatmul.mubr.bf16.gmra.mxu0 %v4528
  %v6834 = vpop.f32.mrf.mxu0
  %v6835 = vadd.f32 %v6226, %v6834
  %v6836 = vpop.f32.mrf.mxu0
  %v6837 = vpop.f32.mrf.mxu0
  %v6838 = vadd.f32 %v6229, %v6837
  %v6839 = vpop.f32.mrf.mxu0
  %6840 = vmatprep.mubr.bf16.mxu0 0
  %6841 = vmatmul.mubr.bf16.gmra.mxu0 %v4531
  %v6842 = vpop.f32.mrf.mxu0
  %v6843 = vadd.f32 %v6234, %v6842
  %v6844 = vpop.f32.mrf.mxu0
  %v6845 = vpop.f32.mrf.mxu0
  %v6846 = vadd.f32 %v6237, %v6845
  %v6847 = vpop.f32.mrf.mxu0
  %6848 = vmatprep.mubr.bf16.mxu0 0
  %6849 = vmatmul.mubr.bf16.gmra.mxu0 %v4534
  %v6850 = vpop.f32.mrf.mxu0
  %v6851 = vadd.f32 %v6242, %v6850
  %v6852 = vpop.f32.mrf.mxu0
  %v6853 = vpop.f32.mrf.mxu0
  %v6854 = vadd.f32 %v6245, %v6853
  %v6855 = vpop.f32.mrf.mxu0
  %6856 = vmatprep.mubr.bf16.mxu0 0
  %6857 = vmatmul.mubr.bf16.gmra.mxu0 %v4537
  %v6858 = vpop.f32.mrf.mxu0
  %v6859 = vadd.f32 %v6250, %v6858
  %v6860 = vpop.f32.mrf.mxu0
  %v6861 = vpop.f32.mrf.mxu0
  %v6862 = vadd.f32 %v6253, %v6861
  %v6863 = vpop.f32.mrf.mxu0
  %6864 = vmatprep.mubr.bf16.mxu0 0
  %6865 = vmatmul.mubr.bf16.gmra.mxu0 %v4540
  %v6866 = vpop.f32.mrf.mxu0
  %v6867 = vadd.f32 %v6258, %v6866
  %v6868 = vpop.f32.mrf.mxu0
  %v6869 = vpop.f32.mrf.mxu0
  %v6870 = vadd.f32 %v6261, %v6869
  %v6871 = vpop.f32.mrf.mxu0
  %6872 = vmatprep.mubr.bf16.mxu0 0
  %6873 = vmatmul.mubr.bf16.gmra.mxu0 %v4543
  %v6874 = vpop.f32.mrf.mxu0
  %v6875 = vadd.f32 %v6266, %v6874
  %v6876 = vpop.f32.mrf.mxu0
  %v6877 = vpop.f32.mrf.mxu0
  %v6878 = vadd.f32 %v6269, %v6877
  %v6879 = vpop.f32.mrf.mxu0
  %6880 = vmatprep.mubr.bf16.mxu0 0
  %6881 = vmatmul.mubr.bf16.gmra.mxu0 %v4546
  %v6882 = vpop.f32.mrf.mxu0
  %v6883 = vadd.f32 %v6274, %v6882
  %v6884 = vpop.f32.mrf.mxu0
  %v6885 = vpop.f32.mrf.mxu0
  %v6886 = vadd.f32 %v6277, %v6885
  %v6887 = vpop.f32.mrf.mxu0
  %6888 = vmatprep.mubr.bf16.mxu0 0
  %6889 = vmatmul.mubr.bf16.gmra.mxu0 %v4549
  %v6890 = vpop.f32.mrf.mxu0
  %v6891 = vadd.f32 %v6282, %v6890
  %v6892 = vpop.f32.mrf.mxu0
  %v6893 = vpop.f32.mrf.mxu0
  %v6894 = vadd.f32 %v6285, %v6893
  %v6895 = vpop.f32.mrf.mxu0
  %6896 = vmatprep.mubr.bf16.mxu0 0
  %6897 = vmatmul.mubr.bf16.gmra.mxu0 %v4552
  %v6898 = vpop.f32.mrf.mxu0
  %v6899 = vadd.f32 %v6290, %v6898
  %v6900 = vpop.f32.mrf.mxu0
  %v6901 = vpop.f32.mrf.mxu0
  %v6902 = vadd.f32 %v6293, %v6901
  %v6903 = vpop.f32.mrf.mxu0
  %6904 = vmatprep.mubr.bf16.mxu0 0
  %6905 = vmatmul.mubr.bf16.gmra.mxu0 %v4555
  %v6906 = vpop.f32.mrf.mxu0
  %v6907 = vadd.f32 %v6298, %v6906
  %v6908 = vpop.f32.mrf.mxu0
  %v6909 = vpop.f32.mrf.mxu0
  %v6910 = vadd.f32 %v6301, %v6909
  %v6911 = vpop.f32.mrf.mxu0
  %6912 = vmatprep.mubr.bf16.mxu0 0
  %6913 = vmatmul.mubr.bf16.gmra.mxu0 %v4558
  %v6914 = vpop.f32.mrf.mxu0
  %v6915 = vadd.f32 %v6306, %v6914
  %v6916 = vpop.f32.mrf.mxu0
  %v6917 = vpop.f32.mrf.mxu0
  %v6918 = vadd.f32 %v6309, %v6917
  %v6919 = vpop.f32.mrf.mxu0
  %6920 = vmatprep.mubr.bf16.mxu0 0
  %6921 = vmatmul.mubr.bf16.gmra.mxu0 %v4561
  %v6922 = vpop.f32.mrf.mxu0
  %v6923 = vadd.f32 %v6314, %v6922
  %v6924 = vpop.f32.mrf.mxu0
  %v6925 = vpop.f32.mrf.mxu0
  %v6926 = vadd.f32 %v6317, %v6925
  %v6927 = vpop.f32.mrf.mxu0
  %6928 = vmatprep.mubr.bf16.mxu0 0
  %6929 = vmatmul.mubr.bf16.gmra.mxu0 %v4564
  %v6930 = vpop.f32.mrf.mxu0
  %v6931 = vadd.f32 %v6322, %v6930
  %v6932 = vpop.f32.mrf.mxu0
  %v6933 = vpop.f32.mrf.mxu0
  %v6934 = vadd.f32 %v6325, %v6933
  %v6935 = vpop.f32.mrf.mxu0
  %6936 = vmatprep.mubr.bf16.mxu0 0
  %6937 = vmatmul.mubr.bf16.gmra.mxu0 %v4567
  %v6938 = vpop.f32.mrf.mxu0
  %v6939 = vadd.f32 %v6330, %v6938
  %v6940 = vpop.f32.mrf.mxu0
  %v6941 = vpop.f32.mrf.mxu0
  %v6942 = vadd.f32 %v6333, %v6941
  %v6943 = vpop.f32.mrf.mxu0
  %6944 = vmatprep.mubr.bf16.mxu0 0
  %6945 = vmatmul.mubr.bf16.gmra.mxu0 %v4570
  %v6946 = vpop.f32.mrf.mxu0
  %v6947 = vadd.f32 %v6338, %v6946
  %v6948 = vpop.f32.mrf.mxu0
  %v6949 = vpop.f32.mrf.mxu0
  %v6950 = vadd.f32 %v6341, %v6949
  %v6951 = vpop.f32.mrf.mxu0
  %6952 = vmatprep.mubr.bf16.mxu0 0
  %6953 = vmatmul.mubr.bf16.gmra.mxu0 %v4573
  %v6954 = vpop.f32.mrf.mxu0
  %v6955 = vadd.f32 %v6346, %v6954
  %v6956 = vpop.f32.mrf.mxu0
  %v6957 = vpop.f32.mrf.mxu0
  %v6958 = vadd.f32 %v6349, %v6957
  %v6959 = vpop.f32.mrf.mxu0
  %6960 = vmatprep.mubr.bf16.mxu0 0
  %6961 = vmatmul.mubr.bf16.gmra.mxu0 %v4576
  %v6962 = vpop.f32.mrf.mxu0
  %v6963 = vadd.f32 %v6354, %v6962
  %v6964 = vpop.f32.mrf.mxu0
  %v6965 = vpop.f32.mrf.mxu0
  %v6966 = vadd.f32 %v6357, %v6965
  %v6967 = vpop.f32.mrf.mxu0
  %6968 = vmatprep.mubr.bf16.mxu0 0
  %6969 = vmatmul.mubr.bf16.gmra.mxu0 %v4579
  %v6970 = vpop.f32.mrf.mxu0
  %v6971 = vadd.f32 %v6362, %v6970
  %v6972 = vpop.f32.mrf.mxu0
  %v6973 = vpop.f32.mrf.mxu0
  %v6974 = vadd.f32 %v6365, %v6973
  %v6975 = vpop.f32.mrf.mxu0
  %6976 = vmatprep.mubr.bf16.mxu0 0
  %6977 = vmatmul.mubr.bf16.gmra.mxu0 %v4582
  %v6978 = vpop.f32.mrf.mxu0
  %v6979 = vadd.f32 %v6370, %v6978
  %v6980 = vpop.f32.mrf.mxu0
  %v6981 = vpop.f32.mrf.mxu0
  %v6982 = vadd.f32 %v6373, %v6981
  %v6983 = vpop.f32.mrf.mxu0
  %6984 = vmatprep.mubr.bf16.mxu0 0
  %6985 = vmatmul.mubr.bf16.gmra.mxu0 %v4585
  %v6986 = vpop.f32.mrf.mxu0
  %v6987 = vadd.f32 %v6378, %v6986
  %v6988 = vpop.f32.mrf.mxu0
  %v6989 = vpop.f32.mrf.mxu0
  %v6990 = vadd.f32 %v6381, %v6989
  %v6991 = vpop.f32.mrf.mxu0
  %6992 = vmatprep.mubr.bf16.mxu0 0
  %6993 = vmatmul.mubr.bf16.gmra.mxu0 %v4588
  %v6994 = vpop.f32.mrf.mxu0
  %v6995 = vadd.f32 %v6386, %v6994
  %v6996 = vpop.f32.mrf.mxu0
  %v6997 = vpop.f32.mrf.mxu0
  %v6998 = vadd.f32 %v6389, %v6997
  %v6999 = vpop.f32.mrf.mxu0
  %7000 = vmatprep.mubr.bf16.mxu0 0
  %7001 = vmatmul.mubr.bf16.gmra.mxu0 %v4591
  %v7002 = vpop.f32.mrf.mxu0
  %v7003 = vadd.f32 %v6394, %v7002
  %v7004 = vpop.f32.mrf.mxu0
  %v7005 = vpop.f32.mrf.mxu0
  %v7006 = vadd.f32 %v6397, %v7005
  %v7007 = vpop.f32.mrf.mxu0
  %7008 = vmatprep.mubr.bf16.mxu0 0
  %7009 = vmatmul.mubr.bf16.gmra.mxu0 %v4594
  %v7010 = vpop.f32.mrf.mxu0
  %v7011 = vadd.f32 %v6402, %v7010
  %v7012 = vpop.f32.mrf.mxu0
  %v7013 = vpop.f32.mrf.mxu0
  %v7014 = vadd.f32 %v6405, %v7013
  %v7015 = vpop.f32.mrf.mxu0
  %7016 = vmatprep.mubr.bf16.mxu0 0
  %7017 = vmatmul.mubr.bf16.gmra.mxu0 %v4597
  %v7018 = vpop.f32.mrf.mxu0
  %v7019 = vadd.f32 %v6410, %v7018
  %v7020 = vpop.f32.mrf.mxu0
  %v7021 = vpop.f32.mrf.mxu0
  %v7022 = vadd.f32 %v6413, %v7021
  %v7023 = vpop.f32.mrf.mxu0
  %7024 = vmatprep.mubr.bf16.mxu0 0
  %7025 = vmatmul.mubr.bf16.gmra.mxu0 %v4600
  %v7026 = vpop.f32.mrf.mxu0
  %v7027 = vadd.f32 %v6418, %v7026
  %v7028 = vpop.f32.mrf.mxu0
  %v7029 = vpop.f32.mrf.mxu0
  %v7030 = vadd.f32 %v6421, %v7029
  %v7031 = vpop.f32.mrf.mxu0
  %7032 = vmatprep.mubr.bf16.mxu0 0
  %7033 = vmatmul.mubr.bf16.gmra.mxu0 %v4603
  %v7034 = vpop.f32.mrf.mxu0
  %v7035 = vadd.f32 %v6426, %v7034
  %v7036 = vpop.f32.mrf.mxu0
  %v7037 = vpop.f32.mrf.mxu0
  %v7038 = vadd.f32 %v6429, %v7037
  %v7039 = vpop.f32.mrf.mxu0
  %7040 = vdwg.mxu0
  %v7041 = vmax.f32 %v6467, 0.0
  %v7042 = vmax.f32 %v6470, 0.0
  %v7043 = vmax.f32 %v6475, 0.0
  %v7044 = vmax.f32 %v6478, 0.0
  %v7045 = vmax.f32 %v6483, 0.0
  %v7046 = vmax.f32 %v6486, 0.0
  %v7047 = vmax.f32 %v6491, 0.0
  %v7048 = vmax.f32 %v6494, 0.0
  %v7049 = vmax.f32 %v6499, 0.0
  %v7050 = vmax.f32 %v6502, 0.0
  %v7051 = vmax.f32 %v6507, 0.0
  %v7052 = vmax.f32 %v6510, 0.0
  %v7053 = vmax.f32 %v6515, 0.0
  %v7054 = vmax.f32 %v6518, 0.0
  %v7055 = vmax.f32 %v6523, 0.0
  %v7056 = vmax.f32 %v6526, 0.0
  %v7057 = vmax.f32 %v6531, 0.0
  %v7058 = vmax.f32 %v6534, 0.0
  %v7059 = vmax.f32 %v6539, 0.0
  %v7060 = vmax.f32 %v6542, 0.0
  %v7061 = vmax.f32 %v6547, 0.0
  %v7062 = vmax.f32 %v6550, 0.0
  %v7063 = vmax.f32 %v6555, 0.0
  %v7064 = vmax.f32 %v6558, 0.0
  %v7065 = vmax.f32 %v6563, 0.0
  %v7066 = vmax.f32 %v6566, 0.0
  %v7067 = vmax.f32 %v6571, 0.0
  %v7068 = vmax.f32 %v6574, 0.0
  %v7069 = vmax.f32 %v6579, 0.0
  %v7070 = vmax.f32 %v6582, 0.0
  %v7071 = vmax.f32 %v6587, 0.0
  %v7072 = vmax.f32 %v6590, 0.0
  %v7073 = vmax.f32 %v6595, 0.0
  %v7074 = vmax.f32 %v6598, 0.0
  %v7075 = vmax.f32 %v6603, 0.0
  %v7076 = vmax.f32 %v6606, 0.0
  %v7077 = vmax.f32 %v6611, 0.0
  %v7078 = vmax.f32 %v6614, 0.0
  %v7079 = vmax.f32 %v6619, 0.0
  %v7080 = vmax.f32 %v6622, 0.0
  %v7081 = vmax.f32 %v6627, 0.0
  %v7082 = vmax.f32 %v6630, 0.0
  %v7083 = vmax.f32 %v6635, 0.0
  %v7084 = vmax.f32 %v6638, 0.0
  %v7085 = vmax.f32 %v6643, 0.0
  %v7086 = vmax.f32 %v6646, 0.0
  %v7087 = vmax.f32 %v6651, 0.0
  %v7088 = vmax.f32 %v6654, 0.0
  %v7089 = vmax.f32 %v6659, 0.0
  %v7090 = vmax.f32 %v6662, 0.0
  %v7091 = vmax.f32 %v6667, 0.0
  %v7092 = vmax.f32 %v6670, 0.0
  %v7093 = vmax.f32 %v6675, 0.0
  %v7094 = vmax.f32 %v6678, 0.0
  %v7095 = vmax.f32 %v6683, 0.0
  %v7096 = vmax.f32 %v6686, 0.0
  %v7097 = vmax.f32 %v6691, 0.0
  %v7098 = vmax.f32 %v6694, 0.0
  %v7099 = vmax.f32 %v6699, 0.0
  %v7100 = vmax.f32 %v6702, 0.0
  %v7101 = vmax.f32 %v6707, 0.0
  %v7102 = vmax.f32 %v6710, 0.0
  %v7103 = vmax.f32 %v6715, 0.0
  %v7104 = vmax.f32 %v6718, 0.0
  %v7105 = vmax.f32 %v6723, 0.0
  %v7106 = vmax.f32 %v6726, 0.0
  %v7107 = vmax.f32 %v6731, 0.0
  %v7108 = vmax.f32 %v6734, 0.0
  %v7109 = vmax.f32 %v6739, 0.0
  %v7110 = vmax.f32 %v6742, 0.0
  %v7111 = vmax.f32 %v6747, 0.0
  %v7112 = vmax.f32 %v6750, 0.0
  %v7113 = vmax.f32 %v6755, 0.0
  %v7114 = vmax.f32 %v6758, 0.0
  %v7115 = vmax.f32 %v6763, 0.0
  %v7116 = vmax.f32 %v6766, 0.0
  %v7117 = vmax.f32 %v6771, 0.0
  %v7118 = vmax.f32 %v6774, 0.0
  %v7119 = vmax.f32 %v6779, 0.0
  %v7120 = vmax.f32 %v6782, 0.0
  %v7121 = vmax.f32 %v6787, 0.0
  %v7122 = vmax.f32 %v6790, 0.0
  %v7123 = vmax.f32 %v6795, 0.0
  %v7124 = vmax.f32 %v6798, 0.0
  %v7125 = vmax.f32 %v6803, 0.0
  %v7126 = vmax.f32 %v6806, 0.0
  %v7127 = vmax.f32 %v6811, 0.0
  %v7128 = vmax.f32 %v6814, 0.0
  %v7129 = vmax.f32 %v6819, 0.0
  %v7130 = vmax.f32 %v6822, 0.0
  %v7131 = vmax.f32 %v6827, 0.0
  %v7132 = vmax.f32 %v6830, 0.0
  %v7133 = vmax.f32 %v6835, 0.0
  %v7134 = vmax.f32 %v6838, 0.0
  %v7135 = vmax.f32 %v6843, 0.0
  %v7136 = vmax.f32 %v6846, 0.0
  %v7137 = vmax.f32 %v6851, 0.0
  %v7138 = vmax.f32 %v6854, 0.0
  %v7139 = vmax.f32 %v6859, 0.0
  %v7140 = vmax.f32 %v6862, 0.0
  %v7141 = vmax.f32 %v6867, 0.0
  %v7142 = vmax.f32 %v6870, 0.0
  %v7143 = vmax.f32 %v6875, 0.0
  %v7144 = vmax.f32 %v6878, 0.0
  %v7145 = vmax.f32 %v6883, 0.0
  %v7146 = vmax.f32 %v6886, 0.0
  %v7147 = vmax.f32 %v6891, 0.0
  %v7148 = vmax.f32 %v6894, 0.0
  %v7149 = vmax.f32 %v6899, 0.0
  %v7150 = vmax.f32 %v6902, 0.0
  %v7151 = vmax.f32 %v6907, 0.0
  %v7152 = vmax.f32 %v6910, 0.0
  %v7153 = vmax.f32 %v6915, 0.0
  %v7154 = vmax.f32 %v6918, 0.0
  %v7155 = vmax.f32 %v6923, 0.0
  %v7156 = vmax.f32 %v6926, 0.0
  %v7157 = vmax.f32 %v6931, 0.0
  %v7158 = vmax.f32 %v6934, 0.0
  %v7159 = vmax.f32 %v6939, 0.0
  %v7160 = vmax.f32 %v6942, 0.0
  %v7161 = vmax.f32 %v6947, 0.0
  %v7162 = vmax.f32 %v6950, 0.0
  %v7163 = vmax.f32 %v6955, 0.0
  %v7164 = vmax.f32 %v6958, 0.0
  %v7165 = vmax.f32 %v6963, 0.0
  %v7166 = vmax.f32 %v6966, 0.0
  %v7167 = vmax.f32 %v6971, 0.0
  %v7168 = vmax.f32 %v6974, 0.0
  %v7169 = vmax.f32 %v6979, 0.0
  %v7170 = vmax.f32 %v6982, 0.0
  %v7171 = vmax.f32 %v6987, 0.0
  %v7172 = vmax.f32 %v6990, 0.0
  %v7173 = vmax.f32 %v6995, 0.0
  %v7174 = vmax.f32 %v6998, 0.0
  %v7175 = vmax.f32 %v7003, 0.0
  %v7176 = vmax.f32 %v7006, 0.0
  %v7177 = vmax.f32 %v7011, 0.0
  %v7178 = vmax.f32 %v7014, 0.0
  %v7179 = vmax.f32 %v7019, 0.0
  %v7180 = vmax.f32 %v7022, 0.0
  %v7181 = vmax.f32 %v7027, 0.0
  %v7182 = vmax.f32 %v7030, 0.0
  %v7183 = vmax.f32 %v7035, 0.0
  %v7184 = vmax.f32 %v7038, 0.0
  %v7185 = vmax.f32 %v7041, %v7077
  %v7186 = vmax.f32 %v7042, %v7078
  %v7187 = vmax.f32 %v7043, %v7079
  %v7188 = vmax.f32 %v7044, %v7080
  %v7189 = vmax.f32 %v7045, %v7081
  %v7190 = vmax.f32 %v7046, %v7082
  %v7191 = vmax.f32 %v7047, %v7083
  %v7192 = vmax.f32 %v7048, %v7084
  %v7193 = vmax.f32 %v7049, %v7085
  %v7194 = vmax.f32 %v7050, %v7086
  %v7195 = vmax.f32 %v7051, %v7087
  %v7196 = vmax.f32 %v7052, %v7088
  %v7197 = vmax.f32 %v7053, %v7089
  %v7198 = vmax.f32 %v7054, %v7090
  %v7199 = vmax.f32 %v7055, %v7091
  %v7200 = vmax.f32 %v7056, %v7092
  %v7201 = vmax.f32 %v7057, %v7093
  %v7202 = vmax.f32 %v7058, %v7094
  %v7203 = vmax.f32 %v7059, %v7095
  %v7204 = vmax.f32 %v7060, %v7096
  %v7205 = vmax.f32 %v7061, %v7097
  %v7206 = vmax.f32 %v7062, %v7098
  %v7207 = vmax.f32 %v7063, %v7099
  %v7208 = vmax.f32 %v7064, %v7100
  %v7209 = vmax.f32 %v7065, %v7101
  %v7210 = vmax.f32 %v7066, %v7102
  %v7211 = vmax.f32 %v7067, %v7103
  %v7212 = vmax.f32 %v7068, %v7104
  %v7213 = vmax.f32 %v7069, %v7105
  %v7214 = vmax.f32 %v7070, %v7106
  %v7215 = vmax.f32 %v7071, %v7107
  %v7216 = vmax.f32 %v7072, %v7108
  %v7217 = vmax.f32 %v7073, %v7109
  %v7218 = vmax.f32 %v7074, %v7110
  %v7219 = vmax.f32 %v7075, %v7111
  %v7220 = vmax.f32 %v7076, %v7112
  %v7221 = vmax.f32 %v7113, %v7149
  %v7222 = vmax.f32 %v7114, %v7150
  %v7223 = vmax.f32 %v7115, %v7151
  %v7224 = vmax.f32 %v7116, %v7152
  %v7225 = vmax.f32 %v7117, %v7153
  %v7226 = vmax.f32 %v7118, %v7154
  %v7227 = vmax.f32 %v7119, %v7155
  %v7228 = vmax.f32 %v7120, %v7156
  %v7229 = vmax.f32 %v7121, %v7157
  %v7230 = vmax.f32 %v7122, %v7158
  %v7231 = vmax.f32 %v7123, %v7159
  %v7232 = vmax.f32 %v7124, %v7160
  %v7233 = vmax.f32 %v7125, %v7161
  %v7234 = vmax.f32 %v7126, %v7162
  %v7235 = vmax.f32 %v7127, %v7163
  %v7236 = vmax.f32 %v7128, %v7164
  %v7237 = vmax.f32 %v7129, %v7165
  %v7238 = vmax.f32 %v7130, %v7166
  %v7239 = vmax.f32 %v7131, %v7167
  %v7240 = vmax.f32 %v7132, %v7168
  %v7241 = vmax.f32 %v7133, %v7169
  %v7242 = vmax.f32 %v7134, %v7170
  %v7243 = vmax.f32 %v7135, %v7171
  %v7244 = vmax.f32 %v7136, %v7172
  %v7245 = vmax.f32 %v7137, %v7173
  %v7246 = vmax.f32 %v7138, %v7174
  %v7247 = vmax.f32 %v7139, %v7175
  %v7248 = vmax.f32 %v7140, %v7176
  %v7249 = vmax.f32 %v7141, %v7177
  %v7250 = vmax.f32 %v7142, %v7178
  %v7251 = vmax.f32 %v7143, %v7179
  %v7252 = vmax.f32 %v7144, %v7180
  %v7253 = vmax.f32 %v7145, %v7181
  %v7254 = vmax.f32 %v7146, %v7182
  %v7255 = vmax.f32 %v7147, %v7183
  %v7256 = vmax.f32 %v7148, %v7184
  %v7257 = vmax.f32 %v7185, %v7221
  %v7258 = vmax.f32 %v7186, %v7222
  %v7259 = vmax.f32 %v7187, %v7223
  %v7260 = vmax.f32 %v7188, %v7224
  %v7261 = vmax.f32 %v7189, %v7225
  %v7262 = vmax.f32 %v7190, %v7226
  %v7263 = vmax.f32 %v7191, %v7227
  %v7264 = vmax.f32 %v7192, %v7228
  %v7265 = vmax.f32 %v7193, %v7229
  %v7266 = vmax.f32 %v7194, %v7230
  %v7267 = vmax.f32 %v7195, %v7231
  %v7268 = vmax.f32 %v7196, %v7232
  %v7269 = vmax.f32 %v7197, %v7233
  %v7270 = vmax.f32 %v7198, %v7234
  %v7271 = vmax.f32 %v7199, %v7235
  %v7272 = vmax.f32 %v7200, %v7236
  %v7273 = vmax.f32 %v7201, %v7237
  %v7274 = vmax.f32 %v7202, %v7238
  %v7275 = vmax.f32 %v7203, %v7239
  %v7276 = vmax.f32 %v7204, %v7240
  %v7277 = vmax.f32 %v7205, %v7241
  %v7278 = vmax.f32 %v7206, %v7242
  %v7279 = vmax.f32 %v7207, %v7243
  %v7280 = vmax.f32 %v7208, %v7244
  %v7281 = vmax.f32 %v7209, %v7245
  %v7282 = vmax.f32 %v7210, %v7246
  %v7283 = vmax.f32 %v7211, %v7247
  %v7284 = vmax.f32 %v7212, %v7248
  %v7285 = vmax.f32 %v7213, %v7249
  %v7286 = vmax.f32 %v7214, %v7250
  %v7287 = vmax.f32 %v7215, %v7251
  %v7288 = vmax.f32 %v7216, %v7252
  %v7289 = vmax.f32 %v7217, %v7253
  %v7290 = vmax.f32 %v7218, %v7254
  %v7291 = vmax.f32 %v7219, %v7255
  %v7292 = vmax.f32 %v7220, %v7256
  %v7293 = vpack.c.bf16 %v7258, %v7257
  %v7294 = vpack.c.bf16 %v7260, %v7259
  %v7295 = vpack.c.bf16 %v7262, %v7261
  %v7296 = vpack.c.bf16 %v7264, %v7263
  %v7297 = vpack.c.bf16 %v7266, %v7265
  %v7298 = vpack.c.bf16 %v7268, %v7267
  %v7299 = vpack.c.bf16 %v7270, %v7269
  %v7300 = vpack.c.bf16 %v7272, %v7271
  %v7301 = vpack.c.bf16 %v7274, %v7273
  %v7302 = vpack.c.bf16 %v7276, %v7275
  %v7303 = vpack.c.bf16 %v7278, %v7277
  %v7304 = vpack.c.bf16 %v7280, %v7279
  %v7305 = vpack.c.bf16 %v7282, %v7281
  %v7306 = vpack.c.bf16 %v7284, %v7283
  %v7307 = vpack.c.bf16 %v7286, %v7285
  %v7308 = vpack.c.bf16 %v7288, %v7287
  %v7309 = vpack.c.bf16 %v7290, %v7289
  %v7310 = vpack.c.bf16 %v7292, %v7291
  %v7311 = vld [vmem:[%s3] sm:$0xff]
  %v7312 = vld [vmem:[%s3 + $0x8] sm:$0xf]
  %v7313 = vld [vmem:[%s3 + $0xc] sm:$0xff]
  %v7314 = vld [vmem:[%s3 + $0x14] sm:$0xf]
  %v7315 = vld [vmem:[%s3 + $0x18] sm:$0xff]
  %v7316 = vld [vmem:[%s3 + $0x20] sm:$0xf]
  %v7317 = vld [vmem:[%s3 + $0x24] sm:$0xff]
  %v7318 = vld [vmem:[%s3 + $0x2c] sm:$0xf]
  %v7319 = vld [vmem:[%s3 + $0x30] sm:$0xff]
  %v7320 = vld [vmem:[%s3 + $0x38] sm:$0xf]
  %v7321 = vld [vmem:[%s3 + $0x3c] sm:$0xff]
  %v7322 = vld [vmem:[%s3 + $0x44] sm:$0xf]
  %v7323 = vld [vmem:[%s3 + $0x48] sm:$0xff]
  %v7324 = vld [vmem:[%s3 + $0x50] sm:$0xf]
  %v7325 = vld [vmem:[%s3 + $0x54] sm:$0xff]
  %v7326 = vld [vmem:[%s3 + $0x5c] sm:$0xf]
  %v7327 = vld [vmem:[%s3 + $0x60] sm:$0xff]
  %v7328 = vld [vmem:[%s3 + $0x68] sm:$0xf]
  %v7329 = vld [vmem:[%s3 + $0x6c] sm:$0xff]
  %v7330 = vld [vmem:[%s3 + $0x74] sm:$0xf]
  %v7331 = vld [vmem:[%s3 + $0x78] sm:$0xff]
  %v7332 = vld [vmem:[%s3 + $0x80] sm:$0xf]
  %v7333 = vld [vmem:[%s3 + $0x84] sm:$0xff]
  %v7334 = vld [vmem:[%s3 + $0x8c] sm:$0xf]
  %v7335 = vld [vmem:[%s3 + $0x90] sm:$0xff]
  %v7336 = vld [vmem:[%s3 + $0x98] sm:$0xf]
  %v7337 = vld [vmem:[%s3 + $0x9c] sm:$0xff]
  %v7338 = vld [vmem:[%s3 + $0xa4] sm:$0xf]
  %v7339 = vld [vmem:[%s3 + $0xa8] sm:$0xff]
  %v7340 = vld [vmem:[%s3 + $0xb0] sm:$0xf]
  %v7341 = vld [vmem:[%s3 + $0xb4] sm:$0xff]
  %v7342 = vld [vmem:[%s3 + $0xbc] sm:$0xf]
  %v7343 = vld [vmem:[%s3 + $0xc0] sm:$0xff]
  %v7344 = vld [vmem:[%s3 + $0xc8] sm:$0xf]
  %v7345 = vld [vmem:[%s3 + $0xcc] sm:$0xff]
  %v7346 = vld [vmem:[%s3 + $0xd4] sm:$0xf]
  %v7347 = vld [vmem:[%s3 + $0xd8] sm:$0xff]
  %v7348 = vld [vmem:[%s3 + $0xe0] sm:$0xf]
  %v7349 = vld [vmem:[%s3 + $0xe4] sm:$0xff]
  %v7350 = vld [vmem:[%s3 + $0xec] sm:$0xf]
  %v7351 = vld [vmem:[%s3 + $0xf0] sm:$0xff]
  %v7352 = vld [vmem:[%s3 + $0xf8] sm:$0xf]
  %v7353 = vld [vmem:[%s3 + $0xfc] sm:$0xff]
  %v7354 = vld [vmem:[%s3 + $0x104] sm:$0xf]
  %v7355 = vld [vmem:[%s3 + $0x108] sm:$0xff]
  %v7356 = vld [vmem:[%s3 + $0x110] sm:$0xf]
  %v7357 = vld [vmem:[%s3 + $0x114] sm:$0xff]
  %v7358 = vld [vmem:[%s3 + $0x11c] sm:$0xf]
  %v7359 = vld [vmem:[%s3 + $0x120] sm:$0xff]
  %v7360 = vld [vmem:[%s3 + $0x128] sm:$0xf]
  %v7361 = vld [vmem:[%s3 + $0x12c] sm:$0xff]
  %v7362 = vld [vmem:[%s3 + $0x134] sm:$0xf]
  %v7363 = vld [vmem:[%s3 + $0x138] sm:$0xff]
  %v7364 = vld [vmem:[%s3 + $0x140] sm:$0xf]
  %v7365 = vld [vmem:[%s3 + $0x144] sm:$0xff]
  %v7366 = vld [vmem:[%s3 + $0x14c] sm:$0xf]
  %v7367 = vld [vmem:[%s3 + $0x150] sm:$0xff]
  %v7368 = vld [vmem:[%s3 + $0x158] sm:$0xf]
  %v7369 = vld [vmem:[%s3 + $0x15c] sm:$0xff]
  %v7370 = vld [vmem:[%s3 + $0x164] sm:$0xf]
  %v7371 = vld [vmem:[%s3 + $0x168] sm:$0xff]
  %v7372 = vld [vmem:[%s3 + $0x170] sm:$0xf]
  %v7373 = vld [vmem:[%s3 + $0x174] sm:$0xff]
  %v7374 = vld [vmem:[%s3 + $0x17c] sm:$0xf]
  %v7375 = vld [vmem:[%s3 + $0x180] sm:$0xff]
  %v7376 = vld [vmem:[%s3 + $0x188] sm:$0xf]
  %v7377 = vld [vmem:[%s3 + $0x18c] sm:$0xff]
  %v7378 = vld [vmem:[%s3 + $0x194] sm:$0xf]
  %v7379 = vld [vmem:[%s3 + $0x198] sm:$0xff]
  %v7380 = vld [vmem:[%s3 + $0x1a0] sm:$0xf]
  %v7381 = vld [vmem:[%s3 + $0x1a4] sm:$0xff]
  %v7382 = vld [vmem:[%s3 + $0x1ac] sm:$0xf]
  %v7383 = vld [vmem:[%s3 + $0x1b0] sm:$0xff]
  %v7384 = vld [vmem:[%s3 + $0x1b8] sm:$0xf]
  %v7385 = vld [vmem:[%s3 + $0x1bc] sm:$0xff]
  %v7386 = vld [vmem:[%s3 + $0x1c4] sm:$0xf]
  %v7387 = vld [vmem:[%s3 + $0x1c8] sm:$0xff]
  %v7388 = vld [vmem:[%s3 + $0x1d0] sm:$0xf]
  %v7389 = vld [vmem:[%s3 + $0x1d4] sm:$0xff]
  %v7390 = vld [vmem:[%s3 + $0x1dc] sm:$0xf]
  %v7391 = vld [vmem:[%s3 + $0x1e0] sm:$0xff]
  %v7392 = vld [vmem:[%s3 + $0x1e8] sm:$0xf]
  %v7393 = vld [vmem:[%s3 + $0x1ec] sm:$0xff]
  %v7394 = vld [vmem:[%s3 + $0x1f4] sm:$0xf]
  %v7395 = vld [vmem:[%s3 + $0x1f8] sm:$0xff]
  %v7396 = vld [vmem:[%s3 + $0x200] sm:$0xf]
  %v7397 = vld [vmem:[%s3 + $0x204] sm:$0xff]
  %v7398 = vld [vmem:[%s3 + $0x20c] sm:$0xf]
  %v7399 = vld [vmem:[%s3 + $0x210] sm:$0xff]
  %v7400 = vld [vmem:[%s3 + $0x218] sm:$0xf]
  %v7401 = vld [vmem:[%s3 + $0x21c] sm:$0xff]
  %v7402 = vld [vmem:[%s3 + $0x224] sm:$0xf]
  %v7403 = vld [vmem:[%s3 + $0x228] sm:$0xff]
  %v7404 = vld [vmem:[%s3 + $0x230] sm:$0xf]
  %v7405 = vld [vmem:[%s3 + $0x234] sm:$0xff]
  %v7406 = vld [vmem:[%s3 + $0x23c] sm:$0xf]
  %v7407 = vld [vmem:[%s3 + $0x240] sm:$0xff]
  %v7408 = vld [vmem:[%s3 + $0x248] sm:$0xf]
  %v7409 = vld [vmem:[%s3 + $0x24c] sm:$0xff]
  %v7410 = vld [vmem:[%s3 + $0x254] sm:$0xf]
  %v7411 = vld [vmem:[%s3 + $0x258] sm:$0xff]
  %v7412 = vld [vmem:[%s3 + $0x260] sm:$0xf]
  %v7413 = vld [vmem:[%s3 + $0x264] sm:$0xff]
  %v7414 = vld [vmem:[%s3 + $0x26c] sm:$0xf]
  %v7415 = vld [vmem:[%s3 + $0x270] sm:$0xff]
  %v7416 = vld [vmem:[%s3 + $0x278] sm:$0xf]
  %v7417 = vld [vmem:[%s3 + $0x27c] sm:$0xff]
  %v7418 = vld [vmem:[%s3 + $0x284] sm:$0xf]
  %v7419 = vld [vmem:[%s3 + $0x288] sm:$0xff]
  %v7420 = vld [vmem:[%s3 + $0x290] sm:$0xf]
  %v7421 = vld [vmem:[%s3 + $0x294] sm:$0xff]
  %v7422 = vld [vmem:[%s3 + $0x29c] sm:$0xf]
  %v7423 = vld [vmem:[%s3 + $0x2a0] sm:$0xff]
  %v7424 = vld [vmem:[%s3 + $0x2a8] sm:$0xf]
  %v7425 = vld [vmem:[%s3 + $0x2ac] sm:$0xff]
  %v7426 = vld [vmem:[%s3 + $0x2b4] sm:$0xf]
  %v7427 = vld [vmem:[%s3 + $0x2b8] sm:$0xff]
  %v7428 = vld [vmem:[%s3 + $0x2c0] sm:$0xf]
  %v7429 = vld [vmem:[%s3 + $0x2c4] sm:$0xff]
  %v7430 = vld [vmem:[%s3 + $0x2cc] sm:$0xf]
  %v7431 = vld [vmem:[%s3 + $0x2d0] sm:$0xff]
  %v7432 = vld [vmem:[%s3 + $0x2d8] sm:$0xf]
  %v7433 = vld [vmem:[%s3 + $0x2dc] sm:$0xff]
  %v7434 = vld [vmem:[%s3 + $0x2e4] sm:$0xf]
  %v7435 = vld [vmem:[%s3 + $0x2e8] sm:$0xff]
  %v7436 = vld [vmem:[%s3 + $0x2f0] sm:$0xf]
  %v7437 = vld [vmem:[%s3 + $0x2f4] sm:$0xff]
  %v7438 = vld [vmem:[%s3 + $0x2fc] sm:$0xf]
  %v7439 = vld [vmem:[%s3 + $0x300] sm:$0xff]
  %v7440 = vld [vmem:[%s3 + $0x308] sm:$0xf]
  %v7441 = vld [vmem:[%s3 + $0x30c] sm:$0xff]
  %v7442 = vld [vmem:[%s3 + $0x314] sm:$0xf]
  %v7443 = vld [vmem:[%s3 + $0x318] sm:$0xff]
  %v7444 = vld [vmem:[%s3 + $0x320] sm:$0xf]
  %v7445 = vld [vmem:[%s3 + $0x324] sm:$0xff]
  %v7446 = vld [vmem:[%s3 + $0x32c] sm:$0xf]
  %v7447 = vld [vmem:[%s3 + $0x330] sm:$0xff]
  %v7448 = vld [vmem:[%s3 + $0x338] sm:$0xf]
  %v7449 = vld [vmem:[%s3 + $0x33c] sm:$0xff]
  %v7450 = vld [vmem:[%s3 + $0x344] sm:$0xf]
  %v7451 = vld [vmem:[%s3 + $0x348] sm:$0xff]
  %v7452 = vld [vmem:[%s3 + $0x350] sm:$0xf]
  %v7453 = vld [vmem:[%s3 + $0x354] sm:$0xff]
  %v7454 = vld [vmem:[%s3 + $0x35c] sm:$0xf]
  %v7455 = vld [vmem:[%s3 + $0x360] sm:$0xff]
  %v7456 = vld [vmem:[%s3 + $0x368] sm:$0xf]
  %v7457 = vld [vmem:[%s3 + $0x36c] sm:$0xff]
  %v7458 = vld [vmem:[%s3 + $0x374] sm:$0xf]
  %v7459 = vld [vmem:[%s3 + $0x378] sm:$0xff]
  %v7460 = vld [vmem:[%s3 + $0x380] sm:$0xf]
  %v7461 = vld [vmem:[%s3 + $0x384] sm:$0xff]
  %v7462 = vld [vmem:[%s3 + $0x38c] sm:$0xf]
  %v7463 = vld [vmem:[%s3 + $0x390] sm:$0xff]
  %v7464 = vld [vmem:[%s3 + $0x398] sm:$0xf]
  %v7465 = vld [vmem:[%s3 + $0x39c] sm:$0xff]
  %v7466 = vld [vmem:[%s3 + $0x3a4] sm:$0xf]
  %v7467 = vld [vmem:[%s3 + $0x3a8] sm:$0xff]
  %v7468 = vld [vmem:[%s3 + $0x3b0] sm:$0xf]
  %v7469 = vld [vmem:[%s3 + $0x3b4] sm:$0xff]
  %v7470 = vld [vmem:[%s3 + $0x3bc] sm:$0xf]
  %v7471 = vld [vmem:[%s3 + $0x3c0] sm:$0xff]
  %v7472 = vld [vmem:[%s3 + $0x3c8] sm:$0xf]
  %v7473 = vld [vmem:[%s3 + $0x3cc] sm:$0xff]
  %v7474 = vld [vmem:[%s3 + $0x3d4] sm:$0xf]
  %v7475 = vld [vmem:[%s3 + $0x3d8] sm:$0xff]
  %v7476 = vld [vmem:[%s3 + $0x3e0] sm:$0xf]
  %v7477 = vld [vmem:[%s3 + $0x3e4] sm:$0xff]
  %v7478 = vld [vmem:[%s3 + $0x3ec] sm:$0xf]
  %v7479 = vld [vmem:[%s3 + $0x3f0] sm:$0xff]
  %v7480 = vld [vmem:[%s3 + $0x3f8] sm:$0xf]
  %v7481 = vld [vmem:[%s3 + $0x3fc] sm:$0xff]
  %v7482 = vld [vmem:[%s3 + $0x404] sm:$0xf]
  %v7483 = vld [vmem:[%s3 + $0x408] sm:$0xff]
  %v7484 = vld [vmem:[%s3 + $0x410] sm:$0xf]
  %v7485 = vld [vmem:[%s3 + $0x414] sm:$0xff]
  %v7486 = vld [vmem:[%s3 + $0x41c] sm:$0xf]
  %v7487 = vld [vmem:[%s3 + $0x420] sm:$0xff]
  %v7488 = vld [vmem:[%s3 + $0x428] sm:$0xf]
  %v7489 = vld [vmem:[%s3 + $0x42c] sm:$0xff]
  %v7490 = vld [vmem:[%s3 + $0x434] sm:$0xf]
  %v7491 = vld [vmem:[%s3 + $0x438] sm:$0xff]
  %v7492 = vld [vmem:[%s3 + $0x440] sm:$0xf]
  %v7493 = vld [vmem:[%s3 + $0x444] sm:$0xff]
  %v7494 = vld [vmem:[%s3 + $0x44c] sm:$0xf]
  %v7495 = vld [vmem:[%s3 + $0x450] sm:$0xff]
  %v7496 = vld [vmem:[%s3 + $0x458] sm:$0xf]
  %v7497 = vld [vmem:[%s3 + $0x45c] sm:$0xff]
  %v7498 = vld [vmem:[%s3 + $0x464] sm:$0xf]
  %v7499 = vld [vmem:[%s3 + $0x468] sm:$0xff]
  %v7500 = vld [vmem:[%s3 + $0x470] sm:$0xf]
  %v7501 = vld [vmem:[%s3 + $0x474] sm:$0xff]
  %v7502 = vld [vmem:[%s3 + $0x47c] sm:$0xf]
  %v7503 = vld [vmem:[%s3 + $0x480] sm:$0xff]
  %v7504 = vld [vmem:[%s3 + $0x488] sm:$0xf]
  %v7505 = vld [vmem:[%s3 + $0x48c] sm:$0xff]
  %v7506 = vld [vmem:[%s3 + $0x494] sm:$0xf]
  %v7507 = vld [vmem:[%s3 + $0x498] sm:$0xff]
  %v7508 = vld [vmem:[%s3 + $0x4a0] sm:$0xf]
  %v7509 = vld [vmem:[%s3 + $0x4a4] sm:$0xff]
  %v7510 = vld [vmem:[%s3 + $0x4ac] sm:$0xf]
  %v7511 = vld [vmem:[%s3 + $0x4b0] sm:$0xff]
  %v7512 = vld [vmem:[%s3 + $0x4b8] sm:$0xf]
  %v7513 = vld [vmem:[%s3 + $0x4bc] sm:$0xff]
  %v7514 = vld [vmem:[%s3 + $0x4c4] sm:$0xf]
  %v7515 = vld [vmem:[%s3 + $0x4c8] sm:$0xff]
  %v7516 = vld [vmem:[%s3 + $0x4d0] sm:$0xf]
  %v7517 = vld [vmem:[%s3 + $0x4d4] sm:$0xff]
  %v7518 = vld [vmem:[%s3 + $0x4dc] sm:$0xf]
  %v7519 = vld [vmem:[%s3 + $0x4e0] sm:$0xff]
  %v7520 = vld [vmem:[%s3 + $0x4e8] sm:$0xf]
  %v7521 = vld [vmem:[%s3 + $0x4ec] sm:$0xff]
  %v7522 = vld [vmem:[%s3 + $0x4f4] sm:$0xf]
  %v7523 = vld [vmem:[%s3 + $0x4f8] sm:$0xff]
  %v7524 = vld [vmem:[%s3 + $0x500] sm:$0xf]
  %v7525 = vld [vmem:[%s3 + $0x504] sm:$0xff]
  %v7526 = vld [vmem:[%s3 + $0x50c] sm:$0xf]
  %v7527 = vld [vmem:[%s3 + $0x510] sm:$0xff]
  %v7528 = vld [vmem:[%s3 + $0x518] sm:$0xf]
  %v7529 = vld [vmem:[%s3 + $0x51c] sm:$0xff]
  %v7530 = vld [vmem:[%s3 + $0x524] sm:$0xf]
  %v7531 = vld [vmem:[%s3 + $0x528] sm:$0xff]
  %v7532 = vld [vmem:[%s3 + $0x530] sm:$0xf]
  %v7533 = vld [vmem:[%s3 + $0x534] sm:$0xff]
  %v7534 = vld [vmem:[%s3 + $0x53c] sm:$0xf]
  %v7535 = vld [vmem:[%s3 + $0x540] sm:$0xff]
  %v7536 = vld [vmem:[%s3 + $0x548] sm:$0xf]
  %v7537 = vld [vmem:[%s3 + $0x54c] sm:$0xff]
  %v7538 = vld [vmem:[%s3 + $0x554] sm:$0xf]
  %v7539 = vld [vmem:[%s3 + $0x558] sm:$0xff]
  %v7540 = vld [vmem:[%s3 + $0x560] sm:$0xf]
  %v7541 = vld [vmem:[%s3 + $0x564] sm:$0xff]
  %v7542 = vld [vmem:[%s3 + $0x56c] sm:$0xf]
  %v7543 = vld [vmem:[%s3 + $0x570] sm:$0xff]
  %v7544 = vld [vmem:[%s3 + $0x578] sm:$0xf]
  %v7545 = vld [vmem:[%s3 + $0x57c] sm:$0xff]
  %v7546 = vld [vmem:[%s3 + $0x584] sm:$0xf]
  %v7547 = vld [vmem:[%s3 + $0x588] sm:$0xff]
  %v7548 = vld [vmem:[%s3 + $0x590] sm:$0xf]
  %v7549 = vld [vmem:[%s3 + $0x594] sm:$0xff]
  %v7550 = vld [vmem:[%s3 + $0x59c] sm:$0xf]
  %v7551 = vld [vmem:[%s3 + $0x5a0] sm:$0xff]
  %v7552 = vld [vmem:[%s3 + $0x5a8] sm:$0xf]
  %v7553 = vld [vmem:[%s3 + $0x5ac] sm:$0xff]
  %v7554 = vld [vmem:[%s3 + $0x5b4] sm:$0xf]
  %v7555 = vld [vmem:[%s3 + $0x5b8] sm:$0xff]
  %v7556 = vld [vmem:[%s3 + $0x5c0] sm:$0xf]
  %v7557 = vld [vmem:[%s3 + $0x5c4] sm:$0xff]
  %v7558 = vld [vmem:[%s3 + $0x5cc] sm:$0xf]
  %v7559 = vld [vmem:[%s3 + $0x5d0] sm:$0xff]
  %v7560 = vld [vmem:[%s3 + $0x5d8] sm:$0xf]
  %v7561 = vld [vmem:[%s3 + $0x5dc] sm:$0xff]
  %v7562 = vld [vmem:[%s3 + $0x5e4] sm:$0xf]
  %v7563 = vld [vmem:[%s3 + $0x5e8] sm:$0xff]
  %v7564 = vld [vmem:[%s3 + $0x5f0] sm:$0xf]
  %v7565 = vld [vmem:[%s3 + $0x5f4] sm:$0xff]
  %v7566 = vld [vmem:[%s3 + $0x5fc] sm:$0xf]
  %v7567 = vld [vmem:[%s4] sm:$0xff]
  %v7568 = vld [vmem:[%s4 + $0x8] sm:$0xff]
  %v7569 = vld [vmem:[%s4 + $0x10] sm:$0xff]
  %v7570 = vld [vmem:[%s4 + $0x18] sm:$0xff]
  %v7571 = vld [vmem:[%s4 + $0x20] sm:$0xff]
  %v7572 = vld [vmem:[%s4 + $0x28] sm:$0xff]
  %v7573 = vld [vmem:[%s4 + $0x30] sm:$0xff]
  %v7574 = vld [vmem:[%s4 + $0x38] sm:$0xff]
  %v7575 = vld [vmem:[%s4 + $0x40] sm:$0xff]
  %v7576 = vld [vmem:[%s4 + $0x48] sm:$0xff]
  %v7577 = vld [vmem:[%s4 + $0x50] sm:$0xff]
  %v7578 = vld [vmem:[%s4 + $0x58] sm:$0xff]
  %v7579 = vld [vmem:[%s4 + $0x60] sm:$0xff]
  %v7580 = vld [vmem:[%s4 + $0x68] sm:$0xff]
  %v7581 = vld [vmem:[%s4 + $0x70] sm:$0xff]
  %v7582 = vld [vmem:[%s4 + $0x78] sm:$0xff]
  %v7583 = vld [vmem:[%s4 + $0x80] sm:$0xff]
  %v7584 = vld [vmem:[%s4 + $0x88] sm:$0xff]
  %v7585 = vld [vmem:[%s4 + $0x90] sm:$0xff]
  %v7586 = vld [vmem:[%s4 + $0x98] sm:$0xff]
  %v7587 = vld [vmem:[%s4 + $0xa0] sm:$0xff]
  %v7588 = vld [vmem:[%s4 + $0xa8] sm:$0xff]
  %v7589 = vld [vmem:[%s4 + $0xb0] sm:$0xff]
  %v7590 = vld [vmem:[%s4 + $0xb8] sm:$0xff]
  %v7591 = vld [vmem:[%s4 + $0xc0] sm:$0xff]
  %v7592 = vld [vmem:[%s4 + $0xc8] sm:$0xff]
  %v7593 = vld [vmem:[%s4 + $0xd0] sm:$0xff]
  %v7594 = vld [vmem:[%s4 + $0xd8] sm:$0xff]
  %v7595 = vld [vmem:[%s4 + $0xe0] sm:$0xff]
  %v7596 = vld [vmem:[%s4 + $0xe8] sm:$0xff]
  %v7597 = vld [vmem:[%s4 + $0xf0] sm:$0xff]
  %v7598 = vld [vmem:[%s4 + $0xf8] sm:$0xff]
  %v7599 = vld [vmem:[%s4 + $0x100] sm:$0xff]
  %v7600 = vld [vmem:[%s4 + $0x108] sm:$0xff]
  %v7601 = vld [vmem:[%s4 + $0x110] sm:$0xff]
  %v7602 = vld [vmem:[%s4 + $0x118] sm:$0xff]
  %v7603 = vld [vmem:[%s4 + $0x120] sm:$0xff]
  %v7604 = vld [vmem:[%s4 + $0x128] sm:$0xff]
  %v7605 = vld [vmem:[%s4 + $0x130] sm:$0xff]
  %v7606 = vld [vmem:[%s4 + $0x138] sm:$0xff]
  %v7607 = vld [vmem:[%s4 + $0x140] sm:$0xff]
  %v7608 = vld [vmem:[%s4 + $0x148] sm:$0xff]
  %v7609 = vld [vmem:[%s4 + $0x150] sm:$0xff]
  %v7610 = vld [vmem:[%s4 + $0x158] sm:$0xff]
  %v7611 = vld [vmem:[%s4 + $0x160] sm:$0xff]
  %v7612 = vld [vmem:[%s4 + $0x168] sm:$0xff]
  %v7613 = vld [vmem:[%s4 + $0x170] sm:$0xff]
  %v7614 = vld [vmem:[%s4 + $0x178] sm:$0xff]
  %v7615 = vld [vmem:[%s4 + $0x180] sm:$0xff]
  %v7616 = vld [vmem:[%s4 + $0x188] sm:$0xff]
  %v7617 = vld [vmem:[%s4 + $0x190] sm:$0xff]
  %v7618 = vld [vmem:[%s4 + $0x198] sm:$0xff]
  %v7619 = vld [vmem:[%s4 + $0x1a0] sm:$0xff]
  %v7620 = vld [vmem:[%s4 + $0x1a8] sm:$0xff]
  %v7621 = vld [vmem:[%s4 + $0x1b0] sm:$0xff]
  %v7622 = vld [vmem:[%s4 + $0x1b8] sm:$0xff]
  %v7623 = vld [vmem:[%s4 + $0x1c0] sm:$0xff]
  %v7624 = vld [vmem:[%s4 + $0x1c8] sm:$0xff]
  %v7625 = vld [vmem:[%s4 + $0x1d0] sm:$0xff]
  %v7626 = vld [vmem:[%s4 + $0x1d8] sm:$0xff]
  %v7627 = vld [vmem:[%s4 + $0x1e0] sm:$0xff]
  %v7628 = vld [vmem:[%s4 + $0x1e8] sm:$0xff]
  %v7629 = vld [vmem:[%s4 + $0x1f0] sm:$0xff]
  %v7630 = vld [vmem:[%s4 + $0x1f8] sm:$0xff]
  %v7631 = vld [vmem:[%s4 + $0x200] sm:$0xff]
  %v7632 = vld [vmem:[%s4 + $0x208] sm:$0xff]
  %v7633 = vld [vmem:[%s4 + $0x210] sm:$0xff]
  %v7634 = vld [vmem:[%s4 + $0x218] sm:$0xff]
  %v7635 = vld [vmem:[%s4 + $0x220] sm:$0xff]
  %v7636 = vld [vmem:[%s4 + $0x228] sm:$0xff]
  %v7637 = vld [vmem:[%s4 + $0x230] sm:$0xff]
  %v7638 = vld [vmem:[%s4 + $0x238] sm:$0xff]
  %v7639 = vld [vmem:[%s4 + $0x240] sm:$0xff]
  %v7640 = vld [vmem:[%s4 + $0x248] sm:$0xff]
  %v7641 = vld [vmem:[%s4 + $0x250] sm:$0xff]
  %v7642 = vld [vmem:[%s4 + $0x258] sm:$0xff]
  %v7643 = vld [vmem:[%s4 + $0x260] sm:$0xff]
  %v7644 = vld [vmem:[%s4 + $0x268] sm:$0xff]
  %v7645 = vld [vmem:[%s4 + $0x270] sm:$0xff]
  %v7646 = vld [vmem:[%s4 + $0x278] sm:$0xff]
  %v7647 = vld [vmem:[%s4 + $0x280] sm:$0xff]
  %v7648 = vld [vmem:[%s4 + $0x288] sm:$0xff]
  %v7649 = vld [vmem:[%s4 + $0x290] sm:$0xff]
  %v7650 = vld [vmem:[%s4 + $0x298] sm:$0xff]
  %v7651 = vld [vmem:[%s4 + $0x2a0] sm:$0xff]
  %v7652 = vld [vmem:[%s4 + $0x2a8] sm:$0xff]
  %v7653 = vld [vmem:[%s4 + $0x2b0] sm:$0xff]
  %v7654 = vld [vmem:[%s4 + $0x2b8] sm:$0xff]
  %v7655 = vld [vmem:[%s4 + $0x2c0] sm:$0xff]
  %v7656 = vld [vmem:[%s4 + $0x2c8] sm:$0xff]
  %v7657 = vld [vmem:[%s4 + $0x2d0] sm:$0xff]
  %v7658 = vld [vmem:[%s4 + $0x2d8] sm:$0xff]
  %v7659 = vld [vmem:[%s4 + $0x2e0] sm:$0xff]
  %v7660 = vld [vmem:[%s4 + $0x2e8] sm:$0xff]
  %v7661 = vld [vmem:[%s4 + $0x2f0] sm:$0xff]
  %v7662 = vld [vmem:[%s4 + $0x2f8] sm:$0xff]
  %v7663 = vld [vmem:[%s4 + $0x300] sm:$0xff]
  %v7664 = vld [vmem:[%s4 + $0x308] sm:$0xff]
  %v7665 = vld [vmem:[%s4 + $0x310] sm:$0xff]
  %v7666 = vld [vmem:[%s4 + $0x318] sm:$0xff]
  %v7667 = vld [vmem:[%s4 + $0x320] sm:$0xff]
  %v7668 = vld [vmem:[%s4 + $0x328] sm:$0xff]
  %v7669 = vld [vmem:[%s4 + $0x330] sm:$0xff]
  %v7670 = vld [vmem:[%s4 + $0x338] sm:$0xff]
  %v7671 = vld [vmem:[%s4 + $0x340] sm:$0xff]
  %v7672 = vld [vmem:[%s4 + $0x348] sm:$0xff]
  %v7673 = vld [vmem:[%s4 + $0x350] sm:$0xff]
  %v7674 = vld [vmem:[%s4 + $0x358] sm:$0xff]
  %v7675 = vld [vmem:[%s4 + $0x360] sm:$0xff]
  %v7676 = vld [vmem:[%s4 + $0x368] sm:$0xff]
  %v7677 = vld [vmem:[%s4 + $0x370] sm:$0xff]
  %v7678 = vld [vmem:[%s4 + $0x378] sm:$0xff]
  %v7679 = vld [vmem:[%s4 + $0x380] sm:$0xff]
  %v7680 = vld [vmem:[%s4 + $0x388] sm:$0xff]
  %v7681 = vld [vmem:[%s4 + $0x390] sm:$0xff]
  %v7682 = vld [vmem:[%s4 + $0x398] sm:$0xff]
  %v7683 = vld [vmem:[%s4 + $0x3a0] sm:$0xff]
  %v7684 = vld [vmem:[%s4 + $0x3a8] sm:$0xff]
  %v7685 = vld [vmem:[%s4 + $0x3b0] sm:$0xff]
  %v7686 = vld [vmem:[%s4 + $0x3b8] sm:$0xff]
  %v7687 = vld [vmem:[%s4 + $0x3c0] sm:$0xff]
  %v7688 = vld [vmem:[%s4 + $0x3c8] sm:$0xff]
  %v7689 = vld [vmem:[%s4 + $0x3d0] sm:$0xff]
  %v7690 = vld [vmem:[%s4 + $0x3d8] sm:$0xff]
  %v7691 = vld [vmem:[%s4 + $0x3e0] sm:$0xff]
  %v7692 = vld [vmem:[%s4 + $0x3e8] sm:$0xff]
  %v7693 = vld [vmem:[%s4 + $0x3f0] sm:$0xff]
  %v7694 = vld [vmem:[%s4 + $0x3f8] sm:$0xff]
  %7696 = vset.pattern.permute.xlu0 0
  %7697 = vperm.xlu0 %7696, %v7567
  %v7698 = vpop.permute.xlu0 %7697
  %7701 = vset.pattern.permute.xlu0 0
  %7702 = vperm.xlu0 %7701, %v7568
  %v7703 = vpop.permute.xlu0 %7702
  %7706 = vset.pattern.permute.xlu0 0
  %7707 = vperm.xlu0 %7706, %v7569
  %v7708 = vpop.permute.xlu0 %7707
  %7711 = vset.pattern.permute.xlu0 0
  %7712 = vperm.xlu0 %7711, %v7570
  %v7713 = vpop.permute.xlu0 %7712
  %7716 = vset.pattern.permute.xlu0 0
  %7717 = vperm.xlu0 %7716, %v7571
  %v7718 = vpop.permute.xlu0 %7717
  %7721 = vset.pattern.permute.xlu0 0
  %7722 = vperm.xlu0 %7721, %v7572
  %v7723 = vpop.permute.xlu0 %7722
  %7726 = vset.pattern.permute.xlu0 0
  %7727 = vperm.xlu0 %7726, %v7573
  %v7728 = vpop.permute.xlu0 %7727
  %7731 = vset.pattern.permute.xlu0 0
  %7732 = vperm.xlu0 %7731, %v7574
  %v7733 = vpop.permute.xlu0 %7732
  %7736 = vset.pattern.permute.xlu0 0
  %7737 = vperm.xlu0 %7736, %v7575
  %v7738 = vpop.permute.xlu0 %7737
  %7741 = vset.pattern.permute.xlu0 0
  %7742 = vperm.xlu0 %7741, %v7576
  %v7743 = vpop.permute.xlu0 %7742
  %7746 = vset.pattern.permute.xlu0 0
  %7747 = vperm.xlu0 %7746, %v7577
  %v7748 = vpop.permute.xlu0 %7747
  %7751 = vset.pattern.permute.xlu0 0
  %7752 = vperm.xlu0 %7751, %v7578
  %v7753 = vpop.permute.xlu0 %7752
  %7756 = vset.pattern.permute.xlu0 0
  %7757 = vperm.xlu0 %7756, %v7579
  %v7758 = vpop.permute.xlu0 %7757
  %7761 = vset.pattern.permute.xlu0 0
  %7762 = vperm.xlu0 %7761, %v7580
  %v7763 = vpop.permute.xlu0 %7762
  %7766 = vset.pattern.permute.xlu0 0
  %7767 = vperm.xlu0 %7766, %v7581
  %v7768 = vpop.permute.xlu0 %7767
  %7771 = vset.pattern.permute.xlu0 0
  %7772 = vperm.xlu0 %7771, %v7582
  %v7773 = vpop.permute.xlu0 %7772
  %7776 = vset.pattern.permute.xlu0 0
  %7777 = vperm.xlu0 %7776, %v7583
  %v7778 = vpop.permute.xlu0 %7777
  %7781 = vset.pattern.permute.xlu0 0
  %7782 = vperm.xlu0 %7781, %v7584
  %v7783 = vpop.permute.xlu0 %7782
  %7786 = vset.pattern.permute.xlu0 0
  %7787 = vperm.xlu0 %7786, %v7585
  %v7788 = vpop.permute.xlu0 %7787
  %7791 = vset.pattern.permute.xlu0 0
  %7792 = vperm.xlu0 %7791, %v7586
  %v7793 = vpop.permute.xlu0 %7792
  %7796 = vset.pattern.permute.xlu0 0
  %7797 = vperm.xlu0 %7796, %v7587
  %v7798 = vpop.permute.xlu0 %7797
  %7801 = vset.pattern.permute.xlu0 0
  %7802 = vperm.xlu0 %7801, %v7588
  %v7803 = vpop.permute.xlu0 %7802
  %7806 = vset.pattern.permute.xlu0 0
  %7807 = vperm.xlu0 %7806, %v7589
  %v7808 = vpop.permute.xlu0 %7807
  %7811 = vset.pattern.permute.xlu0 0
  %7812 = vperm.xlu0 %7811, %v7590
  %v7813 = vpop.permute.xlu0 %7812
  %7816 = vset.pattern.permute.xlu0 0
  %7817 = vperm.xlu0 %7816, %v7591
  %v7818 = vpop.permute.xlu0 %7817
  %7821 = vset.pattern.permute.xlu0 0
  %7822 = vperm.xlu0 %7821, %v7592
  %v7823 = vpop.permute.xlu0 %7822
  %7826 = vset.pattern.permute.xlu0 0
  %7827 = vperm.xlu0 %7826, %v7593
  %v7828 = vpop.permute.xlu0 %7827
  %7831 = vset.pattern.permute.xlu0 0
  %7832 = vperm.xlu0 %7831, %v7594
  %v7833 = vpop.permute.xlu0 %7832
  %7836 = vset.pattern.permute.xlu0 0
  %7837 = vperm.xlu0 %7836, %v7595
  %v7838 = vpop.permute.xlu0 %7837
  %7841 = vset.pattern.permute.xlu0 0
  %7842 = vperm.xlu0 %7841, %v7596
  %v7843 = vpop.permute.xlu0 %7842
  %7846 = vset.pattern.permute.xlu0 0
  %7847 = vperm.xlu0 %7846, %v7597
  %v7848 = vpop.permute.xlu0 %7847
  %7851 = vset.pattern.permute.xlu0 0
  %7852 = vperm.xlu0 %7851, %v7598
  %v7853 = vpop.permute.xlu0 %7852
  %7856 = vset.pattern.permute.xlu0 0
  %7857 = vperm.xlu0 %7856, %v7599
  %v7858 = vpop.permute.xlu0 %7857
  %7861 = vset.pattern.permute.xlu0 0
  %7862 = vperm.xlu0 %7861, %v7600
  %v7863 = vpop.permute.xlu0 %7862
  %7866 = vset.pattern.permute.xlu0 0
  %7867 = vperm.xlu0 %7866, %v7601
  %v7868 = vpop.permute.xlu0 %7867
  %7871 = vset.pattern.permute.xlu0 0
  %7872 = vperm.xlu0 %7871, %v7602
  %v7873 = vpop.permute.xlu0 %7872
  %7876 = vset.pattern.permute.xlu0 0
  %7877 = vperm.xlu0 %7876, %v7603
  %v7878 = vpop.permute.xlu0 %7877
  %7881 = vset.pattern.permute.xlu0 0
  %7882 = vperm.xlu0 %7881, %v7604
  %v7883 = vpop.permute.xlu0 %7882
  %7886 = vset.pattern.permute.xlu0 0
  %7887 = vperm.xlu0 %7886, %v7605
  %v7888 = vpop.permute.xlu0 %7887
  %7891 = vset.pattern.permute.xlu0 0
  %7892 = vperm.xlu0 %7891, %v7606
  %v7893 = vpop.permute.xlu0 %7892
  %7896 = vset.pattern.permute.xlu0 0
  %7897 = vperm.xlu0 %7896, %v7607
  %v7898 = vpop.permute.xlu0 %7897
  %7901 = vset.pattern.permute.xlu0 0
  %7902 = vperm.xlu0 %7901, %v7608
  %v7903 = vpop.permute.xlu0 %7902
  %7906 = vset.pattern.permute.xlu0 0
  %7907 = vperm.xlu0 %7906, %v7609
  %v7908 = vpop.permute.xlu0 %7907
  %7911 = vset.pattern.permute.xlu0 0
  %7912 = vperm.xlu0 %7911, %v7610
  %v7913 = vpop.permute.xlu0 %7912
  %7916 = vset.pattern.permute.xlu0 0
  %7917 = vperm.xlu0 %7916, %v7611
  %v7918 = vpop.permute.xlu0 %7917
  %7921 = vset.pattern.permute.xlu0 0
  %7922 = vperm.xlu0 %7921, %v7612
  %v7923 = vpop.permute.xlu0 %7922
  %7926 = vset.pattern.permute.xlu0 0
  %7927 = vperm.xlu0 %7926, %v7613
  %v7928 = vpop.permute.xlu0 %7927
  %7931 = vset.pattern.permute.xlu0 0
  %7932 = vperm.xlu0 %7931, %v7614
  %v7933 = vpop.permute.xlu0 %7932
  %7936 = vset.pattern.permute.xlu0 0
  %7937 = vperm.xlu0 %7936, %v7615
  %v7938 = vpop.permute.xlu0 %7937
  %7941 = vset.pattern.permute.xlu0 0
  %7942 = vperm.xlu0 %7941, %v7616
  %v7943 = vpop.permute.xlu0 %7942
  %7946 = vset.pattern.permute.xlu0 0
  %7947 = vperm.xlu0 %7946, %v7617
  %v7948 = vpop.permute.xlu0 %7947
  %7951 = vset.pattern.permute.xlu0 0
  %7952 = vperm.xlu0 %7951, %v7618
  %v7953 = vpop.permute.xlu0 %7952
  %7956 = vset.pattern.permute.xlu0 0
  %7957 = vperm.xlu0 %7956, %v7619
  %v7958 = vpop.permute.xlu0 %7957
  %7961 = vset.pattern.permute.xlu0 0
  %7962 = vperm.xlu0 %7961, %v7620
  %v7963 = vpop.permute.xlu0 %7962
  %7966 = vset.pattern.permute.xlu0 0
  %7967 = vperm.xlu0 %7966, %v7621
  %v7968 = vpop.permute.xlu0 %7967
  %7971 = vset.pattern.permute.xlu0 0
  %7972 = vperm.xlu0 %7971, %v7622
  %v7973 = vpop.permute.xlu0 %7972
  %7976 = vset.pattern.permute.xlu0 0
  %7977 = vperm.xlu0 %7976, %v7623
  %v7978 = vpop.permute.xlu0 %7977
  %7981 = vset.pattern.permute.xlu0 0
  %7982 = vperm.xlu0 %7981, %v7624
  %v7983 = vpop.permute.xlu0 %7982
  %7986 = vset.pattern.permute.xlu0 0
  %7987 = vperm.xlu0 %7986, %v7625
  %v7988 = vpop.permute.xlu0 %7987
  %7991 = vset.pattern.permute.xlu0 0
  %7992 = vperm.xlu0 %7991, %v7626
  %v7993 = vpop.permute.xlu0 %7992
  %7996 = vset.pattern.permute.xlu0 0
  %7997 = vperm.xlu0 %7996, %v7627
  %v7998 = vpop.permute.xlu0 %7997
  %8001 = vset.pattern.permute.xlu0 0
  %8002 = vperm.xlu0 %8001, %v7628
  %v8003 = vpop.permute.xlu0 %8002
  %8006 = vset.pattern.permute.xlu0 0
  %8007 = vperm.xlu0 %8006, %v7629
  %v8008 = vpop.permute.xlu0 %8007
  %8011 = vset.pattern.permute.xlu0 0
  %8012 = vperm.xlu0 %8011, %v7630
  %v8013 = vpop.permute.xlu0 %8012
  %8016 = vset.pattern.permute.xlu0 0
  %8017 = vperm.xlu0 %8016, %v7631
  %v8018 = vpop.permute.xlu0 %8017
  %8021 = vset.pattern.permute.xlu0 0
  %8022 = vperm.xlu0 %8021, %v7632
  %v8023 = vpop.permute.xlu0 %8022
  %8026 = vset.pattern.permute.xlu0 0
  %8027 = vperm.xlu0 %8026, %v7633
  %v8028 = vpop.permute.xlu0 %8027
  %8031 = vset.pattern.permute.xlu0 0
  %8032 = vperm.xlu0 %8031, %v7634
  %v8033 = vpop.permute.xlu0 %8032
  %8036 = vset.pattern.permute.xlu0 0
  %8037 = vperm.xlu0 %8036, %v7635
  %v8038 = vpop.permute.xlu0 %8037
  %8041 = vset.pattern.permute.xlu0 0
  %8042 = vperm.xlu0 %8041, %v7636
  %v8043 = vpop.permute.xlu0 %8042
  %8046 = vset.pattern.permute.xlu0 0
  %8047 = vperm.xlu0 %8046, %v7637
  %v8048 = vpop.permute.xlu0 %8047
  %8051 = vset.pattern.permute.xlu0 0
  %8052 = vperm.xlu0 %8051, %v7638
  %v8053 = vpop.permute.xlu0 %8052
  %8056 = vset.pattern.permute.xlu0 0
  %8057 = vperm.xlu0 %8056, %v7639
  %v8058 = vpop.permute.xlu0 %8057
  %8061 = vset.pattern.permute.xlu0 0
  %8062 = vperm.xlu0 %8061, %v7640
  %v8063 = vpop.permute.xlu0 %8062
  %8066 = vset.pattern.permute.xlu0 0
  %8067 = vperm.xlu0 %8066, %v7641
  %v8068 = vpop.permute.xlu0 %8067
  %8071 = vset.pattern.permute.xlu0 0
  %8072 = vperm.xlu0 %8071, %v7642
  %v8073 = vpop.permute.xlu0 %8072
  %8076 = vset.pattern.permute.xlu0 0
  %8077 = vperm.xlu0 %8076, %v7643
  %v8078 = vpop.permute.xlu0 %8077
  %8081 = vset.pattern.permute.xlu0 0
  %8082 = vperm.xlu0 %8081, %v7644
  %v8083 = vpop.permute.xlu0 %8082
  %8086 = vset.pattern.permute.xlu0 0
  %8087 = vperm.xlu0 %8086, %v7645
  %v8088 = vpop.permute.xlu0 %8087
  %8091 = vset.pattern.permute.xlu0 0
  %8092 = vperm.xlu0 %8091, %v7646
  %v8093 = vpop.permute.xlu0 %8092
  %8096 = vset.pattern.permute.xlu0 0
  %8097 = vperm.xlu0 %8096, %v7647
  %v8098 = vpop.permute.xlu0 %8097
  %8101 = vset.pattern.permute.xlu0 0
  %8102 = vperm.xlu0 %8101, %v7648
  %v8103 = vpop.permute.xlu0 %8102
  %8106 = vset.pattern.permute.xlu0 0
  %8107 = vperm.xlu0 %8106, %v7649
  %v8108 = vpop.permute.xlu0 %8107
  %8111 = vset.pattern.permute.xlu0 0
  %8112 = vperm.xlu0 %8111, %v7650
  %v8113 = vpop.permute.xlu0 %8112
  %8116 = vset.pattern.permute.xlu0 0
  %8117 = vperm.xlu0 %8116, %v7651
  %v8118 = vpop.permute.xlu0 %8117
  %8121 = vset.pattern.permute.xlu0 0
  %8122 = vperm.xlu0 %8121, %v7652
  %v8123 = vpop.permute.xlu0 %8122
  %8126 = vset.pattern.permute.xlu0 0
  %8127 = vperm.xlu0 %8126, %v7653
  %v8128 = vpop.permute.xlu0 %8127
  %8131 = vset.pattern.permute.xlu0 0
  %8132 = vperm.xlu0 %8131, %v7654
  %v8133 = vpop.permute.xlu0 %8132
  %8136 = vset.pattern.permute.xlu0 0
  %8137 = vperm.xlu0 %8136, %v7655
  %v8138 = vpop.permute.xlu0 %8137
  %8141 = vset.pattern.permute.xlu0 0
  %8142 = vperm.xlu0 %8141, %v7656
  %v8143 = vpop.permute.xlu0 %8142
  %8146 = vset.pattern.permute.xlu0 0
  %8147 = vperm.xlu0 %8146, %v7657
  %v8148 = vpop.permute.xlu0 %8147
  %8151 = vset.pattern.permute.xlu0 0
  %8152 = vperm.xlu0 %8151, %v7658
  %v8153 = vpop.permute.xlu0 %8152
  %8156 = vset.pattern.permute.xlu0 0
  %8157 = vperm.xlu0 %8156, %v7659
  %v8158 = vpop.permute.xlu0 %8157
  %8161 = vset.pattern.permute.xlu0 0
  %8162 = vperm.xlu0 %8161, %v7660
  %v8163 = vpop.permute.xlu0 %8162
  %8166 = vset.pattern.permute.xlu0 0
  %8167 = vperm.xlu0 %8166, %v7661
  %v8168 = vpop.permute.xlu0 %8167
  %8171 = vset.pattern.permute.xlu0 0
  %8172 = vperm.xlu0 %8171, %v7662
  %v8173 = vpop.permute.xlu0 %8172
  %8176 = vset.pattern.permute.xlu0 0
  %8177 = vperm.xlu0 %8176, %v7663
  %v8178 = vpop.permute.xlu0 %8177
  %8181 = vset.pattern.permute.xlu0 0
  %8182 = vperm.xlu0 %8181, %v7664
  %v8183 = vpop.permute.xlu0 %8182
  %8186 = vset.pattern.permute.xlu0 0
  %8187 = vperm.xlu0 %8186, %v7665
  %v8188 = vpop.permute.xlu0 %8187
  %8191 = vset.pattern.permute.xlu0 0
  %8192 = vperm.xlu0 %8191, %v7666
  %v8193 = vpop.permute.xlu0 %8192
  %8196 = vset.pattern.permute.xlu0 0
  %8197 = vperm.xlu0 %8196, %v7667
  %v8198 = vpop.permute.xlu0 %8197
  %8201 = vset.pattern.permute.xlu0 0
  %8202 = vperm.xlu0 %8201, %v7668
  %v8203 = vpop.permute.xlu0 %8202
  %8206 = vset.pattern.permute.xlu0 0
  %8207 = vperm.xlu0 %8206, %v7669
  %v8208 = vpop.permute.xlu0 %8207
  %8211 = vset.pattern.permute.xlu0 0
  %8212 = vperm.xlu0 %8211, %v7670
  %v8213 = vpop.permute.xlu0 %8212
  %8216 = vset.pattern.permute.xlu0 0
  %8217 = vperm.xlu0 %8216, %v7671
  %v8218 = vpop.permute.xlu0 %8217
  %8221 = vset.pattern.permute.xlu0 0
  %8222 = vperm.xlu0 %8221, %v7672
  %v8223 = vpop.permute.xlu0 %8222
  %8226 = vset.pattern.permute.xlu0 0
  %8227 = vperm.xlu0 %8226, %v7673
  %v8228 = vpop.permute.xlu0 %8227
  %8231 = vset.pattern.permute.xlu0 0
  %8232 = vperm.xlu0 %8231, %v7674
  %v8233 = vpop.permute.xlu0 %8232
  %8236 = vset.pattern.permute.xlu0 0
  %8237 = vperm.xlu0 %8236, %v7675
  %v8238 = vpop.permute.xlu0 %8237
  %8241 = vset.pattern.permute.xlu0 0
  %8242 = vperm.xlu0 %8241, %v7676
  %v8243 = vpop.permute.xlu0 %8242
  %8246 = vset.pattern.permute.xlu0 0
  %8247 = vperm.xlu0 %8246, %v7677
  %v8248 = vpop.permute.xlu0 %8247
  %8251 = vset.pattern.permute.xlu0 0
  %8252 = vperm.xlu0 %8251, %v7678
  %v8253 = vpop.permute.xlu0 %8252
  %8256 = vset.pattern.permute.xlu0 0
  %8257 = vperm.xlu0 %8256, %v7679
  %v8258 = vpop.permute.xlu0 %8257
  %8261 = vset.pattern.permute.xlu0 0
  %8262 = vperm.xlu0 %8261, %v7680
  %v8263 = vpop.permute.xlu0 %8262
  %8266 = vset.pattern.permute.xlu0 0
  %8267 = vperm.xlu0 %8266, %v7681
  %v8268 = vpop.permute.xlu0 %8267
  %8271 = vset.pattern.permute.xlu0 0
  %8272 = vperm.xlu0 %8271, %v7682
  %v8273 = vpop.permute.xlu0 %8272
  %8276 = vset.pattern.permute.xlu0 0
  %8277 = vperm.xlu0 %8276, %v7683
  %v8278 = vpop.permute.xlu0 %8277
  %8281 = vset.pattern.permute.xlu0 0
  %8282 = vperm.xlu0 %8281, %v7684
  %v8283 = vpop.permute.xlu0 %8282
  %8286 = vset.pattern.permute.xlu0 0
  %8287 = vperm.xlu0 %8286, %v7685
  %v8288 = vpop.permute.xlu0 %8287
  %8291 = vset.pattern.permute.xlu0 0
  %8292 = vperm.xlu0 %8291, %v7686
  %v8293 = vpop.permute.xlu0 %8292
  %8296 = vset.pattern.permute.xlu0 0
  %8297 = vperm.xlu0 %8296, %v7687
  %v8298 = vpop.permute.xlu0 %8297
  %8301 = vset.pattern.permute.xlu0 0
  %8302 = vperm.xlu0 %8301, %v7688
  %v8303 = vpop.permute.xlu0 %8302
  %8306 = vset.pattern.permute.xlu0 0
  %8307 = vperm.xlu0 %8306, %v7689
  %v8308 = vpop.permute.xlu0 %8307
  %8311 = vset.pattern.permute.xlu0 0
  %8312 = vperm.xlu0 %8311, %v7690
  %v8313 = vpop.permute.xlu0 %8312
  %8316 = vset.pattern.permute.xlu0 0
  %8317 = vperm.xlu0 %8316, %v7691
  %v8318 = vpop.permute.xlu0 %8317
  %8321 = vset.pattern.permute.xlu0 0
  %8322 = vperm.xlu0 %8321, %v7692
  %v8323 = vpop.permute.xlu0 %8322
  %8326 = vset.pattern.permute.xlu0 0
  %8327 = vperm.xlu0 %8326, %v7693
  %v8328 = vpop.permute.xlu0 %8327
  %8331 = vset.pattern.permute.xlu0 0
  %8332 = vperm.xlu0 %8331, %v7694
  %v8333 = vpop.permute.xlu0 %8332
  %v8591 = vunpack.c.l.b16 %v7311
  %v8592 = vunpack.c.h.b16 %v7311
  %v8593 = vunpack.c.l.b16 %v7312
  %v8594 = vunpack.c.l.b16 %v7313
  %v8595 = vunpack.c.h.b16 %v7313
  %v8596 = vunpack.c.l.b16 %v7314
  %v8597 = vunpack.c.l.b16 %v7315
  %v8598 = vunpack.c.h.b16 %v7315
  %v8599 = vunpack.c.l.b16 %v7316
  %v8600 = vunpack.c.l.b16 %v7317
  %v8601 = vunpack.c.h.b16 %v7317
  %v8602 = vunpack.c.l.b16 %v7318
  %v8603 = vunpack.c.l.b16 %v7319
  %v8604 = vunpack.c.h.b16 %v7319
  %v8605 = vunpack.c.l.b16 %v7320
  %v8606 = vunpack.c.l.b16 %v7321
  %v8607 = vunpack.c.h.b16 %v7321
  %v8608 = vunpack.c.l.b16 %v7322
  %v8609 = vunpack.c.l.b16 %v7323
  %v8610 = vunpack.c.h.b16 %v7323
  %v8611 = vunpack.c.l.b16 %v7324
  %v8612 = vunpack.c.l.b16 %v7325
  %v8613 = vunpack.c.h.b16 %v7325
  %v8614 = vunpack.c.l.b16 %v7326
  %v8615 = vunpack.c.l.b16 %v7327
  %v8616 = vunpack.c.h.b16 %v7327
  %v8617 = vunpack.c.l.b16 %v7328
  %v8618 = vunpack.c.l.b16 %v7329
  %v8619 = vunpack.c.h.b16 %v7329
  %v8620 = vunpack.c.l.b16 %v7330
  %v8621 = vunpack.c.l.b16 %v7331
  %v8622 = vunpack.c.h.b16 %v7331
  %v8623 = vunpack.c.l.b16 %v7332
  %v8624 = vunpack.c.l.b16 %v7333
  %v8625 = vunpack.c.h.b16 %v7333
  %v8626 = vunpack.c.l.b16 %v7334
  %v8627 = vunpack.c.l.b16 %v7335
  %v8628 = vunpack.c.h.b16 %v7335
  %v8629 = vunpack.c.l.b16 %v7336
  %v8630 = vunpack.c.l.b16 %v7337
  %v8631 = vunpack.c.h.b16 %v7337
  %v8632 = vunpack.c.l.b16 %v7338
  %v8633 = vunpack.c.l.b16 %v7339
  %v8634 = vunpack.c.h.b16 %v7339
  %v8635 = vunpack.c.l.b16 %v7340
  %v8636 = vunpack.c.l.b16 %v7341
  %v8637 = vunpack.c.h.b16 %v7341
  %v8638 = vunpack.c.l.b16 %v7342
  %v8639 = vunpack.c.l.b16 %v7343
  %v8640 = vunpack.c.h.b16 %v7343
  %v8641 = vunpack.c.l.b16 %v7344
  %v8642 = vunpack.c.l.b16 %v7345
  %v8643 = vunpack.c.h.b16 %v7345
  %v8644 = vunpack.c.l.b16 %v7346
  %v8645 = vunpack.c.l.b16 %v7347
  %v8646 = vunpack.c.h.b16 %v7347
  %v8647 = vunpack.c.l.b16 %v7348
  %v8648 = vunpack.c.l.b16 %v7349
  %v8649 = vunpack.c.h.b16 %v7349
  %v8650 = vunpack.c.l.b16 %v7350
  %v8651 = vunpack.c.l.b16 %v7351
  %v8652 = vunpack.c.h.b16 %v7351
  %v8653 = vunpack.c.l.b16 %v7352
  %v8654 = vunpack.c.l.b16 %v7353
  %v8655 = vunpack.c.h.b16 %v7353
  %v8656 = vunpack.c.l.b16 %v7354
  %v8657 = vunpack.c.l.b16 %v7355
  %v8658 = vunpack.c.h.b16 %v7355
  %v8659 = vunpack.c.l.b16 %v7356
  %v8660 = vunpack.c.l.b16 %v7357
  %v8661 = vunpack.c.h.b16 %v7357
  %v8662 = vunpack.c.l.b16 %v7358
  %v8663 = vunpack.c.l.b16 %v7359
  %v8664 = vunpack.c.h.b16 %v7359
  %v8665 = vunpack.c.l.b16 %v7360
  %v8666 = vunpack.c.l.b16 %v7361
  %v8667 = vunpack.c.h.b16 %v7361
  %v8668 = vunpack.c.l.b16 %v7362
  %v8669 = vunpack.c.l.b16 %v7363
  %v8670 = vunpack.c.h.b16 %v7363
  %v8671 = vunpack.c.l.b16 %v7364
  %v8672 = vunpack.c.l.b16 %v7365
  %v8673 = vunpack.c.h.b16 %v7365
  %v8674 = vunpack.c.l.b16 %v7366
  %v8675 = vunpack.c.l.b16 %v7367
  %v8676 = vunpack.c.h.b16 %v7367
  %v8677 = vunpack.c.l.b16 %v7368
  %v8678 = vunpack.c.l.b16 %v7369
  %v8679 = vunpack.c.h.b16 %v7369
  %v8680 = vunpack.c.l.b16 %v7370
  %v8681 = vunpack.c.l.b16 %v7371
  %v8682 = vunpack.c.h.b16 %v7371
  %v8683 = vunpack.c.l.b16 %v7372
  %v8684 = vunpack.c.l.b16 %v7373
  %v8685 = vunpack.c.h.b16 %v7373
  %v8686 = vunpack.c.l.b16 %v7374
  %v8687 = vunpack.c.l.b16 %v7375
  %v8688 = vunpack.c.h.b16 %v7375
  %v8689 = vunpack.c.l.b16 %v7376
  %v8690 = vunpack.c.l.b16 %v7377
  %v8691 = vunpack.c.h.b16 %v7377
  %v8692 = vunpack.c.l.b16 %v7378
  %v8693 = vunpack.c.l.b16 %v7379
  %v8694 = vunpack.c.h.b16 %v7379
  %v8695 = vunpack.c.l.b16 %v7380
  %v8696 = vunpack.c.l.b16 %v7381
  %v8697 = vunpack.c.h.b16 %v7381
  %v8698 = vunpack.c.l.b16 %v7382
  %v8699 = vunpack.c.l.b16 %v7383
  %v8700 = vunpack.c.h.b16 %v7383
  %v8701 = vunpack.c.l.b16 %v7384
  %v8702 = vunpack.c.l.b16 %v7385
  %v8703 = vunpack.c.h.b16 %v7385
  %v8704 = vunpack.c.l.b16 %v7386
  %v8705 = vunpack.c.l.b16 %v7387
  %v8706 = vunpack.c.h.b16 %v7387
  %v8707 = vunpack.c.l.b16 %v7388
  %v8708 = vunpack.c.l.b16 %v7389
  %v8709 = vunpack.c.h.b16 %v7389
  %v8710 = vunpack.c.l.b16 %v7390
  %v8711 = vunpack.c.l.b16 %v7391
  %v8712 = vunpack.c.h.b16 %v7391
  %v8713 = vunpack.c.l.b16 %v7392
  %v8714 = vunpack.c.l.b16 %v7393
  %v8715 = vunpack.c.h.b16 %v7393
  %v8716 = vunpack.c.l.b16 %v7394
  %v8717 = vunpack.c.l.b16 %v7395
  %v8718 = vunpack.c.h.b16 %v7395
  %v8719 = vunpack.c.l.b16 %v7396
  %v8720 = vunpack.c.l.b16 %v7397
  %v8721 = vunpack.c.h.b16 %v7397
  %v8722 = vunpack.c.l.b16 %v7398
  %v8723 = vunpack.c.l.b16 %v7399
  %v8724 = vunpack.c.h.b16 %v7399
  %v8725 = vunpack.c.l.b16 %v7400
  %v8726 = vunpack.c.l.b16 %v7401
  %v8727 = vunpack.c.h.b16 %v7401
  %v8728 = vunpack.c.l.b16 %v7402
  %v8729 = vunpack.c.l.b16 %v7403
  %v8730 = vunpack.c.h.b16 %v7403
  %v8731 = vunpack.c.l.b16 %v7404
  %v8732 = vunpack.c.l.b16 %v7405
  %v8733 = vunpack.c.h.b16 %v7405
  %v8734 = vunpack.c.l.b16 %v7406
  %v8735 = vunpack.c.l.b16 %v7407
  %v8736 = vunpack.c.h.b16 %v7407
  %v8737 = vunpack.c.l.b16 %v7408
  %v8738 = vunpack.c.l.b16 %v7409
  %v8739 = vunpack.c.h.b16 %v7409
  %v8740 = vunpack.c.l.b16 %v7410
  %v8741 = vunpack.c.l.b16 %v7411
  %v8742 = vunpack.c.h.b16 %v7411
  %v8743 = vunpack.c.l.b16 %v7412
  %v8744 = vunpack.c.l.b16 %v7413
  %v8745 = vunpack.c.h.b16 %v7413
  %v8746 = vunpack.c.l.b16 %v7414
  %v8747 = vunpack.c.l.b16 %v7415
  %v8748 = vunpack.c.h.b16 %v7415
  %v8749 = vunpack.c.l.b16 %v7416
  %v8750 = vunpack.c.l.b16 %v7417
  %v8751 = vunpack.c.h.b16 %v7417
  %v8752 = vunpack.c.l.b16 %v7418
  %v8753 = vunpack.c.l.b16 %v7419
  %v8754 = vunpack.c.h.b16 %v7419
  %v8755 = vunpack.c.l.b16 %v7420
  %v8756 = vunpack.c.l.b16 %v7421
  %v8757 = vunpack.c.h.b16 %v7421
  %v8758 = vunpack.c.l.b16 %v7422
  %v8759 = vunpack.c.l.b16 %v7423
  %v8760 = vunpack.c.h.b16 %v7423
  %v8761 = vunpack.c.l.b16 %v7424
  %v8762 = vunpack.c.l.b16 %v7425
  %v8763 = vunpack.c.h.b16 %v7425
  %v8764 = vunpack.c.l.b16 %v7426
  %v8765 = vunpack.c.l.b16 %v7427
  %v8766 = vunpack.c.h.b16 %v7427
  %v8767 = vunpack.c.l.b16 %v7428
  %v8768 = vunpack.c.l.b16 %v7429
  %v8769 = vunpack.c.h.b16 %v7429
  %v8770 = vunpack.c.l.b16 %v7430
  %v8771 = vunpack.c.l.b16 %v7431
  %v8772 = vunpack.c.h.b16 %v7431
  %v8773 = vunpack.c.l.b16 %v7432
  %v8774 = vunpack.c.l.b16 %v7433
  %v8775 = vunpack.c.h.b16 %v7433
  %v8776 = vunpack.c.l.b16 %v7434
  %v8777 = vunpack.c.l.b16 %v7435
  %v8778 = vunpack.c.h.b16 %v7435
  %v8779 = vunpack.c.l.b16 %v7436
  %v8780 = vunpack.c.l.b16 %v7437
  %v8781 = vunpack.c.h.b16 %v7437
  %v8782 = vunpack.c.l.b16 %v7438
  %v8783 = vunpack.c.l.b16 %v7439
  %v8784 = vunpack.c.h.b16 %v7439
  %v8785 = vunpack.c.l.b16 %v7440
  %v8786 = vunpack.c.l.b16 %v7441
  %v8787 = vunpack.c.h.b16 %v7441
  %v8788 = vunpack.c.l.b16 %v7442
  %v8789 = vunpack.c.l.b16 %v7443
  %v8790 = vunpack.c.h.b16 %v7443
  %v8791 = vunpack.c.l.b16 %v7444
  %v8792 = vunpack.c.l.b16 %v7445
  %v8793 = vunpack.c.h.b16 %v7445
  %v8794 = vunpack.c.l.b16 %v7446
  %v8795 = vunpack.c.l.b16 %v7447
  %v8796 = vunpack.c.h.b16 %v7447
  %v8797 = vunpack.c.l.b16 %v7448
  %v8798 = vunpack.c.l.b16 %v7449
  %v8799 = vunpack.c.h.b16 %v7449
  %v8800 = vunpack.c.l.b16 %v7450
  %v8801 = vunpack.c.l.b16 %v7451
  %v8802 = vunpack.c.h.b16 %v7451
  %v8803 = vunpack.c.l.b16 %v7452
  %v8804 = vunpack.c.l.b16 %v7453
  %v8805 = vunpack.c.h.b16 %v7453
  %v8806 = vunpack.c.l.b16 %v7454
  %v8807 = vunpack.c.l.b16 %v7455
  %v8808 = vunpack.c.h.b16 %v7455
  %v8809 = vunpack.c.l.b16 %v7456
  %v8810 = vunpack.c.l.b16 %v7457
  %v8811 = vunpack.c.h.b16 %v7457
  %v8812 = vunpack.c.l.b16 %v7458
  %v8813 = vunpack.c.l.b16 %v7459
  %v8814 = vunpack.c.h.b16 %v7459
  %v8815 = vunpack.c.l.b16 %v7460
  %v8816 = vunpack.c.l.b16 %v7461
  %v8817 = vunpack.c.h.b16 %v7461
  %v8818 = vunpack.c.l.b16 %v7462
  %v8819 = vunpack.c.l.b16 %v7463
  %v8820 = vunpack.c.h.b16 %v7463
  %v8821 = vunpack.c.l.b16 %v7464
  %v8822 = vunpack.c.l.b16 %v7465
  %v8823 = vunpack.c.h.b16 %v7465
  %v8824 = vunpack.c.l.b16 %v7466
  %v8825 = vunpack.c.l.b16 %v7467
  %v8826 = vunpack.c.h.b16 %v7467
  %v8827 = vunpack.c.l.b16 %v7468
  %v8828 = vunpack.c.l.b16 %v7469
  %v8829 = vunpack.c.h.b16 %v7469
  %v8830 = vunpack.c.l.b16 %v7470
  %v8831 = vunpack.c.l.b16 %v7471
  %v8832 = vunpack.c.h.b16 %v7471
  %v8833 = vunpack.c.l.b16 %v7472
  %v8834 = vunpack.c.l.b16 %v7473
  %v8835 = vunpack.c.h.b16 %v7473
  %v8836 = vunpack.c.l.b16 %v7474
  %v8837 = vunpack.c.l.b16 %v7475
  %v8838 = vunpack.c.h.b16 %v7475
  %v8839 = vunpack.c.l.b16 %v7476
  %v8840 = vunpack.c.l.b16 %v7477
  %v8841 = vunpack.c.h.b16 %v7477
  %v8842 = vunpack.c.l.b16 %v7478
  %v8843 = vunpack.c.l.b16 %v7479
  %v8844 = vunpack.c.h.b16 %v7479
  %v8845 = vunpack.c.l.b16 %v7480
  %v8846 = vunpack.c.l.b16 %v7481
  %v8847 = vunpack.c.h.b16 %v7481
  %v8848 = vunpack.c.l.b16 %v7482
  %v8849 = vunpack.c.l.b16 %v7483
  %v8850 = vunpack.c.h.b16 %v7483
  %v8851 = vunpack.c.l.b16 %v7484
  %v8852 = vunpack.c.l.b16 %v7485
  %v8853 = vunpack.c.h.b16 %v7485
  %v8854 = vunpack.c.l.b16 %v7486
  %v8855 = vunpack.c.l.b16 %v7487
  %v8856 = vunpack.c.h.b16 %v7487
  %v8857 = vunpack.c.l.b16 %v7488
  %v8858 = vunpack.c.l.b16 %v7489
  %v8859 = vunpack.c.h.b16 %v7489
  %v8860 = vunpack.c.l.b16 %v7490
  %v8861 = vunpack.c.l.b16 %v7491
  %v8862 = vunpack.c.h.b16 %v7491
  %v8863 = vunpack.c.l.b16 %v7492
  %v8864 = vunpack.c.l.b16 %v7493
  %v8865 = vunpack.c.h.b16 %v7493
  %v8866 = vunpack.c.l.b16 %v7494
  %v8867 = vunpack.c.l.b16 %v7495
  %v8868 = vunpack.c.h.b16 %v7495
  %v8869 = vunpack.c.l.b16 %v7496
  %v8870 = vunpack.c.l.b16 %v7497
  %v8871 = vunpack.c.h.b16 %v7497
  %v8872 = vunpack.c.l.b16 %v7498
  %v8873 = vunpack.c.l.b16 %v7499
  %v8874 = vunpack.c.h.b16 %v7499
  %v8875 = vunpack.c.l.b16 %v7500
  %v8876 = vunpack.c.l.b16 %v7501
  %v8877 = vunpack.c.h.b16 %v7501
  %v8878 = vunpack.c.l.b16 %v7502
  %v8879 = vunpack.c.l.b16 %v7503
  %v8880 = vunpack.c.h.b16 %v7503
  %v8881 = vunpack.c.l.b16 %v7504
  %v8882 = vunpack.c.l.b16 %v7505
  %v8883 = vunpack.c.h.b16 %v7505
  %v8884 = vunpack.c.l.b16 %v7506
  %v8885 = vunpack.c.l.b16 %v7507
  %v8886 = vunpack.c.h.b16 %v7507
  %v8887 = vunpack.c.l.b16 %v7508
  %v8888 = vunpack.c.l.b16 %v7509
  %v8889 = vunpack.c.h.b16 %v7509
  %v8890 = vunpack.c.l.b16 %v7510
  %v8891 = vunpack.c.l.b16 %v7511
  %v8892 = vunpack.c.h.b16 %v7511
  %v8893 = vunpack.c.l.b16 %v7512
  %v8894 = vunpack.c.l.b16 %v7513
  %v8895 = vunpack.c.h.b16 %v7513
  %v8896 = vunpack.c.l.b16 %v7514
  %v8897 = vunpack.c.l.b16 %v7515
  %v8898 = vunpack.c.h.b16 %v7515
  %v8899 = vunpack.c.l.b16 %v7516
  %v8900 = vunpack.c.l.b16 %v7517
  %v8901 = vunpack.c.h.b16 %v7517
  %v8902 = vunpack.c.l.b16 %v7518
  %v8903 = vunpack.c.l.b16 %v7519
  %v8904 = vunpack.c.h.b16 %v7519
  %v8905 = vunpack.c.l.b16 %v7520
  %v8906 = vunpack.c.l.b16 %v7521
  %v8907 = vunpack.c.h.b16 %v7521
  %v8908 = vunpack.c.l.b16 %v7522
  %v8909 = vunpack.c.l.b16 %v7523
  %v8910 = vunpack.c.h.b16 %v7523
  %v8911 = vunpack.c.l.b16 %v7524
  %v8912 = vunpack.c.l.b16 %v7525
  %v8913 = vunpack.c.h.b16 %v7525
  %v8914 = vunpack.c.l.b16 %v7526
  %v8915 = vunpack.c.l.b16 %v7527
  %v8916 = vunpack.c.h.b16 %v7527
  %v8917 = vunpack.c.l.b16 %v7528
  %v8918 = vunpack.c.l.b16 %v7529
  %v8919 = vunpack.c.h.b16 %v7529
  %v8920 = vunpack.c.l.b16 %v7530
  %v8921 = vunpack.c.l.b16 %v7531
  %v8922 = vunpack.c.h.b16 %v7531
  %v8923 = vunpack.c.l.b16 %v7532
  %v8924 = vunpack.c.l.b16 %v7533
  %v8925 = vunpack.c.h.b16 %v7533
  %v8926 = vunpack.c.l.b16 %v7534
  %v8927 = vunpack.c.l.b16 %v7535
  %v8928 = vunpack.c.h.b16 %v7535
  %v8929 = vunpack.c.l.b16 %v7536
  %v8930 = vunpack.c.l.b16 %v7537
  %v8931 = vunpack.c.h.b16 %v7537
  %v8932 = vunpack.c.l.b16 %v7538
  %v8933 = vunpack.c.l.b16 %v7539
  %v8934 = vunpack.c.h.b16 %v7539
  %v8935 = vunpack.c.l.b16 %v7540
  %v8936 = vunpack.c.l.b16 %v7541
  %v8937 = vunpack.c.h.b16 %v7541
  %v8938 = vunpack.c.l.b16 %v7542
  %v8939 = vunpack.c.l.b16 %v7543
  %v8940 = vunpack.c.h.b16 %v7543
  %v8941 = vunpack.c.l.b16 %v7544
  %v8942 = vunpack.c.l.b16 %v7545
  %v8943 = vunpack.c.h.b16 %v7545
  %v8944 = vunpack.c.l.b16 %v7546
  %v8945 = vunpack.c.l.b16 %v7547
  %v8946 = vunpack.c.h.b16 %v7547
  %v8947 = vunpack.c.l.b16 %v7548
  %v8948 = vunpack.c.l.b16 %v7549
  %v8949 = vunpack.c.h.b16 %v7549
  %v8950 = vunpack.c.l.b16 %v7550
  %v8951 = vunpack.c.l.b16 %v7551
  %v8952 = vunpack.c.h.b16 %v7551
  %v8953 = vunpack.c.l.b16 %v7552
  %v8954 = vunpack.c.l.b16 %v7553
  %v8955 = vunpack.c.h.b16 %v7553
  %v8956 = vunpack.c.l.b16 %v7554
  %v8957 = vunpack.c.l.b16 %v7555
  %v8958 = vunpack.c.h.b16 %v7555
  %v8959 = vunpack.c.l.b16 %v7556
  %v8960 = vunpack.c.l.b16 %v7557
  %v8961 = vunpack.c.h.b16 %v7557
  %v8962 = vunpack.c.l.b16 %v7558
  %v8963 = vunpack.c.l.b16 %v7559
  %v8964 = vunpack.c.h.b16 %v7559
  %v8965 = vunpack.c.l.b16 %v7560
  %v8966 = vunpack.c.l.b16 %v7561
  %v8967 = vunpack.c.h.b16 %v7561
  %v8968 = vunpack.c.l.b16 %v7562
  %v8969 = vunpack.c.l.b16 %v7563
  %v8970 = vunpack.c.h.b16 %v7563
  %v8971 = vunpack.c.l.b16 %v7564
  %v8972 = vunpack.c.l.b16 %v7565
  %v8973 = vunpack.c.h.b16 %v7565
  %v8974 = vunpack.c.l.b16 %v7566
  %v8975 = vpack.c.b16 %v8594, %v8591
  %v8976 = vpack.c.b16 %v8595, %v8592
  %v8977 = vpack.c.b16 %v8596, %v8593
  %v8978 = vpack.c.b16 %v8600, %v8597
  %v8979 = vpack.c.b16 %v8601, %v8598
  %v8980 = vpack.c.b16 %v8602, %v8599
  %v8981 = vpack.c.b16 %v8606, %v8603
  %v8982 = vpack.c.b16 %v8607, %v8604
  %v8983 = vpack.c.b16 %v8608, %v8605
  %v8984 = vpack.c.b16 %v8612, %v8609
  %v8985 = vpack.c.b16 %v8613, %v8610
  %v8986 = vpack.c.b16 %v8614, %v8611
  %v8987 = vpack.c.b16 %v8618, %v8615
  %v8988 = vpack.c.b16 %v8619, %v8616
  %v8989 = vpack.c.b16 %v8620, %v8617
  %v8990 = vpack.c.b16 %v8624, %v8621
  %v8991 = vpack.c.b16 %v8625, %v8622
  %v8992 = vpack.c.b16 %v8626, %v8623
  %v8993 = vpack.c.b16 %v8630, %v8627
  %v8994 = vpack.c.b16 %v8631, %v8628
  %v8995 = vpack.c.b16 %v8632, %v8629
  %v8996 = vpack.c.b16 %v8636, %v8633
  %v8997 = vpack.c.b16 %v8637, %v8634
  %v8998 = vpack.c.b16 %v8638, %v8635
  %v8999 = vpack.c.b16 %v8642, %v8639
  %v9000 = vpack.c.b16 %v8643, %v8640
  %v9001 = vpack.c.b16 %v8644, %v8641
  %v9002 = vpack.c.b16 %v8648, %v8645
  %v9003 = vpack.c.b16 %v8649, %v8646
  %v9004 = vpack.c.b16 %v8650, %v8647
  %v9005 = vpack.c.b16 %v8654, %v8651
  %v9006 = vpack.c.b16 %v8655, %v8652
  %v9007 = vpack.c.b16 %v8656, %v8653
  %v9008 = vpack.c.b16 %v8660, %v8657
  %v9009 = vpack.c.b16 %v8661, %v8658
  %v9010 = vpack.c.b16 %v8662, %v8659
  %v9011 = vpack.c.b16 %v8666, %v8663
  %v9012 = vpack.c.b16 %v8667, %v8664
  %v9013 = vpack.c.b16 %v8668, %v8665
  %v9014 = vpack.c.b16 %v8672, %v8669
  %v9015 = vpack.c.b16 %v8673, %v8670
  %v9016 = vpack.c.b16 %v8674, %v8671
  %v9017 = vpack.c.b16 %v8678, %v8675
  %v9018 = vpack.c.b16 %v8679, %v8676
  %v9019 = vpack.c.b16 %v8680, %v8677
  %v9020 = vpack.c.b16 %v8684, %v8681
  %v9021 = vpack.c.b16 %v8685, %v8682
  %v9022 = vpack.c.b16 %v8686, %v8683
  %v9023 = vpack.c.b16 %v8690, %v8687
  %v9024 = vpack.c.b16 %v8691, %v8688
  %v9025 = vpack.c.b16 %v8692, %v8689
  %v9026 = vpack.c.b16 %v8696, %v8693
  %v9027 = vpack.c.b16 %v8697, %v8694
  %v9028 = vpack.c.b16 %v8698, %v8695
  %v9029 = vpack.c.b16 %v8702, %v8699
  %v9030 = vpack.c.b16 %v8703, %v8700
  %v9031 = vpack.c.b16 %v8704, %v8701
  %v9032 = vpack.c.b16 %v8708, %v8705
  %v9033 = vpack.c.b16 %v8709, %v8706
  %v9034 = vpack.c.b16 %v8710, %v8707
  %v9035 = vpack.c.b16 %v8714, %v8711
  %v9036 = vpack.c.b16 %v8715, %v8712
  %v9037 = vpack.c.b16 %v8716, %v8713
  %v9038 = vpack.c.b16 %v8720, %v8717
  %v9039 = vpack.c.b16 %v8721, %v8718
  %v9040 = vpack.c.b16 %v8722, %v8719
  %v9041 = vpack.c.b16 %v8726, %v8723
  %v9042 = vpack.c.b16 %v8727, %v8724
  %v9043 = vpack.c.b16 %v8728, %v8725
  %v9044 = vpack.c.b16 %v8732, %v8729
  %v9045 = vpack.c.b16 %v8733, %v8730
  %v9046 = vpack.c.b16 %v8734, %v8731
  %v9047 = vpack.c.b16 %v8738, %v8735
  %v9048 = vpack.c.b16 %v8739, %v8736
  %v9049 = vpack.c.b16 %v8740, %v8737
  %v9050 = vpack.c.b16 %v8744, %v8741
  %v9051 = vpack.c.b16 %v8745, %v8742
  %v9052 = vpack.c.b16 %v8746, %v8743
  %v9053 = vpack.c.b16 %v8750, %v8747
  %v9054 = vpack.c.b16 %v8751, %v8748
  %v9055 = vpack.c.b16 %v8752, %v8749
  %v9056 = vpack.c.b16 %v8756, %v8753
  %v9057 = vpack.c.b16 %v8757, %v8754
  %v9058 = vpack.c.b16 %v8758, %v8755
  %v9059 = vpack.c.b16 %v8762, %v8759
  %v9060 = vpack.c.b16 %v8763, %v8760
  %v9061 = vpack.c.b16 %v8764, %v8761
  %v9062 = vpack.c.b16 %v8768, %v8765
  %v9063 = vpack.c.b16 %v8769, %v8766
  %v9064 = vpack.c.b16 %v8770, %v8767
  %v9065 = vpack.c.b16 %v8774, %v8771
  %v9066 = vpack.c.b16 %v8775, %v8772
  %v9067 = vpack.c.b16 %v8776, %v8773
  %v9068 = vpack.c.b16 %v8780, %v8777
  %v9069 = vpack.c.b16 %v8781, %v8778
  %v9070 = vpack.c.b16 %v8782, %v8779
  %v9071 = vpack.c.b16 %v8786, %v8783
  %v9072 = vpack.c.b16 %v8787, %v8784
  %v9073 = vpack.c.b16 %v8788, %v8785
  %v9074 = vpack.c.b16 %v8792, %v8789
  %v9075 = vpack.c.b16 %v8793, %v8790
  %v9076 = vpack.c.b16 %v8794, %v8791
  %v9077 = vpack.c.b16 %v8798, %v8795
  %v9078 = vpack.c.b16 %v8799, %v8796
  %v9079 = vpack.c.b16 %v8800, %v8797
  %v9080 = vpack.c.b16 %v8804, %v8801
  %v9081 = vpack.c.b16 %v8805, %v8802
  %v9082 = vpack.c.b16 %v8806, %v8803
  %v9083 = vpack.c.b16 %v8810, %v8807
  %v9084 = vpack.c.b16 %v8811, %v8808
  %v9085 = vpack.c.b16 %v8812, %v8809
  %v9086 = vpack.c.b16 %v8816, %v8813
  %v9087 = vpack.c.b16 %v8817, %v8814
  %v9088 = vpack.c.b16 %v8818, %v8815
  %v9089 = vpack.c.b16 %v8822, %v8819
  %v9090 = vpack.c.b16 %v8823, %v8820
  %v9091 = vpack.c.b16 %v8824, %v8821
  %v9092 = vpack.c.b16 %v8828, %v8825
  %v9093 = vpack.c.b16 %v8829, %v8826
  %v9094 = vpack.c.b16 %v8830, %v8827
  %v9095 = vpack.c.b16 %v8834, %v8831
  %v9096 = vpack.c.b16 %v8835, %v8832
  %v9097 = vpack.c.b16 %v8836, %v8833
  %v9098 = vpack.c.b16 %v8840, %v8837
  %v9099 = vpack.c.b16 %v8841, %v8838
  %v9100 = vpack.c.b16 %v8842, %v8839
  %v9101 = vpack.c.b16 %v8846, %v8843
  %v9102 = vpack.c.b16 %v8847, %v8844
  %v9103 = vpack.c.b16 %v8848, %v8845
  %v9104 = vpack.c.b16 %v8852, %v8849
  %v9105 = vpack.c.b16 %v8853, %v8850
  %v9106 = vpack.c.b16 %v8854, %v8851
  %v9107 = vpack.c.b16 %v8858, %v8855
  %v9108 = vpack.c.b16 %v8859, %v8856
  %v9109 = vpack.c.b16 %v8860, %v8857
  %v9110 = vpack.c.b16 %v8864, %v8861
  %v9111 = vpack.c.b16 %v8865, %v8862
  %v9112 = vpack.c.b16 %v8866, %v8863
  %v9113 = vpack.c.b16 %v8870, %v8867
  %v9114 = vpack.c.b16 %v8871, %v8868
  %v9115 = vpack.c.b16 %v8872, %v8869
  %v9116 = vpack.c.b16 %v8876, %v8873
  %v9117 = vpack.c.b16 %v8877, %v8874
  %v9118 = vpack.c.b16 %v8878, %v8875
  %v9119 = vpack.c.b16 %v8882, %v8879
  %v9120 = vpack.c.b16 %v8883, %v8880
  %v9121 = vpack.c.b16 %v8884, %v8881
  %v9122 = vpack.c.b16 %v8888, %v8885
  %v9123 = vpack.c.b16 %v8889, %v8886
  %v9124 = vpack.c.b16 %v8890, %v8887
  %v9125 = vpack.c.b16 %v8894, %v8891
  %v9126 = vpack.c.b16 %v8895, %v8892
  %v9127 = vpack.c.b16 %v8896, %v8893
  %v9128 = vpack.c.b16 %v8900, %v8897
  %v9129 = vpack.c.b16 %v8901, %v8898
  %v9130 = vpack.c.b16 %v8902, %v8899
  %v9131 = vpack.c.b16 %v8906, %v8903
  %v9132 = vpack.c.b16 %v8907, %v8904
  %v9133 = vpack.c.b16 %v8908, %v8905
  %v9134 = vpack.c.b16 %v8912, %v8909
  %v9135 = vpack.c.b16 %v8913, %v8910
  %v9136 = vpack.c.b16 %v8914, %v8911
  %v9137 = vpack.c.b16 %v8918, %v8915
  %v9138 = vpack.c.b16 %v8919, %v8916
  %v9139 = vpack.c.b16 %v8920, %v8917
  %v9140 = vpack.c.b16 %v8924, %v8921
  %v9141 = vpack.c.b16 %v8925, %v8922
  %v9142 = vpack.c.b16 %v8926, %v8923
  %v9143 = vpack.c.b16 %v8930, %v8927
  %v9144 = vpack.c.b16 %v8931, %v8928
  %v9145 = vpack.c.b16 %v8932, %v8929
  %v9146 = vpack.c.b16 %v8936, %v8933
  %v9147 = vpack.c.b16 %v8937, %v8934
  %v9148 = vpack.c.b16 %v8938, %v8935
  %v9149 = vpack.c.b16 %v8942, %v8939
  %v9150 = vpack.c.b16 %v8943, %v8940
  %v9151 = vpack.c.b16 %v8944, %v8941
  %v9152 = vpack.c.b16 %v8948, %v8945
  %v9153 = vpack.c.b16 %v8949, %v8946
  %v9154 = vpack.c.b16 %v8950, %v8947
  %v9155 = vpack.c.b16 %v8954, %v8951
  %v9156 = vpack.c.b16 %v8955, %v8952
  %v9157 = vpack.c.b16 %v8956, %v8953
  %v9158 = vpack.c.b16 %v8960, %v8957
  %v9159 = vpack.c.b16 %v8961, %v8958
  %v9160 = vpack.c.b16 %v8962, %v8959
  %v9161 = vpack.c.b16 %v8966, %v8963
  %v9162 = vpack.c.b16 %v8967, %v8964
  %v9163 = vpack.c.b16 %v8968, %v8965
  %v9164 = vpack.c.b16 %v8972, %v8969
  %v9165 = vpack.c.b16 %v8973, %v8970
  %v9166 = vpack.c.b16 %v8974, %v8971
  %vm9295 = vcmask 261120
  %v9297 = vsel %vm9295, %v8977, 0
  %v9300 = vsel %vm9295, %v8980, 0
  %v9303 = vsel %vm9295, %v8983, 0
  %v9306 = vsel %vm9295, %v8986, 0
  %v9309 = vsel %vm9295, %v8989, 0
  %v9312 = vsel %vm9295, %v8992, 0
  %v9315 = vsel %vm9295, %v8995, 0
  %v9318 = vsel %vm9295, %v8998, 0
  %v9321 = vsel %vm9295, %v9001, 0
  %v9324 = vsel %vm9295, %v9004, 0
  %v9327 = vsel %vm9295, %v9007, 0
  %v9330 = vsel %vm9295, %v9010, 0
  %v9333 = vsel %vm9295, %v9013, 0
  %v9336 = vsel %vm9295, %v9016, 0
  %v9339 = vsel %vm9295, %v9019, 0
  %v9342 = vsel %vm9295, %v9022, 0
  %v9345 = vsel %vm9295, %v9025, 0
  %v9348 = vsel %vm9295, %v9028, 0
  %v9351 = vsel %vm9295, %v9031, 0
  %v9354 = vsel %vm9295, %v9034, 0
  %v9357 = vsel %vm9295, %v9037, 0
  %v9360 = vsel %vm9295, %v9040, 0
  %v9363 = vsel %vm9295, %v9043, 0
  %v9366 = vsel %vm9295, %v9046, 0
  %v9369 = vsel %vm9295, %v9049, 0
  %v9372 = vsel %vm9295, %v9052, 0
  %v9375 = vsel %vm9295, %v9055, 0
  %v9378 = vsel %vm9295, %v9058, 0
  %v9381 = vsel %vm9295, %v9061, 0
  %v9384 = vsel %vm9295, %v9064, 0
  %v9387 = vsel %vm9295, %v9067, 0
  %v9390 = vsel %vm9295, %v9070, 0
  %v9393 = vsel %vm9295, %v9073, 0
  %v9396 = vsel %vm9295, %v9076, 0
  %v9399 = vsel %vm9295, %v9079, 0
  %v9402 = vsel %vm9295, %v9082, 0
  %v9405 = vsel %vm9295, %v9085, 0
  %v9408 = vsel %vm9295, %v9088, 0
  %v9411 = vsel %vm9295, %v9091, 0
  %v9414 = vsel %vm9295, %v9094, 0
  %v9417 = vsel %vm9295, %v9097, 0
  %v9420 = vsel %vm9295, %v9100, 0
  %v9423 = vsel %vm9295, %v9103, 0
  %v9426 = vsel %vm9295, %v9106, 0
  %v9429 = vsel %vm9295, %v9109, 0
  %v9432 = vsel %vm9295, %v9112, 0
  %v9435 = vsel %vm9295, %v9115, 0
  %v9438 = vsel %vm9295, %v9118, 0
  %v9441 = vsel %vm9295, %v9121, 0
  %v9444 = vsel %vm9295, %v9124, 0
  %v9447 = vsel %vm9295, %v9127, 0
  %v9450 = vsel %vm9295, %v9130, 0
  %v9453 = vsel %vm9295, %v9133, 0
  %v9456 = vsel %vm9295, %v9136, 0
  %v9459 = vsel %vm9295, %v9139, 0
  %v9462 = vsel %vm9295, %v9142, 0
  %v9465 = vsel %vm9295, %v9145, 0
  %v9468 = vsel %vm9295, %v9148, 0
  %v9471 = vsel %vm9295, %v9151, 0
  %v9474 = vsel %vm9295, %v9154, 0
  %v9477 = vsel %vm9295, %v9157, 0
  %v9480 = vsel %vm9295, %v9160, 0
  %v9483 = vsel %vm9295, %v9163, 0
  %v9486 = vsel %vm9295, %v9166, 0
  %9488 = vmatprep.subr.bf16.mxu0 0
  %9489 = vmatpush1.bf16.msra.mxu0 %v7300
  %9490 = vmatprep.subr.bf16.mxu0 0
  %9491 = vmatpush1.bf16.msra.mxu0 %v7299
  %9492 = vmatprep.subr.bf16.mxu0 0
  %9493 = vmatpush1.bf16.msra.mxu0 %v7298
  %9494 = vmatprep.subr.bf16.mxu0 0
  %9495 = vmatpush1.bf16.msra.mxu0 %v7297
  %9496 = vmatprep.subr.bf16.mxu0 0
  %9497 = vmatpush1.bf16.msra.mxu0 %v7296
  %9498 = vmatprep.subr.bf16.mxu0 0
  %9499 = vmatpush1.bf16.msra.mxu0 %v7295
  %9500 = vmatprep.subr.bf16.mxu0 0
  %9501 = vmatpush1.bf16.msra.mxu0 %v7294
  %9502 = vmatprep.subr.bf16.mxu0 0
  %9503 = vmatpush1.bf16.msra.mxu0 %v7293
  %9504 = vmatprep.subr.bf16.mxu0 0
  %9505 = vmatpush2.bf16.msra.mxu0 %v7308
  %9506 = vmatprep.subr.bf16.mxu0 0
  %9507 = vmatpush2.bf16.msra.mxu0 %v7307
  %9508 = vmatprep.subr.bf16.mxu0 0
  %9509 = vmatpush2.bf16.msra.mxu0 %v7306
  %9510 = vmatprep.subr.bf16.mxu0 0
  %9511 = vmatpush2.bf16.msra.mxu0 %v7305
  %9512 = vmatprep.subr.bf16.mxu0 0
  %9513 = vmatpush2.bf16.msra.mxu0 %v7304
  %9514 = vmatprep.subr.bf16.mxu0 0
  %9515 = vmatpush2.bf16.msra.mxu0 %v7303
  %9516 = vmatprep.subr.bf16.mxu0 0
  %9517 = vmatpush2.bf16.msra.mxu0 %v7302
  %9518 = vmatprep.subr.bf16.mxu0 0
  %9519 = vmatpush2.bf16.msra.mxu0 %v7301
  %9520 = vmatprep.mubr.bf16.mxu0 %v8976
  %9521 = vmatmul.mubr.bf16.gmra.mxu0 %v8975
  %v9522 = vpop.f32.mrf.mxu0
  %v9523 = vadd.f32 %v7698, %v9522
  %v9524 = vpop.f32.mrf.mxu0
  %v9525 = vpop.f32.mrf.mxu0
  %v9526 = vadd.f32 %v7703, %v9525
  %v9527 = vpop.f32.mrf.mxu0
  %9528 = vmatprep.mubr.bf16.mxu0 %v8979
  %9529 = vmatmul.mubr.bf16.gmra.mxu0 %v8978
  %v9530 = vpop.f32.mrf.mxu0
  %v9531 = vadd.f32 %v7708, %v9530
  %v9532 = vpop.f32.mrf.mxu0
  %v9533 = vpop.f32.mrf.mxu0
  %v9534 = vadd.f32 %v7713, %v9533
  %v9535 = vpop.f32.mrf.mxu0
  %9536 = vmatprep.mubr.bf16.mxu0 %v8982
  %9537 = vmatmul.mubr.bf16.gmra.mxu0 %v8981
  %v9538 = vpop.f32.mrf.mxu0
  %v9539 = vadd.f32 %v7718, %v9538
  %v9540 = vpop.f32.mrf.mxu0
  %v9541 = vpop.f32.mrf.mxu0
  %v9542 = vadd.f32 %v7723, %v9541
  %v9543 = vpop.f32.mrf.mxu0
  %9544 = vmatprep.mubr.bf16.mxu0 %v8985
  %9545 = vmatmul.mubr.bf16.gmra.mxu0 %v8984
  %v9546 = vpop.f32.mrf.mxu0
  %v9547 = vadd.f32 %v7728, %v9546
  %v9548 = vpop.f32.mrf.mxu0
  %v9549 = vpop.f32.mrf.mxu0
  %v9550 = vadd.f32 %v7733, %v9549
  %v9551 = vpop.f32.mrf.mxu0
  %9552 = vmatprep.mubr.bf16.mxu0 %v8988
  %9553 = vmatmul.mubr.bf16.gmra.mxu0 %v8987
  %v9554 = vpop.f32.mrf.mxu0
  %v9555 = vadd.f32 %v7738, %v9554
  %v9556 = vpop.f32.mrf.mxu0
  %v9557 = vpop.f32.mrf.mxu0
  %v9558 = vadd.f32 %v7743, %v9557
  %v9559 = vpop.f32.mrf.mxu0
  %9560 = vmatprep.mubr.bf16.mxu0 %v8991
  %9561 = vmatmul.mubr.bf16.gmra.mxu0 %v8990
  %v9562 = vpop.f32.mrf.mxu0
  %v9563 = vadd.f32 %v7748, %v9562
  %v9564 = vpop.f32.mrf.mxu0
  %v9565 = vpop.f32.mrf.mxu0
  %v9566 = vadd.f32 %v7753, %v9565
  %v9567 = vpop.f32.mrf.mxu0
  %9568 = vmatprep.mubr.bf16.mxu0 %v8994
  %9569 = vmatmul.mubr.bf16.gmra.mxu0 %v8993
  %v9570 = vpop.f32.mrf.mxu0
  %v9571 = vadd.f32 %v7758, %v9570
  %v9572 = vpop.f32.mrf.mxu0
  %v9573 = vpop.f32.mrf.mxu0
  %v9574 = vadd.f32 %v7763, %v9573
  %v9575 = vpop.f32.mrf.mxu0
  %9576 = vmatprep.mubr.bf16.mxu0 %v8997
  %9577 = vmatmul.mubr.bf16.gmra.mxu0 %v8996
  %v9578 = vpop.f32.mrf.mxu0
  %v9579 = vadd.f32 %v7768, %v9578
  %v9580 = vpop.f32.mrf.mxu0
  %v9581 = vpop.f32.mrf.mxu0
  %v9582 = vadd.f32 %v7773, %v9581
  %v9583 = vpop.f32.mrf.mxu0
  %9584 = vmatprep.mubr.bf16.mxu0 %v9000
  %9585 = vmatmul.mubr.bf16.gmra.mxu0 %v8999
  %v9586 = vpop.f32.mrf.mxu0
  %v9587 = vadd.f32 %v7778, %v9586
  %v9588 = vpop.f32.mrf.mxu0
  %v9589 = vpop.f32.mrf.mxu0
  %v9590 = vadd.f32 %v7783, %v9589
  %v9591 = vpop.f32.mrf.mxu0
  %9592 = vmatprep.mubr.bf16.mxu0 %v9003
  %9593 = vmatmul.mubr.bf16.gmra.mxu0 %v9002
  %v9594 = vpop.f32.mrf.mxu0
  %v9595 = vadd.f32 %v7788, %v9594
  %v9596 = vpop.f32.mrf.mxu0
  %v9597 = vpop.f32.mrf.mxu0
  %v9598 = vadd.f32 %v7793, %v9597
  %v9599 = vpop.f32.mrf.mxu0
  %9600 = vmatprep.mubr.bf16.mxu0 %v9006
  %9601 = vmatmul.mubr.bf16.gmra.mxu0 %v9005
  %v9602 = vpop.f32.mrf.mxu0
  %v9603 = vadd.f32 %v7798, %v9602
  %v9604 = vpop.f32.mrf.mxu0
  %v9605 = vpop.f32.mrf.mxu0
  %v9606 = vadd.f32 %v7803, %v9605
  %v9607 = vpop.f32.mrf.mxu0
  %9608 = vmatprep.mubr.bf16.mxu0 %v9009
  %9609 = vmatmul.mubr.bf16.gmra.mxu0 %v9008
  %v9610 = vpop.f32.mrf.mxu0
  %v9611 = vadd.f32 %v7808, %v9610
  %v9612 = vpop.f32.mrf.mxu0
  %v9613 = vpop.f32.mrf.mxu0
  %v9614 = vadd.f32 %v7813, %v9613
  %v9615 = vpop.f32.mrf.mxu0
  %9616 = vmatprep.mubr.bf16.mxu0 %v9012
  %9617 = vmatmul.mubr.bf16.gmra.mxu0 %v9011
  %v9618 = vpop.f32.mrf.mxu0
  %v9619 = vadd.f32 %v7818, %v9618
  %v9620 = vpop.f32.mrf.mxu0
  %v9621 = vpop.f32.mrf.mxu0
  %v9622 = vadd.f32 %v7823, %v9621
  %v9623 = vpop.f32.mrf.mxu0
  %9624 = vmatprep.mubr.bf16.mxu0 %v9015
  %9625 = vmatmul.mubr.bf16.gmra.mxu0 %v9014
  %v9626 = vpop.f32.mrf.mxu0
  %v9627 = vadd.f32 %v7828, %v9626
  %v9628 = vpop.f32.mrf.mxu0
  %v9629 = vpop.f32.mrf.mxu0
  %v9630 = vadd.f32 %v7833, %v9629
  %v9631 = vpop.f32.mrf.mxu0
  %9632 = vmatprep.mubr.bf16.mxu0 %v9018
  %9633 = vmatmul.mubr.bf16.gmra.mxu0 %v9017
  %v9634 = vpop.f32.mrf.mxu0
  %v9635 = vadd.f32 %v7838, %v9634
  %v9636 = vpop.f32.mrf.mxu0
  %v9637 = vpop.f32.mrf.mxu0
  %v9638 = vadd.f32 %v7843, %v9637
  %v9639 = vpop.f32.mrf.mxu0
  %9640 = vmatprep.mubr.bf16.mxu0 %v9021
  %9641 = vmatmul.mubr.bf16.gmra.mxu0 %v9020
  %v9642 = vpop.f32.mrf.mxu0
  %v9643 = vadd.f32 %v7848, %v9642
  %v9644 = vpop.f32.mrf.mxu0
  %v9645 = vpop.f32.mrf.mxu0
  %v9646 = vadd.f32 %v7853, %v9645
  %v9647 = vpop.f32.mrf.mxu0
  %9648 = vmatprep.mubr.bf16.mxu0 %v9024
  %9649 = vmatmul.mubr.bf16.gmra.mxu0 %v9023
  %v9650 = vpop.f32.mrf.mxu0
  %v9651 = vadd.f32 %v7858, %v9650
  %v9652 = vpop.f32.mrf.mxu0
  %v9653 = vpop.f32.mrf.mxu0
  %v9654 = vadd.f32 %v7863, %v9653
  %v9655 = vpop.f32.mrf.mxu0
  %9656 = vmatprep.mubr.bf16.mxu0 %v9027
  %9657 = vmatmul.mubr.bf16.gmra.mxu0 %v9026
  %v9658 = vpop.f32.mrf.mxu0
  %v9659 = vadd.f32 %v7868, %v9658
  %v9660 = vpop.f32.mrf.mxu0
  %v9661 = vpop.f32.mrf.mxu0
  %v9662 = vadd.f32 %v7873, %v9661
  %v9663 = vpop.f32.mrf.mxu0
  %9664 = vmatprep.mubr.bf16.mxu0 %v9030
  %9665 = vmatmul.mubr.bf16.gmra.mxu0 %v9029
  %v9666 = vpop.f32.mrf.mxu0
  %v9667 = vadd.f32 %v7878, %v9666
  %v9668 = vpop.f32.mrf.mxu0
  %v9669 = vpop.f32.mrf.mxu0
  %v9670 = vadd.f32 %v7883, %v9669
  %v9671 = vpop.f32.mrf.mxu0
  %9672 = vmatprep.mubr.bf16.mxu0 %v9033
  %9673 = vmatmul.mubr.bf16.gmra.mxu0 %v9032
  %v9674 = vpop.f32.mrf.mxu0
  %v9675 = vadd.f32 %v7888, %v9674
  %v9676 = vpop.f32.mrf.mxu0
  %v9677 = vpop.f32.mrf.mxu0
  %v9678 = vadd.f32 %v7893, %v9677
  %v9679 = vpop.f32.mrf.mxu0
  %9680 = vmatprep.mubr.bf16.mxu0 %v9036
  %9681 = vmatmul.mubr.bf16.gmra.mxu0 %v9035
  %v9682 = vpop.f32.mrf.mxu0
  %v9683 = vadd.f32 %v7898, %v9682
  %v9684 = vpop.f32.mrf.mxu0
  %v9685 = vpop.f32.mrf.mxu0
  %v9686 = vadd.f32 %v7903, %v9685
  %v9687 = vpop.f32.mrf.mxu0
  %9688 = vmatprep.mubr.bf16.mxu0 %v9039
  %9689 = vmatmul.mubr.bf16.gmra.mxu0 %v9038
  %v9690 = vpop.f32.mrf.mxu0
  %v9691 = vadd.f32 %v7908, %v9690
  %v9692 = vpop.f32.mrf.mxu0
  %v9693 = vpop.f32.mrf.mxu0
  %v9694 = vadd.f32 %v7913, %v9693
  %v9695 = vpop.f32.mrf.mxu0
  %9696 = vmatprep.mubr.bf16.mxu0 %v9042
  %9697 = vmatmul.mubr.bf16.gmra.mxu0 %v9041
  %v9698 = vpop.f32.mrf.mxu0
  %v9699 = vadd.f32 %v7918, %v9698
  %v9700 = vpop.f32.mrf.mxu0
  %v9701 = vpop.f32.mrf.mxu0
  %v9702 = vadd.f32 %v7923, %v9701
  %v9703 = vpop.f32.mrf.mxu0
  %9704 = vmatprep.mubr.bf16.mxu0 %v9045
  %9705 = vmatmul.mubr.bf16.gmra.mxu0 %v9044
  %v9706 = vpop.f32.mrf.mxu0
  %v9707 = vadd.f32 %v7928, %v9706
  %v9708 = vpop.f32.mrf.mxu0
  %v9709 = vpop.f32.mrf.mxu0
  %v9710 = vadd.f32 %v7933, %v9709
  %v9711 = vpop.f32.mrf.mxu0
  %9712 = vmatprep.mubr.bf16.mxu0 %v9048
  %9713 = vmatmul.mubr.bf16.gmra.mxu0 %v9047
  %v9714 = vpop.f32.mrf.mxu0
  %v9715 = vadd.f32 %v7938, %v9714
  %v9716 = vpop.f32.mrf.mxu0
  %v9717 = vpop.f32.mrf.mxu0
  %v9718 = vadd.f32 %v7943, %v9717
  %v9719 = vpop.f32.mrf.mxu0
  %9720 = vmatprep.mubr.bf16.mxu0 %v9051
  %9721 = vmatmul.mubr.bf16.gmra.mxu0 %v9050
  %v9722 = vpop.f32.mrf.mxu0
  %v9723 = vadd.f32 %v7948, %v9722
  %v9724 = vpop.f32.mrf.mxu0
  %v9725 = vpop.f32.mrf.mxu0
  %v9726 = vadd.f32 %v7953, %v9725
  %v9727 = vpop.f32.mrf.mxu0
  %9728 = vmatprep.mubr.bf16.mxu0 %v9054
  %9729 = vmatmul.mubr.bf16.gmra.mxu0 %v9053
  %v9730 = vpop.f32.mrf.mxu0
  %v9731 = vadd.f32 %v7958, %v9730
  %v9732 = vpop.f32.mrf.mxu0
  %v9733 = vpop.f32.mrf.mxu0
  %v9734 = vadd.f32 %v7963, %v9733
  %v9735 = vpop.f32.mrf.mxu0
  %9736 = vmatprep.mubr.bf16.mxu0 %v9057
  %9737 = vmatmul.mubr.bf16.gmra.mxu0 %v9056
  %v9738 = vpop.f32.mrf.mxu0
  %v9739 = vadd.f32 %v7968, %v9738
  %v9740 = vpop.f32.mrf.mxu0
  %v9741 = vpop.f32.mrf.mxu0
  %v9742 = vadd.f32 %v7973, %v9741
  %v9743 = vpop.f32.mrf.mxu0
  %9744 = vmatprep.mubr.bf16.mxu0 %v9060
  %9745 = vmatmul.mubr.bf16.gmra.mxu0 %v9059
  %v9746 = vpop.f32.mrf.mxu0
  %v9747 = vadd.f32 %v7978, %v9746
  %v9748 = vpop.f32.mrf.mxu0
  %v9749 = vpop.f32.mrf.mxu0
  %v9750 = vadd.f32 %v7983, %v9749
  %v9751 = vpop.f32.mrf.mxu0
  %9752 = vmatprep.mubr.bf16.mxu0 %v9063
  %9753 = vmatmul.mubr.bf16.gmra.mxu0 %v9062
  %v9754 = vpop.f32.mrf.mxu0
  %v9755 = vadd.f32 %v7988, %v9754
  %v9756 = vpop.f32.mrf.mxu0
  %v9757 = vpop.f32.mrf.mxu0
  %v9758 = vadd.f32 %v7993, %v9757
  %v9759 = vpop.f32.mrf.mxu0
  %9760 = vmatprep.mubr.bf16.mxu0 %v9066
  %9761 = vmatmul.mubr.bf16.gmra.mxu0 %v9065
  %v9762 = vpop.f32.mrf.mxu0
  %v9763 = vadd.f32 %v7998, %v9762
  %v9764 = vpop.f32.mrf.mxu0
  %v9765 = vpop.f32.mrf.mxu0
  %v9766 = vadd.f32 %v8003, %v9765
  %v9767 = vpop.f32.mrf.mxu0
  %9768 = vmatprep.mubr.bf16.mxu0 %v9069
  %9769 = vmatmul.mubr.bf16.gmra.mxu0 %v9068
  %v9770 = vpop.f32.mrf.mxu0
  %v9771 = vadd.f32 %v8008, %v9770
  %v9772 = vpop.f32.mrf.mxu0
  %v9773 = vpop.f32.mrf.mxu0
  %v9774 = vadd.f32 %v8013, %v9773
  %v9775 = vpop.f32.mrf.mxu0
  %9776 = vmatprep.mubr.bf16.mxu0 %v9072
  %9777 = vmatmul.mubr.bf16.gmra.mxu0 %v9071
  %v9778 = vpop.f32.mrf.mxu0
  %v9779 = vadd.f32 %v8018, %v9778
  %v9780 = vpop.f32.mrf.mxu0
  %v9781 = vpop.f32.mrf.mxu0
  %v9782 = vadd.f32 %v8023, %v9781
  %v9783 = vpop.f32.mrf.mxu0
  %9784 = vmatprep.mubr.bf16.mxu0 %v9075
  %9785 = vmatmul.mubr.bf16.gmra.mxu0 %v9074
  %v9786 = vpop.f32.mrf.mxu0
  %v9787 = vadd.f32 %v8028, %v9786
  %v9788 = vpop.f32.mrf.mxu0
  %v9789 = vpop.f32.mrf.mxu0
  %v9790 = vadd.f32 %v8033, %v9789
  %v9791 = vpop.f32.mrf.mxu0
  %9792 = vmatprep.mubr.bf16.mxu0 %v9078
  %9793 = vmatmul.mubr.bf16.gmra.mxu0 %v9077
  %v9794 = vpop.f32.mrf.mxu0
  %v9795 = vadd.f32 %v8038, %v9794
  %v9796 = vpop.f32.mrf.mxu0
  %v9797 = vpop.f32.mrf.mxu0
  %v9798 = vadd.f32 %v8043, %v9797
  %v9799 = vpop.f32.mrf.mxu0
  %9800 = vmatprep.mubr.bf16.mxu0 %v9081
  %9801 = vmatmul.mubr.bf16.gmra.mxu0 %v9080
  %v9802 = vpop.f32.mrf.mxu0
  %v9803 = vadd.f32 %v8048, %v9802
  %v9804 = vpop.f32.mrf.mxu0
  %v9805 = vpop.f32.mrf.mxu0
  %v9806 = vadd.f32 %v8053, %v9805
  %v9807 = vpop.f32.mrf.mxu0
  %9808 = vmatprep.mubr.bf16.mxu0 %v9084
  %9809 = vmatmul.mubr.bf16.gmra.mxu0 %v9083
  %v9810 = vpop.f32.mrf.mxu0
  %v9811 = vadd.f32 %v8058, %v9810
  %v9812 = vpop.f32.mrf.mxu0
  %v9813 = vpop.f32.mrf.mxu0
  %v9814 = vadd.f32 %v8063, %v9813
  %v9815 = vpop.f32.mrf.mxu0
  %9816 = vmatprep.mubr.bf16.mxu0 %v9087
  %9817 = vmatmul.mubr.bf16.gmra.mxu0 %v9086
  %v9818 = vpop.f32.mrf.mxu0
  %v9819 = vadd.f32 %v8068, %v9818
  %v9820 = vpop.f32.mrf.mxu0
  %v9821 = vpop.f32.mrf.mxu0
  %v9822 = vadd.f32 %v8073, %v9821
  %v9823 = vpop.f32.mrf.mxu0
  %9824 = vmatprep.mubr.bf16.mxu0 %v9090
  %9825 = vmatmul.mubr.bf16.gmra.mxu0 %v9089
  %v9826 = vpop.f32.mrf.mxu0
  %v9827 = vadd.f32 %v8078, %v9826
  %v9828 = vpop.f32.mrf.mxu0
  %v9829 = vpop.f32.mrf.mxu0
  %v9830 = vadd.f32 %v8083, %v9829
  %v9831 = vpop.f32.mrf.mxu0
  %9832 = vmatprep.mubr.bf16.mxu0 %v9093
  %9833 = vmatmul.mubr.bf16.gmra.mxu0 %v9092
  %v9834 = vpop.f32.mrf.mxu0
  %v9835 = vadd.f32 %v8088, %v9834
  %v9836 = vpop.f32.mrf.mxu0
  %v9837 = vpop.f32.mrf.mxu0
  %v9838 = vadd.f32 %v8093, %v9837
  %v9839 = vpop.f32.mrf.mxu0
  %9840 = vmatprep.mubr.bf16.mxu0 %v9096
  %9841 = vmatmul.mubr.bf16.gmra.mxu0 %v9095
  %v9842 = vpop.f32.mrf.mxu0
  %v9843 = vadd.f32 %v8098, %v9842
  %v9844 = vpop.f32.mrf.mxu0
  %v9845 = vpop.f32.mrf.mxu0
  %v9846 = vadd.f32 %v8103, %v9845
  %v9847 = vpop.f32.mrf.mxu0
  %9848 = vmatprep.mubr.bf16.mxu0 %v9099
  %9849 = vmatmul.mubr.bf16.gmra.mxu0 %v9098
  %v9850 = vpop.f32.mrf.mxu0
  %v9851 = vadd.f32 %v8108, %v9850
  %v9852 = vpop.f32.mrf.mxu0
  %v9853 = vpop.f32.mrf.mxu0
  %v9854 = vadd.f32 %v8113, %v9853
  %v9855 = vpop.f32.mrf.mxu0
  %9856 = vmatprep.mubr.bf16.mxu0 %v9102
  %9857 = vmatmul.mubr.bf16.gmra.mxu0 %v9101
  %v9858 = vpop.f32.mrf.mxu0
  %v9859 = vadd.f32 %v8118, %v9858
  %v9860 = vpop.f32.mrf.mxu0
  %v9861 = vpop.f32.mrf.mxu0
  %v9862 = vadd.f32 %v8123, %v9861
  %v9863 = vpop.f32.mrf.mxu0
  %9864 = vmatprep.mubr.bf16.mxu0 %v9105
  %9865 = vmatmul.mubr.bf16.gmra.mxu0 %v9104
  %v9866 = vpop.f32.mrf.mxu0
  %v9867 = vadd.f32 %v8128, %v9866
  %v9868 = vpop.f32.mrf.mxu0
  %v9869 = vpop.f32.mrf.mxu0
  %v9870 = vadd.f32 %v8133, %v9869
  %v9871 = vpop.f32.mrf.mxu0
  %9872 = vmatprep.mubr.bf16.mxu0 %v9108
  %9873 = vmatmul.mubr.bf16.gmra.mxu0 %v9107
  %v9874 = vpop.f32.mrf.mxu0
  %v9875 = vadd.f32 %v8138, %v9874
  %v9876 = vpop.f32.mrf.mxu0
  %v9877 = vpop.f32.mrf.mxu0
  %v9878 = vadd.f32 %v8143, %v9877
  %v9879 = vpop.f32.mrf.mxu0
  %9880 = vmatprep.mubr.bf16.mxu0 %v9111
  %9881 = vmatmul.mubr.bf16.gmra.mxu0 %v9110
  %v9882 = vpop.f32.mrf.mxu0
  %v9883 = vadd.f32 %v8148, %v9882
  %v9884 = vpop.f32.mrf.mxu0
  %v9885 = vpop.f32.mrf.mxu0
  %v9886 = vadd.f32 %v8153, %v9885
  %v9887 = vpop.f32.mrf.mxu0
  %9888 = vmatprep.mubr.bf16.mxu0 %v9114
  %9889 = vmatmul.mubr.bf16.gmra.mxu0 %v9113
  %v9890 = vpop.f32.mrf.mxu0
  %v9891 = vadd.f32 %v8158, %v9890
  %v9892 = vpop.f32.mrf.mxu0
  %v9893 = vpop.f32.mrf.mxu0
  %v9894 = vadd.f32 %v8163, %v9893
  %v9895 = vpop.f32.mrf.mxu0
  %9896 = vmatprep.mubr.bf16.mxu0 %v9117
  %9897 = vmatmul.mubr.bf16.gmra.mxu0 %v9116
  %v9898 = vpop.f32.mrf.mxu0
  %v9899 = vadd.f32 %v8168, %v9898
  %v9900 = vpop.f32.mrf.mxu0
  %v9901 = vpop.f32.mrf.mxu0
  %v9902 = vadd.f32 %v8173, %v9901
  %v9903 = vpop.f32.mrf.mxu0
  %9904 = vmatprep.mubr.bf16.mxu0 %v9120
  %9905 = vmatmul.mubr.bf16.gmra.mxu0 %v9119
  %v9906 = vpop.f32.mrf.mxu0
  %v9907 = vadd.f32 %v8178, %v9906
  %v9908 = vpop.f32.mrf.mxu0
  %v9909 = vpop.f32.mrf.mxu0
  %v9910 = vadd.f32 %v8183, %v9909
  %v9911 = vpop.f32.mrf.mxu0
  %9912 = vmatprep.mubr.bf16.mxu0 %v9123
  %9913 = vmatmul.mubr.bf16.gmra.mxu0 %v9122
  %v9914 = vpop.f32.mrf.mxu0
  %v9915 = vadd.f32 %v8188, %v9914
  %v9916 = vpop.f32.mrf.mxu0
  %v9917 = vpop.f32.mrf.mxu0
  %v9918 = vadd.f32 %v8193, %v9917
  %v9919 = vpop.f32.mrf.mxu0
  %9920 = vmatprep.mubr.bf16.mxu0 %v9126
  %9921 = vmatmul.mubr.bf16.gmra.mxu0 %v9125
  %v9922 = vpop.f32.mrf.mxu0
  %v9923 = vadd.f32 %v8198, %v9922
  %v9924 = vpop.f32.mrf.mxu0
  %v9925 = vpop.f32.mrf.mxu0
  %v9926 = vadd.f32 %v8203, %v9925
  %v9927 = vpop.f32.mrf.mxu0
  %9928 = vmatprep.mubr.bf16.mxu0 %v9129
  %9929 = vmatmul.mubr.bf16.gmra.mxu0 %v9128
  %v9930 = vpop.f32.mrf.mxu0
  %v9931 = vadd.f32 %v8208, %v9930
  %v9932 = vpop.f32.mrf.mxu0
  %v9933 = vpop.f32.mrf.mxu0
  %v9934 = vadd.f32 %v8213, %v9933
  %v9935 = vpop.f32.mrf.mxu0
  %9936 = vmatprep.mubr.bf16.mxu0 %v9132
  %9937 = vmatmul.mubr.bf16.gmra.mxu0 %v9131
  %v9938 = vpop.f32.mrf.mxu0
  %v9939 = vadd.f32 %v8218, %v9938
  %v9940 = vpop.f32.mrf.mxu0
  %v9941 = vpop.f32.mrf.mxu0
  %v9942 = vadd.f32 %v8223, %v9941
  %v9943 = vpop.f32.mrf.mxu0
  %9944 = vmatprep.mubr.bf16.mxu0 %v9135
  %9945 = vmatmul.mubr.bf16.gmra.mxu0 %v9134
  %v9946 = vpop.f32.mrf.mxu0
  %v9947 = vadd.f32 %v8228, %v9946
  %v9948 = vpop.f32.mrf.mxu0
  %v9949 = vpop.f32.mrf.mxu0
  %v9950 = vadd.f32 %v8233, %v9949
  %v9951 = vpop.f32.mrf.mxu0
  %9952 = vmatprep.mubr.bf16.mxu0 %v9138
  %9953 = vmatmul.mubr.bf16.gmra.mxu0 %v9137
  %v9954 = vpop.f32.mrf.mxu0
  %v9955 = vadd.f32 %v8238, %v9954
  %v9956 = vpop.f32.mrf.mxu0
  %v9957 = vpop.f32.mrf.mxu0
  %v9958 = vadd.f32 %v8243, %v9957
  %v9959 = vpop.f32.mrf.mxu0
  %9960 = vmatprep.mubr.bf16.mxu0 %v9141
  %9961 = vmatmul.mubr.bf16.gmra.mxu0 %v9140
  %v9962 = vpop.f32.mrf.mxu0
  %v9963 = vadd.f32 %v8248, %v9962
  %v9964 = vpop.f32.mrf.mxu0
  %v9965 = vpop.f32.mrf.mxu0
  %v9966 = vadd.f32 %v8253, %v9965
  %v9967 = vpop.f32.mrf.mxu0
  %9968 = vmatprep.mubr.bf16.mxu0 %v9144
  %9969 = vmatmul.mubr.bf16.gmra.mxu0 %v9143
  %v9970 = vpop.f32.mrf.mxu0
  %v9971 = vadd.f32 %v8258, %v9970
  %v9972 = vpop.f32.mrf.mxu0
  %v9973 = vpop.f32.mrf.mxu0
  %v9974 = vadd.f32 %v8263, %v9973
  %v9975 = vpop.f32.mrf.mxu0
  %9976 = vmatprep.mubr.bf16.mxu0 %v9147
  %9977 = vmatmul.mubr.bf16.gmra.mxu0 %v9146
  %v9978 = vpop.f32.mrf.mxu0
  %v9979 = vadd.f32 %v8268, %v9978
  %v9980 = vpop.f32.mrf.mxu0
  %v9981 = vpop.f32.mrf.mxu0
  %v9982 = vadd.f32 %v8273, %v9981
  %v9983 = vpop.f32.mrf.mxu0
  %9984 = vmatprep.mubr.bf16.mxu0 %v9150
  %9985 = vmatmul.mubr.bf16.gmra.mxu0 %v9149
  %v9986 = vpop.f32.mrf.mxu0
  %v9987 = vadd.f32 %v8278, %v9986
  %v9988 = vpop.f32.mrf.mxu0
  %v9989 = vpop.f32.mrf.mxu0
  %v9990 = vadd.f32 %v8283, %v9989
  %v9991 = vpop.f32.mrf.mxu0
  %9992 = vmatprep.mubr.bf16.mxu0 %v9153
  %9993 = vmatmul.mubr.bf16.gmra.mxu0 %v9152
  %v9994 = vpop.f32.mrf.mxu0
  %v9995 = vadd.f32 %v8288, %v9994
  %v9996 = vpop.f32.mrf.mxu0
  %v9997 = vpop.f32.mrf.mxu0
  %v9998 = vadd.f32 %v8293, %v9997
  %v9999 = vpop.f32.mrf.mxu0
  %10000 = vmatprep.mubr.bf16.mxu0 %v9156
  %10001 = vmatmul.mubr.bf16.gmra.mxu0 %v9155
  %v10002 = vpop.f32.mrf.mxu0
  %v10003 = vadd.f32 %v8298, %v10002
  %v10004 = vpop.f32.mrf.mxu0
  %v10005 = vpop.f32.mrf.mxu0
  %v10006 = vadd.f32 %v8303, %v10005
  %v10007 = vpop.f32.mrf.mxu0
  %10008 = vmatprep.mubr.bf16.mxu0 %v9159
  %10009 = vmatmul.mubr.bf16.gmra.mxu0 %v9158
  %v10010 = vpop.f32.mrf.mxu0
  %v10011 = vadd.f32 %v8308, %v10010
  %v10012 = vpop.f32.mrf.mxu0
  %v10013 = vpop.f32.mrf.mxu0
  %v10014 = vadd.f32 %v8313, %v10013
  %v10015 = vpop.f32.mrf.mxu0
  %10016 = vmatprep.mubr.bf16.mxu0 %v9162
  %10017 = vmatmul.mubr.bf16.gmra.mxu0 %v9161
  %v10018 = vpop.f32.mrf.mxu0
  %v10019 = vadd.f32 %v8318, %v10018
  %v10020 = vpop.f32.mrf.mxu0
  %v10021 = vpop.f32.mrf.mxu0
  %v10022 = vadd.f32 %v8323, %v10021
  %v10023 = vpop.f32.mrf.mxu0
  %10024 = vmatprep.mubr.bf16.mxu0 %v9165
  %10025 = vmatmul.mubr.bf16.gmra.mxu0 %v9164
  %v10026 = vpop.f32.mrf.mxu0
  %v10027 = vadd.f32 %v8328, %v10026
  %v10028 = vpop.f32.mrf.mxu0
  %v10029 = vpop.f32.mrf.mxu0
  %v10030 = vadd.f32 %v8333, %v10029
  %v10031 = vpop.f32.mrf.mxu0
  %10032 = vdwg.mxu0
  %10033 = vmatprep.subr.bf16.mxu0 0
  %10034 = vmatpush1.bf16.msra.mxu0 0
  %10035 = vmatprep.subr.bf16.mxu0 0
  %10036 = vmatpush1.bf16.msra.mxu0 0
  %10037 = vmatprep.subr.bf16.mxu0 0
  %10038 = vmatpush1.bf16.msra.mxu0 0
  %10039 = vmatprep.subr.bf16.mxu0 0
  %10040 = vmatpush1.bf16.msra.mxu0 0
  %10041 = vmatprep.subr.bf16.mxu0 0
  %10042 = vmatpush1.bf16.msra.mxu0 0
  %10043 = vmatprep.subr.bf16.mxu0 0
  %10044 = vmatpush1.bf16.msra.mxu0 0
  %10045 = vmatprep.subr.bf16.mxu0 0
  %10046 = vmatpush1.bf16.msra.mxu0 %v7310
  %10047 = vmatprep.subr.bf16.mxu0 0
  %10048 = vmatpush1.bf16.msra.mxu0 %v7309
  %10049 = vmatprep.subr.bf16.mxu0 0
  %10050 = vmatpush2.bf16.msra.mxu0 0
  %10051 = vmatprep.subr.bf16.mxu0 0
  %10052 = vmatpush2.bf16.msra.mxu0 0
  %10053 = vmatprep.subr.bf16.mxu0 0
  %10054 = vmatpush2.bf16.msra.mxu0 0
  %10055 = vmatprep.subr.bf16.mxu0 0
  %10056 = vmatpush2.bf16.msra.mxu0 0
  %10057 = vmatprep.subr.bf16.mxu0 0
  %10058 = vmatpush2.bf16.msra.mxu0 0
  %10059 = vmatprep.subr.bf16.mxu0 0
  %10060 = vmatpush2.bf16.msra.mxu0 0
  %10061 = vmatprep.subr.bf16.mxu0 0
  %10062 = vmatpush2.bf16.msra.mxu0 0
  %10063 = vmatprep.subr.bf16.mxu0 0
  %10064 = vmatpush2.bf16.msra.mxu0 0
  %10065 = vmatprep.mubr.bf16.mxu0 0
  %10066 = vmatmul.mubr.bf16.gmra.mxu0 %v9297
  %v10067 = vpop.f32.mrf.mxu0
  %v10068 = vadd.f32 %v9523, %v10067
  %v10069 = vpop.f32.mrf.mxu0
  %v10070 = vpop.f32.mrf.mxu0
  %v10071 = vadd.f32 %v9526, %v10070
  %v10072 = vpop.f32.mrf.mxu0
  %10073 = vmatprep.mubr.bf16.mxu0 0
  %10074 = vmatmul.mubr.bf16.gmra.mxu0 %v9300
  %v10075 = vpop.f32.mrf.mxu0
  %v10076 = vadd.f32 %v9531, %v10075
  %v10077 = vpop.f32.mrf.mxu0
  %v10078 = vpop.f32.mrf.mxu0
  %v10079 = vadd.f32 %v9534, %v10078
  %v10080 = vpop.f32.mrf.mxu0
  %10081 = vmatprep.mubr.bf16.mxu0 0
  %10082 = vmatmul.mubr.bf16.gmra.mxu0 %v9303
  %v10083 = vpop.f32.mrf.mxu0
  %v10084 = vadd.f32 %v9539, %v10083
  %v10085 = vpop.f32.mrf.mxu0
  %v10086 = vpop.f32.mrf.mxu0
  %v10087 = vadd.f32 %v9542, %v10086
  %v10088 = vpop.f32.mrf.mxu0
  %10089 = vmatprep.mubr.bf16.mxu0 0
  %10090 = vmatmul.mubr.bf16.gmra.mxu0 %v9306
  %v10091 = vpop.f32.mrf.mxu0
  %v10092 = vadd.f32 %v9547, %v10091
  %v10093 = vpop.f32.mrf.mxu0
  %v10094 = vpop.f32.mrf.mxu0
  %v10095 = vadd.f32 %v9550, %v10094
  %v10096 = vpop.f32.mrf.mxu0
  %10097 = vmatprep.mubr.bf16.mxu0 0
  %10098 = vmatmul.mubr.bf16.gmra.mxu0 %v9309
  %v10099 = vpop.f32.mrf.mxu0
  %v10100 = vadd.f32 %v9555, %v10099
  %v10101 = vpop.f32.mrf.mxu0
  %v10102 = vpop.f32.mrf.mxu0
  %v10103 = vadd.f32 %v9558, %v10102
  %v10104 = vpop.f32.mrf.mxu0
  %10105 = vmatprep.mubr.bf16.mxu0 0
  %10106 = vmatmul.mubr.bf16.gmra.mxu0 %v9312
  %v10107 = vpop.f32.mrf.mxu0
  %v10108 = vadd.f32 %v9563, %v10107
  %v10109 = vpop.f32.mrf.mxu0
  %v10110 = vpop.f32.mrf.mxu0
  %v10111 = vadd.f32 %v9566, %v10110
  %v10112 = vpop.f32.mrf.mxu0
  %10113 = vmatprep.mubr.bf16.mxu0 0
  %10114 = vmatmul.mubr.bf16.gmra.mxu0 %v9315
  %v10115 = vpop.f32.mrf.mxu0
  %v10116 = vadd.f32 %v9571, %v10115
  %v10117 = vpop.f32.mrf.mxu0
  %v10118 = vpop.f32.mrf.mxu0
  %v10119 = vadd.f32 %v9574, %v10118
  %v10120 = vpop.f32.mrf.mxu0
  %10121 = vmatprep.mubr.bf16.mxu0 0
  %10122 = vmatmul.mubr.bf16.gmra.mxu0 %v9318
  %v10123 = vpop.f32.mrf.mxu0
  %v10124 = vadd.f32 %v9579, %v10123
  %v10125 = vpop.f32.mrf.mxu0
  %v10126 = vpop.f32.mrf.mxu0
  %v10127 = vadd.f32 %v9582, %v10126
  %v10128 = vpop.f32.mrf.mxu0
  %10129 = vmatprep.mubr.bf16.mxu0 0
  %10130 = vmatmul.mubr.bf16.gmra.mxu0 %v9321
  %v10131 = vpop.f32.mrf.mxu0
  %v10132 = vadd.f32 %v9587, %v10131
  %v10133 = vpop.f32.mrf.mxu0
  %v10134 = vpop.f32.mrf.mxu0
  %v10135 = vadd.f32 %v9590, %v10134
  %v10136 = vpop.f32.mrf.mxu0
  %10137 = vmatprep.mubr.bf16.mxu0 0
  %10138 = vmatmul.mubr.bf16.gmra.mxu0 %v9324
  %v10139 = vpop.f32.mrf.mxu0
  %v10140 = vadd.f32 %v9595, %v10139
  %v10141 = vpop.f32.mrf.mxu0
  %v10142 = vpop.f32.mrf.mxu0
  %v10143 = vadd.f32 %v9598, %v10142
  %v10144 = vpop.f32.mrf.mxu0
  %10145 = vmatprep.mubr.bf16.mxu0 0
  %10146 = vmatmul.mubr.bf16.gmra.mxu0 %v9327
  %v10147 = vpop.f32.mrf.mxu0
  %v10148 = vadd.f32 %v9603, %v10147
  %v10149 = vpop.f32.mrf.mxu0
  %v10150 = vpop.f32.mrf.mxu0
  %v10151 = vadd.f32 %v9606, %v10150
  %v10152 = vpop.f32.mrf.mxu0
  %10153 = vmatprep.mubr.bf16.mxu0 0
  %10154 = vmatmul.mubr.bf16.gmra.mxu0 %v9330
  %v10155 = vpop.f32.mrf.mxu0
  %v10156 = vadd.f32 %v9611, %v10155
  %v10157 = vpop.f32.mrf.mxu0
  %v10158 = vpop.f32.mrf.mxu0
  %v10159 = vadd.f32 %v9614, %v10158
  %v10160 = vpop.f32.mrf.mxu0
  %10161 = vmatprep.mubr.bf16.mxu0 0
  %10162 = vmatmul.mubr.bf16.gmra.mxu0 %v9333
  %v10163 = vpop.f32.mrf.mxu0
  %v10164 = vadd.f32 %v9619, %v10163
  %v10165 = vpop.f32.mrf.mxu0
  %v10166 = vpop.f32.mrf.mxu0
  %v10167 = vadd.f32 %v9622, %v10166
  %v10168 = vpop.f32.mrf.mxu0
  %10169 = vmatprep.mubr.bf16.mxu0 0
  %10170 = vmatmul.mubr.bf16.gmra.mxu0 %v9336
  %v10171 = vpop.f32.mrf.mxu0
  %v10172 = vadd.f32 %v9627, %v10171
  %v10173 = vpop.f32.mrf.mxu0
  %v10174 = vpop.f32.mrf.mxu0
  %v10175 = vadd.f32 %v9630, %v10174
  %v10176 = vpop.f32.mrf.mxu0
  %10177 = vmatprep.mubr.bf16.mxu0 0
  %10178 = vmatmul.mubr.bf16.gmra.mxu0 %v9339
  %v10179 = vpop.f32.mrf.mxu0
  %v10180 = vadd.f32 %v9635, %v10179
  %v10181 = vpop.f32.mrf.mxu0
  %v10182 = vpop.f32.mrf.mxu0
  %v10183 = vadd.f32 %v9638, %v10182
  %v10184 = vpop.f32.mrf.mxu0
  %10185 = vmatprep.mubr.bf16.mxu0 0
  %10186 = vmatmul.mubr.bf16.gmra.mxu0 %v9342
  %v10187 = vpop.f32.mrf.mxu0
  %v10188 = vadd.f32 %v9643, %v10187
  %v10189 = vpop.f32.mrf.mxu0
  %v10190 = vpop.f32.mrf.mxu0
  %v10191 = vadd.f32 %v9646, %v10190
  %v10192 = vpop.f32.mrf.mxu0
  %10193 = vmatprep.mubr.bf16.mxu0 0
  %10194 = vmatmul.mubr.bf16.gmra.mxu0 %v9345
  %v10195 = vpop.f32.mrf.mxu0
  %v10196 = vadd.f32 %v9651, %v10195
  %v10197 = vpop.f32.mrf.mxu0
  %v10198 = vpop.f32.mrf.mxu0
  %v10199 = vadd.f32 %v9654, %v10198
  %v10200 = vpop.f32.mrf.mxu0
  %10201 = vmatprep.mubr.bf16.mxu0 0
  %10202 = vmatmul.mubr.bf16.gmra.mxu0 %v9348
  %v10203 = vpop.f32.mrf.mxu0
  %v10204 = vadd.f32 %v9659, %v10203
  %v10205 = vpop.f32.mrf.mxu0
  %v10206 = vpop.f32.mrf.mxu0
  %v10207 = vadd.f32 %v9662, %v10206
  %v10208 = vpop.f32.mrf.mxu0
  %10209 = vmatprep.mubr.bf16.mxu0 0
  %10210 = vmatmul.mubr.bf16.gmra.mxu0 %v9351
  %v10211 = vpop.f32.mrf.mxu0
  %v10212 = vadd.f32 %v9667, %v10211
  %v10213 = vpop.f32.mrf.mxu0
  %v10214 = vpop.f32.mrf.mxu0
  %v10215 = vadd.f32 %v9670, %v10214
  %v10216 = vpop.f32.mrf.mxu0
  %10217 = vmatprep.mubr.bf16.mxu0 0
  %10218 = vmatmul.mubr.bf16.gmra.mxu0 %v9354
  %v10219 = vpop.f32.mrf.mxu0
  %v10220 = vadd.f32 %v9675, %v10219
  %v10221 = vpop.f32.mrf.mxu0
  %v10222 = vpop.f32.mrf.mxu0
  %v10223 = vadd.f32 %v9678, %v10222
  %v10224 = vpop.f32.mrf.mxu0
  %10225 = vmatprep.mubr.bf16.mxu0 0
  %10226 = vmatmul.mubr.bf16.gmra.mxu0 %v9357
  %v10227 = vpop.f32.mrf.mxu0
  %v10228 = vadd.f32 %v9683, %v10227
  %v10229 = vpop.f32.mrf.mxu0
  %v10230 = vpop.f32.mrf.mxu0
  %v10231 = vadd.f32 %v9686, %v10230
  %v10232 = vpop.f32.mrf.mxu0
  %10233 = vmatprep.mubr.bf16.mxu0 0
  %10234 = vmatmul.mubr.bf16.gmra.mxu0 %v9360
  %v10235 = vpop.f32.mrf.mxu0
  %v10236 = vadd.f32 %v9691, %v10235
  %v10237 = vpop.f32.mrf.mxu0
  %v10238 = vpop.f32.mrf.mxu0
  %v10239 = vadd.f32 %v9694, %v10238
  %v10240 = vpop.f32.mrf.mxu0
  %10241 = vmatprep.mubr.bf16.mxu0 0
  %10242 = vmatmul.mubr.bf16.gmra.mxu0 %v9363
  %v10243 = vpop.f32.mrf.mxu0
  %v10244 = vadd.f32 %v9699, %v10243
  %v10245 = vpop.f32.mrf.mxu0
  %v10246 = vpop.f32.mrf.mxu0
  %v10247 = vadd.f32 %v9702, %v10246
  %v10248 = vpop.f32.mrf.mxu0
  %10249 = vmatprep.mubr.bf16.mxu0 0
  %10250 = vmatmul.mubr.bf16.gmra.mxu0 %v9366
  %v10251 = vpop.f32.mrf.mxu0
  %v10252 = vadd.f32 %v9707, %v10251
  %v10253 = vpop.f32.mrf.mxu0
  %v10254 = vpop.f32.mrf.mxu0
  %v10255 = vadd.f32 %v9710, %v10254
  %v10256 = vpop.f32.mrf.mxu0
  %10257 = vmatprep.mubr.bf16.mxu0 0
  %10258 = vmatmul.mubr.bf16.gmra.mxu0 %v9369
  %v10259 = vpop.f32.mrf.mxu0
  %v10260 = vadd.f32 %v9715, %v10259
  %v10261 = vpop.f32.mrf.mxu0
  %v10262 = vpop.f32.mrf.mxu0
  %v10263 = vadd.f32 %v9718, %v10262
  %v10264 = vpop.f32.mrf.mxu0
  %10265 = vmatprep.mubr.bf16.mxu0 0
  %10266 = vmatmul.mubr.bf16.gmra.mxu0 %v9372
  %v10267 = vpop.f32.mrf.mxu0
  %v10268 = vadd.f32 %v9723, %v10267
  %v10269 = vpop.f32.mrf.mxu0
  %v10270 = vpop.f32.mrf.mxu0
  %v10271 = vadd.f32 %v9726, %v10270
  %v10272 = vpop.f32.mrf.mxu0
  %10273 = vmatprep.mubr.bf16.mxu0 0
  %10274 = vmatmul.mubr.bf16.gmra.mxu0 %v9375
  %v10275 = vpop.f32.mrf.mxu0
  %v10276 = vadd.f32 %v9731, %v10275
  %v10277 = vpop.f32.mrf.mxu0
  %v10278 = vpop.f32.mrf.mxu0
  %v10279 = vadd.f32 %v9734, %v10278
  %v10280 = vpop.f32.mrf.mxu0
  %10281 = vmatprep.mubr.bf16.mxu0 0
  %10282 = vmatmul.mubr.bf16.gmra.mxu0 %v9378
  %v10283 = vpop.f32.mrf.mxu0
  %v10284 = vadd.f32 %v9739, %v10283
  %v10285 = vpop.f32.mrf.mxu0
  %v10286 = vpop.f32.mrf.mxu0
  %v10287 = vadd.f32 %v9742, %v10286
  %v10288 = vpop.f32.mrf.mxu0
  %10289 = vmatprep.mubr.bf16.mxu0 0
  %10290 = vmatmul.mubr.bf16.gmra.mxu0 %v9381
  %v10291 = vpop.f32.mrf.mxu0
  %v10292 = vadd.f32 %v9747, %v10291
  %v10293 = vpop.f32.mrf.mxu0
  %v10294 = vpop.f32.mrf.mxu0
  %v10295 = vadd.f32 %v9750, %v10294
  %v10296 = vpop.f32.mrf.mxu0
  %10297 = vmatprep.mubr.bf16.mxu0 0
  %10298 = vmatmul.mubr.bf16.gmra.mxu0 %v9384
  %v10299 = vpop.f32.mrf.mxu0
  %v10300 = vadd.f32 %v9755, %v10299
  %v10301 = vpop.f32.mrf.mxu0
  %v10302 = vpop.f32.mrf.mxu0
  %v10303 = vadd.f32 %v9758, %v10302
  %v10304 = vpop.f32.mrf.mxu0
  %10305 = vmatprep.mubr.bf16.mxu0 0
  %10306 = vmatmul.mubr.bf16.gmra.mxu0 %v9387
  %v10307 = vpop.f32.mrf.mxu0
  %v10308 = vadd.f32 %v9763, %v10307
  %v10309 = vpop.f32.mrf.mxu0
  %v10310 = vpop.f32.mrf.mxu0
  %v10311 = vadd.f32 %v9766, %v10310
  %v10312 = vpop.f32.mrf.mxu0
  %10313 = vmatprep.mubr.bf16.mxu0 0
  %10314 = vmatmul.mubr.bf16.gmra.mxu0 %v9390
  %v10315 = vpop.f32.mrf.mxu0
  %v10316 = vadd.f32 %v9771, %v10315
  %v10317 = vpop.f32.mrf.mxu0
  %v10318 = vpop.f32.mrf.mxu0
  %v10319 = vadd.f32 %v9774, %v10318
  %v10320 = vpop.f32.mrf.mxu0
  %10321 = vmatprep.mubr.bf16.mxu0 0
  %10322 = vmatmul.mubr.bf16.gmra.mxu0 %v9393
  %v10323 = vpop.f32.mrf.mxu0
  %v10324 = vadd.f32 %v9779, %v10323
  %v10325 = vpop.f32.mrf.mxu0
  %v10326 = vpop.f32.mrf.mxu0
  %v10327 = vadd.f32 %v9782, %v10326
  %v10328 = vpop.f32.mrf.mxu0
  %10329 = vmatprep.mubr.bf16.mxu0 0
  %10330 = vmatmul.mubr.bf16.gmra.mxu0 %v9396
  %v10331 = vpop.f32.mrf.mxu0
  %v10332 = vadd.f32 %v9787, %v10331
  %v10333 = vpop.f32.mrf.mxu0
  %v10334 = vpop.f32.mrf.mxu0
  %v10335 = vadd.f32 %v9790, %v10334
  %v10336 = vpop.f32.mrf.mxu0
  %10337 = vmatprep.mubr.bf16.mxu0 0
  %10338 = vmatmul.mubr.bf16.gmra.mxu0 %v9399
  %v10339 = vpop.f32.mrf.mxu0
  %v10340 = vadd.f32 %v9795, %v10339
  %v10341 = vpop.f32.mrf.mxu0
  %v10342 = vpop.f32.mrf.mxu0
  %v10343 = vadd.f32 %v9798, %v10342
  %v10344 = vpop.f32.mrf.mxu0
  %10345 = vmatprep.mubr.bf16.mxu0 0
  %10346 = vmatmul.mubr.bf16.gmra.mxu0 %v9402
  %v10347 = vpop.f32.mrf.mxu0
  %v10348 = vadd.f32 %v9803, %v10347
  %v10349 = vpop.f32.mrf.mxu0
  %v10350 = vpop.f32.mrf.mxu0
  %v10351 = vadd.f32 %v9806, %v10350
  %v10352 = vpop.f32.mrf.mxu0
  %10353 = vmatprep.mubr.bf16.mxu0 0
  %10354 = vmatmul.mubr.bf16.gmra.mxu0 %v9405
  %v10355 = vpop.f32.mrf.mxu0
  %v10356 = vadd.f32 %v9811, %v10355
  %v10357 = vpop.f32.mrf.mxu0
  %v10358 = vpop.f32.mrf.mxu0
  %v10359 = vadd.f32 %v9814, %v10358
  %v10360 = vpop.f32.mrf.mxu0
  %10361 = vmatprep.mubr.bf16.mxu0 0
  %10362 = vmatmul.mubr.bf16.gmra.mxu0 %v9408
  %v10363 = vpop.f32.mrf.mxu0
  %v10364 = vadd.f32 %v9819, %v10363
  %v10365 = vpop.f32.mrf.mxu0
  %v10366 = vpop.f32.mrf.mxu0
  %v10367 = vadd.f32 %v9822, %v10366
  %v10368 = vpop.f32.mrf.mxu0
  %10369 = vmatprep.mubr.bf16.mxu0 0
  %10370 = vmatmul.mubr.bf16.gmra.mxu0 %v9411
  %v10371 = vpop.f32.mrf.mxu0
  %v10372 = vadd.f32 %v9827, %v10371
  %v10373 = vpop.f32.mrf.mxu0
  %v10374 = vpop.f32.mrf.mxu0
  %v10375 = vadd.f32 %v9830, %v10374
  %v10376 = vpop.f32.mrf.mxu0
  %10377 = vmatprep.mubr.bf16.mxu0 0
  %10378 = vmatmul.mubr.bf16.gmra.mxu0 %v9414
  %v10379 = vpop.f32.mrf.mxu0
  %v10380 = vadd.f32 %v9835, %v10379
  %v10381 = vpop.f32.mrf.mxu0
  %v10382 = vpop.f32.mrf.mxu0
  %v10383 = vadd.f32 %v9838, %v10382
  %v10384 = vpop.f32.mrf.mxu0
  %10385 = vmatprep.mubr.bf16.mxu0 0
  %10386 = vmatmul.mubr.bf16.gmra.mxu0 %v9417
  %v10387 = vpop.f32.mrf.mxu0
  %v10388 = vadd.f32 %v9843, %v10387
  %v10389 = vpop.f32.mrf.mxu0
  %v10390 = vpop.f32.mrf.mxu0
  %v10391 = vadd.f32 %v9846, %v10390
  %v10392 = vpop.f32.mrf.mxu0
  %10393 = vmatprep.mubr.bf16.mxu0 0
  %10394 = vmatmul.mubr.bf16.gmra.mxu0 %v9420
  %v10395 = vpop.f32.mrf.mxu0
  %v10396 = vadd.f32 %v9851, %v10395
  %v10397 = vpop.f32.mrf.mxu0
  %v10398 = vpop.f32.mrf.mxu0
  %v10399 = vadd.f32 %v9854, %v10398
  %v10400 = vpop.f32.mrf.mxu0
  %10401 = vmatprep.mubr.bf16.mxu0 0
  %10402 = vmatmul.mubr.bf16.gmra.mxu0 %v9423
  %v10403 = vpop.f32.mrf.mxu0
  %v10404 = vadd.f32 %v9859, %v10403
  %v10405 = vpop.f32.mrf.mxu0
  %v10406 = vpop.f32.mrf.mxu0
  %v10407 = vadd.f32 %v9862, %v10406
  %v10408 = vpop.f32.mrf.mxu0
  %10409 = vmatprep.mubr.bf16.mxu0 0
  %10410 = vmatmul.mubr.bf16.gmra.mxu0 %v9426
  %v10411 = vpop.f32.mrf.mxu0
  %v10412 = vadd.f32 %v9867, %v10411
  %v10413 = vpop.f32.mrf.mxu0
  %v10414 = vpop.f32.mrf.mxu0
  %v10415 = vadd.f32 %v9870, %v10414
  %v10416 = vpop.f32.mrf.mxu0
  %10417 = vmatprep.mubr.bf16.mxu0 0
  %10418 = vmatmul.mubr.bf16.gmra.mxu0 %v9429
  %v10419 = vpop.f32.mrf.mxu0
  %v10420 = vadd.f32 %v9875, %v10419
  %v10421 = vpop.f32.mrf.mxu0
  %v10422 = vpop.f32.mrf.mxu0
  %v10423 = vadd.f32 %v9878, %v10422
  %v10424 = vpop.f32.mrf.mxu0
  %10425 = vmatprep.mubr.bf16.mxu0 0
  %10426 = vmatmul.mubr.bf16.gmra.mxu0 %v9432
  %v10427 = vpop.f32.mrf.mxu0
  %v10428 = vadd.f32 %v9883, %v10427
  %v10429 = vpop.f32.mrf.mxu0
  %v10430 = vpop.f32.mrf.mxu0
  %v10431 = vadd.f32 %v9886, %v10430
  %v10432 = vpop.f32.mrf.mxu0
  %10433 = vmatprep.mubr.bf16.mxu0 0
  %10434 = vmatmul.mubr.bf16.gmra.mxu0 %v9435
  %v10435 = vpop.f32.mrf.mxu0
  %v10436 = vadd.f32 %v9891, %v10435
  %v10437 = vpop.f32.mrf.mxu0
  %v10438 = vpop.f32.mrf.mxu0
  %v10439 = vadd.f32 %v9894, %v10438
  %v10440 = vpop.f32.mrf.mxu0
  %10441 = vmatprep.mubr.bf16.mxu0 0
  %10442 = vmatmul.mubr.bf16.gmra.mxu0 %v9438
  %v10443 = vpop.f32.mrf.mxu0
  %v10444 = vadd.f32 %v9899, %v10443
  %v10445 = vpop.f32.mrf.mxu0
  %v10446 = vpop.f32.mrf.mxu0
  %v10447 = vadd.f32 %v9902, %v10446
  %v10448 = vpop.f32.mrf.mxu0
  %10449 = vmatprep.mubr.bf16.mxu0 0
  %10450 = vmatmul.mubr.bf16.gmra.mxu0 %v9441
  %v10451 = vpop.f32.mrf.mxu0
  %v10452 = vadd.f32 %v9907, %v10451
  %v10453 = vpop.f32.mrf.mxu0
  %v10454 = vpop.f32.mrf.mxu0
  %v10455 = vadd.f32 %v9910, %v10454
  %v10456 = vpop.f32.mrf.mxu0
  %10457 = vmatprep.mubr.bf16.mxu0 0
  %10458 = vmatmul.mubr.bf16.gmra.mxu0 %v9444
  %v10459 = vpop.f32.mrf.mxu0
  %v10460 = vadd.f32 %v9915, %v10459
  %v10461 = vpop.f32.mrf.mxu0
  %v10462 = vpop.f32.mrf.mxu0
  %v10463 = vadd.f32 %v9918, %v10462
  %v10464 = vpop.f32.mrf.mxu0
  %10465 = vmatprep.mubr.bf16.mxu0 0
  %10466 = vmatmul.mubr.bf16.gmra.mxu0 %v9447
  %v10467 = vpop.f32.mrf.mxu0
  %v10468 = vadd.f32 %v9923, %v10467
  %v10469 = vpop.f32.mrf.mxu0
  %v10470 = vpop.f32.mrf.mxu0
  %v10471 = vadd.f32 %v9926, %v10470
  %v10472 = vpop.f32.mrf.mxu0
  %10473 = vmatprep.mubr.bf16.mxu0 0
  %10474 = vmatmul.mubr.bf16.gmra.mxu0 %v9450
  %v10475 = vpop.f32.mrf.mxu0
  %v10476 = vadd.f32 %v9931, %v10475
  %v10477 = vpop.f32.mrf.mxu0
  %v10478 = vpop.f32.mrf.mxu0
  %v10479 = vadd.f32 %v9934, %v10478
  %v10480 = vpop.f32.mrf.mxu0
  %10481 = vmatprep.mubr.bf16.mxu0 0
  %10482 = vmatmul.mubr.bf16.gmra.mxu0 %v9453
  %v10483 = vpop.f32.mrf.mxu0
  %v10484 = vadd.f32 %v9939, %v10483
  %v10485 = vpop.f32.mrf.mxu0
  %v10486 = vpop.f32.mrf.mxu0
  %v10487 = vadd.f32 %v9942, %v10486
  %v10488 = vpop.f32.mrf.mxu0
  %10489 = vmatprep.mubr.bf16.mxu0 0
  %10490 = vmatmul.mubr.bf16.gmra.mxu0 %v9456
  %v10491 = vpop.f32.mrf.mxu0
  %v10492 = vadd.f32 %v9947, %v10491
  %v10493 = vpop.f32.mrf.mxu0
  %v10494 = vpop.f32.mrf.mxu0
  %v10495 = vadd.f32 %v9950, %v10494
  %v10496 = vpop.f32.mrf.mxu0
  %10497 = vmatprep.mubr.bf16.mxu0 0
  %10498 = vmatmul.mubr.bf16.gmra.mxu0 %v9459
  %v10499 = vpop.f32.mrf.mxu0
  %v10500 = vadd.f32 %v9955, %v10499
  %v10501 = vpop.f32.mrf.mxu0
  %v10502 = vpop.f32.mrf.mxu0
  %v10503 = vadd.f32 %v9958, %v10502
  %v10504 = vpop.f32.mrf.mxu0
  %10505 = vmatprep.mubr.bf16.mxu0 0
  %10506 = vmatmul.mubr.bf16.gmra.mxu0 %v9462
  %v10507 = vpop.f32.mrf.mxu0
  %v10508 = vadd.f32 %v9963, %v10507
  %v10509 = vpop.f32.mrf.mxu0
  %v10510 = vpop.f32.mrf.mxu0
  %v10511 = vadd.f32 %v9966, %v10510
  %v10512 = vpop.f32.mrf.mxu0
  %10513 = vmatprep.mubr.bf16.mxu0 0
  %10514 = vmatmul.mubr.bf16.gmra.mxu0 %v9465
  %v10515 = vpop.f32.mrf.mxu0
  %v10516 = vadd.f32 %v9971, %v10515
  %v10517 = vpop.f32.mrf.mxu0
  %v10518 = vpop.f32.mrf.mxu0
  %v10519 = vadd.f32 %v9974, %v10518
  %v10520 = vpop.f32.mrf.mxu0
  %10521 = vmatprep.mubr.bf16.mxu0 0
  %10522 = vmatmul.mubr.bf16.gmra.mxu0 %v9468
  %v10523 = vpop.f32.mrf.mxu0
  %v10524 = vadd.f32 %v9979, %v10523
  %v10525 = vpop.f32.mrf.mxu0
  %v10526 = vpop.f32.mrf.mxu0
  %v10527 = vadd.f32 %v9982, %v10526
  %v10528 = vpop.f32.mrf.mxu0
  %10529 = vmatprep.mubr.bf16.mxu0 0
  %10530 = vmatmul.mubr.bf16.gmra.mxu0 %v9471
  %v10531 = vpop.f32.mrf.mxu0
  %v10532 = vadd.f32 %v9987, %v10531
  %v10533 = vpop.f32.mrf.mxu0
  %v10534 = vpop.f32.mrf.mxu0
  %v10535 = vadd.f32 %v9990, %v10534
  %v10536 = vpop.f32.mrf.mxu0
  %10537 = vmatprep.mubr.bf16.mxu0 0
  %10538 = vmatmul.mubr.bf16.gmra.mxu0 %v9474
  %v10539 = vpop.f32.mrf.mxu0
  %v10540 = vadd.f32 %v9995, %v10539
  %v10541 = vpop.f32.mrf.mxu0
  %v10542 = vpop.f32.mrf.mxu0
  %v10543 = vadd.f32 %v9998, %v10542
  %v10544 = vpop.f32.mrf.mxu0
  %10545 = vmatprep.mubr.bf16.mxu0 0
  %10546 = vmatmul.mubr.bf16.gmra.mxu0 %v9477
  %v10547 = vpop.f32.mrf.mxu0
  %v10548 = vadd.f32 %v10003, %v10547
  %v10549 = vpop.f32.mrf.mxu0
  %v10550 = vpop.f32.mrf.mxu0
  %v10551 = vadd.f32 %v10006, %v10550
  %v10552 = vpop.f32.mrf.mxu0
  %10553 = vmatprep.mubr.bf16.mxu0 0
  %10554 = vmatmul.mubr.bf16.gmra.mxu0 %v9480
  %v10555 = vpop.f32.mrf.mxu0
  %v10556 = vadd.f32 %v10011, %v10555
  %v10557 = vpop.f32.mrf.mxu0
  %v10558 = vpop.f32.mrf.mxu0
  %v10559 = vadd.f32 %v10014, %v10558
  %v10560 = vpop.f32.mrf.mxu0
  %10561 = vmatprep.mubr.bf16.mxu0 0
  %10562 = vmatmul.mubr.bf16.gmra.mxu0 %v9483
  %v10563 = vpop.f32.mrf.mxu0
  %v10564 = vadd.f32 %v10019, %v10563
  %v10565 = vpop.f32.mrf.mxu0
  %v10566 = vpop.f32.mrf.mxu0
  %v10567 = vadd.f32 %v10022, %v10566
  %v10568 = vpop.f32.mrf.mxu0
  %10569 = vmatprep.mubr.bf16.mxu0 0
  %10570 = vmatmul.mubr.bf16.gmra.mxu0 %v9486
  %v10571 = vpop.f32.mrf.mxu0
  %v10572 = vadd.f32 %v10027, %v10571
  %v10573 = vpop.f32.mrf.mxu0
  %v10574 = vpop.f32.mrf.mxu0
  %v10575 = vadd.f32 %v10030, %v10574
  %v10576 = vpop.f32.mrf.mxu0
  %10577 = vdwg.mxu0
  %v10578 = vmax.f32 %v10068, 0.0
  %v10579 = vmax.f32 %v10071, 0.0
  %v10580 = vmax.f32 %v10076, 0.0
  %v10581 = vmax.f32 %v10079, 0.0
  %v10582 = vmax.f32 %v10084, 0.0
  %v10583 = vmax.f32 %v10087, 0.0
  %v10584 = vmax.f32 %v10092, 0.0
  %v10585 = vmax.f32 %v10095, 0.0
  %v10586 = vmax.f32 %v10100, 0.0
  %v10587 = vmax.f32 %v10103, 0.0
  %v10588 = vmax.f32 %v10108, 0.0
  %v10589 = vmax.f32 %v10111, 0.0
  %v10590 = vmax.f32 %v10116, 0.0
  %v10591 = vmax.f32 %v10119, 0.0
  %v10592 = vmax.f32 %v10124, 0.0
  %v10593 = vmax.f32 %v10127, 0.0
  %v10594 = vmax.f32 %v10132, 0.0
  %v10595 = vmax.f32 %v10135, 0.0
  %v10596 = vmax.f32 %v10140, 0.0
  %v10597 = vmax.f32 %v10143, 0.0
  %v10598 = vmax.f32 %v10148, 0.0
  %v10599 = vmax.f32 %v10151, 0.0
  %v10600 = vmax.f32 %v10156, 0.0
  %v10601 = vmax.f32 %v10159, 0.0
  %v10602 = vmax.f32 %v10164, 0.0
  %v10603 = vmax.f32 %v10167, 0.0
  %v10604 = vmax.f32 %v10172, 0.0
  %v10605 = vmax.f32 %v10175, 0.0
  %v10606 = vmax.f32 %v10180, 0.0
  %v10607 = vmax.f32 %v10183, 0.0
  %v10608 = vmax.f32 %v10188, 0.0
  %v10609 = vmax.f32 %v10191, 0.0
  %v10610 = vmax.f32 %v10196, 0.0
  %v10611 = vmax.f32 %v10199, 0.0
  %v10612 = vmax.f32 %v10204, 0.0
  %v10613 = vmax.f32 %v10207, 0.0
  %v10614 = vmax.f32 %v10212, 0.0
  %v10615 = vmax.f32 %v10215, 0.0
  %v10616 = vmax.f32 %v10220, 0.0
  %v10617 = vmax.f32 %v10223, 0.0
  %v10618 = vmax.f32 %v10228, 0.0
  %v10619 = vmax.f32 %v10231, 0.0
  %v10620 = vmax.f32 %v10236, 0.0
  %v10621 = vmax.f32 %v10239, 0.0
  %v10622 = vmax.f32 %v10244, 0.0
  %v10623 = vmax.f32 %v10247, 0.0
  %v10624 = vmax.f32 %v10252, 0.0
  %v10625 = vmax.f32 %v10255, 0.0
  %v10626 = vmax.f32 %v10260, 0.0
  %v10627 = vmax.f32 %v10263, 0.0
  %v10628 = vmax.f32 %v10268, 0.0
  %v10629 = vmax.f32 %v10271, 0.0
  %v10630 = vmax.f32 %v10276, 0.0
  %v10631 = vmax.f32 %v10279, 0.0
  %v10632 = vmax.f32 %v10284, 0.0
  %v10633 = vmax.f32 %v10287, 0.0
  %v10634 = vmax.f32 %v10292, 0.0
  %v10635 = vmax.f32 %v10295, 0.0
  %v10636 = vmax.f32 %v10300, 0.0
  %v10637 = vmax.f32 %v10303, 0.0
  %v10638 = vmax.f32 %v10308, 0.0
  %v10639 = vmax.f32 %v10311, 0.0
  %v10640 = vmax.f32 %v10316, 0.0
  %v10641 = vmax.f32 %v10319, 0.0
  %v10642 = vmax.f32 %v10324, 0.0
  %v10643 = vmax.f32 %v10327, 0.0
  %v10644 = vmax.f32 %v10332, 0.0
  %v10645 = vmax.f32 %v10335, 0.0
  %v10646 = vmax.f32 %v10340, 0.0
  %v10647 = vmax.f32 %v10343, 0.0
  %v10648 = vmax.f32 %v10348, 0.0
  %v10649 = vmax.f32 %v10351, 0.0
  %v10650 = vmax.f32 %v10356, 0.0
  %v10651 = vmax.f32 %v10359, 0.0
  %v10652 = vmax.f32 %v10364, 0.0
  %v10653 = vmax.f32 %v10367, 0.0
  %v10654 = vmax.f32 %v10372, 0.0
  %v10655 = vmax.f32 %v10375, 0.0
  %v10656 = vmax.f32 %v10380, 0.0
  %v10657 = vmax.f32 %v10383, 0.0
  %v10658 = vmax.f32 %v10388, 0.0
  %v10659 = vmax.f32 %v10391, 0.0
  %v10660 = vmax.f32 %v10396, 0.0
  %v10661 = vmax.f32 %v10399, 0.0
  %v10662 = vmax.f32 %v10404, 0.0
  %v10663 = vmax.f32 %v10407, 0.0
  %v10664 = vmax.f32 %v10412, 0.0
  %v10665 = vmax.f32 %v10415, 0.0
  %v10666 = vmax.f32 %v10420, 0.0
  %v10667 = vmax.f32 %v10423, 0.0
  %v10668 = vmax.f32 %v10428, 0.0
  %v10669 = vmax.f32 %v10431, 0.0
  %v10670 = vmax.f32 %v10436, 0.0
  %v10671 = vmax.f32 %v10439, 0.0
  %v10672 = vmax.f32 %v10444, 0.0
  %v10673 = vmax.f32 %v10447, 0.0
  %v10674 = vmax.f32 %v10452, 0.0
  %v10675 = vmax.f32 %v10455, 0.0
  %v10676 = vmax.f32 %v10460, 0.0
  %v10677 = vmax.f32 %v10463, 0.0
  %v10678 = vmax.f32 %v10468, 0.0
  %v10679 = vmax.f32 %v10471, 0.0
  %v10680 = vmax.f32 %v10476, 0.0
  %v10681 = vmax.f32 %v10479, 0.0
  %v10682 = vmax.f32 %v10484, 0.0
  %v10683 = vmax.f32 %v10487, 0.0
  %v10684 = vmax.f32 %v10492, 0.0
  %v10685 = vmax.f32 %v10495, 0.0
  %v10686 = vmax.f32 %v10500, 0.0
  %v10687 = vmax.f32 %v10503, 0.0
  %v10688 = vmax.f32 %v10508, 0.0
  %v10689 = vmax.f32 %v10511, 0.0
  %v10690 = vmax.f32 %v10516, 0.0
  %v10691 = vmax.f32 %v10519, 0.0
  %v10692 = vmax.f32 %v10524, 0.0
  %v10693 = vmax.f32 %v10527, 0.0
  %v10694 = vmax.f32 %v10532, 0.0
  %v10695 = vmax.f32 %v10535, 0.0
  %v10696 = vmax.f32 %v10540, 0.0
  %v10697 = vmax.f32 %v10543, 0.0
  %v10698 = vmax.f32 %v10548, 0.0
  %v10699 = vmax.f32 %v10551, 0.0
  %v10700 = vmax.f32 %v10556, 0.0
  %v10701 = vmax.f32 %v10559, 0.0
  %v10702 = vmax.f32 %v10564, 0.0
  %v10703 = vmax.f32 %v10567, 0.0
  %v10704 = vmax.f32 %v10572, 0.0
  %v10705 = vmax.f32 %v10575, 0.0
  %v10706 = vmax.f32 %v10578, %v10610
  %v10707 = vmax.f32 %v10579, %v10611
  %v10708 = vmax.f32 %v10580, %v10612
  %v10709 = vmax.f32 %v10581, %v10613
  %v10710 = vmax.f32 %v10582, %v10614
  %v10711 = vmax.f32 %v10583, %v10615
  %v10712 = vmax.f32 %v10584, %v10616
  %v10713 = vmax.f32 %v10585, %v10617
  %v10714 = vmax.f32 %v10586, %v10618
  %v10715 = vmax.f32 %v10587, %v10619
  %v10716 = vmax.f32 %v10588, %v10620
  %v10717 = vmax.f32 %v10589, %v10621
  %v10718 = vmax.f32 %v10590, %v10622
  %v10719 = vmax.f32 %v10591, %v10623
  %v10720 = vmax.f32 %v10592, %v10624
  %v10721 = vmax.f32 %v10593, %v10625
  %v10722 = vmax.f32 %v10594, %v10626
  %v10723 = vmax.f32 %v10595, %v10627
  %v10724 = vmax.f32 %v10596, %v10628
  %v10725 = vmax.f32 %v10597, %v10629
  %v10726 = vmax.f32 %v10598, %v10630
  %v10727 = vmax.f32 %v10599, %v10631
  %v10728 = vmax.f32 %v10600, %v10632
  %v10729 = vmax.f32 %v10601, %v10633
  %v10730 = vmax.f32 %v10602, %v10634
  %v10731 = vmax.f32 %v10603, %v10635
  %v10732 = vmax.f32 %v10604, %v10636
  %v10733 = vmax.f32 %v10605, %v10637
  %v10734 = vmax.f32 %v10606, %v10638
  %v10735 = vmax.f32 %v10607, %v10639
  %v10736 = vmax.f32 %v10608, %v10640
  %v10737 = vmax.f32 %v10609, %v10641
  %v10738 = vmax.f32 %v10642, %v10674
  %v10739 = vmax.f32 %v10643, %v10675
  %v10740 = vmax.f32 %v10644, %v10676
  %v10741 = vmax.f32 %v10645, %v10677
  %v10742 = vmax.f32 %v10646, %v10678
  %v10743 = vmax.f32 %v10647, %v10679
  %v10744 = vmax.f32 %v10648, %v10680
  %v10745 = vmax.f32 %v10649, %v10681
  %v10746 = vmax.f32 %v10650, %v10682
  %v10747 = vmax.f32 %v10651, %v10683
  %v10748 = vmax.f32 %v10652, %v10684
  %v10749 = vmax.f32 %v10653, %v10685
  %v10750 = vmax.f32 %v10654, %v10686
  %v10751 = vmax.f32 %v10655, %v10687
  %v10752 = vmax.f32 %v10656, %v10688
  %v10753 = vmax.f32 %v10657, %v10689
  %v10754 = vmax.f32 %v10658, %v10690
  %v10755 = vmax.f32 %v10659, %v10691
  %v10756 = vmax.f32 %v10660, %v10692
  %v10757 = vmax.f32 %v10661, %v10693
  %v10758 = vmax.f32 %v10662, %v10694
  %v10759 = vmax.f32 %v10663, %v10695
  %v10760 = vmax.f32 %v10664, %v10696
  %v10761 = vmax.f32 %v10665, %v10697
  %v10762 = vmax.f32 %v10666, %v10698
  %v10763 = vmax.f32 %v10667, %v10699
  %v10764 = vmax.f32 %v10668, %v10700
  %v10765 = vmax.f32 %v10669, %v10701
  %v10766 = vmax.f32 %v10670, %v10702
  %v10767 = vmax.f32 %v10671, %v10703
  %v10768 = vmax.f32 %v10672, %v10704
  %v10769 = vmax.f32 %v10673, %v10705
  %v10770 = vmax.f32 %v10706, %v10738
  %v10771 = vmax.f32 %v10707, %v10739
  %v10772 = vmax.f32 %v10708, %v10740
  %v10773 = vmax.f32 %v10709, %v10741
  %v10774 = vmax.f32 %v10710, %v10742
  %v10775 = vmax.f32 %v10711, %v10743
  %v10776 = vmax.f32 %v10712, %v10744
  %v10777 = vmax.f32 %v10713, %v10745
  %v10778 = vmax.f32 %v10714, %v10746
  %v10779 = vmax.f32 %v10715, %v10747
  %v10780 = vmax.f32 %v10716, %v10748
  %v10781 = vmax.f32 %v10717, %v10749
  %v10782 = vmax.f32 %v10718, %v10750
  %v10783 = vmax.f32 %v10719, %v10751
  %v10784 = vmax.f32 %v10720, %v10752
  %v10785 = vmax.f32 %v10721, %v10753
  %v10786 = vmax.f32 %v10722, %v10754
  %v10787 = vmax.f32 %v10723, %v10755
  %v10788 = vmax.f32 %v10724, %v10756
  %v10789 = vmax.f32 %v10725, %v10757
  %v10790 = vmax.f32 %v10726, %v10758
  %v10791 = vmax.f32 %v10727, %v10759
  %v10792 = vmax.f32 %v10728, %v10760
  %v10793 = vmax.f32 %v10729, %v10761
  %v10794 = vmax.f32 %v10730, %v10762
  %v10795 = vmax.f32 %v10731, %v10763
  %v10796 = vmax.f32 %v10732, %v10764
  %v10797 = vmax.f32 %v10733, %v10765
  %v10798 = vmax.f32 %v10734, %v10766
  %v10799 = vmax.f32 %v10735, %v10767
  %v10800 = vmax.f32 %v10736, %v10768
  %v10801 = vmax.f32 %v10737, %v10769
  %v10802 = vpack.c.bf16 %v10771, %v10770
  %v10803 = vpack.c.bf16 %v10773, %v10772
  %v10804 = vpack.c.bf16 %v10775, %v10774
  %v10805 = vpack.c.bf16 %v10777, %v10776
  %v10806 = vpack.c.bf16 %v10779, %v10778
  %v10807 = vpack.c.bf16 %v10781, %v10780
  %v10808 = vpack.c.bf16 %v10783, %v10782
  %v10809 = vpack.c.bf16 %v10785, %v10784
  %v10810 = vpack.c.bf16 %v10787, %v10786
  %v10811 = vpack.c.bf16 %v10789, %v10788
  %v10812 = vpack.c.bf16 %v10791, %v10790
  %v10813 = vpack.c.bf16 %v10793, %v10792
  %v10814 = vpack.c.bf16 %v10795, %v10794
  %v10815 = vpack.c.bf16 %v10797, %v10796
  %v10816 = vpack.c.bf16 %v10799, %v10798
  %v10817 = vpack.c.bf16 %v10801, %v10800
  %v10818 = vld [vmem:[%s5] sm:$0xff]
  %v10819 = vld [vmem:[%s5 + $0x8] sm:$0xff]
  %v10820 = vld [vmem:[%s5 + $0x10] sm:$0xff]
  %v10821 = vld [vmem:[%s5 + $0x18] sm:$0xff]
  %v10822 = vld [vmem:[%s5 + $0x20] sm:$0xff]
  %v10823 = vld [vmem:[%s5 + $0x28] sm:$0xff]
  %v10824 = vld [vmem:[%s5 + $0x30] sm:$0xff]
  %v10825 = vld [vmem:[%s5 + $0x38] sm:$0xff]
  %v10826 = vld [vmem:[%s6] sm:$0xff]
  %v10827 = vld [vmem:[%s6 + $0x8] sm:$0xff]
  %v10828 = vld [vmem:[%s6 + $0x10] sm:$0xff]
  %v10829 = vld [vmem:[%s6 + $0x18] sm:$0xff]
  %v10830 = vld [vmem:[%s6 + $0x20] sm:$0xff]
  %v10831 = vld [vmem:[%s6 + $0x28] sm:$0xff]
  %v10832 = vld [vmem:[%s6 + $0x30] sm:$0xff]
  %v10833 = vld [vmem:[%s6 + $0x38] sm:$0xff]
  %10835 = vset.pattern.permute.xlu0 0
  %10836 = vperm.xlu0 %10835, %v10826
  %v10837 = vpop.permute.xlu0 %10836
  %10840 = vset.pattern.permute.xlu0 0
  %10841 = vperm.xlu0 %10840, %v10827
  %v10842 = vpop.permute.xlu0 %10841
  %10845 = vset.pattern.permute.xlu0 0
  %10846 = vperm.xlu0 %10845, %v10828
  %v10847 = vpop.permute.xlu0 %10846
  %10850 = vset.pattern.permute.xlu0 0
  %10851 = vperm.xlu0 %10850, %v10829
  %v10852 = vpop.permute.xlu0 %10851
  %10855 = vset.pattern.permute.xlu0 0
  %10856 = vperm.xlu0 %10855, %v10830
  %v10857 = vpop.permute.xlu0 %10856
  %10860 = vset.pattern.permute.xlu0 0
  %10861 = vperm.xlu0 %10860, %v10831
  %v10862 = vpop.permute.xlu0 %10861
  %10865 = vset.pattern.permute.xlu0 0
  %10866 = vperm.xlu0 %10865, %v10832
  %v10867 = vpop.permute.xlu0 %10866
  %10870 = vset.pattern.permute.xlu0 0
  %10871 = vperm.xlu0 %10870, %v10833
  %v10872 = vpop.permute.xlu0 %10871
  %v10882 = vunpack.c.l.b16 %v10818
  %v10883 = vunpack.c.h.b16 %v10818
  %v10884 = vunpack.c.l.b16 %v10819
  %v10885 = vunpack.c.h.b16 %v10819
  %v10886 = vunpack.c.l.b16 %v10820
  %v10887 = vunpack.c.h.b16 %v10820
  %v10888 = vunpack.c.l.b16 %v10821
  %v10889 = vunpack.c.h.b16 %v10821
  %v10890 = vunpack.c.l.b16 %v10822
  %v10891 = vunpack.c.h.b16 %v10822
  %v10892 = vunpack.c.l.b16 %v10823
  %v10893 = vunpack.c.h.b16 %v10823
  %v10894 = vunpack.c.l.b16 %v10824
  %v10895 = vunpack.c.h.b16 %v10824
  %v10896 = vunpack.c.l.b16 %v10825
  %v10897 = vunpack.c.h.b16 %v10825
  %v10898 = vpack.c.b16 %v10884, %v10882
  %v10899 = vpack.c.b16 %v10885, %v10883
  %v10900 = vpack.c.b16 %v10888, %v10886
  %v10901 = vpack.c.b16 %v10889, %v10887
  %v10902 = vpack.c.b16 %v10892, %v10890
  %v10903 = vpack.c.b16 %v10893, %v10891
  %v10904 = vpack.c.b16 %v10896, %v10894
  %v10905 = vpack.c.b16 %v10897, %v10895
  %10914 = vmatprep.subr.bf16.mxu0 0
  %10915 = vmatpush1.bf16.msra.mxu0 %v10809
  %10916 = vmatprep.subr.bf16.mxu0 0
  %10917 = vmatpush1.bf16.msra.mxu0 %v10808
  %10918 = vmatprep.subr.bf16.mxu0 0
  %10919 = vmatpush1.bf16.msra.mxu0 %v10807
  %10920 = vmatprep.subr.bf16.mxu0 0
  %10921 = vmatpush1.bf16.msra.mxu0 %v10806
  %10922 = vmatprep.subr.bf16.mxu0 0
  %10923 = vmatpush1.bf16.msra.mxu0 %v10805
  %10924 = vmatprep.subr.bf16.mxu0 0
  %10925 = vmatpush1.bf16.msra.mxu0 %v10804
  %10926 = vmatprep.subr.bf16.mxu0 0
  %10927 = vmatpush1.bf16.msra.mxu0 %v10803
  %10928 = vmatprep.subr.bf16.mxu0 0
  %10929 = vmatpush1.bf16.msra.mxu0 %v10802
  %10930 = vmatprep.subr.bf16.mxu0 0
  %10931 = vmatpush2.bf16.msra.mxu0 %v10817
  %10932 = vmatprep.subr.bf16.mxu0 0
  %10933 = vmatpush2.bf16.msra.mxu0 %v10816
  %10934 = vmatprep.subr.bf16.mxu0 0
  %10935 = vmatpush2.bf16.msra.mxu0 %v10815
  %10936 = vmatprep.subr.bf16.mxu0 0
  %10937 = vmatpush2.bf16.msra.mxu0 %v10814
  %10938 = vmatprep.subr.bf16.mxu0 0
  %10939 = vmatpush2.bf16.msra.mxu0 %v10813
  %10940 = vmatprep.subr.bf16.mxu0 0
  %10941 = vmatpush2.bf16.msra.mxu0 %v10812
  %10942 = vmatprep.subr.bf16.mxu0 0
  %10943 = vmatpush2.bf16.msra.mxu0 %v10811
  %10944 = vmatprep.subr.bf16.mxu0 0
  %10945 = vmatpush2.bf16.msra.mxu0 %v10810
  %10946 = vmatprep.mubr.bf16.mxu0 %v10899
  %10947 = vmatmul.mubr.bf16.gmra.mxu0 %v10898
  %v10948 = vpop.f32.mrf.mxu0
  %v10949 = vadd.f32 %v10837, %v10948
  %v10950 = vpop.f32.mrf.mxu0
  %v10951 = vpop.f32.mrf.mxu0
  %v10952 = vadd.f32 %v10842, %v10951
  %v10953 = vpop.f32.mrf.mxu0
  %10954 = vmatprep.mubr.bf16.mxu0 %v10901
  %10955 = vmatmul.mubr.bf16.gmra.mxu0 %v10900
  %v10956 = vpop.f32.mrf.mxu0
  %v10957 = vadd.f32 %v10847, %v10956
  %v10958 = vpop.f32.mrf.mxu0
  %v10959 = vpop.f32.mrf.mxu0
  %v10960 = vadd.f32 %v10852, %v10959
  %v10961 = vpop.f32.mrf.mxu0
  %10962 = vmatprep.mubr.bf16.mxu0 %v10903
  %10963 = vmatmul.mubr.bf16.gmra.mxu0 %v10902
  %v10964 = vpop.f32.mrf.mxu0
  %v10965 = vadd.f32 %v10857, %v10964
  %v10966 = vpop.f32.mrf.mxu0
  %v10967 = vpop.f32.mrf.mxu0
  %v10968 = vadd.f32 %v10862, %v10967
  %v10969 = vpop.f32.mrf.mxu0
  %10970 = vmatprep.mubr.bf16.mxu0 %v10905
  %10971 = vmatmul.mubr.bf16.gmra.mxu0 %v10904
  %v10972 = vpop.f32.mrf.mxu0
  %v10973 = vadd.f32 %v10867, %v10972
  %v10974 = vpop.f32.mrf.mxu0
  %v10975 = vpop.f32.mrf.mxu0
  %v10976 = vadd.f32 %v10872, %v10975
  %v10977 = vpop.f32.mrf.mxu0
  %10978 = vdwg.mxu0
  %v10979 = vmax.f32 %v10949, 0.0
  %v10980 = vmax.f32 %v10952, 0.0
  %v10981 = vmax.f32 %v10957, 0.0
  %v10982 = vmax.f32 %v10960, 0.0
  %v10983 = vmax.f32 %v10965, 0.0
  %v10984 = vmax.f32 %v10968, 0.0
  %v10985 = vmax.f32 %v10973, 0.0
  %v10986 = vmax.f32 %v10976, 0.0
  %v10987 = vpack.c.bf16 %v10980, %v10979
  %v10988 = vpack.c.bf16 %v10982, %v10981
  %v10989 = vpack.c.bf16 %v10984, %v10983
  %v10990 = vpack.c.bf16 %v10986, %v10985
  %v10991 = vld [vmem:[%s7] sm:$0x1]
  %v10992 = vld [vmem:[%s8] sm:$0x3]
  %10994 = vset.pattern.permute.xlu0 0
  %10995 = vperm.xlu0 %10994, %v10992
  %v10996 = vpop.permute.xlu0 %10995
  %vm10998 = vcmask 523264
  %v11000 = vsel %vm10998, %v10991, 0
  %11002 = vmatprep.subr.bf16.mxu0 0
  %11003 = vmatpush1.bf16.msra.mxu0 0
  %11004 = vmatprep.subr.bf16.mxu0 0
  %11005 = vmatpush1.bf16.msra.mxu0 0
  %11006 = vmatprep.subr.bf16.mxu0 0
  %11007 = vmatpush1.bf16.msra.mxu0 0
  %11008 = vmatprep.subr.bf16.mxu0 0
  %11009 = vmatpush1.bf16.msra.mxu0 0
  %11010 = vmatprep.subr.bf16.mxu0 0
  %11011 = vmatpush1.bf16.msra.mxu0 %v10990
  %11012 = vmatprep.subr.bf16.mxu0 0
  %11013 = vmatpush1.bf16.msra.mxu0 %v10989
  %11014 = vmatprep.subr.bf16.mxu0 0
  %11015 = vmatpush1.bf16.msra.mxu0 %v10988
  %11016 = vmatprep.subr.bf16.mxu0 0
  %11017 = vmatpush1.bf16.msra.mxu0 %v10987
  %11018 = vmatprep.subr.bf16.mxu0 0
  %11019 = vmatpush2.bf16.msra.mxu0 0
  %11020 = vmatprep.subr.bf16.mxu0 0
  %11021 = vmatpush2.bf16.msra.mxu0 0
  %11022 = vmatprep.subr.bf16.mxu0 0
  %11023 = vmatpush2.bf16.msra.mxu0 0
  %11024 = vmatprep.subr.bf16.mxu0 0
  %11025 = vmatpush2.bf16.msra.mxu0 0
  %11026 = vmatprep.subr.bf16.mxu0 0
  %11027 = vmatpush2.bf16.msra.mxu0 0
  %11028 = vmatprep.subr.bf16.mxu0 0
  %11029 = vmatpush2.bf16.msra.mxu0 0
  %11030 = vmatprep.subr.bf16.mxu0 0
  %11031 = vmatpush2.bf16.msra.mxu0 0
  %11032 = vmatprep.subr.bf16.mxu0 0
  %11033 = vmatpush2.bf16.msra.mxu0 0
  %11034 = vmatprep.mubr.bf16.mxu0 0
  %11035 = vmatmul.mubr.bf16.gmra.mxu0 %v11000
  %v11036 = vpop.f32.mrf.mxu0
  %v11037 = vadd.f32 %v10996, %v11036
  %v11038 = vpop.f32.mrf.mxu0
  %v11039 = vpop.f32.mrf.mxu0
  %v11040 = vpop.f32.mrf.mxu0
  %11041 = vdwg.mxu0
  %v11042 = vsub.f32 3.1415927, %v11037
  %v11044 = vrot.slane %v11042, 1
  %v11046 = vmul.f32 %v11042, %v11044
  %v11047 = vmul.f32 %v11037, 2.0
  %v11048 = vmul.f32 %v11046, 2.0
  %v11050 = vrot.slane %v11048, 6
  %vm11052 = vcmask 1040384
  %vm11053 = vcmask 1041408
  %v11054 = vsel %vm11053, %v11047, %v11050
  %v11055 = vmul.f32 %v11054, 0.31830987
  %v11056 = vadd.f32 %v11055, 0.5
  %v11057 = vfloor.f32 %v11056
  %v11058 = vmul.f32 %v11057, 3.140625
  %v11059 = vsub.f32 %v11054, %v11058
  %v11060 = vmul.f32 %v11057, 0.0009676536
  %v11061 = vsub.f32 %v11059, %v11060
  %v11062 = vmul.f32 %v11057, 0.5
  %v11063 = vfloor.f32 %v11062
  %v11064 = vmul.f32 %v11063, 2.0
  %v11065 = vsub.f32 %v11057, %v11064
  %v11066 = vmul.f32 %v11065, 2.0
  %v11067 = vsub.f32 1.0, %v11066
  %v11068 = vmul.f32 %v11061, %v11061
  %v11069 = vmul.f32 %v11068, 2.5052108e-08
  %v11070 = vsub.f32 2.7557319e-06, %v11069
  %v11071 = vmul.f32 %v11068, %v11070
  %v11072 = vadd.f32 %v11071, -0.0001984127
  %v11073 = vmul.f32 %v11068, %v11072
  %v11074 = vadd.f32 %v11073, 0.008333334
  %v11075 = vmul.f32 %v11068, %v11074
  %v11076 = vadd.f32 %v11075, -0.16666667
  %v11077 = vmul.f32 %v11068, %v11076
  %v11078 = vadd.f32 %v11077, 1.0
  %v11079 = vmul.f32 %v11061, %v11078
  %v11080 = vmul.f32 %v11068, 2.755732e-07
  %v11081 = vsub.f32 2.4801588e-05, %v11080
  %v11082 = vmul.f32 %v11068, %v11081
  %v11083 = vadd.f32 %v11082, -0.0013888889
  %v11084 = vmul.f32 %v11068, %v11083
  %v11085 = vadd.f32 %v11084, 0.041666668
  %v11086 = vmul.f32 %v11068, %v11085
  %v11087 = vadd.f32 %v11086, -0.5
  %v11088 = vmul.f32 %v11068, %v11087
  %v11089 = vadd.f32 %v11088, 1.0
  %v11090 = vmul.f32 %v11067, %v11079
  %v11091 = vmul.f32 %v11067, %v11089
  %v11092 = vld [vmem:[%s9] sm:$0x1]
  %11094 = vset.pattern.permute.xlu0 0
  %11095 = vperm.xlu0 %11094, %v11092
  %v11096 = vpop.permute.xlu0 %11095
  %v11098 = vlaneseq
  %v11099 = vshrl.u32 %v11098, 7
  %v11100 = vsub.s32 0, %v11099
  %v11101 = vrot.slane %v11096, %v11100
  %v11102 = vmul.f32 %v11101, %v11091
  %v11104 = vrot.slane %v11091, 1
  %v11106 = vmul.f32 %v11102, %v11104
  %11107 = vset.pattern.permute.xlu0 1
  %11108 = vperm.xlu0 %11107, %v11092
  %v11109 = vpop.permute.xlu0 %11108
  %v11111 = vlaneseq
  %v11112 = vshrl.u32 %v11111, 7
  %v11113 = vsub.s32 0, %v11112
  %v11114 = vrot.slane %v11109, %v11113
  %v11115 = vmul.f32 %v11114, %v11090
  %v11117 = vrot.slane %v11090, 1
  %v11119 = vmul.f32 %v11115, %v11117
  %v11120 = vadd.f32 %v11106, %v11119
  %11121 = vset.pattern.permute.xlu0 2
  %11122 = vperm.xlu0 %11121, %v11092
  %v11123 = vpop.permute.xlu0 %11122
  %v11125 = vlaneseq
  %v11126 = vshrl.u32 %v11125, 7
  %v11127 = vsub.s32 0, %v11126
  %v11128 = vrot.slane %v11123, %v11127
  %v11129 = vmul.f32 %v11128, %v11091
  %v11130 = vrot.slane %v11091, 2
  %v11132 = vmul.f32 %v11129, %v11130
  %v11133 = vadd.f32 %v11120, %v11132
  %11134 = vset.pattern.permute.xlu0 3
  %11135 = vperm.xlu0 %11134, %v11092
  %v11136 = vpop.permute.xlu0 %11135
  %v11138 = vlaneseq
  %v11139 = vshrl.u32 %v11138, 7
  %v11140 = vsub.s32 0, %v11139
  %v11141 = vrot.slane %v11136, %v11140
  %v11142 = vmul.f32 %v11141, %v11090
  %v11143 = vrot.slane %v11090, 2
  %v11145 = vmul.f32 %v11142, %v11143
  %v11146 = vadd.f32 %v11133, %v11145
  %11147 = vset.pattern.permute.xlu0 4
  %11148 = vperm.xlu0 %11147, %v11092
  %v11149 = vpop.permute.xlu0 %11148
  %v11151 = vlaneseq
  %v11152 = vshrl.u32 %v11151, 7
  %v11153 = vsub.s32 0, %v11152
  %v11154 = vrot.slane %v11149, %v11153
  %v11155 = vmul.f32 %v11154, %v11091
  %v11156 = vmul.f32 %v11155, %v11104
  %v11158 = vrot.slane %v11156, 1
  %v11160 = vadd.f32 %v11146, %v11158
  %11161 = vset.pattern.permute.xlu0 5
  %11162 = vperm.xlu0 %11161, %v11092
  %v11163 = vpop.permute.xlu0 %11162
  %v11165 = vlaneseq
  %v11166 = vshrl.u32 %v11165, 7
  %v11167 = vsub.s32 0, %v11166
  %v11168 = vrot.slane %v11163, %v11167
  %v11169 = vmul.f32 %v11168, %v11090
  %v11170 = vmul.f32 %v11169, %v11117
  %v11172 = vrot.slane %v11170, 1
  %v11174 = vadd.f32 %v11160, %v11172
  %11175 = vset.pattern.permute.xlu0 6
  %11176 = vperm.xlu0 %11175, %v11092
  %v11177 = vpop.permute.xlu0 %11176
  %v11179 = vlaneseq
  %v11180 = vshrl.u32 %v11179, 7
  %v11181 = vsub.s32 0, %v11180
  %v11182 = vrot.slane %v11177, %v11181
  %v11183 = vmul.f32 %v11182, %v11174
  %11184 = vset.pattern.permute.xlu0 7
  %11185 = vperm.xlu0 %11184, %v11092
  %v11186 = vpop.permute.xlu0 %11185
  %v11188 = vlaneseq
  %v11189 = vshrl.u32 %v11188, 7
  %v11190 = vsub.s32 0, %v11189
  %v11191 = vrot.slane %v11186, %v11190
  %v11192 = vadd.f32 %v11183, %v11191
  %v11193 = vmul.f32 %v11192, 2.0
  %v11194 = vsub.f32 1.0, %v11193
  %v11195 = vmax.f32 %v11194, 0.0
  %v11196 = vand.u32 2147483647, %v11194
  %v11197 = vsub.f32 0.0, %v11196
  %v11198 = vmul.f32 %v11197, 1.442695
  %v11199 = vpow.pop %v11198
  %v11200 = vadd.f32 %v11199, 1.0
  %v11201 = vlog2.pop %v11200
  %v11202 = vmul.f32 %v11201, 0.6931472
  %v11203 = vadd.f32 %v11195, %v11202
  %v11204 = vsub.f32 0.0, %v11203
  %v11205 = vsub.f32 %v11194, %v11203
  %v11207 = vrot.slane %v11205, 7
  %v11209 = vsel %vm11052, %v11204, %v11207
  %vm11210 = vcmask 9216
  %11211 = vst.msk [vmem:[%s10] sm:$0x3] %vm11210, %v11209
  // Predicated region
  $region42: #{_lambda_.1} parent=0 // pred_check
    _
  $region43: #{_lambda_.1} parent=0 // pred_check_branch
    %11213 = sbr.rel (0) target = $region45
  $region44: #{_lambda_.1} parent=0 // pred_region
    _
  $region45: #{_lambda_.1} parent=0 // pred_fallthru
    _
  // Predicated region
  $region46: #{_lambda_.1} parent=0 // pred_check
    _
  $region47: #{_lambda_.1} parent=0 // pred_check_branch
    %11215 = sbr.rel (0) target = $region49
  $region48: #{_lambda_.1} parent=0 // pred_region
    _
  $region49: #{_lambda_.1} parent=0 // pred_fallthru
    _

</llo_original>
